<compile_context>
chip_gen: v7x
topology: tpu7x:2x2x1
jax: 0.10.0
libtpu: 0.0.40
codegen_flags: <defaults>
</compile_context>

<pallas_src>
import functools
import math

import jax
import jax.numpy as jnp
import numpy as np
from jax.experimental import pallas as pl
from jax.experimental.pallas import tpu as pltpu

# ----------------------------------------------------------------------------
# model config (small synthetic, but consistent with the SD3 forward pass).
# D=128 / heads=4 keeps every kernel output lane-dense (>=128 wide) except the
# final 16-channel projection.
# ----------------------------------------------------------------------------
CFG = dict(
    B=2,          # batch
    C_in=4,       # latent channels
    H=16, W=16,   # latent spatial size
    p=2,          # patch size
    D=128,        # transformer hidden size
    heads=4,      # attention heads (head_dim = 32)
    T=8,          # text (prompt) sequence length
    P=48,         # prompt-embed feature dim
    PP=64,        # pooled-prompt feature dim
    L=2,          # number of joint transformer blocks
    time_dim=256, # sinusoidal timestep embedding channels
    ff_mult=4,    # MLP expansion
)
_EPS = 1e-6


# ----------------------------------------------------------------------------
# shared in-kernel helper: LayerNorm (no affine) + AdaLN modulation
# ----------------------------------------------------------------------------
def _ln_modulate(x, scale_row, shift_row, eps):
    mean = jnp.mean(x, axis=-1, keepdims=True)
    var = jnp.mean(jnp.square(x - mean), axis=-1, keepdims=True)
    xn = (x - mean) * jax.lax.rsqrt(var + eps)
    return xn * (1.0 + scale_row) + shift_row


# ----------------------------------------------------------------------------
# generic tiled linear (bf16 matmul, f32 accumulation) - batch folded into M
# ----------------------------------------------------------------------------
def _tile(dim, cap, align):
    if dim <= cap:
        return dim
    t = (cap // align) * align
    while t >= align and dim % t:
        t -= align
    return t if t >= align else dim


def _matmul_kernel(x_ref, w_ref, b_ref, o_ref, acc_ref, *, nk):
    @pl.when(pl.program_id(2) == 0)
    def _():
        acc_ref[...] = jnp.zeros_like(acc_ref)

    acc_ref[...] += jnp.dot(x_ref[...], w_ref[...],
                            preferred_element_type=jnp.float32)

    @pl.when(pl.program_id(2) == nk - 1)
    def _():
        o_ref[...] = acc_ref[...] + b_ref[...]


def linear(x, p):
    """x: (..., K) @ w(K, N) + b(N); bf16 MXU operands, f32 accumulate."""
    w, b = p["w"], p["b"]
    orig = x.shape
    K = orig[-1]
    M = int(np.prod(orig[:-1]))
    N = w.shape[1]
    x2 = x.reshape(M, K).astype(jnp.bfloat16)

    tm = _tile(M, 256, 16)       # 16-aligned M tiles for bf16 sublane packing
    tn = _tile(N, 512, 128)
    tk = _tile(K, 512, 128)
    nm, nn, nk = M // tm, N // tn, K // tk

    out = pl.pallas_call(
        functools.partial(_matmul_kernel, nk=nk),
        out_shape=jax.ShapeDtypeStruct((M, N), jnp.float32),
        grid=(nm, nn, nk),
        in_specs=[
            pl.BlockSpec((tm, tk), lambda i, j, k: (i, k)),
            pl.BlockSpec((tk, tn), lambda i, j, k: (k, j)),
            pl.BlockSpec((1, tn), lambda i, j, k: (0, j)),
        ],
        out_specs=pl.BlockSpec((tm, tn), lambda i, j, k: (i, j)),
        scratch_shapes=[pltpu.VMEM((tm, tn), jnp.float32)],
        compiler_params=pltpu.CompilerParams(
            dimension_semantics=("parallel", "parallel", "arbitrary")),
    )(x2, w, b.reshape(1, N))
    return out.reshape(*orig[:-1], N)


# ----------------------------------------------------------------------------
# patch embedding: matmul + bias + positional embedding, one fused epilogue
# ----------------------------------------------------------------------------
def _patch_embed_kernel(x_ref, w_ref, b_ref, pos_ref, o_ref):
    y = jnp.dot(x_ref[0].astype(jnp.bfloat16), w_ref[...],
                preferred_element_type=jnp.float32)
    o_ref[0] = y + b_ref[...] + pos_ref[0]


def patch_embed(x, p, pos):
    B, n_img, K = x.shape
    D = p["w"].shape[1]
    return pl.pallas_call(
        _patch_embed_kernel,
        out_shape=jax.ShapeDtypeStruct((B, n_img, D), jnp.float32),
        grid=(B,),
        in_specs=[
            pl.BlockSpec((1, n_img, K), lambda b: (b, 0, 0)),
            pl.BlockSpec((K, D), lambda b: (0, 0)),
            pl.BlockSpec((1, D), lambda b: (0, 0)),
            pl.BlockSpec((1, n_img, D), lambda b: (0, 0, 0)),
        ],
        out_specs=pl.BlockSpec((1, n_img, D), lambda b: (b, 0, 0)),
        compiler_params=pltpu.CompilerParams(dimension_semantics=("parallel",)),
    )(x, p["w"], p["b"].reshape(1, D), pos)


# ----------------------------------------------------------------------------
# final AdaLayerNormContinuous + projection (fused LN + mod + matmul)
# ----------------------------------------------------------------------------
def _ln_mod_matmul_kernel(x_ref, sc_ref, sh_ref, w_ref, b_ref, o_ref, *, eps):
    xm = _ln_modulate(x_ref[0], sc_ref[0], sh_ref[0], eps)
    o_ref[0] = jnp.dot(xm.astype(jnp.bfloat16), w_ref[...],
                       preferred_element_type=jnp.float32) + b_ref[...]
    # TODO(synk): output is only p*p*C = 16 lanes wide (sub-128 masked stores);
    # pad to 128 lanes if this shows up in profiles at real SD3.5 sizes.


def ln_mod_matmul(x, scale, shift, p, eps=_EPS):
    B, S, C = x.shape
    N = p["w"].shape[1]
    return pl.pallas_call(
        functools.partial(_ln_mod_matmul_kernel, eps=eps),
        out_shape=jax.ShapeDtypeStruct((B, S, N), jnp.float32),
        grid=(B,),
        in_specs=[
            pl.BlockSpec((1, S, C), lambda b: (b, 0, 0)),
            pl.BlockSpec((1, 1, C), lambda b: (b, 0, 0)),
            pl.BlockSpec((1, 1, C), lambda b: (b, 0, 0)),
            pl.BlockSpec((C, N), lambda b: (0, 0)),
            pl.BlockSpec((1, N), lambda b: (0, 0)),
        ],
        out_specs=pl.BlockSpec((1, S, N), lambda b: (b, 0, 0)),
        compiler_params=pltpu.CompilerParams(dimension_semantics=("parallel",)),
    )(x, scale.reshape(B, 1, C), shift.reshape(B, 1, C),
      p["w"], p["b"].reshape(1, N))


# ----------------------------------------------------------------------------
# fused MM-DiT block megakernel: one pallas_call per block, grid=(B,)
#   LN+mod -> QKV (both streams) -> joint attention -> out-proj + gate + res
#   -> LN+mod -> MLP -> gate + res (both streams), all in VMEM.
# ----------------------------------------------------------------------------
def _mmdit_block_kernel(h_ref, c_ref, mod_ref,
                        wqkv_x, bqkv_x, wqkv_c, bqkv_c,
                        wo_x, bo_x, wo_c, bo_c,
                        wf1_x, bf1_x, wf2_x, bf2_x,
                        wf1_c, bf1_c, wf2_c, bf2_c,
                        h_out, c_out,
                        *, heads, dh, n_img, D, eps, scale):
    h = h_ref[0]                                  # (n_img, D) f32 residual
    c = c_ref[0]                                  # (T, D)     f32 residual
    mod = mod_ref[0]                              # (12, D) AdaLN-Zero vectors
    sh_msa, sc_msa, g_msa = mod[0:1], mod[1:2], mod[2:3]
    sh_mlp, sc_mlp, g_mlp = mod[3:4], mod[4:5], mod[5:6]
    csh_msa, csc_msa, cg_msa = mod[6:7], mod[7:8], mod[8:9]
    csh_mlp, csc_mlp, cg_mlp = mod[9:10], mod[10:11], mod[11:12]

    # ---- attention branch -----------------------------------------------
    hm = _ln_modulate(h, sc_msa, sh_msa, eps)
    cm = _ln_modulate(c, csc_msa, csh_msa, eps)
    qkv_h = jnp.dot(hm.astype(jnp.bfloat16), wqkv_x[...],
                    preferred_element_type=jnp.float32) + bqkv_x[...]
    qkv_c = jnp.dot(cm.astype(jnp.bfloat16), wqkv_c[...],
                    preferred_element_type=jnp.float32) + bqkv_c[...]

    # joint sequence built in VMEM (lane-aligned 128-wide slices, sublane concat)
    q = jnp.concatenate([qkv_h[:, 0 * D:1 * D], qkv_c[:, 0 * D:1 * D]], axis=0)
    k = jnp.concatenate([qkv_h[:, 1 * D:2 * D], qkv_c[:, 1 * D:2 * D]], axis=0)
    v = jnp.concatenate([qkv_h[:, 2 * D:3 * D], qkv_c[:, 2 * D:3 * D]], axis=0)

    # TODO(synk): dh=32 per-head column slices are sub-128-lane; at real SD3.5
    # sizes restructure to a head-major layout to fill the MXU K dimension.
    contract_last = (((1,), (1,)), ((), ()))      # contract last axes, no k.T
    heads_out = []
    for hh in range(heads):                       # static unroll (heads=4)
        lo = hh * dh
        qh = q[:, lo:lo + dh].astype(jnp.bfloat16)
        kh = k[:, lo:lo + dh].astype(jnp.bfloat16)
        vh = v[:, lo:lo + dh].astype(jnp.bfloat16)
        s = jax.lax.dot_general(qh, kh, contract_last,
                                preferred_element_type=jnp.float32) * scale
        m = jnp.max(s, axis=-1, keepdims=True)
        e = jnp.exp(s - m)
        l = jnp.sum(e, axis=-1, keepdims=True)
        pm = e * pl.reciprocal(l, approx=True)    # EUP reciprocal
        heads_out.append(jnp.dot(pm.astype(jnp.bfloat16), vh,
                                 preferred_element_type=jnp.float32))
    attn = jnp.concatenate(heads_out, axis=-1)    # (S, D) in VMEM

    attn_img = attn[:n_img]
    attn_txt = attn[n_img:]
    h1 = h + g_msa * (jnp.dot(attn_img.astype(jnp.bfloat16), wo_x[...],
                              preferred_element_type=jnp.float32) + bo_x[...])
    c1 = c + cg_msa * (jnp.dot(attn_txt.astype(jnp.bfloat16), wo_c[...],
                               preferred_element_type=jnp.float32) + bo_c[...])

    # ---- MLP branch (4D-wide intermediate stays in VMEM) ------------------
    hm2 = _ln_modulate(h1, sc_mlp, sh_mlp, eps)
    th = jax.nn.gelu(jnp.dot(hm2.astype(jnp.bfloat16), wf1_x[...],
                             preferred_element_type=jnp.float32) + bf1_x[...],
                     approximate=True)
    h_out[0] = h1 + g_mlp * (jnp.dot(th.astype(jnp.bfloat16), wf2_x[...],
                                     preferred_element_type=jnp.float32) + bf2_x[...])

    cm2 = _ln_modulate(c1, csc_mlp, csh_mlp, eps)
    tc = jax.nn.gelu(jnp.dot(cm2.astype(jnp.bfloat16), wf1_c[...],
                             preferred_element_type=jnp.float32) + bf1_c[...],
                     approximate=True)
    c_out[0] = c1 + cg_mlp * (jnp.dot(tc.astype(jnp.bfloat16), wf2_c[...],
                                      preferred_element_type=jnp.float32) + bf2_c[...])


def mm_dit_block(hidden, context, mod, blk, heads, eps=_EPS):
    B, n_img, D = hidden.shape
    T = context.shape[1]
    dh = D // heads
    scale = 1.0 / math.sqrt(dh)
    F = blk["ff_x1"]["w"].shape[1]

    def shared(shape):
        return pl.BlockSpec(shape, lambda b: (0, 0))

    kernel = functools.partial(_mmdit_block_kernel, heads=heads, dh=dh,
                               n_img=n_img, D=D, eps=eps, scale=scale)
    # TODO(synk): at real SD3.5 dims, tile the F axis of the MLP weights and
    # use pipeline_mode=pl.Buffered(1) on the constant-index weight specs so
    # the fused block fits v7x's 64 MiB VMEM.
    hidden_new, context_new = pl.pallas_call(
        kernel,
        out_shape=(jax.ShapeDtypeStruct((B, n_img, D), jnp.float32),
                   jax.ShapeDtypeStruct((B, T, D), jnp.float32)),
        grid=(B,),
        in_specs=[
            pl.BlockSpec((1, n_img, D), lambda b: (b, 0, 0)),
            pl.BlockSpec((1, T, D), lambda b: (b, 0, 0)),
            pl.BlockSpec((1, 12, D), lambda b: (b, 0, 0)),
            shared((D, 3 * D)), shared((1, 3 * D)),
            shared((D, 3 * D)), shared((1, 3 * D)),
            shared((D, D)), shared((1, D)),
            shared((D, D)), shared((1, D)),
            shared((D, F)), shared((1, F)),
            shared((F, D)), shared((1, D)),
            shared((D, F)), shared((1, F)),
            shared((F, D)), shared((1, D)),
        ],
        out_specs=[
            pl.BlockSpec((1, n_img, D), lambda b: (b, 0, 0)),
            pl.BlockSpec((1, T, D), lambda b: (b, 0, 0)),
        ],
        input_output_aliases={0: 0, 1: 1},        # residual streams in place
        compiler_params=pltpu.CompilerParams(dimension_semantics=("parallel",)),
    )(hidden, context, mod,
      blk["qkv_x"]["w"], blk["qkv_x"]["b"].reshape(1, 3 * D),
      blk["qkv_c"]["w"], blk["qkv_c"]["b"].reshape(1, 3 * D),
      blk["to_out"]["w"], blk["to_out"]["b"].reshape(1, D),
      blk["to_add_out"]["w"], blk["to_add_out"]["b"].reshape(1, D),
      blk["ff_x1"]["w"], blk["ff_x1"]["b"].reshape(1, F),
      blk["ff_x2"]["w"], blk["ff_x2"]["b"].reshape(1, D),
      blk["ff_c1"]["w"], blk["ff_c1"]["b"].reshape(1, F),
      blk["ff_c2"]["w"], blk["ff_c2"]["b"].reshape(1, D))
    return hidden_new, context_new


# ----------------------------------------------------------------------------
# tiny conditioning matmuls (M = B = 2): plain XLA, a Pallas launch is overhead
# ----------------------------------------------------------------------------
def dense(x, p):
    return jnp.dot(x.astype(jnp.bfloat16), p["w"],
                   preferred_element_type=jnp.float32) + p["b"]


# ----------------------------------------------------------------------------
# parameter init (deterministic, synthetic).  Matmul weights stored bf16.
# ----------------------------------------------------------------------------
def _dense_params(key, fan_in, fan_out):
    kw, kb = jax.random.split(key)
    return {
        "w": (jax.random.normal(kw, (fan_in, fan_out), jnp.float32) * 0.02
              ).astype(jnp.bfloat16),
        "b": jax.random.normal(kb, (fan_out,), jnp.float32) * 0.01,
    }


def init_params(key):
    c = CFG
    D, p = c["D"], c["p"]
    n_tokens = (c["H"] // p) * (c["W"] // p)
    keys = iter(jax.random.split(key, 64))
    params = {
        "patch_proj": _dense_params(next(keys), c["C_in"] * p * p, D),
        "pos_embed": jax.random.normal(next(keys), (1, n_tokens, D), jnp.float32) * 0.02,
        "time_mlp1": _dense_params(next(keys), c["time_dim"], D),
        "time_mlp2": _dense_params(next(keys), D, D),
        "pooled_mlp1": _dense_params(next(keys), c["PP"], D),
        "pooled_mlp2": _dense_params(next(keys), D, D),
        "context_embedder": _dense_params(next(keys), c["P"], D),
        "proj_out": _dense_params(next(keys), D, p * p * c["C_in"]),
        "blocks": [],
    }
    mod_ws, mod_bs = [], []
    for _ in range(c["L"]):
        blk = {
            "qkv_x": _dense_params(next(keys), D, 3 * D),   # fused to_q|to_k|to_v
            "qkv_c": _dense_params(next(keys), D, 3 * D),   # fused add_q|add_k|add_v
            "to_out": _dense_params(next(keys), D, D),
            "to_add_out": _dense_params(next(keys), D, D),
            "ff_x1": _dense_params(next(keys), D, c["ff_mult"] * D),
            "ff_x2": _dense_params(next(keys), c["ff_mult"] * D, D),
            "ff_c1": _dense_params(next(keys), D, c["ff_mult"] * D),
            "ff_c2": _dense_params(next(keys), c["ff_mult"] * D, D),
        }
        params["blocks"].append(blk)
        adaln = _dense_params(next(keys), D, 12 * D)         # adaln_x ++ adaln_c
        mod_ws.append(adaln["w"]); mod_bs.append(adaln["b"])
    norm_out = _dense_params(next(keys), D, 2 * D)            # final AdaLN-continuous
    # hoisted: ALL block modulations + final norm-out as ONE stacked matmul
    params["mod_all"] = {
        "w": jnp.concatenate(mod_ws + [norm_out["w"]], axis=1),
        "b": jnp.concatenate(mod_bs + [norm_out["b"]], axis=0),
    }
    return params


# ----------------------------------------------------------------------------
# forward pass (SD3 MM-DiT style)
# ----------------------------------------------------------------------------
def sinusoidal_timestep_embedding(timesteps, dim):
    half = dim // 2
    exponent = -math.log(10000.0) * jnp.arange(half, dtype=jnp.float32) / half
    freqs = jnp.exp(exponent)
    args = timesteps.astype(jnp.float32)[:, None] * freqs[None, :]
    return jnp.concatenate([jnp.cos(args), jnp.sin(args)], axis=-1)  # flip_sin_to_cos


def sd3_forward(params, latent, timestep, prompt_embeds, pooled_prompt_embeds):
    c = CFG
    B, C_in, H, W = latent.shape
    p, D, heads = c["p"], c["D"], c["heads"]
    h, w = H // p, W // p
    n_img = h * w
    L = len(params["blocks"])

    # ---- patch embed (conv k=s=p as reshape + matmul; pos_embed add fused) ----
    x = latent.reshape(B, C_in, h, p, w, p)
    x = jnp.transpose(x, (0, 2, 4, 1, 3, 5)).reshape(B, n_img, C_in * p * p)
    hidden = patch_embed(x, params["patch_proj"], params["pos_embed"])   # (B, N, D)

    # ---- timestep + pooled-projection embeddings (tiny; plain XLA) ------------
    t_sin = sinusoidal_timestep_embedding(timestep, c["time_dim"])       # (B, 256)
    t_emb = dense(jax.nn.silu(dense(t_sin, params["time_mlp1"])), params["time_mlp2"])
    p_emb = dense(jax.nn.silu(dense(pooled_prompt_embeds, params["pooled_mlp1"])),
                  params["pooled_mlp2"])
    temb_act = jax.nn.silu(t_emb + p_emb)                                # (B, D)

    # ---- context embedder (Pallas tiled linear, batch folded into M) ----------
    context = linear(prompt_embeds, params["context_embedder"])         # (B, T, D)

    # ---- ALL AdaLN modulations hoisted: one (D -> L*12D + 2D) matmul ----------
    mod_all = dense(temb_act, params["mod_all"])                         # (B, L*12D+2D)

    # ---- joint transformer blocks: one fused megakernel per block -------------
    for li, blk in enumerate(params["blocks"]):
        mod = mod_all[:, li * 12 * D:(li + 1) * 12 * D].reshape(B, 12, D)
        hidden, context = mm_dit_block(hidden, context, mod, blk, heads)

    # ---- final AdaLayerNormContinuous + projection (fused LN+mod+matmul) ------
    mod_out = mod_all[:, L * 12 * D:]                                    # (B, 2D)
    scale_out, shift_out = jnp.split(mod_out, 2, axis=-1)                # diffusers order
    hidden = ln_mod_matmul(hidden, scale_out, shift_out, params["proj_out"])  # (B, N, p*p*C)

    # ---- unpatchify back to NCHW ----------------------------------------------
    out = hidden.reshape(B, h, w, p, p, C_in)
    out = jnp.transpose(out, (0, 5, 1, 3, 2, 4)).reshape(B, C_in, H, W)
    return out  # noise_pred


# TODO(synk): the real SD3.5 checkpoint (16 latent channels, 24 heads, 38 blocks)
# is replaced by a deterministic synthetic small config; architecture semantics
# (MM-DiT joint blocks, AdaLN-Zero, joint attention, patch embed, unpatchify)
# are preserved.  Patchify/unpatchify reshapes, the sinusoidal timestep
# embedding and the M=2 conditioning MLPs stay as cheap JAX glue.

# ----------------------------------------------------------------------------
if __name__ == "__main__":
    key = jax.random.PRNGKey(0)
    k_lat, k_prm, k_pool, k_par = jax.random.split(key, 4)

    latent_model_input = jax.random.normal(
        k_lat, (CFG["B"], CFG["C_in"], CFG["H"], CFG["W"]), jnp.float32)
    timestep = jnp.array([999.0, 500.0], jnp.float32)
    prompt_embeds = jax.random.normal(k_prm, (CFG["B"], CFG["T"], CFG["P"]), jnp.float32)
    pooled_prompt_embeds = jax.random.normal(k_pool, (CFG["B"], CFG["PP"]), jnp.float32)

    params = init_params(k_par)

    fwd = jax.jit(functools.partial(sd3_forward, params))
    noise_pred = fwd(latent_model_input, timestep, prompt_embeds, pooled_prompt_embeds)
    jax.block_until_ready(noise_pred)

    assert noise_pred.shape == latent_model_input.shape
    assert noise_pred.dtype == jnp.float32
    assert bool(jnp.all(jnp.isfinite(noise_pred)))
    print("KERNEL_OK")
</pallas_src>

<mosaic_0001>
module attributes {stable_mosaic.version = 11 : i64} {
  func.func @_patch_embed_kernel(%arg0: i32, %arg1: memref<1x64x16xf32, #tpu.memory_space<vmem>>, %arg2: memref<16x128xbf16, #tpu.memory_space<vmem>>, %arg3: memref<1x128xf32, #tpu.memory_space<vmem>>, %arg4: memref<1x64x128xf32, #tpu.memory_space<vmem>>, %arg5: memref<1x64x128xf32, #tpu.memory_space<vmem>>) attributes {dimension_semantics = [#tpu.dimension_semantics<parallel>], iteration_bounds = array<i64: 2>, scalar_prefetch = 0 : i64, scratch_operands = 0 : i64, tpu.core_type = #tpu.core_type<tc>, window_params = [{transform_indices = @transform_0, window_bounds = array<i64: 1, 64, 16>}, {pipeline_mode = #tpu.pipeline_mode<synchronous>, transform_indices = @transform_1, window_bounds = array<i64: 16, 128>}, {pipeline_mode = #tpu.pipeline_mode<synchronous>, transform_indices = @transform_2, window_bounds = array<i64: 1, 128>}, {pipeline_mode = #tpu.pipeline_mode<synchronous>, transform_indices = @transform_3, window_bounds = array<i64: 1, 64, 128>}, {transform_indices = @transform_4, window_bounds = array<i64: 1, 64, 128>}]} {
    %c0 = arith.constant 0 : index
    %c0_0 = arith.constant 0 : index
    %c0_1 = arith.constant 0 : index
    %0 = vector.load %arg1[%c0, %c0_0, %c0_1] : memref<1x64x16xf32, #tpu.memory_space<vmem>>, vector<1x64x16xf32>
    %1 = vector.shape_cast %0 : vector<1x64x16xf32> to vector<64x16xf32>
    %2 = arith.truncf %1 : vector<64x16xf32> to vector<64x16xbf16>
    %c0_2 = arith.constant 0 : index
    %c0_3 = arith.constant 0 : index
    %3 = vector.load %arg2[%c0_2, %c0_3] : memref<16x128xbf16, #tpu.memory_space<vmem>>, vector<16x128xbf16>
    %cst = arith.constant dense<0.000000e+00> : vector<64x128xf32>
    %4 = tpu.matmul %2, %3, %cst {dimension_numbers = #tpu.dot_dimension_numbers<[1], [0], [0], [1], [0, 0, 1, 1], [], []>} : vector<64x16xbf16>, vector<16x128xbf16>, vector<64x128xf32> -> vector<64x128xf32>
    %c0_4 = arith.constant 0 : index
    %c0_5 = arith.constant 0 : index
    %5 = vector.load %arg3[%c0_4, %c0_5] : memref<1x128xf32, #tpu.memory_space<vmem>>, vector<1x128xf32>
    %6 = vector.broadcast %5 : vector<1x128xf32> to vector<64x128xf32>
    %7 = arith.addf %4, %6 : vector<64x128xf32>
    %c0_6 = arith.constant 0 : index
    %c0_7 = arith.constant 0 : index
    %c0_8 = arith.constant 0 : index
    %8 = vector.load %arg4[%c0_6, %c0_7, %c0_8] : memref<1x64x128xf32, #tpu.memory_space<vmem>>, vector<1x64x128xf32>
    %9 = vector.shape_cast %8 : vector<1x64x128xf32> to vector<64x128xf32>
    %10 = arith.addf %7, %9 : vector<64x128xf32>
    %c0_9 = arith.constant 0 : index
    %c0_10 = arith.constant 0 : index
    %c0_11 = arith.constant 0 : index
    %11 = vector.load %arg5[%c0_9, %c0_10, %c0_11] : memref<1x64x128xf32, #tpu.memory_space<vmem>>, vector<1x64x128xf32>
    %12 = vector.shape_cast %11 : vector<1x64x128xf32> to vector<64x128xf32>
    %13 = vector.shape_cast %10 : vector<64x128xf32> to vector<1x64x128xf32>
    tpu.vector_store %arg5[%c0_9, %c0_10, %c0_11], %13 {strides = array<i32>} : memref<1x64x128xf32, #tpu.memory_space<vmem>>, vector<1x64x128xf32>,
    return
  }
  func.func @transform_0(%arg0: i32) -> (i32, i32, i32) {
    %c0_i32 = arith.constant 0 : i32
    %c0_i32_0 = arith.constant 0 : i32
    %c0_i32_1 = arith.constant 0 : i32
    return %arg0, %c0_i32, %c0_i32_0 : i32, i32, i32
  }
  func.func @transform_1(%arg0: i32) -> (i32, i32) {
    %c0_i32 = arith.constant 0 : i32
    %c0_i32_0 = arith.constant 0 : i32
    %c0_i32_1 = arith.constant 0 : i32
    return %c0_i32, %c0_i32_0 : i32, i32
  }
  func.func @transform_2(%arg0: i32) -> (i32, i32) {
    %c0_i32 = arith.constant 0 : i32
    %c0_i32_0 = arith.constant 0 : i32
    %c0_i32_1 = arith.constant 0 : i32
    return %c0_i32, %c0_i32_0 : i32, i32
  }
  func.func @transform_3(%arg0: i32) -> (i32, i32, i32) {
    %c0_i32 = arith.constant 0 : i32
    %c0_i32_0 = arith.constant 0 : i32
    %c0_i32_1 = arith.constant 0 : i32
    %c0_i32_2 = arith.constant 0 : i32
    return %c0_i32, %c0_i32_0, %c0_i32_1 : i32, i32, i32
  }
  func.func @transform_4(%arg0: i32) -> (i32, i32, i32) {
    %c0_i32 = arith.constant 0 : i32
    %c0_i32_0 = arith.constant 0 : i32
    %c0_i32_1 = arith.constant 0 : i32
    return %arg0, %c0_i32, %c0_i32_0 : i32, i32, i32
  }
}

module attributes {stable_mosaic.version = 11 : i64} {
  func.func @_matmul_kernel(%arg0: i32, %arg1: i32, %arg2: i32, %arg3: memref<16x48xbf16, #tpu.memory_space<vmem>>, %arg4: memref<48x128xbf16, #tpu.memory_space<vmem>>, %arg5: memref<1x128xf32, #tpu.memory_space<vmem>>, %arg6: memref<16x128xf32, #tpu.memory_space<vmem>>, %arg7: memref<16x128xf32, #tpu.memory_space<vmem>>) attributes {dimension_semantics = [#tpu.dimension_semantics<parallel>, #tpu.dimension_semantics<parallel>, #tpu.dimension_semantics<arbitrary>], iteration_bounds = array<i64: 1, 1, 1>, scalar_prefetch = 0 : i64, scratch_operands = 1 : i64, tpu.core_type = #tpu.core_type<tc>, window_params = [{transform_indices = @transform_0, window_bounds = array<i64: 16, 48>}, {transform_indices = @transform_1, window_bounds = array<i64: 48, 128>}, {transform_indices = @transform_2, window_bounds = array<i64: 1, 128>}, {transform_indices = @transform_3, window_bounds = array<i64: 16, 128>}]} {
    %c0_i32 = arith.constant 0 : i32
    %0 = arith.cmpi eq, %arg2, %c0_i32 : i32
    %1 = arith.extui %0 : i1 to i32
    %c0_i32_0 = arith.constant 0 : i32
    %2 = arith.cmpi ne, %1, %c0_i32_0 : i32
    scf.if %2 {
      %cst_10 = arith.constant 0.000000e+00 : f32
      %12 = vector.broadcast %cst_10 : f32 to vector<16x128xf32>
      %c0_11 = arith.constant 0 : index
      %c0_12 = arith.constant 0 : index
      %13 = vector.load %arg7[%c0_11, %c0_12] : memref<16x128xf32, #tpu.memory_space<vmem>>, vector<16x128xf32>
      tpu.vector_store %arg7[%c0_11, %c0_12], %12 {strides = array<i32>} : memref<16x128xf32, #tpu.memory_space<vmem>>, vector<16x128xf32>,
    } else {
    }
    %c0 = arith.constant 0 : index
    %c0_1 = arith.constant 0 : index
    %3 = vector.load %arg7[%c0, %c0_1] : memref<16x128xf32, #tpu.memory_space<vmem>>, vector<16x128xf32>
    %c0_2 = arith.constant 0 : index
    %c0_3 = arith.constant 0 : index
    %4 = vector.load %arg3[%c0_2, %c0_3] : memref<16x48xbf16, #tpu.memory_space<vmem>>, vector<16x48xbf16>
    %c0_4 = arith.constant 0 : index
    %c0_5 = arith.constant 0 : index
    %5 = vector.load %arg4[%c0_4, %c0_5] : memref<48x128xbf16, #tpu.memory_space<vmem>>, vector<48x128xbf16>
    %cst = arith.constant dense<0.000000e+00> : vector<16x128xf32>
    %6 = tpu.matmul %4, %5, %cst {dimension_numbers = #tpu.dot_dimension_numbers<[1], [0], [0], [1], [0, 0, 1, 1], [], []>} : vector<16x48xbf16>, vector<48x128xbf16>, vector<16x128xf32> -> vector<16x128xf32>
    %7 = arith.addf %3, %6 : vector<16x128xf32>
    %c0_6 = arith.constant 0 : index
    %c0_7 = arith.constant 0 : index
    %8 = vector.load %arg7[%c0_6, %c0_7] : memref<16x128xf32, #tpu.memory_space<vmem>>, vector<16x128xf32>
    tpu.vector_store %arg7[%c0_6, %c0_7], %7 {strides = array<i32>} : memref<16x128xf32, #tpu.memory_space<vmem>>, vector<16x128xf32>,
    %c0_i32_8 = arith.constant 0 : i32
    %9 = arith.cmpi eq, %arg2, %c0_i32_8 : i32
    %10 = arith.extui %9 : i1 to i32
    %c0_i32_9 = arith.constant 0 : i32
    %11 = arith.cmpi ne, %10, %c0_i32_9 : i32
    scf.if %11 {
      %c0_10 = arith.constant 0 : index
      %c0_11 = arith.constant 0 : index
      %12 = vector.load %arg7[%c0_10, %c0_11] : memref<16x128xf32, #tpu.memory_space<vmem>>, vector<16x128xf32>
      %c0_12 = arith.constant 0 : index
      %c0_13 = arith.constant 0 : index
      %13 = vector.load %arg5[%c0_12, %c0_13] : memref<1x128xf32, #tpu.memory_space<vmem>>, vector<1x128xf32>
      %14 = vector.broadcast %13 : vector<1x128xf32> to vector<16x128xf32>
      %15 = arith.addf %12, %14 : vector<16x128xf32>
      %c0_14 = arith.constant 0 : index
      %c0_15 = arith.constant 0 : index
      %16 = vector.load %arg6[%c0_14, %c0_15] : memref<16x128xf32, #tpu.memory_space<vmem>>, vector<16x128xf32>
      tpu.vector_store %arg6[%c0_14, %c0_15], %15 {strides = array<i32>} : memref<16x128xf32, #tpu.memory_space<vmem>>, vector<16x128xf32>,
    } else {
    }
    return
  }
  func.func @transform_0(%arg0: i32, %arg1: i32, %arg2: i32) -> (i32, i32) {
    %c0_i32 = arith.constant 0 : i32
    return %arg0, %arg2 : i32, i32
  }
  func.func @transform_1(%arg0: i32, %arg1: i32, %arg2: i32) -> (i32, i32) {
    %c0_i32 = arith.constant 0 : i32
    return %arg2, %arg1 : i32, i32
  }
  func.func @transform_2(%arg0: i32, %arg1: i32, %arg2: i32) -> (i32, i32) {
    %c0_i32 = arith.constant 0 : i32
    %c0_i32_0 = arith.constant 0 : i32
    return %c0_i32, %arg1 : i32, i32
  }
  func.func @transform_3(%arg0: i32, %arg1: i32, %arg2: i32) -> (i32, i32) {
    %c0_i32 = arith.constant 0 : i32
    return %arg0, %arg1 : i32, i32
  }
}

module attributes {stable_mosaic.version = 11 : i64} {
  func.func @_mmdit_block_kernel(%arg0: i32, %arg1: memref<1x64x128xf32, #tpu.memory_space<vmem>>, %arg2: memref<1x8x128xf32, #tpu.memory_space<vmem>>, %arg3: memref<1x12x128xf32, #tpu.memory_space<vmem>>, %arg4: memref<128x384xbf16, #tpu.memory_space<vmem>>, %arg5: memref<1x384xf32, #tpu.memory_space<vmem>>, %arg6: memref<128x384xbf16, #tpu.memory_space<vmem>>, %arg7: memref<1x384xf32, #tpu.memory_space<vmem>>, %arg8: memref<128x128xbf16, #tpu.memory_space<vmem>>, %arg9: memref<1x128xf32, #tpu.memory_space<vmem>>, %arg10: memref<128x128xbf16, #tpu.memory_space<vmem>>, %arg11: memref<1x128xf32, #tpu.memory_space<vmem>>, %arg12: memref<128x512xbf16, #tpu.memory_space<vmem>>, %arg13: memref<1x512xf32, #tpu.memory_space<vmem>>, %arg14: memref<512x128xbf16, #tpu.memory_space<vmem>>, %arg15: memref<1x128xf32, #tpu.memory_space<vmem>>, %arg16: memref<128x512xbf16, #tpu.memory_space<vmem>>, %arg17: memref<1x512xf32, #tpu.memory_space<vmem>>, %arg18: memref<512x128xbf16, #tpu.memory_space<vmem>>, %arg19: memref<1x128xf32, #tpu.memory_space<vmem>>, %arg20: memref<1x64x128xf32, #tpu.memory_space<vmem>>, %arg21: memref<1x8x128xf32, #tpu.memory_space<vmem>>) attributes {dimension_semantics = [#tpu.dimension_semantics<parallel>], iteration_bounds = array<i64: 2>, scalar_prefetch = 0 : i64, scratch_operands = 0 : i64, tpu.core_type = #tpu.core_type<tc>, window_params = [{transform_indices = @transform_0, window_bounds = array<i64: 1, 64, 128>}, {transform_indices = @transform_1, window_bounds = array<i64: 1, 8, 128>}, {transform_indices = @transform_2, window_bounds = array<i64: 1, 12, 128>}, {pipeline_mode = #tpu.pipeline_mode<synchronous>, transform_indices = @transform_3, window_bounds = array<i64: 128, 384>}, {pipeline_mode = #tpu.pipeline_mode<synchronous>, transform_indices = @transform_4, window_bounds = array<i64: 1, 384>}, {pipeline_mode = #tpu.pipeline_mode<synchronous>, transform_indices = @transform_5, window_bounds = array<i64: 128, 384>}, {pipeline_mode = #tpu.pipeline_mode<synchronous>, transform_indices = @transform_6, window_bounds = array<i64: 1, 384>}, {pipeline_mode = #tpu.pipeline_mode<synchronous>, transform_indices = @transform_7, window_bounds = array<i64: 128, 128>}, {pipeline_mode = #tpu.pipeline_mode<synchronous>, transform_indices = @transform_8, window_bounds = array<i64: 1, 128>}, {pipeline_mode = #tpu.pipeline_mode<synchronous>, transform_indices = @transform_9, window_bounds = array<i64: 128, 128>}, {pipeline_mode = #tpu.pipeline_mode<synchronous>, transform_indices = @transform_10, window_bounds = array<i64: 1, 128>}, {pipeline_mode = #tpu.pipeline_mode<synchronous>, transform_indices = @transform_11, window_bounds = array<i64: 128, 512>}, {pipeline_mode = #tpu.pipeline_mode<synchronous>, transform_indices = @transform_12, window_bounds = array<i64: 1, 512>}, {pipeline_mode = #tpu.pipeline_mode<synchronous>, transform_indices = @transform_13, window_bounds = array<i64: 512, 128>}, {pipeline_mode = #tpu.pipeline_mode<synchronous>, transform_indices = @transform_14, window_bounds = array<i64: 1, 128>}, {pipeline_mode = #tpu.pipeline_mode<synchronous>, transform_indices = @transform_15, window_bounds = array<i64: 128, 512>}, {pipeline_mode = #tpu.pipeline_mode<synchronous>, transform_indices = @transform_16, window_bounds = array<i64: 1, 512>}, {pipeline_mode = #tpu.pipeline_mode<synchronous>, transform_indices = @transform_17, window_bounds = array<i64: 512, 128>}, {pipeline_mode = #tpu.pipeline_mode<synchronous>, transform_indices = @transform_18, window_bounds = array<i64: 1, 128>}, {transform_indices = @transform_19, window_bounds = array<i64: 1, 64, 128>}, {transform_indices = @transform_20, window_bounds = array<i64: 1, 8, 128>}]} {
    %c0 = arith.constant 0 : index
    %c0_0 = arith.constant 0 : index
    %c0_1 = arith.constant 0 : index
    %0 = vector.load %arg1[%c0, %c0_0, %c0_1] : memref<1x64x128xf32, #tpu.memory_space<vmem>>, vector<1x64x128xf32>
    %1 = vector.shape_cast %0 : vector<1x64x128xf32> to vector<64x128xf32>
    %c0_2 = arith.constant 0 : index
    %c0_3 = arith.constant 0 : index
    %c0_4 = arith.constant 0 : index
    %2 = vector.load %arg2[%c0_2, %c0_3, %c0_4] : memref<1x8x128xf32, #tpu.memory_space<vmem>>, vector<1x8x128xf32>
    %3 = vector.shape_cast %2 : vector<1x8x128xf32> to vector<8x128xf32>
    %c0_5 = arith.constant 0 : index
    %c0_6 = arith.constant 0 : index
    %c0_7 = arith.constant 0 : index
    %4 = vector.load %arg3[%c0_5, %c0_6, %c0_7] : memref<1x12x128xf32, #tpu.memory_space<vmem>>, vector<1x12x128xf32>
    %5 = vector.shape_cast %4 : vector<1x12x128xf32> to vector<12x128xf32>
    %6 = vector.extract_strided_slice %5 {offsets = [0, 0], sizes = [1, 128], strides = [1, 1]} : vector<12x128xf32> to vector<1x128xf32>
    %7 = vector.extract_strided_slice %5 {offsets = [1, 0], sizes = [1, 128], strides = [1, 1]} : vector<12x128xf32> to vector<1x128xf32>
    %8 = vector.extract_strided_slice %5 {offsets = [2, 0], sizes = [1, 128], strides = [1, 1]} : vector<12x128xf32> to vector<1x128xf32>
    %9 = vector.extract_strided_slice %5 {offsets = [3, 0], sizes = [1, 128], strides = [1, 1]} : vector<12x128xf32> to vector<1x128xf32>
    %10 = vector.extract_strided_slice %5 {offsets = [4, 0], sizes = [1, 128], strides = [1, 1]} : vector<12x128xf32> to vector<1x128xf32>
    %11 = vector.extract_strided_slice %5 {offsets = [5, 0], sizes = [1, 128], strides = [1, 1]} : vector<12x128xf32> to vector<1x128xf32>
    %12 = vector.extract_strided_slice %5 {offsets = [6, 0], sizes = [1, 128], strides = [1, 1]} : vector<12x128xf32> to vector<1x128xf32>
    %13 = vector.extract_strided_slice %5 {offsets = [7, 0], sizes = [1, 128], strides = [1, 1]} : vector<12x128xf32> to vector<1x128xf32>
    %14 = vector.extract_strided_slice %5 {offsets = [8, 0], sizes = [1, 128], strides = [1, 1]} : vector<12x128xf32> to vector<1x128xf32>
    %15 = vector.extract_strided_slice %5 {offsets = [9, 0], sizes = [1, 128], strides = [1, 1]} : vector<12x128xf32> to vector<1x128xf32>
    %16 = vector.extract_strided_slice %5 {offsets = [10, 0], sizes = [1, 128], strides = [1, 1]} : vector<12x128xf32> to vector<1x128xf32>
    %17 = vector.extract_strided_slice %5 {offsets = [11, 0], sizes = [1, 128], strides = [1, 1]} : vector<12x128xf32> to vector<1x128xf32>
    %cst = arith.constant dense<0.000000e+00> : vector<64xf32>
    %18 = vector.multi_reduction <add>, %1, %cst [1] : vector<64x128xf32> to vector<64xf32>
    %19 = vector.shape_cast %18 : vector<64xf32> to vector<64x1xf32>
    %cst_8 = arith.constant 1.280000e+02 : f32
    %20 = vector.broadcast %cst_8 : f32 to vector<64x1xf32>
    %21 = arith.divf %19, %20 : vector<64x1xf32>
    %22 = vector.broadcast %21 : vector<64x1xf32> to vector<64x128xf32>
    %23 = arith.subf %1, %22 : vector<64x128xf32>
    %24 = arith.mulf %23, %23 : vector<64x128xf32>
    %cst_9 = arith.constant dense<0.000000e+00> : vector<64xf32>
    %25 = vector.multi_reduction <add>, %24, %cst_9 [1] : vector<64x128xf32> to vector<64xf32>
    %26 = vector.shape_cast %25 : vector<64xf32> to vector<64x1xf32>
    %cst_10 = arith.constant 1.280000e+02 : f32
    %27 = vector.broadcast %cst_10 : f32 to vector<64x1xf32>
    %28 = arith.divf %26, %27 : vector<64x1xf32>
    %29 = vector.broadcast %21 : vector<64x1xf32> to vector<64x128xf32>
    %30 = arith.subf %1, %29 : vector<64x128xf32>
    %cst_11 = arith.constant 9.99999997E-7 : f32
    %31 = vector.broadcast %cst_11 : f32 to vector<64x1xf32>
    %32 = arith.addf %28, %31 : vector<64x1xf32>
    %33 = math.rsqrt %32 : vector<64x1xf32>
    %34 = vector.broadcast %33 : vector<64x1xf32> to vector<64x128xf32>
    %35 = arith.mulf %30, %34 : vector<64x128xf32>
    %cst_12 = arith.constant 1.000000e+00 : f32
    %36 = vector.broadcast %cst_12 : f32 to vector<1x128xf32>
    %37 = arith.addf %36, %7 : vector<1x128xf32>
    %38 = vector.broadcast %37 : vector<1x128xf32> to vector<64x128xf32>
    %39 = arith.mulf %35, %38 : vector<64x128xf32>
    %40 = vector.broadcast %6 : vector<1x128xf32> to vector<64x128xf32>
    %41 = arith.addf %39, %40 : vector<64x128xf32>
    %cst_13 = arith.constant dense<0.000000e+00> : vector<8xf32>
    %42 = vector.multi_reduction <add>, %3, %cst_13 [1] : vector<8x128xf32> to vector<8xf32>
    %43 = vector.shape_cast %42 : vector<8xf32> to vector<8x1xf32>
    %cst_14 = arith.constant 1.280000e+02 : f32
    %44 = vector.broadcast %cst_14 : f32 to vector<8x1xf32>
    %45 = arith.divf %43, %44 : vector<8x1xf32>
    %46 = vector.broadcast %45 : vector<8x1xf32> to vector<8x128xf32>
    %47 = arith.subf %3, %46 : vector<8x128xf32>
    %48 = arith.mulf %47, %47 : vector<8x128xf32>
    %cst_15 = arith.constant dense<0.000000e+00> : vector<8xf32>
    %49 = vector.multi_reduction <add>, %48, %cst_15 [1] : vector<8x128xf32> to vector<8xf32>
    %50 = vector.shape_cast %49 : vector<8xf32> to vector<8x1xf32>
    %cst_16 = arith.constant 1.280000e+02 : f32
    %51 = vector.broadcast %cst_16 : f32 to vector<8x1xf32>
    %52 = arith.divf %50, %51 : vector<8x1xf32>
    %53 = vector.broadcast %45 : vector<8x1xf32> to vector<8x128xf32>
    %54 = arith.subf %3, %53 : vector<8x128xf32>
    %cst_17 = arith.constant 9.99999997E-7 : f32
    %55 = vector.broadcast %cst_17 : f32 to vector<8x1xf32>
    %56 = arith.addf %52, %55 : vector<8x1xf32>
    %57 = math.rsqrt %56 : vector<8x1xf32>
    %58 = vector.broadcast %57 : vector<8x1xf32> to vector<8x128xf32>
    %59 = arith.mulf %54, %58 : vector<8x128xf32>
    %cst_18 = arith.constant 1.000000e+00 : f32
    %60 = vector.broadcast %cst_18 : f32 to vector<1x128xf32>
    %61 = arith.addf %60, %13 : vector<1x128xf32>
    %62 = vector.broadcast %61 : vector<1x128xf32> to vector<8x128xf32>
    %63 = arith.mulf %59, %62 : vector<8x128xf32>
    %64 = vector.broadcast %12 : vector<1x128xf32> to vector<8x128xf32>
    %65 = arith.addf %63, %64 : vector<8x128xf32>
    %66 = arith.truncf %41 : vector<64x128xf32> to vector<64x128xbf16>
    %c0_19 = arith.constant 0 : index
    %c0_20 = arith.constant 0 : index
    %67 = vector.load %arg4[%c0_19, %c0_20] : memref<128x384xbf16, #tpu.memory_space<vmem>>, vector<128x384xbf16>
    %cst_21 = arith.constant dense<0.000000e+00> : vector<64x384xf32>
    %68 = tpu.matmul %66, %67, %cst_21 {dimension_numbers = #tpu.dot_dimension_numbers<[1], [0], [0], [1], [0, 0, 1, 1], [], []>} : vector<64x128xbf16>, vector<128x384xbf16>, vector<64x384xf32> -> vector<64x384xf32>
    %c0_22 = arith.constant 0 : index
    %c0_23 = arith.constant 0 : index
    %69 = vector.load %arg5[%c0_22, %c0_23] : memref<1x384xf32, #tpu.memory_space<vmem>>, vector<1x384xf32>
    %70 = vector.broadcast %69 : vector<1x384xf32> to vector<64x384xf32>
    %71 = arith.addf %68, %70 : vector<64x384xf32>
    %72 = arith.truncf %65 : vector<8x128xf32> to vector<8x128xbf16>
    %c0_24 = arith.constant 0 : index
    %c0_25 = arith.constant 0 : index
    %73 = vector.load %arg6[%c0_24, %c0_25] : memref<128x384xbf16, #tpu.memory_space<vmem>>, vector<128x384xbf16>
    %cst_26 = arith.constant dense<0.000000e+00> : vector<8x384xf32>
    %74 = tpu.matmul %72, %73, %cst_26 {dimension_numbers = #tpu.dot_dimension_numbers<[1], [0], [0], [1], [0, 0, 1, 1], [], []>} : vector<8x128xbf16>, vector<128x384xbf16>, vector<8x384xf32> -> vector<8x384xf32>
    %c0_27 = arith.constant 0 : index
    %c0_28 = arith.constant 0 : index
    %75 = vector.load %arg7[%c0_27, %c0_28] : memref<1x384xf32, #tpu.memory_space<vmem>>, vector<1x384xf32>
    %76 = vector.broadcast %75 : vector<1x384xf32> to vector<8x384xf32>
    %77 = arith.addf %74, %76 : vector<8x384xf32>
    %78 = vector.extract_strided_slice %71 {offsets = [0, 0], sizes = [64, 128], strides = [1, 1]} : vector<64x384xf32> to vector<64x128xf32>
    %79 = vector.extract_strided_slice %77 {offsets = [0, 0], sizes = [8, 128], strides = [1, 1]} : vector<8x384xf32> to vector<8x128xf32>
    %80 = tpu.concatenate %78, %79 in 0 : vector<64x128xf32>, vector<8x128xf32> -> vector<72x128xf32>
    %81 = vector.extract_strided_slice %71 {offsets = [0, 128], sizes = [64, 128], strides = [1, 1]} : vector<64x384xf32> to vector<64x128xf32>
    %82 = vector.extract_strided_slice %77 {offsets = [0, 128], sizes = [8, 128], strides = [1, 1]} : vector<8x384xf32> to vector<8x128xf32>
    %83 = tpu.concatenate %81, %82 in 0 : vector<64x128xf32>, vector<8x128xf32> -> vector<72x128xf32>
    %84 = vector.extract_strided_slice %71 {offsets = [0, 256], sizes = [64, 128], strides = [1, 1]} : vector<64x384xf32> to vector<64x128xf32>
    %85 = vector.extract_strided_slice %77 {offsets = [0, 256], sizes = [8, 128], strides = [1, 1]} : vector<8x384xf32> to vector<8x128xf32>
    %86 = tpu.concatenate %84, %85 in 0 : vector<64x128xf32>, vector<8x128xf32> -> vector<72x128xf32>
    %87 = vector.extract_strided_slice %80 {offsets = [0, 0], sizes = [72, 32], strides = [1, 1]} : vector<72x128xf32> to vector<72x32xf32>
    %88 = arith.truncf %87 : vector<72x32xf32> to vector<72x32xbf16>
    %89 = vector.extract_strided_slice %83 {offsets = [0, 0], sizes = [72, 32], strides = [1, 1]} : vector<72x128xf32> to vector<72x32xf32>
    %90 = arith.truncf %89 : vector<72x32xf32> to vector<72x32xbf16>
    %91 = vector.extract_strided_slice %86 {offsets = [0, 0], sizes = [72, 32], strides = [1, 1]} : vector<72x128xf32> to vector<72x32xf32>
    %92 = arith.truncf %91 : vector<72x32xf32> to vector<72x32xbf16>
    %cst_29 = arith.constant dense<0.000000e+00> : vector<72x72xf32>
    %93 = tpu.matmul %88, %90, %cst_29 {dimension_numbers = #tpu.dot_dimension_numbers<[1], [1], [0], [0], [0, 0, 1, 0], [], []>} : vector<72x32xbf16>, vector<72x32xbf16>, vector<72x72xf32> -> vector<72x72xf32>
    %cst_30 = arith.constant 0.176776692 : f32
    %94 = vector.broadcast %cst_30 : f32 to vector<72x72xf32>
    %95 = arith.mulf %93, %94 : vector<72x72xf32>
    %cst_31 = arith.constant dense<0xFF800000> : vector<72xf32>
    %96 = vector.multi_reduction <maximumf>, %95, %cst_31 [1] : vector<72x72xf32> to vector<72xf32>
    %97 = vector.shape_cast %96 : vector<72xf32> to vector<72x1xf32>
    %98 = vector.broadcast %97 : vector<72x1xf32> to vector<72x72xf32>
    %99 = arith.subf %95, %98 : vector<72x72xf32>
    %100 = math.exp %99 : vector<72x72xf32>
    %cst_32 = arith.constant dense<0.000000e+00> : vector<72xf32>
    %101 = vector.multi_reduction <add>, %100, %cst_32 [1] : vector<72x72xf32> to vector<72xf32>
    %102 = vector.shape_cast %101 : vector<72xf32> to vector<72x1xf32>
    %103 = tpu.reciprocal %102 {approx = true} : vector<72x1xf32> -> vector<72x1xf32>
    %104 = vector.broadcast %103 : vector<72x1xf32> to vector<72x72xf32>
    %105 = arith.mulf %100, %104 : vector<72x72xf32>
    %106 = arith.truncf %105 : vector<72x72xf32> to vector<72x72xbf16>
    %cst_33 = arith.constant dense<0.000000e+00> : vector<72x32xf32>
    %107 = tpu.matmul %106, %92, %cst_33 {dimension_numbers = #tpu.dot_dimension_numbers<[1], [0], [0], [1], [0, 0, 1, 1], [], []>} : vector<72x72xbf16>, vector<72x32xbf16>, vector<72x32xf32> -> vector<72x32xf32>
    %108 = vector.extract_strided_slice %80 {offsets = [0, 32], sizes = [72, 32], strides = [1, 1]} : vector<72x128xf32> to vector<72x32xf32>
    %109 = arith.truncf %108 : vector<72x32xf32> to vector<72x32xbf16>
    %110 = vector.extract_strided_slice %83 {offsets = [0, 32], sizes = [72, 32], strides = [1, 1]} : vector<72x128xf32> to vector<72x32xf32>
    %111 = arith.truncf %110 : vector<72x32xf32> to vector<72x32xbf16>
    %112 = vector.extract_strided_slice %86 {offsets = [0, 32], sizes = [72, 32], strides = [1, 1]} : vector<72x128xf32> to vector<72x32xf32>
    %113 = arith.truncf %112 : vector<72x32xf32> to vector<72x32xbf16>
    %cst_34 = arith.constant dense<0.000000e+00> : vector<72x72xf32>
    %114 = tpu.matmul %109, %111, %cst_34 {dimension_numbers = #tpu.dot_dimension_numbers<[1], [1], [0], [0], [0, 0, 1, 0], [], []>} : vector<72x32xbf16>, vector<72x32xbf16>, vector<72x72xf32> -> vector<72x72xf32>
    %cst_35 = arith.constant 0.176776692 : f32
    %115 = vector.broadcast %cst_35 : f32 to vector<72x72xf32>
    %116 = arith.mulf %114, %115 : vector<72x72xf32>
    %cst_36 = arith.constant dense<0xFF800000> : vector<72xf32>
    %117 = vector.multi_reduction <maximumf>, %116, %cst_36 [1] : vector<72x72xf32> to vector<72xf32>
    %118 = vector.shape_cast %117 : vector<72xf32> to vector<72x1xf32>
    %119 = vector.broadcast %118 : vector<72x1xf32> to vector<72x72xf32>
    %120 = arith.subf %116, %119 : vector<72x72xf32>
    %121 = math.exp %120 : vector<72x72xf32>
    %cst_37 = arith.constant dense<0.000000e+00> : vector<72xf32>
    %122 = vector.multi_reduction <add>, %121, %cst_37 [1] : vector<72x72xf32> to vector<72xf32>
    %123 = vector.shape_cast %122 : vector<72xf32> to vector<72x1xf32>
    %124 = tpu.reciprocal %123 {approx = true} : vector<72x1xf32> -> vector<72x1xf32>
    %125 = vector.broadcast %124 : vector<72x1xf32> to vector<72x72xf32>
    %126 = arith.mulf %121, %125 : vector<72x72xf32>
    %127 = arith.truncf %126 : vector<72x72xf32> to vector<72x72xbf16>
    %cst_38 = arith.constant dense<0.000000e+00> : vector<72x32xf32>
    %128 = tpu.matmul %127, %113, %cst_38 {dimension_numbers = #tpu.dot_dimension_numbers<[1], [0], [0], [1], [0, 0, 1, 1], [], []>} : vector<72x72xbf16>, vector<72x32xbf16>, vector<72x32xf32> -> vector<72x32xf32>
    %129 = vector.extract_strided_slice %80 {offsets = [0, 64], sizes = [72, 32], strides = [1, 1]} : vector<72x128xf32> to vector<72x32xf32>
    %130 = arith.truncf %129 : vector<72x32xf32> to vector<72x32xbf16>
    %131 = vector.extract_strided_slice %83 {offsets = [0, 64], sizes = [72, 32], strides = [1, 1]} : vector<72x128xf32> to vector<72x32xf32>
    %132 = arith.truncf %131 : vector<72x32xf32> to vector<72x32xbf16>
    %133 = vector.extract_strided_slice %86 {offsets = [0, 64], sizes = [72, 32], strides = [1, 1]} : vector<72x128xf32> to vector<72x32xf32>
    %134 = arith.truncf %133 : vector<72x32xf32> to vector<72x32xbf16>
    %cst_39 = arith.constant dense<0.000000e+00> : vector<72x72xf32>
    %135 = tpu.matmul %130, %132, %cst_39 {dimension_numbers = #tpu.dot_dimension_numbers<[1], [1], [0], [0], [0, 0, 1, 0], [], []>} : vector<72x32xbf16>, vector<72x32xbf16>, vector<72x72xf32> -> vector<72x72xf32>
    %cst_40 = arith.constant 0.176776692 : f32
    %136 = vector.broadcast %cst_40 : f32 to vector<72x72xf32>
    %137 = arith.mulf %135, %136 : vector<72x72xf32>
    %cst_41 = arith.constant dense<0xFF800000> : vector<72xf32>
    %138 = vector.multi_reduction <maximumf>, %137, %cst_41 [1] : vector<72x72xf32> to vector<72xf32>
    %139 = vector.shape_cast %138 : vector<72xf32> to vector<72x1xf32>
    %140 = vector.broadcast %139 : vector<72x1xf32> to vector<72x72xf32>
    %141 = arith.subf %137, %140 : vector<72x72xf32>
    %142 = math.exp %141 : vector<72x72xf32>
    %cst_42 = arith.constant dense<0.000000e+00> : vector<72xf32>
    %143 = vector.multi_reduction <add>, %142, %cst_42 [1] : vector<72x72xf32> to vector<72xf32>
    %144 = vector.shape_cast %143 : vector<72xf32> to vector<72x1xf32>
    %145 = tpu.reciprocal %144 {approx = true} : vector<72x1xf32> -> vector<72x1xf32>
    %146 = vector.broadcast %145 : vector<72x1xf32> to vector<72x72xf32>
    %147 = arith.mulf %142, %146 : vector<72x72xf32>
    %148 = arith.truncf %147 : vector<72x72xf32> to vector<72x72xbf16>
    %cst_43 = arith.constant dense<0.000000e+00> : vector<72x32xf32>
    %149 = tpu.matmul %148, %134, %cst_43 {dimension_numbers = #tpu.dot_dimension_numbers<[1], [0], [0], [1], [0, 0, 1, 1], [], []>} : vector<72x72xbf16>, vector<72x32xbf16>, vector<72x32xf32> -> vector<72x32xf32>
    %150 = vector.extract_strided_slice %80 {offsets = [0, 96], sizes = [72, 32], strides = [1, 1]} : vector<72x128xf32> to vector<72x32xf32>
    %151 = arith.truncf %150 : vector<72x32xf32> to vector<72x32xbf16>
    %152 = vector.extract_strided_slice %83 {offsets = [0, 96], sizes = [72, 32], strides = [1, 1]} : vector<72x128xf32> to vector<72x32xf32>
    %153 = arith.truncf %152 : vector<72x32xf32> to vector<72x32xbf16>
    %154 = vector.extract_strided_slice %86 {offsets = [0, 96], sizes = [72, 32], strides = [1, 1]} : vector<72x128xf32> to vector<72x32xf32>
    %155 = arith.truncf %154 : vector<72x32xf32> to vector<72x32xbf16>
    %cst_44 = arith.constant dense<0.000000e+00> : vector<72x72xf32>
    %156 = tpu.matmul %151, %153, %cst_44 {dimension_numbers = #tpu.dot_dimension_numbers<[1], [1], [0], [0], [0, 0, 1, 0], [], []>} : vector<72x32xbf16>, vector<72x32xbf16>, vector<72x72xf32> -> vector<72x72xf32>
    %cst_45 = arith.constant 0.176776692 : f32
    %157 = vector.broadcast %cst_45 : f32 to vector<72x72xf32>
    %158 = arith.mulf %156, %157 : vector<72x72xf32>
    %cst_46 = arith.constant dense<0xFF800000> : vector<72xf32>
    %159 = vector.multi_reduction <maximumf>, %158, %cst_46 [1] : vector<72x72xf32> to vector<72xf32>
    %160 = vector.shape_cast %159 : vector<72xf32> to vector<72x1xf32>
    %161 = vector.broadcast %160 : vector<72x1xf32> to vector<72x72xf32>
    %162 = arith.subf %158, %161 : vector<72x72xf32>
    %163 = math.exp %162 : vector<72x72xf32>
    %cst_47 = arith.constant dense<0.000000e+00> : vector<72xf32>
    %164 = vector.multi_reduction <add>, %163, %cst_47 [1] : vector<72x72xf32> to vector<72xf32>
    %165 = vector.shape_cast %164 : vector<72xf32> to vector<72x1xf32>
    %166 = tpu.reciprocal %165 {approx = true} : vector<72x1xf32> -> vector<72x1xf32>
    %167 = vector.broadcast %166 : vector<72x1xf32> to vector<72x72xf32>
    %168 = arith.mulf %163, %167 : vector<72x72xf32>
    %169 = arith.truncf %168 : vector<72x72xf32> to vector<72x72xbf16>
    %cst_48 = arith.constant dense<0.000000e+00> : vector<72x32xf32>
    %170 = tpu.matmul %169, %155, %cst_48 {dimension_numbers = #tpu.dot_dimension_numbers<[1], [0], [0], [1], [0, 0, 1, 1], [], []>} : vector<72x72xbf16>, vector<72x32xbf16>, vector<72x32xf32> -> vector<72x32xf32>
    %171 = tpu.concatenate %107, %128, %149, %170 in 1 : vector<72x32xf32>, vector<72x32xf32>, vector<72x32xf32>, vector<72x32xf32> -> vector<72x128xf32>
    %172 = vector.extract_strided_slice %171 {offsets = [0, 0], sizes = [64, 128], strides = [1, 1]} : vector<72x128xf32> to vector<64x128xf32>
    %173 = vector.extract_strided_slice %171 {offsets = [64, 0], sizes = [8, 128], strides = [1, 1]} : vector<72x128xf32> to vector<8x128xf32>
    %174 = arith.truncf %172 : vector<64x128xf32> to vector<64x128xbf16>
    %c0_49 = arith.constant 0 : index
    %c0_50 = arith.constant 0 : index
    %175 = vector.load %arg8[%c0_49, %c0_50] : memref<128x128xbf16, #tpu.memory_space<vmem>>, vector<128x128xbf16>
    %cst_51 = arith.constant dense<0.000000e+00> : vector<64x128xf32>
    %176 = tpu.matmul %174, %175, %cst_51 {dimension_numbers = #tpu.dot_dimension_numbers<[1], [0], [0], [1], [0, 0, 1, 1], [], []>} : vector<64x128xbf16>, vector<128x128xbf16>, vector<64x128xf32> -> vector<64x128xf32>
    %c0_52 = arith.constant 0 : index
    %c0_53 = arith.constant 0 : index
    %177 = vector.load %arg9[%c0_52, %c0_53] : memref<1x128xf32, #tpu.memory_space<vmem>>, vector<1x128xf32>
    %178 = vector.broadcast %177 : vector<1x128xf32> to vector<64x128xf32>
    %179 = arith.addf %176, %178 : vector<64x128xf32>
    %180 = vector.broadcast %8 : vector<1x128xf32> to vector<64x128xf32>
    %181 = arith.mulf %180, %179 : vector<64x128xf32>
    %182 = arith.addf %1, %181 : vector<64x128xf32>
    %183 = arith.truncf %173 : vector<8x128xf32> to vector<8x128xbf16>
    %c0_54 = arith.constant 0 : index
    %c0_55 = arith.constant 0 : index
    %184 = vector.load %arg10[%c0_54, %c0_55] : memref<128x128xbf16, #tpu.memory_space<vmem>>, vector<128x128xbf16>
    %cst_56 = arith.constant dense<0.000000e+00> : vector<8x128xf32>
    %185 = tpu.matmul %183, %184, %cst_56 {dimension_numbers = #tpu.dot_dimension_numbers<[1], [0], [0], [1], [0, 0, 1, 1], [], []>} : vector<8x128xbf16>, vector<128x128xbf16>, vector<8x128xf32> -> vector<8x128xf32>
    %c0_57 = arith.constant 0 : index
    %c0_58 = arith.constant 0 : index
    %186 = vector.load %arg11[%c0_57, %c0_58] : memref<1x128xf32, #tpu.memory_space<vmem>>, vector<1x128xf32>
    %187 = vector.broadcast %186 : vector<1x128xf32> to vector<8x128xf32>
    %188 = arith.addf %185, %187 : vector<8x128xf32>
    %189 = vector.broadcast %14 : vector<1x128xf32> to vector<8x128xf32>
    %190 = arith.mulf %189, %188 : vector<8x128xf32>
    %191 = arith.addf %3, %190 : vector<8x128xf32>
    %cst_59 = arith.constant dense<0.000000e+00> : vector<64xf32>
    %192 = vector.multi_reduction <add>, %182, %cst_59 [1] : vector<64x128xf32> to vector<64xf32>
    %193 = vector.shape_cast %192 : vector<64xf32> to vector<64x1xf32>
    %cst_60 = arith.constant 1.280000e+02 : f32
    %194 = vector.broadcast %cst_60 : f32 to vector<64x1xf32>
    %195 = arith.divf %193, %194 : vector<64x1xf32>
    %196 = vector.broadcast %195 : vector<64x1xf32> to vector<64x128xf32>
    %197 = arith.subf %182, %196 : vector<64x128xf32>
    %198 = arith.mulf %197, %197 : vector<64x128xf32>
    %cst_61 = arith.constant dense<0.000000e+00> : vector<64xf32>
    %199 = vector.multi_reduction <add>, %198, %cst_61 [1] : vector<64x128xf32> to vector<64xf32>
    %200 = vector.shape_cast %199 : vector<64xf32> to vector<64x1xf32>
    %cst_62 = arith.constant 1.280000e+02 : f32
    %201 = vector.broadcast %cst_62 : f32 to vector<64x1xf32>
    %202 = arith.divf %200, %201 : vector<64x1xf32>
    %203 = vector.broadcast %195 : vector<64x1xf32> to vector<64x128xf32>
    %204 = arith.subf %182, %203 : vector<64x128xf32>
    %cst_63 = arith.constant 9.99999997E-7 : f32
    %205 = vector.broadcast %cst_63 : f32 to vector<64x1xf32>
    %206 = arith.addf %202, %205 : vector<64x1xf32>
    %207 = math.rsqrt %206 : vector<64x1xf32>
    %208 = vector.broadcast %207 : vector<64x1xf32> to vector<64x128xf32>
    %209 = arith.mulf %204, %208 : vector<64x128xf32>
    %cst_64 = arith.constant 1.000000e+00 : f32
    %210 = vector.broadcast %cst_64 : f32 to vector<1x128xf32>
    %211 = arith.addf %210, %10 : vector<1x128xf32>
    %212 = vector.broadcast %211 : vector<1x128xf32> to vector<64x128xf32>
    %213 = arith.mulf %209, %212 : vector<64x128xf32>
    %214 = vector.broadcast %9 : vector<1x128xf32> to vector<64x128xf32>
    %215 = arith.addf %213, %214 : vector<64x128xf32>
    %216 = arith.truncf %215 : vector<64x128xf32> to vector<64x128xbf16>
    %c0_65 = arith.constant 0 : index
    %c0_66 = arith.constant 0 : index
    %217 = vector.load %arg12[%c0_65, %c0_66] : memref<128x512xbf16, #tpu.memory_space<vmem>>, vector<128x512xbf16>
    %cst_67 = arith.constant dense<0.000000e+00> : vector<64x512xf32>
    %218 = tpu.matmul %216, %217, %cst_67 {dimension_numbers = #tpu.dot_dimension_numbers<[1], [0], [0], [1], [0, 0, 1, 1], [], []>} : vector<64x128xbf16>, vector<128x512xbf16>, vector<64x512xf32> -> vector<64x512xf32>
    %c0_68 = arith.constant 0 : index
    %c0_69 = arith.constant 0 : index
    %219 = vector.load %arg13[%c0_68, %c0_69] : memref<1x512xf32, #tpu.memory_space<vmem>>, vector<1x512xf32>
    %220 = vector.broadcast %219 : vector<1x512xf32> to vector<64x512xf32>
    %221 = arith.addf %218, %220 : vector<64x512xf32>
    %222 = arith.mulf %221, %221 : vector<64x512xf32>
    %223 = arith.mulf %221, %222 : vector<64x512xf32>
    %cst_70 = arith.constant 4.471500e-02 : f32
    %224 = vector.broadcast %cst_70 : f32 to vector<64x512xf32>
    %225 = arith.mulf %224, %223 : vector<64x512xf32>
    %226 = arith.addf %221, %225 : vector<64x512xf32>
    %cst_71 = arith.constant 0.797884583 : f32
    %227 = vector.broadcast %cst_71 : f32 to vector<64x512xf32>
    %228 = arith.mulf %227, %226 : vector<64x512xf32>
    %229 = math.tanh %228 : vector<64x512xf32>
    %cst_72 = arith.constant 1.000000e+00 : f32
    %230 = vector.broadcast %cst_72 : f32 to vector<64x512xf32>
    %231 = arith.addf %230, %229 : vector<64x512xf32>
    %cst_73 = arith.constant 5.000000e-01 : f32
    %232 = vector.broadcast %cst_73 : f32 to vector<64x512xf32>
    %233 = arith.mulf %232, %231 : vector<64x512xf32>
    %234 = arith.mulf %221, %233 : vector<64x512xf32>
    %235 = arith.truncf %234 : vector<64x512xf32> to vector<64x512xbf16>
    %c0_74 = arith.constant 0 : index
    %c0_75 = arith.constant 0 : index
    %236 = vector.load %arg14[%c0_74, %c0_75] : memref<512x128xbf16, #tpu.memory_space<vmem>>, vector<512x128xbf16>
    %cst_76 = arith.constant dense<0.000000e+00> : vector<64x128xf32>
    %237 = tpu.matmul %235, %236, %cst_76 {dimension_numbers = #tpu.dot_dimension_numbers<[1], [0], [0], [1], [0, 0, 1, 1], [], []>} : vector<64x512xbf16>, vector<512x128xbf16>, vector<64x128xf32> -> vector<64x128xf32>
    %c0_77 = arith.constant 0 : index
    %c0_78 = arith.constant 0 : index
    %238 = vector.load %arg15[%c0_77, %c0_78] : memref<1x128xf32, #tpu.memory_space<vmem>>, vector<1x128xf32>
    %239 = vector.broadcast %238 : vector<1x128xf32> to vector<64x128xf32>
    %240 = arith.addf %237, %239 : vector<64x128xf32>
    %241 = vector.broadcast %11 : vector<1x128xf32> to vector<64x128xf32>
    %242 = arith.mulf %241, %240 : vector<64x128xf32>
    %243 = arith.addf %182, %242 : vector<64x128xf32>
    %c0_79 = arith.constant 0 : index
    %c0_80 = arith.constant 0 : index
    %c0_81 = arith.constant 0 : index
    %244 = vector.load %arg20[%c0_79, %c0_80, %c0_81] : memref<1x64x128xf32, #tpu.memory_space<vmem>>, vector<1x64x128xf32>
    %245 = vector.shape_cast %244 : vector<1x64x128xf32> to vector<64x128xf32>
    %246 = vector.shape_cast %243 : vector<64x128xf32> to vector<1x64x128xf32>
    tpu.vector_store %arg20[%c0_79, %c0_80, %c0_81], %246 {strides = array<i32>} : memref<1x64x128xf32, #tpu.memory_space<vmem>>, vector<1x64x128xf32>,
    %cst_82 = arith.constant dense<0.000000e+00> : vector<8xf32>
    %247 = vector.multi_reduction <add>, %191, %cst_82 [1] : vector<8x128xf32> to vector<8xf32>
    %248 = vector.shape_cast %247 : vector<8xf32> to vector<8x1xf32>
    %cst_83 = arith.constant 1.280000e+02 : f32
    %249 = vector.broadcast %cst_83 : f32 to vector<8x1xf32>
    %250 = arith.divf %248, %249 : vector<8x1xf32>
    %251 = vector.broadcast %250 : vector<8x1xf32> to vector<8x128xf32>
    %252 = arith.subf %191, %251 : vector<8x128xf32>
    %253 = arith.mulf %252, %252 : vector<8x128xf32>
    %cst_84 = arith.constant dense<0.000000e+00> : vector<8xf32>
    %254 = vector.multi_reduction <add>, %253, %cst_84 [1] : vector<8x128xf32> to vector<8xf32>
    %255 = vector.shape_cast %254 : vector<8xf32> to vector<8x1xf32>
    %cst_85 = arith.constant 1.280000e+02 : f32
    %256 = vector.broadcast %cst_85 : f32 to vector<8x1xf32>
    %257 = arith.divf %255, %256 : vector<8x1xf32>
    %258 = vector.broadcast %250 : vector<8x1xf32> to vector<8x128xf32>
    %259 = arith.subf %191, %258 : vector<8x128xf32>
    %cst_86 = arith.constant 9.99999997E-7 : f32
    %260 = vector.broadcast %cst_86 : f32 to vector<8x1xf32>
    %261 = arith.addf %257, %260 : vector<8x1xf32>
    %262 = math.rsqrt %261 : vector<8x1xf32>
    %263 = vector.broadcast %262 : vector<8x1xf32> to vector<8x128xf32>
    %264 = arith.mulf %259, %263 : vector<8x128xf32>
    %cst_87 = arith.constant 1.000000e+00 : f32
    %265 = vector.broadcast %cst_87 : f32 to vector<1x128xf32>
    %266 = arith.addf %265, %16 : vector<1x128xf32>
    %267 = vector.broadcast %266 : vector<1x128xf32> to vector<8x128xf32>
    %268 = arith.mulf %264, %267 : vector<8x128xf32>
    %269 = vector.broadcast %15 : vector<1x128xf32> to vector<8x128xf32>
    %270 = arith.addf %268, %269 : vector<8x128xf32>
    %271 = arith.truncf %270 : vector<8x128xf32> to vector<8x128xbf16>
    %c0_88 = arith.constant 0 : index
    %c0_89 = arith.constant 0 : index
    %272 = vector.load %arg16[%c0_88, %c0_89] : memref<128x512xbf16, #tpu.memory_space<vmem>>, vector<128x512xbf16>
    %cst_90 = arith.constant dense<0.000000e+00> : vector<8x512xf32>
    %273 = tpu.matmul %271, %272, %cst_90 {dimension_numbers = #tpu.dot_dimension_numbers<[1], [0], [0], [1], [0, 0, 1, 1], [], []>} : vector<8x128xbf16>, vector<128x512xbf16>, vector<8x512xf32> -> vector<8x512xf32>
    %c0_91 = arith.constant 0 : index
    %c0_92 = arith.constant 0 : index
    %274 = vector.load %arg17[%c0_91, %c0_92] : memref<1x512xf32, #tpu.memory_space<vmem>>, vector<1x512xf32>
    %275 = vector.broadcast %274 : vector<1x512xf32> to vector<8x512xf32>
    %276 = arith.addf %273, %275 : vector<8x512xf32>
    %277 = arith.mulf %276, %276 : vector<8x512xf32>
    %278 = arith.mulf %276, %277 : vector<8x512xf32>
    %cst_93 = arith.constant 4.471500e-02 : f32
    %279 = vector.broadcast %cst_93 : f32 to vector<8x512xf32>
    %280 = arith.mulf %279, %278 : vector<8x512xf32>
    %281 = arith.addf %276, %280 : vector<8x512xf32>
    %cst_94 = arith.constant 0.797884583 : f32
    %282 = vector.broadcast %cst_94 : f32 to vector<8x512xf32>
    %283 = arith.mulf %282, %281 : vector<8x512xf32>
    %284 = math.tanh %283 : vector<8x512xf32>
    %cst_95 = arith.constant 1.000000e+00 : f32
    %285 = vector.broadcast %cst_95 : f32 to vector<8x512xf32>
    %286 = arith.addf %285, %284 : vector<8x512xf32>
    %cst_96 = arith.constant 5.000000e-01 : f32
    %287 = vector.broadcast %cst_96 : f32 to vector<8x512xf32>
    %288 = arith.mulf %287, %286 : vector<8x512xf32>
    %289 = arith.mulf %276, %288 : vector<8x512xf32>
    %290 = arith.truncf %289 : vector<8x512xf32> to vector<8x512xbf16>
    %c0_97 = arith.constant 0 : index
    %c0_98 = arith.constant 0 : index
    %291 = vector.load %arg18[%c0_97, %c0_98] : memref<512x128xbf16, #tpu.memory_space<vmem>>, vector<512x128xbf16>
    %cst_99 = arith.constant dense<0.000000e+00> : vector<8x128xf32>
    %292 = tpu.matmul %290, %291, %cst_99 {dimension_numbers = #tpu.dot_dimension_numbers<[1], [0], [0], [1], [0, 0, 1, 1], [], []>} : vector<8x512xbf16>, vector<512x128xbf16>, vector<8x128xf32> -> vector<8x128xf32>
    %c0_100 = arith.constant 0 : index
    %c0_101 = arith.constant 0 : index
    %293 = vector.load %arg19[%c0_100, %c0_101] : memref<1x128xf32, #tpu.memory_space<vmem>>, vector<1x128xf32>
    %294 = vector.broadcast %293 : vector<1x128xf32> to vector<8x128xf32>
    %295 = arith.addf %292, %294 : vector<8x128xf32>
    %296 = vector.broadcast %17 : vector<1x128xf32> to vector<8x128xf32>
    %297 = arith.mulf %296, %295 : vector<8x128xf32>
    %298 = arith.addf %191, %297 : vector<8x128xf32>
    %c0_102 = arith.constant 0 : index
    %c0_103 = arith.constant 0 : index
    %c0_104 = arith.constant 0 : index
    %299 = vector.load %arg21[%c0_102, %c0_103, %c0_104] : memref<1x8x128xf32, #tpu.memory_space<vmem>>, vector<1x8x128xf32>
    %300 = vector.shape_cast %299 : vector<1x8x128xf32> to vector<8x128xf32>
    %301 = vector.shape_cast %298 : vector<8x128xf32> to vector<1x8x128xf32>
    tpu.vector_store %arg21[%c0_102, %c0_103, %c0_104], %301 {strides = array<i32>} : memref<1x8x128xf32, #tpu.memory_space<vmem>>, vector<1x8x128xf32>,
    return
  }
  func.func @transform_0(%arg0: i32) -> (i32, i32, i32) {
    %c0_i32 = arith.constant 0 : i32
    %c0_i32_0 = arith.constant 0 : i32
    %c0_i32_1 = arith.constant 0 : i32
    return %arg0, %c0_i32, %c0_i32_0 : i32, i32, i32
  }
  func.func @transform_1(%arg0: i32) -> (i32, i32, i32) {
    %c0_i32 = arith.constant 0 : i32
    %c0_i32_0 = arith.constant 0 : i32
    %c0_i32_1 = arith.constant 0 : i32
    return %arg0, %c0_i32, %c0_i32_0 : i32, i32, i32
  }
  func.func @transform_2(%arg0: i32) -> (i32, i32, i32) {
    %c0_i32 = arith.constant 0 : i32
    %c0_i32_0 = arith.constant 0 : i32
    %c0_i32_1 = arith.constant 0 : i32
    return %arg0, %c0_i32, %c0_i32_0 : i32, i32, i32
  }
  func.func @transform_3(%arg0: i32) -> (i32, i32) {
    %c0_i32 = arith.constant 0 : i32
    %c0_i32_0 = arith.constant 0 : i32
    %c0_i32_1 = arith.constant 0 : i32
    return %c0_i32, %c0_i32_0 : i32, i32
  }
  func.func @transform_4(%arg0: i32) -> (i32, i32) {
    %c0_i32 = arith.constant 0 : i32
    %c0_i32_0 = arith.constant 0 : i32
    %c0_i32_1 = arith.constant 0 : i32
    return %c0_i32, %c0_i32_0 : i32, i32
  }
  func.func @transform_5(%arg0: i32) -> (i32, i32) {
    %c0_i32 = arith.constant 0 : i32
    %c0_i32_0 = arith.constant 0 : i32
    %c0_i32_1 = arith.constant 0 : i32
    return %c0_i32, %c0_i32_0 : i32, i32
  }
  func.func @transform_6(%arg0: i32) -> (i32, i32) {
    %c0_i32 = arith.constant 0 : i32
    %c0_i32_0 = arith.constant 0 : i32
    %c0_i32_1 = arith.constant 0 : i32
    return %c0_i32, %c0_i32_0 : i32, i32
  }
  func.func @transform_7(%arg0: i32) -> (i32, i32) {
    %c0_i32 = arith.constant 0 : i32
    %c0_i32_0 = arith.constant 0 : i32
    %c0_i32_1 = arith.constant 0 : i32
    return %c0_i32, %c0_i32_0 : i32, i32
  }
  func.func @transform_8(%arg0: i32) -> (i32, i32) {
    %c0_i32 = arith.constant 0 : i32
    %c0_i32_0 = arith.constant 0 : i32
    %c0_i32_1 = arith.constant 0 : i32
    return %c0_i32, %c0_i32_0 : i32, i32
  }
  func.func @transform_9(%arg0: i32) -> (i32, i32) {
    %c0_i32 = arith.constant 0 : i32
    %c0_i32_0 = arith.constant 0 : i32
    %c0_i32_1 = arith.constant 0 : i32
    return %c0_i32, %c0_i32_0 : i32, i32
  }
  func.func @transform_10(%arg0: i32) -> (i32, i32) {
    %c0_i32 = arith.constant 0 : i32
    %c0_i32_0 = arith.constant 0 : i32
    %c0_i32_1 = arith.constant 0 : i32
    return %c0_i32, %c0_i32_0 : i32, i32
  }
  func.func @transform_11(%arg0: i32) -> (i32, i32) {
    %c0_i32 = arith.constant 0 : i32
    %c0_i32_0 = arith.constant 0 : i32
    %c0_i32_1 = arith.constant 0 : i32
    return %c0_i32, %c0_i32_0 : i32, i32
  }
  func.func @transform_12(%arg0: i32) -> (i32, i32) {
    %c0_i32 = arith.constant 0 : i32
    %c0_i32_0 = arith.constant 0 : i32
    %c0_i32_1 = arith.constant 0 : i32
    return %c0_i32, %c0_i32_0 : i32, i32
  }
  func.func @transform_13(%arg0: i32) -> (i32, i32) {
    %c0_i32 = arith.constant 0 : i32
    %c0_i32_0 = arith.constant 0 : i32
    %c0_i32_1 = arith.constant 0 : i32
    return %c0_i32, %c0_i32_0 : i32, i32
  }
  func.func @transform_14(%arg0: i32) -> (i32, i32) {
    %c0_i32 = arith.constant 0 : i32
    %c0_i32_0 = arith.constant 0 : i32
    %c0_i32_1 = arith.constant 0 : i32
    return %c0_i32, %c0_i32_0 : i32, i32
  }
  func.func @transform_15(%arg0: i32) -> (i32, i32) {
    %c0_i32 = arith.constant 0 : i32
    %c0_i32_0 = arith.constant 0 : i32
    %c0_i32_1 = arith.constant 0 : i32
    return %c0_i32, %c0_i32_0 : i32, i32
  }
  func.func @transform_16(%arg0: i32) -> (i32, i32) {
    %c0_i32 = arith.constant 0 : i32
    %c0_i32_0 = arith.constant 0 : i32
    %c0_i32_1 = arith.constant 0 : i32
    return %c0_i32, %c0_i32_0 : i32, i32
  }
  func.func @transform_17(%arg0: i32) -> (i32, i32) {
    %c0_i32 = arith.constant 0 : i32
    %c0_i32_0 = arith.constant 0 : i32
    %c0_i32_1 = arith.constant 0 : i32
    return %c0_i32, %c0_i32_0 : i32, i32
  }
  func.func @transform_18(%arg0: i32) -> (i32, i32) {
    %c0_i32 = arith.constant 0 : i32
    %c0_i32_0 = arith.constant 0 : i32
    %c0_i32_1 = arith.constant 0 : i32
    return %c0_i32, %c0_i32_0 : i32, i32
  }
  func.func @transform_19(%arg0: i32) -> (i32, i32, i32) {
    %c0_i32 = arith.constant 0 : i32
    %c0_i32_0 = arith.constant 0 : i32
    %c0_i32_1 = arith.constant 0 : i32
    return %arg0, %c0_i32, %c0_i32_0 : i32, i32, i32
  }
  func.func @transform_20(%arg0: i32) -> (i32, i32, i32) {
    %c0_i32 = arith.constant 0 : i32
    %c0_i32_0 = arith.constant 0 : i32
    %c0_i32_1 = arith.constant 0 : i32
    return %arg0, %c0_i32, %c0_i32_0 : i32, i32, i32
  }
}

module attributes {stable_mosaic.version = 11 : i64} {
  func.func @_ln_mod_matmul_kernel(%arg0: i32, %arg1: memref<1x64x128xf32, #tpu.memory_space<vmem>>, %arg2: memref<1x1x128xf32, #tpu.memory_space<vmem>>, %arg3: memref<1x1x128xf32, #tpu.memory_space<vmem>>, %arg4: memref<128x16xbf16, #tpu.memory_space<vmem>>, %arg5: memref<1x16xf32, #tpu.memory_space<vmem>>, %arg6: memref<1x64x16xf32, #tpu.memory_space<vmem>>) attributes {dimension_semantics = [#tpu.dimension_semantics<parallel>], iteration_bounds = array<i64: 2>, scalar_prefetch = 0 : i64, scratch_operands = 0 : i64, tpu.core_type = #tpu.core_type<tc>, window_params = [{transform_indices = @transform_0, window_bounds = array<i64: 1, 64, 128>}, {transform_indices = @transform_1, window_bounds = array<i64: 1, 1, 128>}, {transform_indices = @transform_2, window_bounds = array<i64: 1, 1, 128>}, {pipeline_mode = #tpu.pipeline_mode<synchronous>, transform_indices = @transform_3, window_bounds = array<i64: 128, 16>}, {pipeline_mode = #tpu.pipeline_mode<synchronous>, transform_indices = @transform_4, window_bounds = array<i64: 1, 16>}, {transform_indices = @transform_5, window_bounds = array<i64: 1, 64, 16>}]} {
    %c0 = arith.constant 0 : index
    %c0_0 = arith.constant 0 : index
    %c0_1 = arith.constant 0 : index
    %0 = vector.load %arg1[%c0, %c0_0, %c0_1] : memref<1x64x128xf32, #tpu.memory_space<vmem>>, vector<1x64x128xf32>
    %1 = vector.shape_cast %0 : vector<1x64x128xf32> to vector<64x128xf32>
    %c0_2 = arith.constant 0 : index
    %c0_3 = arith.constant 0 : index
    %c0_4 = arith.constant 0 : index
    %2 = vector.load %arg2[%c0_2, %c0_3, %c0_4] : memref<1x1x128xf32, #tpu.memory_space<vmem>>, vector<1x1x128xf32>
    %3 = vector.shape_cast %2 : vector<1x1x128xf32> to vector<1x128xf32>
    %c0_5 = arith.constant 0 : index
    %c0_6 = arith.constant 0 : index
    %c0_7 = arith.constant 0 : index
    %4 = vector.load %arg3[%c0_5, %c0_6, %c0_7] : memref<1x1x128xf32, #tpu.memory_space<vmem>>, vector<1x1x128xf32>
    %5 = vector.shape_cast %4 : vector<1x1x128xf32> to vector<1x128xf32>
    %cst = arith.constant dense<0.000000e+00> : vector<64xf32>
    %6 = vector.multi_reduction <add>, %1, %cst [1] : vector<64x128xf32> to vector<64xf32>
    %7 = vector.shape_cast %6 : vector<64xf32> to vector<64x1xf32>
    %cst_8 = arith.constant 1.280000e+02 : f32
    %8 = vector.broadcast %cst_8 : f32 to vector<64x1xf32>
    %9 = arith.divf %7, %8 : vector<64x1xf32>
    %10 = vector.broadcast %9 : vector<64x1xf32> to vector<64x128xf32>
    %11 = arith.subf %1, %10 : vector<64x128xf32>
    %12 = arith.mulf %11, %11 : vector<64x128xf32>
    %cst_9 = arith.constant dense<0.000000e+00> : vector<64xf32>
    %13 = vector.multi_reduction <add>, %12, %cst_9 [1] : vector<64x128xf32> to vector<64xf32>
    %14 = vector.shape_cast %13 : vector<64xf32> to vector<64x1xf32>
    %cst_10 = arith.constant 1.280000e+02 : f32
    %15 = vector.broadcast %cst_10 : f32 to vector<64x1xf32>
    %16 = arith.divf %14, %15 : vector<64x1xf32>
    %17 = vector.broadcast %9 : vector<64x1xf32> to vector<64x128xf32>
    %18 = arith.subf %1, %17 : vector<64x128xf32>
    %cst_11 = arith.constant 9.99999997E-7 : f32
    %19 = vector.broadcast %cst_11 : f32 to vector<64x1xf32>
    %20 = arith.addf %16, %19 : vector<64x1xf32>
    %21 = math.rsqrt %20 : vector<64x1xf32>
    %22 = vector.broadcast %21 : vector<64x1xf32> to vector<64x128xf32>
    %23 = arith.mulf %18, %22 : vector<64x128xf32>
    %cst_12 = arith.constant 1.000000e+00 : f32
    %24 = vector.broadcast %cst_12 : f32 to vector<1x128xf32>
    %25 = arith.addf %24, %3 : vector<1x128xf32>
    %26 = vector.broadcast %25 : vector<1x128xf32> to vector<64x128xf32>
    %27 = arith.mulf %23, %26 : vector<64x128xf32>
    %28 = vector.broadcast %5 : vector<1x128xf32> to vector<64x128xf32>
    %29 = arith.addf %27, %28 : vector<64x128xf32>
    %30 = arith.truncf %29 : vector<64x128xf32> to vector<64x128xbf16>
    %c0_13 = arith.constant 0 : index
    %c0_14 = arith.constant 0 : index
    %31 = vector.load %arg4[%c0_13, %c0_14] : memref<128x16xbf16, #tpu.memory_space<vmem>>, vector<128x16xbf16>
    %cst_15 = arith.constant dense<0.000000e+00> : vector<64x16xf32>
    %32 = tpu.matmul %30, %31, %cst_15 {dimension_numbers = #tpu.dot_dimension_numbers<[1], [0], [0], [1], [0, 0, 1, 1], [], []>} : vector<64x128xbf16>, vector<128x16xbf16>, vector<64x16xf32> -> vector<64x16xf32>
    %c0_16 = arith.constant 0 : index
    %c0_17 = arith.constant 0 : index
    %33 = vector.load %arg5[%c0_16, %c0_17] : memref<1x16xf32, #tpu.memory_space<vmem>>, vector<1x16xf32>
    %34 = vector.broadcast %33 : vector<1x16xf32> to vector<64x16xf32>
    %35 = arith.addf %32, %34 : vector<64x16xf32>
    %c0_18 = arith.constant 0 : index
    %c0_19 = arith.constant 0 : index
    %c0_20 = arith.constant 0 : index
    %36 = vector.load %arg6[%c0_18, %c0_19, %c0_20] : memref<1x64x16xf32, #tpu.memory_space<vmem>>, vector<1x64x16xf32>
    %37 = vector.shape_cast %36 : vector<1x64x16xf32> to vector<64x16xf32>
    %38 = vector.shape_cast %35 : vector<64x16xf32> to vector<1x64x16xf32>
    tpu.vector_store %arg6[%c0_18, %c0_19, %c0_20], %38 {strides = array<i32>} : memref<1x64x16xf32, #tpu.memory_space<vmem>>, vector<1x64x16xf32>,
    return
  }
  func.func @transform_0(%arg0: i32) -> (i32, i32, i32) {
    %c0_i32 = arith.constant 0 : i32
    %c0_i32_0 = arith.constant 0 : i32
    %c0_i32_1 = arith.constant 0 : i32
    return %arg0, %c0_i32, %c0_i32_0 : i32, i32, i32
  }
  func.func @transform_1(%arg0: i32) -> (i32, i32, i32) {
    %c0_i32 = arith.constant 0 : i32
    %c0_i32_0 = arith.constant 0 : i32
    %c0_i32_1 = arith.constant 0 : i32
    return %arg0, %c0_i32, %c0_i32_0 : i32, i32, i32
  }
  func.func @transform_2(%arg0: i32) -> (i32, i32, i32) {
    %c0_i32 = arith.constant 0 : i32
    %c0_i32_0 = arith.constant 0 : i32
    %c0_i32_1 = arith.constant 0 : i32
    return %arg0, %c0_i32, %c0_i32_0 : i32, i32, i32
  }
  func.func @transform_3(%arg0: i32) -> (i32, i32) {
    %c0_i32 = arith.constant 0 : i32
    %c0_i32_0 = arith.constant 0 : i32
    %c0_i32_1 = arith.constant 0 : i32
    return %c0_i32, %c0_i32_0 : i32, i32
  }
  func.func @transform_4(%arg0: i32) -> (i32, i32) {
    %c0_i32 = arith.constant 0 : i32
    %c0_i32_0 = arith.constant 0 : i32
    %c0_i32_1 = arith.constant 0 : i32
    return %c0_i32, %c0_i32_0 : i32, i32
  }
  func.func @transform_5(%arg0: i32) -> (i32, i32, i32) {
    %c0_i32 = arith.constant 0 : i32
    %c0_i32_0 = arith.constant 0 : i32
    %c0_i32_1 = arith.constant 0 : i32
    return %arg0, %c0_i32, %c0_i32_0 : i32, i32, i32
  }
}

</mosaic_0001>

<llo_original>
// kernel: sd3_forward.6
$region0: #{sd3_forward.6}
  #allocation0 [shape = 'u32[]', space=smem, size = 0x4, offset = 0x4, fixed_abs, tag = 'smem constant byte address 0x4 - core index']
  #allocation1 [shape = 'u32[144,128]{1,0:T(1,128)}', space=vmem, size = 0x12000, scoped, tag = 'internal scratch']
  #allocation2 [shape = 'f32[16,128]{1,0:T(8,128)}', space=vmem, size = 0x2000, scoped, tag = 'scratch operand']
  %s0 = inlined_call_operand.vmem [shape: bf16[16,48], index: 0, kind: input, shape index: {}]
  %s1 = inlined_call_operand.vmem [shape: bf16[48,128], index: 1, kind: input, shape index: {}]
  %s2 = inlined_call_operand.vmem [shape: f32[1,128], index: 2, kind: input, shape index: {}]
  %s3 = inlined_call_operand.vmem [shape: f32[16,128], index: 3, kind: output, shape index: {}]
  %s4 = sld [smem:[#allocation0]]
  $region30: #{sd3_forward.6} parent=0
    _
  %s6 = ssub.s32 1, %s4
  %s7 = scalar_select 0, %s6, %s4
  // Predicated region
  $region2: #{sd3_forward.6} parent=0 // pred_check
    _
  $region3: #{sd3_forward.6} parent=0 // pred_check_branch
    %9 = sbr.rel (0) target = $region5
  $region4: #{sd3_forward.6} parent=0 // pred_region
    _
  $region5: #{sd3_forward.6} parent=0 // pred_fallthru
    _
  // Predicated region
  $region6: #{sd3_forward.6} parent=0 // pred_check
    _
  $region7: #{sd3_forward.6} parent=0 // pred_check_branch
    %11 = sbr.rel (0) target = $region9
  $region8: #{sd3_forward.6} parent=0 // pred_region
    _
  $region9: #{sd3_forward.6} parent=0 // pred_fallthru
    _
  // Predicated region
  $region10: #{sd3_forward.6} parent=0 // pred_check
    _
  $region11: #{sd3_forward.6} parent=0 // pred_check_branch
    %13 = sbr.rel (0) target = $region13
  $region12: #{sd3_forward.6} parent=0 // pred_region
    _
  $region13: #{sd3_forward.6} parent=0 // pred_fallthru
    _
  %p15 = scmp.eq.s32.totalorder 0, 0
  // Predicated region
  $region14: #{sd3_forward.6} parent=0 // pred_check
    %p16 = pneg %p15
  $region15: #{sd3_forward.6} parent=0 // pred_check_branch
    %18 = sbr.rel (%p16) target = $region17
  $region16: #{sd3_forward.6} parent=0 // pred_region
    %19 = vst [vmem:[#allocation2] sm:$0xff] 0.0
    %20 = vst [vmem:[#allocation2 + $0x8] sm:$0xff] 0.0
  $region17: #{sd3_forward.6} parent=0 // pred_fallthru
    _
  %v21 = vld [vmem:[#allocation2] sm:$0xff]
  %v22 = vld [vmem:[#allocation2 + $0x8] sm:$0xff]
  %v23 = vld [vmem:[%s0] sm:$0xf]
  %v24 = vld [vmem:[%s0 + $0x4] sm:$0xf]
  %v25 = vld [vmem:[%s1] sm:$0xf]
  %v26 = vld [vmem:[%s1 + $0x4] sm:$0xf]
  %v27 = vld [vmem:[%s1 + $0x8] sm:$0xf]
  %v28 = vld [vmem:[%s1 + $0xc] sm:$0xf]
  %v29 = vld [vmem:[%s1 + $0x10] sm:$0xf]
  %v30 = vld [vmem:[%s1 + $0x14] sm:$0xf]
  %v33 = vunpack.c.l.b16 %v23
  %v34 = vunpack.c.l.b16 %v24
  %v35 = vpack.c.b16 %v34, %v33
  %v42 = vunpack.c.l.b16 %v25
  %v43 = vunpack.c.l.b16 %v26
  %v44 = vunpack.c.l.b16 %v27
  %v45 = vunpack.c.l.b16 %v28
  %v46 = vunpack.c.l.b16 %v29
  %v47 = vunpack.c.l.b16 %v30
  %v48 = vpack.c.b16 %v43, %v42
  %v49 = vpack.c.b16 %v45, %v44
  %v50 = vpack.c.b16 %v47, %v46
  %vm54 = vcmask 392192
  %v56 = vsel %vm54, %v35, 0
  %58 = vmatprep.subr.bf16.mxu0 0
  %59 = vmatpush1.bf16.msra.mxu0 %v48
  %60 = vmatprep.subr.bf16.mxu0 0
  %61 = vmatpush1.bf16.msra.mxu0 %v49
  %62 = vmatprep.subr.bf16.mxu0 0
  %63 = vmatpush1.bf16.msra.mxu0 %v50
  %64 = vmatprep.subr.bf16.mxu0 0
  %65 = vmatpush1.bf16.msra.mxu0 0
  %66 = vmatprep.subr.bf16.mxu0 0
  %67 = vmatpush1.bf16.msra.mxu0 0
  %68 = vmatprep.subr.bf16.mxu0 0
  %69 = vmatpush1.bf16.msra.mxu0 0
  %70 = vmatprep.subr.bf16.mxu0 0
  %71 = vmatpush1.bf16.msra.mxu0 0
  %72 = vmatprep.subr.bf16.mxu0 0
  %73 = vmatpush1.bf16.msra.mxu0 0
  %74 = vmatprep.subr.bf16.mxu0 0
  %75 = vmatpush1.bf16.msra.mxu0 0
  %76 = vmatprep.subr.bf16.mxu0 0
  %77 = vmatpush1.bf16.msra.mxu0 0
  %78 = vmatprep.subr.bf16.mxu0 0
  %79 = vmatpush1.bf16.msra.mxu0 0
  %80 = vmatprep.subr.bf16.mxu0 0
  %81 = vmatpush1.bf16.msra.mxu0 0
  %82 = vmatprep.subr.bf16.mxu0 0
  %83 = vmatpush1.bf16.msra.mxu0 0
  %84 = vmatprep.subr.bf16.mxu0 0
  %85 = vmatpush1.bf16.msra.mxu0 0
  %86 = vmatprep.subr.bf16.mxu0 0
  %87 = vmatpush1.bf16.msra.mxu0 0
  %88 = vmatprep.subr.bf16.mxu0 0
  %89 = vmatpush1.bf16.msra.mxu0 0
  %90 = vmatprep.mubr.bf16.mxu0 0
  %91 = vmatmul.mubr.bf16.gmra.mrb[0].mxu0 %v56
  %v92 = vpop.f32.mrb[0].mxu0
  %v93 = vadd.f32 0.0, %v92
  %v94 = vpop.f32.mrb[0].mxu0
  %v95 = vpop.f32.mrb[0].mxu0
  %v96 = vadd.f32 0.0, %v95
  %v97 = vpop.f32.mrb[0].mxu0
  %98 = vdwg.mxu0
  %v99 = vadd.f32 %v21, %v93
  %v100 = vadd.f32 %v22, %v96
  %101 = vst [vmem:[#allocation2] sm:$0xff] %v99
  %102 = vst [vmem:[#allocation2 + $0x8] sm:$0xff] %v100
  // Predicated region
  $region18: #{sd3_forward.6} parent=0 // pred_check
    %p103 = pneg %p15
  $region19: #{sd3_forward.6} parent=0 // pred_check_branch
    %105 = sbr.rel (%p103) target = $region21
  $region20: #{sd3_forward.6} parent=0 // pred_region
    %v106 = vld [vmem:[#allocation2] sm:$0xff]
    %v107 = vld [vmem:[#allocation2 + $0x8] sm:$0xff]
    %v108 = vld [vmem:[%s2] sm:$0x1]
    %v110 = vlaneseq
    %v111 = vshrl.u32 %v110, 7
    %v112 = vsub.s32 0, %v111
    %v113 = vrot.slane %v108, %v112
    %v115 = vadd.f32 %v106, %v113
    %v116 = vadd.f32 %v107, %v113
    %117 = vst [vmem:[%s3] sm:$0xff] %v115
    %118 = vst [vmem:[%s3 + $0x8] sm:$0xff] %v116
  $region21: #{sd3_forward.6} parent=0 // pred_fallthru
    _
  // Predicated region
  $region22: #{sd3_forward.6} parent=0 // pred_check
    _
  $region23: #{sd3_forward.6} parent=0 // pred_check_branch
    %120 = sbr.rel (0) target = $region25
  $region24: #{sd3_forward.6} parent=0 // pred_region
    _
  $region25: #{sd3_forward.6} parent=0 // pred_fallthru
    _
  // Predicated region
  $region26: #{sd3_forward.6} parent=0 // pred_check
    _
  $region27: #{sd3_forward.6} parent=0 // pred_check_branch
    %122 = sbr.rel (0) target = $region29
  $region28: #{sd3_forward.6} parent=0 // pred_region
    _
  $region29: #{sd3_forward.6} parent=0 // pred_fallthru
    _

// kernel: sd3_forward.5
$region0: #{sd3_forward.5}
  #allocation0 [shape = 'u32[]', space=smem, size = 0x4, offset = 0x4, fixed_abs, tag = 'smem constant byte address 0x4 - core index']
  #allocation1 [shape = 'u32[144,128]{1,0:T(1,128)}', space=vmem, size = 0x12000, scoped, tag = 'internal scratch']
  %s0 = inlined_call_operand.vmem [shape: f32[2,64,16], index: 0, kind: input, shape index: {}]
  %s1 = inlined_call_operand.vmem [shape: bf16[16,128], index: 1, kind: input, shape index: {}]
  %s2 = inlined_call_operand.vmem [shape: f32[1,128], index: 2, kind: input, shape index: {}]
  %s3 = inlined_call_operand.vmem [shape: f32[1,64,128], index: 3, kind: input, shape index: {}]
  %s4 = inlined_call_operand.vmem [shape: f32[2,64,128], index: 4, kind: output, shape index: {}]
  %s5 = sld [smem:[#allocation0]]
  $region49: #{sd3_forward.5} parent=0
    _
  %s7 = ssub.s32 1, %s5
  %s8 = scalar_select 0, %s7, %s5
  loop: start=0, step=1, limit=4
  $region2: #{sd3_forward.5} parent=0 // loop_pre_header
    _
  $region3: #{sd3_forward.5} parent=0 // loop_header
    %s10 = sphi 0, %s14
    %p11 = scmp.ge.s32.totalorder %s10, 4
    %s20 = sphi 0, %s22
    %s23 = sphi 0, %s20
    %s24 = sphi 0, %s23
    %s40 = sphi 0, %s24
    %s44 = sphi 0, %s44
    %s46 = sphi 0, %s44
    %s47 = sphi 0, %s46
    %s61 = sphi 0, %s47
    %s65 = sphi 0, %s65
    %s67 = sphi 0, %s65
    %s68 = sphi 0, %s67
    %s82 = sphi 0, %s68
    %s86 = sphi 0, %s86
    %s88 = sphi 0, %s86
    %s89 = sphi 0, %s88
    %s103 = sphi 0, %s89
    %s109 = sphi 0, %s111
    %s112 = sphi 0, %s109
    %s113 = sphi 0, %s112
    %s129 = sphi 0, %s113
  $region4: #{sd3_forward.5} parent=0 // loop_header_branch
    %13 = sbr.rel (%p11) target = $region8
  $region5: #{sd3_forward.5} parent=0 // loop_body
    %s15 = ssub.s32 %s10, 1
    %s16 = ssub.s32 %s10, 2
    %s17 = sadd.s32 %s10, 1
    %s18 = ssub.s32 %s10, %s17
    %p19 = scmp.eq.s32.totalorder %s18, 0
    %s21 = sadd.s32 %s20, 1
    %s22 = scalar_select %p19, %s20, %s21
    %p25 = pneg %p19
    %p26 = scmp.eq.s32.totalorder %s10, 1
    %p27 = por %p25, %p26
    %p28 = scmp.ne.s32.totalorder %s20, %s23
    %p29 = scmp.eq.s32.totalorder %s10, 0
    %p30 = por %p28, %p29
    %p31 = scmp.ne.s32.totalorder %s20, %s23
    %p32 = scmp.eq.s32.totalorder %s15, 1
    %p33 = por %p31, %p32
    %p34 = scmp.ne.s32.totalorder %s23, %s24
    %p35 = scmp.eq.s32.totalorder %s15, 0
    %p36 = por %p34, %p35
    %p37 = scmp.ne.s32.totalorder %s23, %s24
    %p38 = scmp.eq.s32.totalorder %s16, 1
    %p39 = por %p37, %p38
    %p41 = scmp.ne.s32.totalorder %s24, %s40
    %p42 = scmp.eq.s32.totalorder %s16, 0
    %p43 = por %p41, %p42
    %s45 = sadd.s32 %s44, 1
    %p48 = scmp.eq.s32.totalorder %s10, 1
    %p49 = scmp.ne.s32.totalorder %s44, %s46
    %p50 = scmp.eq.s32.totalorder %s10, 0
    %p51 = por %p49, %p50
    %p52 = scmp.ne.s32.totalorder %s44, %s46
    %p53 = scmp.eq.s32.totalorder %s15, 1
    %p54 = por %p52, %p53
    %p55 = scmp.ne.s32.totalorder %s46, %s47
    %p56 = scmp.eq.s32.totalorder %s15, 0
    %p57 = por %p55, %p56
    %p58 = scmp.ne.s32.totalorder %s46, %s47
    %p59 = scmp.eq.s32.totalorder %s16, 1
    %p60 = por %p58, %p59
    %p62 = scmp.ne.s32.totalorder %s47, %s61
    %p63 = scmp.eq.s32.totalorder %s16, 0
    %p64 = por %p62, %p63
    %s66 = sadd.s32 %s65, 1
    %p69 = scmp.eq.s32.totalorder %s10, 1
    %p70 = scmp.ne.s32.totalorder %s65, %s67
    %p71 = scmp.eq.s32.totalorder %s10, 0
    %p72 = por %p70, %p71
    %p73 = scmp.ne.s32.totalorder %s65, %s67
    %p74 = scmp.eq.s32.totalorder %s15, 1
    %p75 = por %p73, %p74
    %p76 = scmp.ne.s32.totalorder %s67, %s68
    %p77 = scmp.eq.s32.totalorder %s15, 0
    %p78 = por %p76, %p77
    %p79 = scmp.ne.s32.totalorder %s67, %s68
    %p80 = scmp.eq.s32.totalorder %s16, 1
    %p81 = por %p79, %p80
    %p83 = scmp.ne.s32.totalorder %s68, %s82
    %p84 = scmp.eq.s32.totalorder %s16, 0
    %p85 = por %p83, %p84
    %s87 = sadd.s32 %s86, 1
    %p90 = scmp.eq.s32.totalorder %s10, 1
    %p91 = scmp.ne.s32.totalorder %s86, %s88
    %p92 = scmp.eq.s32.totalorder %s10, 0
    %p93 = por %p91, %p92
    %p94 = scmp.ne.s32.totalorder %s86, %s88
    %p95 = scmp.eq.s32.totalorder %s15, 1
    %p96 = por %p94, %p95
    %p97 = scmp.ne.s32.totalorder %s88, %s89
    %p98 = scmp.eq.s32.totalorder %s15, 0
    %p99 = por %p97, %p98
    %p100 = scmp.ne.s32.totalorder %s88, %s89
    %p101 = scmp.eq.s32.totalorder %s16, 1
    %p102 = por %p100, %p101
    %p104 = scmp.ne.s32.totalorder %s89, %s103
    %p105 = scmp.eq.s32.totalorder %s16, 0
    %p106 = por %p104, %p105
    %s107 = ssub.s32 %s10, %s17
    %p108 = scmp.eq.s32.totalorder %s107, 0
    %s110 = sadd.s32 %s109, 1
    %s111 = scalar_select %p108, %s109, %s110
    %p114 = pneg %p108
    %p115 = scmp.eq.s32.totalorder %s10, 1
    %p116 = por %p114, %p115
    %p117 = scmp.ne.s32.totalorder %s109, %s112
    %p118 = scmp.eq.s32.totalorder %s10, 0
    %p119 = por %p117, %p118
    %p120 = scmp.ne.s32.totalorder %s109, %s112
    %p121 = scmp.eq.s32.totalorder %s15, 1
    %p122 = por %p120, %p121
    %p123 = scmp.ne.s32.totalorder %s112, %s113
    %p124 = scmp.eq.s32.totalorder %s15, 0
    %p125 = por %p123, %p124
    %p126 = scmp.ne.s32.totalorder %s112, %s113
    %p127 = scmp.eq.s32.totalorder %s16, 1
    %p128 = por %p126, %p127
    %p130 = scmp.ne.s32.totalorder %s113, %s129
    %p131 = scmp.eq.s32.totalorder %s16, 0
    %p132 = por %p130, %p131
    %p133 = scmp.le.s32.totalorder 1, %s10
    %p134 = scmp.lt.s32.totalorder %s10, 3
    %p135 = pnand %p133, %p134
    %p136 = pneg %p135
    // Predicated region
    $region9: #{sd3_forward.5} parent=5 // pred_check
      _
    $region10: #{sd3_forward.5} parent=5 // pred_check_branch
      %138 = sbr.rel (%p135) target = $region12
    $region11: #{sd3_forward.5} parent=5 // pred_region
      %s139 = ssub.s32 %s10, 1
      // Predicated region
      $region13: #{sd3_forward.5} parent=11 // pred_check
        %p140 = pneg %p57
      $region14: #{sd3_forward.5} parent=11 // pred_check_branch
        %142 = sbr.rel (%p140) target = $region16
      $region15: #{sd3_forward.5} parent=11 // pred_region
        _
      $region16: #{sd3_forward.5} parent=11 // pred_fallthru
        _
      // Predicated region
      $region17: #{sd3_forward.5} parent=11 // pred_check
        %p143 = pneg %p78
      $region18: #{sd3_forward.5} parent=11 // pred_check_branch
        %145 = sbr.rel (%p143) target = $region20
      $region19: #{sd3_forward.5} parent=11 // pred_region
        _
      $region20: #{sd3_forward.5} parent=11 // pred_fallthru
        _
      // Predicated region
      $region21: #{sd3_forward.5} parent=11 // pred_check
        %p146 = pneg %p99
      $region22: #{sd3_forward.5} parent=11 // pred_check_branch
        %148 = sbr.rel (%p146) target = $region24
      $region23: #{sd3_forward.5} parent=11 // pred_region
        _
      $region24: #{sd3_forward.5} parent=11 // pred_fallthru
        _
    $region12: #{sd3_forward.5} parent=5 // pred_fallthru
      _
    %p149 = scmp.lt.s32.totalorder %s10, 2
    // Predicated region
    $region25: #{sd3_forward.5} parent=5 // pred_check
      %p150 = pneg %p149
    $region26: #{sd3_forward.5} parent=5 // pred_check_branch
      %152 = sbr.rel (%p150) target = $region28
    $region27: #{sd3_forward.5} parent=5 // pred_region
      // Predicated region
      $region29: #{sd3_forward.5} parent=27 // pred_check
        %p153 = pneg %p30
      $region30: #{sd3_forward.5} parent=27 // pred_check_branch
        %155 = sbr.rel (%p153) target = $region32
      $region31: #{sd3_forward.5} parent=27 // pred_region
        %p156 = scmp.lt.s32.totalorder %s10, 1
        %s157 = scalar_select %p156, %s10, 1
        %s158 = smul.addr %s157, 8
        %s159 = smul.addr %s158, 8
        %s160 = scalar_lea.vmem %s0, %s159
      $region32: #{sd3_forward.5} parent=27 // pred_fallthru
        _
    $region28: #{sd3_forward.5} parent=5 // pred_fallthru
      _
    %p161 = scmp.le.s32.totalorder 1, %s10
    %p162 = scmp.lt.s32.totalorder %s10, 3
    %p163 = pnand %p161, %p162
    %p164 = pneg %p163
    // Predicated region
    $region33: #{sd3_forward.5} parent=5 // pred_check
      _
    $region34: #{sd3_forward.5} parent=5 // pred_check_branch
      %166 = sbr.rel (%p163) target = $region36
    $region35: #{sd3_forward.5} parent=5 // pred_region
      %s167 = ssub.s32 %s10, 1
      %p168 = scmp.lt.s32.totalorder %s15, 1
      %s169 = scalar_select %p168, %s15, 1
      %s170 = smul.addr %s169, 8
      %s171 = smul.addr %s170, 8
      %s172 = scalar_lea.vmem %s0, %s171
      %p173 = pneg %p36
      %p174 = pneg %p33
      %p175 = pneg %p57
      %p176 = pneg %p54
      %p177 = pneg %p78
      %p178 = pneg %p75
      %p179 = pneg %p99
      %p180 = pneg %p96
      %p181 = pneg %p125
      %p182 = pneg %p122
      %p183 = scmp.lt.s32.totalorder %s15, 1
      %s184 = scalar_select %p183, %s15, 1
      %s185 = smul.addr %s184, 8
      %s186 = smul.addr %s185, 8
      %s187 = scalar_lea.vmem %s4, %s186
      %p188 = scmp.lt.s32.totalorder %s15, 1
      %s189 = scalar_select %p188, %s15, 1
      %s190 = smul.addr %s189, 8
      %s191 = smul.addr %s190, 8
      %s192 = scalar_lea.vmem %s0, %s191
      %p193 = scmp.lt.s32.totalorder %s15, 1
      %s194 = scalar_select %p193, %s15, 1
      %s195 = smul.addr %s194, 8
      %s196 = smul.addr %s195, 8
      %s197 = scalar_lea.vmem %s4, %s196
      %v199 = vld [vmem:[%s192] sm:$0xff]
      %v200 = vld [vmem:[%s192 + $0x8] sm:$0xff]
      %v201 = vld [vmem:[%s192 + $0x10] sm:$0xff]
      %v202 = vld [vmem:[%s192 + $0x18] sm:$0xff]
      %v203 = vld [vmem:[%s192 + $0x20] sm:$0xff]
      %v204 = vld [vmem:[%s192 + $0x28] sm:$0xff]
      %v205 = vld [vmem:[%s192 + $0x30] sm:$0xff]
      %v206 = vld [vmem:[%s192 + $0x38] sm:$0xff]
      %v207 = vpack.c.bf16 %v200, %v199
      %v208 = vpack.c.bf16 %v202, %v201
      %v209 = vpack.c.bf16 %v204, %v203
      %v210 = vpack.c.bf16 %v206, %v205
      %v211 = vld [vmem:[%s1] sm:$0xf]
      %v212 = vld [vmem:[%s1 + $0x4] sm:$0xf]
      %v213 = vld [vmem:[%s2] sm:$0x1]
      %v215 = vlaneseq
      %v216 = vshrl.u32 %v215, 7
      %v217 = vsub.s32 0, %v216
      %v218 = vrot.slane %v213, %v217
      %v222 = vunpack.c.l.b16 %v211
      %v223 = vunpack.c.l.b16 %v212
      %v224 = vpack.c.b16 %v223, %v222
      %vm226 = vcmask 130048
      %v228 = vsel %vm226, %v207, 0
      %v231 = vsel %vm226, %v208, 0
      %v234 = vsel %vm226, %v209, 0
      %v237 = vsel %vm226, %v210, 0
      %239 = vmatprep.subr.bf16.mxu0 0
      %240 = vmatpush1.bf16.msra.mxu0 %v224
      %241 = vmatprep.subr.bf16.mxu0 0
      %242 = vmatpush1.bf16.msra.mxu0 0
      %243 = vmatprep.subr.bf16.mxu0 0
      %244 = vmatpush1.bf16.msra.mxu0 0
      %245 = vmatprep.subr.bf16.mxu0 0
      %246 = vmatpush1.bf16.msra.mxu0 0
      %247 = vmatprep.subr.bf16.mxu0 0
      %248 = vmatpush1.bf16.msra.mxu0 0
      %249 = vmatprep.subr.bf16.mxu0 0
      %250 = vmatpush1.bf16.msra.mxu0 0
      %251 = vmatprep.subr.bf16.mxu0 0
      %252 = vmatpush1.bf16.msra.mxu0 0
      %253 = vmatprep.subr.bf16.mxu0 0
      %254 = vmatpush1.bf16.msra.mxu0 0
      %255 = vmatprep.subr.bf16.mxu0 0
      %256 = vmatpush1.bf16.msra.mxu0 0
      %257 = vmatprep.subr.bf16.mxu0 0
      %258 = vmatpush1.bf16.msra.mxu0 0
      %259 = vmatprep.subr.bf16.mxu0 0
      %260 = vmatpush1.bf16.msra.mxu0 0
      %261 = vmatprep.subr.bf16.mxu0 0
      %262 = vmatpush1.bf16.msra.mxu0 0
      %263 = vmatprep.subr.bf16.mxu0 0
      %264 = vmatpush1.bf16.msra.mxu0 0
      %265 = vmatprep.subr.bf16.mxu0 0
      %266 = vmatpush1.bf16.msra.mxu0 0
      %267 = vmatprep.subr.bf16.mxu0 0
      %268 = vmatpush1.bf16.msra.mxu0 0
      %269 = vmatprep.subr.bf16.mxu0 0
      %270 = vmatpush1.bf16.msra.mxu0 0
      %271 = vmatprep.mubr.bf16.mxu0 0
      %272 = vmatmul.mubr.bf16.gmra.mrb[0].mxu0 %v228
      %v273 = vpop.f32.mrb[0].mxu0
      %v274 = vadd.f32 %v218, %v273
      %v275 = vpop.f32.mrb[0].mxu0
      %v276 = vpop.f32.mrb[0].mxu0
      %v277 = vadd.f32 %v218, %v276
      %v278 = vpop.f32.mrb[0].mxu0
      %279 = vmatprep.mubr.bf16.mxu0 0
      %280 = vmatmul.mubr.bf16.gmra.mrb[0].mxu0 %v231
      %v281 = vpop.f32.mrb[0].mxu0
      %v282 = vadd.f32 %v218, %v281
      %v283 = vpop.f32.mrb[0].mxu0
      %v284 = vpop.f32.mrb[0].mxu0
      %v285 = vadd.f32 %v218, %v284
      %v286 = vpop.f32.mrb[0].mxu0
      %287 = vmatprep.mubr.bf16.mxu0 0
      %288 = vmatmul.mubr.bf16.gmra.mrb[0].mxu0 %v234
      %v289 = vpop.f32.mrb[0].mxu0
      %v290 = vadd.f32 %v218, %v289
      %v291 = vpop.f32.mrb[0].mxu0
      %v292 = vpop.f32.mrb[0].mxu0
      %v293 = vadd.f32 %v218, %v292
      %v294 = vpop.f32.mrb[0].mxu0
      %295 = vmatprep.mubr.bf16.mxu0 0
      %296 = vmatmul.mubr.bf16.gmra.mrb[0].mxu0 %v237
      %v297 = vpop.f32.mrb[0].mxu0
      %v298 = vadd.f32 %v218, %v297
      %v299 = vpop.f32.mrb[0].mxu0
      %v300 = vpop.f32.mrb[0].mxu0
      %v301 = vadd.f32 %v218, %v300
      %v302 = vpop.f32.mrb[0].mxu0
      %303 = vdwg.mxu0
      %v304 = vld [vmem:[%s3] sm:$0xff]
      %v305 = vld [vmem:[%s3 + $0x8] sm:$0xff]
      %v306 = vld [vmem:[%s3 + $0x10] sm:$0xff]
      %v307 = vld [vmem:[%s3 + $0x18] sm:$0xff]
      %v308 = vld [vmem:[%s3 + $0x20] sm:$0xff]
      %v309 = vld [vmem:[%s3 + $0x28] sm:$0xff]
      %v310 = vld [vmem:[%s3 + $0x30] sm:$0xff]
      %v311 = vld [vmem:[%s3 + $0x38] sm:$0xff]
      %v312 = vadd.f32 %v274, %v304
      %v313 = vadd.f32 %v277, %v305
      %v314 = vadd.f32 %v282, %v306
      %v315 = vadd.f32 %v285, %v307
      %v316 = vadd.f32 %v290, %v308
      %v317 = vadd.f32 %v293, %v309
      %v318 = vadd.f32 %v298, %v310
      %v319 = vadd.f32 %v301, %v311
      %320 = vst [vmem:[%s197] sm:$0xff] %v312
      %321 = vst [vmem:[%s197 + $0x8] sm:$0xff] %v313
      %322 = vst [vmem:[%s197 + $0x10] sm:$0xff] %v314
      %323 = vst [vmem:[%s197 + $0x18] sm:$0xff] %v315
      %324 = vst [vmem:[%s197 + $0x20] sm:$0xff] %v316
      %325 = vst [vmem:[%s197 + $0x28] sm:$0xff] %v317
      %326 = vst [vmem:[%s197 + $0x30] sm:$0xff] %v318
      %327 = vst [vmem:[%s197 + $0x38] sm:$0xff] %v319
      %p328 = scmp.lt.s32.totalorder %s15, 1
      %s329 = scalar_select %p328, %s15, 1
      %s330 = smul.addr %s329, 8
      %s331 = smul.addr %s330, 8
      %s332 = scalar_lea.vmem %s4, %s331
      // Predicated region
      $region37: #{sd3_forward.5} parent=35 // pred_check
        %p333 = pneg %p122
      $region38: #{sd3_forward.5} parent=35 // pred_check_branch
        %335 = sbr.rel (%p333) target = $region40
      $region39: #{sd3_forward.5} parent=35 // pred_region
        _
      $region40: #{sd3_forward.5} parent=35 // pred_fallthru
        _
    $region36: #{sd3_forward.5} parent=5 // pred_fallthru
      _
    %p336 = scmp.le.s32.totalorder 2, %s10
    // Predicated region
    $region41: #{sd3_forward.5} parent=5 // pred_check
      %p337 = pneg %p336
    $region42: #{sd3_forward.5} parent=5 // pred_check_branch
      %339 = sbr.rel (%p337) target = $region44
    $region43: #{sd3_forward.5} parent=5 // pred_region
      %s340 = ssub.s32 %s10, 2
      // Predicated region
      $region45: #{sd3_forward.5} parent=43 // pred_check
        %p341 = pneg %p128
      $region46: #{sd3_forward.5} parent=43 // pred_check_branch
        %343 = sbr.rel (%p341) target = $region48
      $region47: #{sd3_forward.5} parent=43 // pred_region
        %p344 = scmp.lt.s32.totalorder %s16, 1
        %s345 = scalar_select %p344, %s16, 1
        %s346 = smul.addr %s345, 8
        %s347 = smul.addr %s346, 8
        %s348 = scalar_lea.vmem %s4, %s347
      $region48: #{sd3_forward.5} parent=43 // pred_fallthru
        _
    $region44: #{sd3_forward.5} parent=5 // pred_fallthru
      _
  $region6: #{sd3_forward.5} parent=0 // loop_footer
    %s14 = sadd.s32 1, %s10
  $region7: #{sd3_forward.5} parent=0 // loop_footer_branch
    %9 = sbr.rel target = $region3
  $region8: #{sd3_forward.5} parent=0 // loop_exit
    _

// kernel: sd3_forward.9
$region0: #{sd3_forward.9}
  #allocation0 [shape = 'u32[]', space=smem, size = 0x4, offset = 0x4, fixed_abs, tag = 'smem constant byte address 0x4 - core index']
  #allocation1 [shape = 'u32[144,128]{1,0:T(1,128)}', space=vmem, size = 0x12000, scoped, tag = 'internal scratch']
  %s0 = inlined_call_operand.vmem [shape: f32[2,64,128], index: 0, kind: input, shape index: {}]
  %s1 = inlined_call_operand.vmem [shape: f32[2,1,128], index: 1, kind: input, shape index: {}]
  %s2 = inlined_call_operand.vmem [shape: f32[2,1,128], index: 2, kind: input, shape index: {}]
  %s3 = inlined_call_operand.vmem [shape: bf16[128,16], index: 3, kind: input, shape index: {}]
  %s4 = inlined_call_operand.vmem [shape: f32[1,16], index: 4, kind: input, shape index: {}]
  %s5 = inlined_call_operand.vmem [shape: f32[2,64,16], index: 5, kind: output, shape index: {}]
  %s6 = sld [smem:[#allocation0]]
  $region53: #{sd3_forward.9} parent=0
    _
  %s8 = ssub.s32 1, %s6
  %s9 = scalar_select 0, %s8, %s6
  loop: start=0, step=1, limit=4
  $region2: #{sd3_forward.9} parent=0 // loop_pre_header
    _
  $region3: #{sd3_forward.9} parent=0 // loop_header
    %s11 = sphi 0, %s15
    %p12 = scmp.ge.s32.totalorder %s11, 4
    %s21 = sphi 0, %s23
    %s24 = sphi 0, %s21
    %s25 = sphi 0, %s24
    %s41 = sphi 0, %s25
    %s47 = sphi 0, %s49
    %s50 = sphi 0, %s47
    %s51 = sphi 0, %s50
    %s67 = sphi 0, %s51
    %s73 = sphi 0, %s75
    %s76 = sphi 0, %s73
    %s77 = sphi 0, %s76
    %s93 = sphi 0, %s77
    %s97 = sphi 0, %s97
    %s99 = sphi 0, %s97
    %s100 = sphi 0, %s99
    %s114 = sphi 0, %s100
    %s118 = sphi 0, %s118
    %s120 = sphi 0, %s118
    %s121 = sphi 0, %s120
    %s135 = sphi 0, %s121
    %s141 = sphi 0, %s143
    %s144 = sphi 0, %s141
    %s145 = sphi 0, %s144
    %s161 = sphi 0, %s145
  $region4: #{sd3_forward.9} parent=0 // loop_header_branch
    %14 = sbr.rel (%p12) target = $region8
  $region5: #{sd3_forward.9} parent=0 // loop_body
    %s16 = ssub.s32 %s11, 1
    %s17 = ssub.s32 %s11, 2
    %s18 = sadd.s32 %s11, 1
    %s19 = ssub.s32 %s11, %s18
    %p20 = scmp.eq.s32.totalorder %s19, 0
    %s22 = sadd.s32 %s21, 1
    %s23 = scalar_select %p20, %s21, %s22
    %p26 = pneg %p20
    %p27 = scmp.eq.s32.totalorder %s11, 1
    %p28 = por %p26, %p27
    %p29 = scmp.ne.s32.totalorder %s21, %s24
    %p30 = scmp.eq.s32.totalorder %s11, 0
    %p31 = por %p29, %p30
    %p32 = scmp.ne.s32.totalorder %s21, %s24
    %p33 = scmp.eq.s32.totalorder %s16, 1
    %p34 = por %p32, %p33
    %p35 = scmp.ne.s32.totalorder %s24, %s25
    %p36 = scmp.eq.s32.totalorder %s16, 0
    %p37 = por %p35, %p36
    %p38 = scmp.ne.s32.totalorder %s24, %s25
    %p39 = scmp.eq.s32.totalorder %s17, 1
    %p40 = por %p38, %p39
    %p42 = scmp.ne.s32.totalorder %s25, %s41
    %p43 = scmp.eq.s32.totalorder %s17, 0
    %p44 = por %p42, %p43
    %s45 = ssub.s32 %s11, %s18
    %p46 = scmp.eq.s32.totalorder %s45, 0
    %s48 = sadd.s32 %s47, 1
    %s49 = scalar_select %p46, %s47, %s48
    %p52 = pneg %p46
    %p53 = scmp.eq.s32.totalorder %s11, 1
    %p54 = por %p52, %p53
    %p55 = scmp.ne.s32.totalorder %s47, %s50
    %p56 = scmp.eq.s32.totalorder %s11, 0
    %p57 = por %p55, %p56
    %p58 = scmp.ne.s32.totalorder %s47, %s50
    %p59 = scmp.eq.s32.totalorder %s16, 1
    %p60 = por %p58, %p59
    %p61 = scmp.ne.s32.totalorder %s50, %s51
    %p62 = scmp.eq.s32.totalorder %s16, 0
    %p63 = por %p61, %p62
    %p64 = scmp.ne.s32.totalorder %s50, %s51
    %p65 = scmp.eq.s32.totalorder %s17, 1
    %p66 = por %p64, %p65
    %p68 = scmp.ne.s32.totalorder %s51, %s67
    %p69 = scmp.eq.s32.totalorder %s17, 0
    %p70 = por %p68, %p69
    %s71 = ssub.s32 %s11, %s18
    %p72 = scmp.eq.s32.totalorder %s71, 0
    %s74 = sadd.s32 %s73, 1
    %s75 = scalar_select %p72, %s73, %s74
    %p78 = pneg %p72
    %p79 = scmp.eq.s32.totalorder %s11, 1
    %p80 = por %p78, %p79
    %p81 = scmp.ne.s32.totalorder %s73, %s76
    %p82 = scmp.eq.s32.totalorder %s11, 0
    %p83 = por %p81, %p82
    %p84 = scmp.ne.s32.totalorder %s73, %s76
    %p85 = scmp.eq.s32.totalorder %s16, 1
    %p86 = por %p84, %p85
    %p87 = scmp.ne.s32.totalorder %s76, %s77
    %p88 = scmp.eq.s32.totalorder %s16, 0
    %p89 = por %p87, %p88
    %p90 = scmp.ne.s32.totalorder %s76, %s77
    %p91 = scmp.eq.s32.totalorder %s17, 1
    %p92 = por %p90, %p91
    %p94 = scmp.ne.s32.totalorder %s77, %s93
    %p95 = scmp.eq.s32.totalorder %s17, 0
    %p96 = por %p94, %p95
    %s98 = sadd.s32 %s97, 1
    %p101 = scmp.eq.s32.totalorder %s11, 1
    %p102 = scmp.ne.s32.totalorder %s97, %s99
    %p103 = scmp.eq.s32.totalorder %s11, 0
    %p104 = por %p102, %p103
    %p105 = scmp.ne.s32.totalorder %s97, %s99
    %p106 = scmp.eq.s32.totalorder %s16, 1
    %p107 = por %p105, %p106
    %p108 = scmp.ne.s32.totalorder %s99, %s100
    %p109 = scmp.eq.s32.totalorder %s16, 0
    %p110 = por %p108, %p109
    %p111 = scmp.ne.s32.totalorder %s99, %s100
    %p112 = scmp.eq.s32.totalorder %s17, 1
    %p113 = por %p111, %p112
    %p115 = scmp.ne.s32.totalorder %s100, %s114
    %p116 = scmp.eq.s32.totalorder %s17, 0
    %p117 = por %p115, %p116
    %s119 = sadd.s32 %s118, 1
    %p122 = scmp.eq.s32.totalorder %s11, 1
    %p123 = scmp.ne.s32.totalorder %s118, %s120
    %p124 = scmp.eq.s32.totalorder %s11, 0
    %p125 = por %p123, %p124
    %p126 = scmp.ne.s32.totalorder %s118, %s120
    %p127 = scmp.eq.s32.totalorder %s16, 1
    %p128 = por %p126, %p127
    %p129 = scmp.ne.s32.totalorder %s120, %s121
    %p130 = scmp.eq.s32.totalorder %s16, 0
    %p131 = por %p129, %p130
    %p132 = scmp.ne.s32.totalorder %s120, %s121
    %p133 = scmp.eq.s32.totalorder %s17, 1
    %p134 = por %p132, %p133
    %p136 = scmp.ne.s32.totalorder %s121, %s135
    %p137 = scmp.eq.s32.totalorder %s17, 0
    %p138 = por %p136, %p137
    %s139 = ssub.s32 %s11, %s18
    %p140 = scmp.eq.s32.totalorder %s139, 0
    %s142 = sadd.s32 %s141, 1
    %s143 = scalar_select %p140, %s141, %s142
    %p146 = pneg %p140
    %p147 = scmp.eq.s32.totalorder %s11, 1
    %p148 = por %p146, %p147
    %p149 = scmp.ne.s32.totalorder %s141, %s144
    %p150 = scmp.eq.s32.totalorder %s11, 0
    %p151 = por %p149, %p150
    %p152 = scmp.ne.s32.totalorder %s141, %s144
    %p153 = scmp.eq.s32.totalorder %s16, 1
    %p154 = por %p152, %p153
    %p155 = scmp.ne.s32.totalorder %s144, %s145
    %p156 = scmp.eq.s32.totalorder %s16, 0
    %p157 = por %p155, %p156
    %p158 = scmp.ne.s32.totalorder %s144, %s145
    %p159 = scmp.eq.s32.totalorder %s17, 1
    %p160 = por %p158, %p159
    %p162 = scmp.ne.s32.totalorder %s145, %s161
    %p163 = scmp.eq.s32.totalorder %s17, 0
    %p164 = por %p162, %p163
    %p165 = scmp.le.s32.totalorder 1, %s11
    %p166 = scmp.lt.s32.totalorder %s11, 3
    %p167 = pnand %p165, %p166
    %p168 = pneg %p167
    // Predicated region
    $region9: #{sd3_forward.9} parent=5 // pred_check
      _
    $region10: #{sd3_forward.9} parent=5 // pred_check_branch
      %170 = sbr.rel (%p167) target = $region12
    $region11: #{sd3_forward.9} parent=5 // pred_region
      %s171 = ssub.s32 %s11, 1
      // Predicated region
      $region13: #{sd3_forward.9} parent=11 // pred_check
        %p172 = pneg %p110
      $region14: #{sd3_forward.9} parent=11 // pred_check_branch
        %174 = sbr.rel (%p172) target = $region16
      $region15: #{sd3_forward.9} parent=11 // pred_region
        _
      $region16: #{sd3_forward.9} parent=11 // pred_fallthru
        _
      // Predicated region
      $region17: #{sd3_forward.9} parent=11 // pred_check
        %p175 = pneg %p131
      $region18: #{sd3_forward.9} parent=11 // pred_check_branch
        %177 = sbr.rel (%p175) target = $region20
      $region19: #{sd3_forward.9} parent=11 // pred_region
        _
      $region20: #{sd3_forward.9} parent=11 // pred_fallthru
        _
    $region12: #{sd3_forward.9} parent=5 // pred_fallthru
      _
    %p178 = scmp.lt.s32.totalorder %s11, 2
    // Predicated region
    $region21: #{sd3_forward.9} parent=5 // pred_check
      %p179 = pneg %p178
    $region22: #{sd3_forward.9} parent=5 // pred_check_branch
      %181 = sbr.rel (%p179) target = $region24
    $region23: #{sd3_forward.9} parent=5 // pred_region
      // Predicated region
      $region25: #{sd3_forward.9} parent=23 // pred_check
        %p182 = pneg %p31
      $region26: #{sd3_forward.9} parent=23 // pred_check_branch
        %184 = sbr.rel (%p182) target = $region28
      $region27: #{sd3_forward.9} parent=23 // pred_region
        %p185 = scmp.lt.s32.totalorder %s11, 1
        %s186 = scalar_select %p185, %s11, 1
        %s187 = smul.addr %s186, 8
        %s188 = smul.addr %s187, 8
        %s189 = scalar_lea.vmem %s0, %s188
      $region28: #{sd3_forward.9} parent=23 // pred_fallthru
        _
      // Predicated region
      $region29: #{sd3_forward.9} parent=23 // pred_check
        %p190 = pneg %p57
      $region30: #{sd3_forward.9} parent=23 // pred_check_branch
        %192 = sbr.rel (%p190) target = $region32
      $region31: #{sd3_forward.9} parent=23 // pred_region
        %p193 = scmp.lt.s32.totalorder %s11, 1
        %s194 = scalar_select %p193, %s11, 1
        %s195 = scalar_lea.vmem %s1, %s194
      $region32: #{sd3_forward.9} parent=23 // pred_fallthru
        _
      // Predicated region
      $region33: #{sd3_forward.9} parent=23 // pred_check
        %p196 = pneg %p83
      $region34: #{sd3_forward.9} parent=23 // pred_check_branch
        %198 = sbr.rel (%p196) target = $region36
      $region35: #{sd3_forward.9} parent=23 // pred_region
        %p199 = scmp.lt.s32.totalorder %s11, 1
        %s200 = scalar_select %p199, %s11, 1
        %s201 = scalar_lea.vmem %s2, %s200
      $region36: #{sd3_forward.9} parent=23 // pred_fallthru
        _
    $region24: #{sd3_forward.9} parent=5 // pred_fallthru
      _
    %p202 = scmp.le.s32.totalorder 1, %s11
    %p203 = scmp.lt.s32.totalorder %s11, 3
    %p204 = pnand %p202, %p203
    %p205 = pneg %p204
    // Predicated region
    $region37: #{sd3_forward.9} parent=5 // pred_check
      _
    $region38: #{sd3_forward.9} parent=5 // pred_check_branch
      %207 = sbr.rel (%p204) target = $region40
    $region39: #{sd3_forward.9} parent=5 // pred_region
      %s208 = ssub.s32 %s11, 1
      %p209 = scmp.lt.s32.totalorder %s16, 1
      %s210 = scalar_select %p209, %s16, 1
      %s211 = smul.addr %s210, 8
      %s212 = smul.addr %s211, 8
      %s213 = scalar_lea.vmem %s0, %s212
      %p214 = pneg %p37
      %p215 = pneg %p34
      %p216 = scmp.lt.s32.totalorder %s16, 1
      %s217 = scalar_select %p216, %s16, 1
      %s218 = scalar_lea.vmem %s1, %s217
      %p219 = pneg %p63
      %p220 = pneg %p60
      %p221 = scmp.lt.s32.totalorder %s16, 1
      %s222 = scalar_select %p221, %s16, 1
      %s223 = scalar_lea.vmem %s2, %s222
      %p224 = pneg %p89
      %p225 = pneg %p86
      %p226 = pneg %p110
      %p227 = pneg %p107
      %p228 = pneg %p131
      %p229 = pneg %p128
      %p230 = pneg %p157
      %p231 = pneg %p154
      %p232 = scmp.lt.s32.totalorder %s16, 1
      %s233 = scalar_select %p232, %s16, 1
      %s234 = smul.addr %s233, 8
      %s235 = smul.addr %s234, 8
      %s236 = scalar_lea.vmem %s5, %s235
      %p237 = scmp.lt.s32.totalorder %s16, 1
      %s238 = scalar_select %p237, %s16, 1
      %s239 = smul.addr %s238, 8
      %s240 = smul.addr %s239, 8
      %s241 = scalar_lea.vmem %s0, %s240
      %p242 = scmp.lt.s32.totalorder %s16, 1
      %s243 = scalar_select %p242, %s16, 1
      %s244 = scalar_lea.vmem %s1, %s243
      %p245 = scmp.lt.s32.totalorder %s16, 1
      %s246 = scalar_select %p245, %s16, 1
      %s247 = scalar_lea.vmem %s2, %s246
      %p248 = scmp.lt.s32.totalorder %s16, 1
      %s249 = scalar_select %p248, %s16, 1
      %s250 = smul.addr %s249, 8
      %s251 = smul.addr %s250, 8
      %s252 = scalar_lea.vmem %s5, %s251
      %v254 = vld [vmem:[%s241] sm:$0xff]
      %v255 = vld [vmem:[%s241 + $0x8] sm:$0xff]
      %v256 = vld [vmem:[%s241 + $0x10] sm:$0xff]
      %v257 = vld [vmem:[%s241 + $0x18] sm:$0xff]
      %v258 = vld [vmem:[%s241 + $0x20] sm:$0xff]
      %v259 = vld [vmem:[%s241 + $0x28] sm:$0xff]
      %v260 = vld [vmem:[%s241 + $0x30] sm:$0xff]
      %v261 = vld [vmem:[%s241 + $0x38] sm:$0xff]
      %v262 = vld [vmem:[%s244] sm:$0x1]
      %v263 = vld [vmem:[%s247] sm:$0x1]
      %264 = vadd.xlane.f32.xlu0 %v254
      %v265 = vpop.xlane.xlu0 %264
      %266 = vadd.xlane.f32.xlu0 %v255
      %v267 = vpop.xlane.xlu0 %266
      %268 = vadd.xlane.f32.xlu0 %v256
      %v269 = vpop.xlane.xlu0 %268
      %270 = vadd.xlane.f32.xlu0 %v257
      %v271 = vpop.xlane.xlu0 %270
      %272 = vadd.xlane.f32.xlu0 %v258
      %v273 = vpop.xlane.xlu0 %272
      %274 = vadd.xlane.f32.xlu0 %v259
      %v275 = vpop.xlane.xlu0 %274
      %276 = vadd.xlane.f32.xlu0 %v260
      %v277 = vpop.xlane.xlu0 %276
      %278 = vadd.xlane.f32.xlu0 %v261
      %v279 = vpop.xlane.xlu0 %278
      %v280 = vrcp.pop 128.0
      %v281 = vmul.f32 %v265, %v280
      %v282 = vmul.f32 %v267, %v280
      %v283 = vmul.f32 %v269, %v280
      %v284 = vmul.f32 %v271, %v280
      %v285 = vmul.f32 %v273, %v280
      %v286 = vmul.f32 %v275, %v280
      %v287 = vmul.f32 %v277, %v280
      %v288 = vmul.f32 %v279, %v280
      %v289 = vsub.f32 %v254, %v281
      %v290 = vsub.f32 %v255, %v282
      %v291 = vsub.f32 %v256, %v283
      %v292 = vsub.f32 %v257, %v284
      %v293 = vsub.f32 %v258, %v285
      %v294 = vsub.f32 %v259, %v286
      %v295 = vsub.f32 %v260, %v287
      %v296 = vsub.f32 %v261, %v288
      %v297 = vmul.f32 %v289, %v289
      %v298 = vmul.f32 %v290, %v290
      %v299 = vmul.f32 %v291, %v291
      %v300 = vmul.f32 %v292, %v292
      %v301 = vmul.f32 %v293, %v293
      %v302 = vmul.f32 %v294, %v294
      %v303 = vmul.f32 %v295, %v295
      %v304 = vmul.f32 %v296, %v296
      %305 = vadd.xlane.f32.xlu0 %v297
      %v306 = vpop.xlane.xlu0 %305
      %307 = vadd.xlane.f32.xlu0 %v298
      %v308 = vpop.xlane.xlu0 %307
      %309 = vadd.xlane.f32.xlu0 %v299
      %v310 = vpop.xlane.xlu0 %309
      %311 = vadd.xlane.f32.xlu0 %v300
      %v312 = vpop.xlane.xlu0 %311
      %313 = vadd.xlane.f32.xlu0 %v301
      %v314 = vpop.xlane.xlu0 %313
      %315 = vadd.xlane.f32.xlu0 %v302
      %v316 = vpop.xlane.xlu0 %315
      %317 = vadd.xlane.f32.xlu0 %v303
      %v318 = vpop.xlane.xlu0 %317
      %319 = vadd.xlane.f32.xlu0 %v304
      %v320 = vpop.xlane.xlu0 %319
      %v321 = vmul.f32 %v306, %v280
      %v322 = vmul.f32 %v308, %v280
      %v323 = vmul.f32 %v310, %v280
      %v324 = vmul.f32 %v312, %v280
      %v325 = vmul.f32 %v314, %v280
      %v326 = vmul.f32 %v316, %v280
      %v327 = vmul.f32 %v318, %v280
      %v328 = vmul.f32 %v320, %v280
      %v329 = vadd.f32 %v321, 1e-06
      %v330 = vadd.f32 %v322, 1e-06
      %v331 = vadd.f32 %v323, 1e-06
      %v332 = vadd.f32 %v324, 1e-06
      %v333 = vadd.f32 %v325, 1e-06
      %v334 = vadd.f32 %v326, 1e-06
      %v335 = vadd.f32 %v327, 1e-06
      %v336 = vadd.f32 %v328, 1e-06
      %v337 = vrsqrt.pop %v329
      %v338 = vrsqrt.pop %v330
      %v339 = vrsqrt.pop %v331
      %v340 = vrsqrt.pop %v332
      %v341 = vrsqrt.pop %v333
      %v342 = vrsqrt.pop %v334
      %v343 = vrsqrt.pop %v335
      %v344 = vrsqrt.pop %v336
      %v345 = vmul.f32 %v289, %v337
      %v346 = vmul.f32 %v290, %v338
      %v347 = vmul.f32 %v291, %v339
      %v348 = vmul.f32 %v292, %v340
      %v349 = vmul.f32 %v293, %v341
      %v350 = vmul.f32 %v294, %v342
      %v351 = vmul.f32 %v295, %v343
      %v352 = vmul.f32 %v296, %v344
      %v353 = vadd.f32 %v262, 1.0
      %v355 = vlaneseq
      %v356 = vshrl.u32 %v355, 7
      %v357 = vsub.s32 0, %v356
      %v358 = vrot.slane %v353, %v357
      %v360 = vmul.f32 %v345, %v358
      %v361 = vmul.f32 %v346, %v358
      %v362 = vmul.f32 %v347, %v358
      %v363 = vmul.f32 %v348, %v358
      %v364 = vmul.f32 %v349, %v358
      %v365 = vmul.f32 %v350, %v358
      %v366 = vmul.f32 %v351, %v358
      %v367 = vmul.f32 %v352, %v358
      %v369 = vlaneseq
      %v370 = vshrl.u32 %v369, 7
      %v371 = vsub.s32 0, %v370
      %v372 = vrot.slane %v263, %v371
      %v374 = vadd.f32 %v360, %v372
      %v375 = vadd.f32 %v361, %v372
      %v376 = vadd.f32 %v362, %v372
      %v377 = vadd.f32 %v363, %v372
      %v378 = vadd.f32 %v364, %v372
      %v379 = vadd.f32 %v365, %v372
      %v380 = vadd.f32 %v366, %v372
      %v381 = vadd.f32 %v367, %v372
      %v382 = vpack.c.bf16 %v375, %v374
      %v383 = vpack.c.bf16 %v377, %v376
      %v384 = vpack.c.bf16 %v379, %v378
      %v385 = vpack.c.bf16 %v381, %v380
      %v386 = vld [vmem:[%s3] sm:$0xf]
      %v387 = vld [vmem:[%s3 + $0x4] sm:$0xf]
      %v388 = vld [vmem:[%s3 + $0x8] sm:$0xf]
      %v389 = vld [vmem:[%s3 + $0xc] sm:$0xf]
      %v390 = vld [vmem:[%s3 + $0x10] sm:$0xf]
      %v391 = vld [vmem:[%s3 + $0x14] sm:$0xf]
      %v392 = vld [vmem:[%s3 + $0x18] sm:$0xf]
      %v393 = vld [vmem:[%s3 + $0x1c] sm:$0xf]
      %v394 = vld [vmem:[%s3 + $0x20] sm:$0xf]
      %v395 = vld [vmem:[%s3 + $0x24] sm:$0xf]
      %v396 = vld [vmem:[%s3 + $0x28] sm:$0xf]
      %v397 = vld [vmem:[%s3 + $0x2c] sm:$0xf]
      %v398 = vld [vmem:[%s3 + $0x30] sm:$0xf]
      %v399 = vld [vmem:[%s3 + $0x34] sm:$0xf]
      %v400 = vld [vmem:[%s3 + $0x38] sm:$0xf]
      %v401 = vld [vmem:[%s3 + $0x3c] sm:$0xf]
      %v402 = vld [vmem:[%s4] sm:$0x1]
      %v404 = vlaneseq
      %v405 = vshrl.u32 %v404, 7
      %v406 = vsub.s32 0, %v405
      %v407 = vrot.slane %v402, %v406
      %v425 = vunpack.c.l.b16 %v386
      %v426 = vunpack.c.l.b16 %v387
      %v427 = vunpack.c.l.b16 %v388
      %v428 = vunpack.c.l.b16 %v389
      %v429 = vunpack.c.l.b16 %v390
      %v430 = vunpack.c.l.b16 %v391
      %v431 = vunpack.c.l.b16 %v392
      %v432 = vunpack.c.l.b16 %v393
      %v433 = vunpack.c.l.b16 %v394
      %v434 = vunpack.c.l.b16 %v395
      %v435 = vunpack.c.l.b16 %v396
      %v436 = vunpack.c.l.b16 %v397
      %v437 = vunpack.c.l.b16 %v398
      %v438 = vunpack.c.l.b16 %v399
      %v439 = vunpack.c.l.b16 %v400
      %v440 = vunpack.c.l.b16 %v401
      %v441 = vpack.c.b16 %v426, %v425
      %v442 = vpack.c.b16 %v428, %v427
      %v443 = vpack.c.b16 %v430, %v429
      %v444 = vpack.c.b16 %v432, %v431
      %v445 = vpack.c.b16 %v434, %v433
      %v446 = vpack.c.b16 %v436, %v435
      %v447 = vpack.c.b16 %v438, %v437
      %v448 = vpack.c.b16 %v440, %v439
      %457 = vmatprep.subr.bf16.mxu0 0
      %458 = vmatpush1.bf16.msra.mxu0 %v441
      %459 = vmatprep.subr.bf16.mxu0 0
      %460 = vmatpush1.bf16.msra.mxu0 %v442
      %461 = vmatprep.subr.bf16.mxu0 0
      %462 = vmatpush1.bf16.msra.mxu0 %v443
      %463 = vmatprep.subr.bf16.mxu0 0
      %464 = vmatpush1.bf16.msra.mxu0 %v444
      %465 = vmatprep.subr.bf16.mxu0 0
      %466 = vmatpush1.bf16.msra.mxu0 %v445
      %467 = vmatprep.subr.bf16.mxu0 0
      %468 = vmatpush1.bf16.msra.mxu0 %v446
      %469 = vmatprep.subr.bf16.mxu0 0
      %470 = vmatpush1.bf16.msra.mxu0 %v447
      %471 = vmatprep.subr.bf16.mxu0 0
      %472 = vmatpush1.bf16.msra.mxu0 %v448
      %473 = vmatprep.subr.bf16.mxu0 0
      %474 = vmatpush1.bf16.msra.mxu0 0
      %475 = vmatprep.subr.bf16.mxu0 0
      %476 = vmatpush1.bf16.msra.mxu0 0
      %477 = vmatprep.subr.bf16.mxu0 0
      %478 = vmatpush1.bf16.msra.mxu0 0
      %479 = vmatprep.subr.bf16.mxu0 0
      %480 = vmatpush1.bf16.msra.mxu0 0
      %481 = vmatprep.subr.bf16.mxu0 0
      %482 = vmatpush1.bf16.msra.mxu0 0
      %483 = vmatprep.subr.bf16.mxu0 0
      %484 = vmatpush1.bf16.msra.mxu0 0
      %485 = vmatprep.subr.bf16.mxu0 0
      %486 = vmatpush1.bf16.msra.mxu0 0
      %487 = vmatprep.subr.bf16.mxu0 0
      %488 = vmatpush1.bf16.msra.mxu0 0
      %489 = vmatprep.mubr.bf16.mxu0 0
      %490 = vmatmul.mubr.bf16.gmra.mrb[0].mxu0 %v382
      %v491 = vpop.f32.mrb[0].mxu0
      %v492 = vadd.f32 %v407, %v491
      %v493 = vpop.f32.mrb[0].mxu0
      %v494 = vpop.f32.mrb[0].mxu0
      %v495 = vadd.f32 %v407, %v494
      %v496 = vpop.f32.mrb[0].mxu0
      %497 = vmatprep.mubr.bf16.mxu0 0
      %498 = vmatmul.mubr.bf16.gmra.mrb[0].mxu0 %v383
      %v499 = vpop.f32.mrb[0].mxu0
      %v500 = vadd.f32 %v407, %v499
      %v501 = vpop.f32.mrb[0].mxu0
      %v502 = vpop.f32.mrb[0].mxu0
      %v503 = vadd.f32 %v407, %v502
      %v504 = vpop.f32.mrb[0].mxu0
      %505 = vmatprep.mubr.bf16.mxu0 0
      %506 = vmatmul.mubr.bf16.gmra.mrb[0].mxu0 %v384
      %v507 = vpop.f32.mrb[0].mxu0
      %v508 = vadd.f32 %v407, %v507
      %v509 = vpop.f32.mrb[0].mxu0
      %v510 = vpop.f32.mrb[0].mxu0
      %v511 = vadd.f32 %v407, %v510
      %v512 = vpop.f32.mrb[0].mxu0
      %513 = vmatprep.mubr.bf16.mxu0 0
      %514 = vmatmul.mubr.bf16.gmra.mrb[0].mxu0 %v385
      %v515 = vpop.f32.mrb[0].mxu0
      %v516 = vadd.f32 %v407, %v515
      %v517 = vpop.f32.mrb[0].mxu0
      %v518 = vpop.f32.mrb[0].mxu0
      %v519 = vadd.f32 %v407, %v518
      %v520 = vpop.f32.mrb[0].mxu0
      %521 = vdwg.mxu0
      %vm522 = vcmask 130048
      %523 = vst.msk [vmem:[%s252] sm:$0xff] %vm522, %v492
      %524 = vst.msk [vmem:[%s252 + $0x8] sm:$0xff] %vm522, %v495
      %525 = vst.msk [vmem:[%s252 + $0x10] sm:$0xff] %vm522, %v500
      %526 = vst.msk [vmem:[%s252 + $0x18] sm:$0xff] %vm522, %v503
      %527 = vst.msk [vmem:[%s252 + $0x20] sm:$0xff] %vm522, %v508
      %528 = vst.msk [vmem:[%s252 + $0x28] sm:$0xff] %vm522, %v511
      %529 = vst.msk [vmem:[%s252 + $0x30] sm:$0xff] %vm522, %v516
      %530 = vst.msk [vmem:[%s252 + $0x38] sm:$0xff] %vm522, %v519
      %p531 = scmp.lt.s32.totalorder %s16, 1
      %s532 = scalar_select %p531, %s16, 1
      %s533 = smul.addr %s532, 8
      %s534 = smul.addr %s533, 8
      %s535 = scalar_lea.vmem %s5, %s534
      // Predicated region
      $region41: #{sd3_forward.9} parent=39 // pred_check
        %p536 = pneg %p154
      $region42: #{sd3_forward.9} parent=39 // pred_check_branch
        %538 = sbr.rel (%p536) target = $region44
      $region43: #{sd3_forward.9} parent=39 // pred_region
        _
      $region44: #{sd3_forward.9} parent=39 // pred_fallthru
        _
    $region40: #{sd3_forward.9} parent=5 // pred_fallthru
      _
    %p539 = scmp.le.s32.totalorder 2, %s11
    // Predicated region
    $region45: #{sd3_forward.9} parent=5 // pred_check
      %p540 = pneg %p539
    $region46: #{sd3_forward.9} parent=5 // pred_check_branch
      %542 = sbr.rel (%p540) target = $region48
    $region47: #{sd3_forward.9} parent=5 // pred_region
      %s543 = ssub.s32 %s11, 2
      // Predicated region
      $region49: #{sd3_forward.9} parent=47 // pred_check
        %p544 = pneg %p160
      $region50: #{sd3_forward.9} parent=47 // pred_check_branch
        %546 = sbr.rel (%p544) target = $region52
      $region51: #{sd3_forward.9} parent=47 // pred_region
        %p547 = scmp.lt.s32.totalorder %s17, 1
        %s548 = scalar_select %p547, %s17, 1
        %s549 = smul.addr %s548, 8
        %s550 = smul.addr %s549, 8
        %s551 = scalar_lea.vmem %s5, %s550
      $region52: #{sd3_forward.9} parent=47 // pred_fallthru
        _
    $region48: #{sd3_forward.9} parent=5 // pred_fallthru
      _
  $region6: #{sd3_forward.9} parent=0 // loop_footer
    %s15 = sadd.s32 1, %s11
  $region7: #{sd3_forward.9} parent=0 // loop_footer_branch
    %10 = sbr.rel target = $region3
  $region8: #{sd3_forward.9} parent=0 // loop_exit
    _

// kernel: sd3_forward.7
$region0: #{sd3_forward.7}
  #allocation0 [shape = 'u32[]', space=smem, size = 0x4, offset = 0x4, fixed_abs, tag = 'smem constant byte address 0x4 - core index']
  #allocation1 [shape = 'u32[144,128]{1,0:T(1,128)}', space=vmem, size = 0x12000, scoped, tag = 'internal scratch']
  %s0 = inlined_call_operand.vmem [shape: f32[2,64,128], index: 0, kind: input, shape index: {}, may-alias: {0,19}]
  %s1 = inlined_call_operand.vmem [shape: f32[2,8,128], index: 1, kind: input, shape index: {}, may-alias: {1,20}]
  %s2 = inlined_call_operand.vmem [shape: f32[2,12,128], index: 2, kind: input, shape index: {}]
  %s3 = inlined_call_operand.vmem [shape: bf16[128,384], index: 3, kind: input, shape index: {}]
  %s4 = inlined_call_operand.vmem [shape: f32[1,384], index: 4, kind: input, shape index: {}]
  %s5 = inlined_call_operand.vmem [shape: bf16[128,384], index: 5, kind: input, shape index: {}]
  %s6 = inlined_call_operand.vmem [shape: f32[1,384], index: 6, kind: input, shape index: {}]
  %s7 = inlined_call_operand.vmem [shape: bf16[128,128], index: 7, kind: input, shape index: {}]
  %s8 = inlined_call_operand.vmem [shape: f32[1,128], index: 8, kind: input, shape index: {}]
  %s9 = inlined_call_operand.vmem [shape: bf16[128,128], index: 9, kind: input, shape index: {}]
  %s10 = inlined_call_operand.vmem [shape: f32[1,128], index: 10, kind: input, shape index: {}]
  %s11 = inlined_call_operand.vmem [shape: bf16[128,512], index: 11, kind: input, shape index: {}]
  %s12 = inlined_call_operand.vmem [shape: f32[1,512], index: 12, kind: input, shape index: {}]
  %s13 = inlined_call_operand.vmem [shape: bf16[512,128], index: 13, kind: input, shape index: {}]
  %s14 = inlined_call_operand.vmem [shape: f32[1,128], index: 14, kind: input, shape index: {}]
  %s15 = inlined_call_operand.vmem [shape: bf16[128,512], index: 15, kind: input, shape index: {}]
  %s16 = inlined_call_operand.vmem [shape: f32[1,512], index: 16, kind: input, shape index: {}]
  %s17 = inlined_call_operand.vmem [shape: bf16[512,128], index: 17, kind: input, shape index: {}]
  %s18 = inlined_call_operand.vmem [shape: f32[1,128], index: 18, kind: input, shape index: {}]
  %s19 = inlined_call_operand.vmem [shape: f32[2,64,128], index: 19, kind: output, shape index: {0}, may-alias: {0,19}]
  %s20 = inlined_call_operand.vmem [shape: f32[2,8,128], index: 20, kind: output, shape index: {1}, may-alias: {1,20}]
  %21 = xla_tuple %s19, %s20
  %s22 = sld [smem:[#allocation0]]
  $region117: #{sd3_forward.7} parent=0
    _
  %s24 = ssub.s32 1, %s22
  %s25 = scalar_select 0, %s24, %s22
  loop: start=0, step=1, limit=4
  $region2: #{sd3_forward.7} parent=0 // loop_pre_header
    _
  $region3: #{sd3_forward.7} parent=0 // loop_header
    %s27 = sphi 0, %s31
    %p28 = scmp.ge.s32.totalorder %s27, 4
    %s37 = sphi 0, %s39
    %s40 = sphi 0, %s37
    %s41 = sphi 0, %s40
    %s57 = sphi 0, %s41
    %s63 = sphi 0, %s65
    %s66 = sphi 0, %s63
    %s67 = sphi 0, %s66
    %s83 = sphi 0, %s67
    %s89 = sphi 0, %s91
    %s92 = sphi 0, %s89
    %s93 = sphi 0, %s92
    %s109 = sphi 0, %s93
    %s113 = sphi 0, %s113
    %s115 = sphi 0, %s113
    %s116 = sphi 0, %s115
    %s130 = sphi 0, %s116
    %s134 = sphi 0, %s134
    %s136 = sphi 0, %s134
    %s137 = sphi 0, %s136
    %s151 = sphi 0, %s137
    %s155 = sphi 0, %s155
    %s157 = sphi 0, %s155
    %s158 = sphi 0, %s157
    %s172 = sphi 0, %s158
    %s176 = sphi 0, %s176
    %s178 = sphi 0, %s176
    %s179 = sphi 0, %s178
    %s193 = sphi 0, %s179
    %s197 = sphi 0, %s197
    %s199 = sphi 0, %s197
    %s200 = sphi 0, %s199
    %s214 = sphi 0, %s200
    %s218 = sphi 0, %s218
    %s220 = sphi 0, %s218
    %s221 = sphi 0, %s220
    %s235 = sphi 0, %s221
    %s239 = sphi 0, %s239
    %s241 = sphi 0, %s239
    %s242 = sphi 0, %s241
    %s256 = sphi 0, %s242
    %s260 = sphi 0, %s260
    %s262 = sphi 0, %s260
    %s263 = sphi 0, %s262
    %s277 = sphi 0, %s263
    %s281 = sphi 0, %s281
    %s283 = sphi 0, %s281
    %s284 = sphi 0, %s283
    %s298 = sphi 0, %s284
    %s302 = sphi 0, %s302
    %s304 = sphi 0, %s302
    %s305 = sphi 0, %s304
    %s319 = sphi 0, %s305
    %s323 = sphi 0, %s323
    %s325 = sphi 0, %s323
    %s326 = sphi 0, %s325
    %s340 = sphi 0, %s326
    %s344 = sphi 0, %s344
    %s346 = sphi 0, %s344
    %s347 = sphi 0, %s346
    %s361 = sphi 0, %s347
    %s365 = sphi 0, %s365
    %s367 = sphi 0, %s365
    %s368 = sphi 0, %s367
    %s382 = sphi 0, %s368
    %s386 = sphi 0, %s386
    %s388 = sphi 0, %s386
    %s389 = sphi 0, %s388
    %s403 = sphi 0, %s389
    %s407 = sphi 0, %s407
    %s409 = sphi 0, %s407
    %s410 = sphi 0, %s409
    %s424 = sphi 0, %s410
    %s428 = sphi 0, %s428
    %s430 = sphi 0, %s428
    %s431 = sphi 0, %s430
    %s445 = sphi 0, %s431
    %s451 = sphi 0, %s453
    %s454 = sphi 0, %s451
    %s455 = sphi 0, %s454
    %s471 = sphi 0, %s455
    %s477 = sphi 0, %s479
    %s480 = sphi 0, %s477
    %s481 = sphi 0, %s480
    %s497 = sphi 0, %s481
  $region4: #{sd3_forward.7} parent=0 // loop_header_branch
    %30 = sbr.rel (%p28) target = $region8
  $region5: #{sd3_forward.7} parent=0 // loop_body
    %s32 = ssub.s32 %s27, 1
    %s33 = ssub.s32 %s27, 2
    %s34 = sadd.s32 %s27, 1
    %s35 = ssub.s32 %s27, %s34
    %p36 = scmp.eq.s32.totalorder %s35, 0
    %s38 = sadd.s32 %s37, 1
    %s39 = scalar_select %p36, %s37, %s38
    %p42 = pneg %p36
    %p43 = scmp.eq.s32.totalorder %s27, 1
    %p44 = por %p42, %p43
    %p45 = scmp.ne.s32.totalorder %s37, %s40
    %p46 = scmp.eq.s32.totalorder %s27, 0
    %p47 = por %p45, %p46
    %p48 = scmp.ne.s32.totalorder %s37, %s40
    %p49 = scmp.eq.s32.totalorder %s32, 1
    %p50 = por %p48, %p49
    %p51 = scmp.ne.s32.totalorder %s40, %s41
    %p52 = scmp.eq.s32.totalorder %s32, 0
    %p53 = por %p51, %p52
    %p54 = scmp.ne.s32.totalorder %s40, %s41
    %p55 = scmp.eq.s32.totalorder %s33, 1
    %p56 = por %p54, %p55
    %p58 = scmp.ne.s32.totalorder %s41, %s57
    %p59 = scmp.eq.s32.totalorder %s33, 0
    %p60 = por %p58, %p59
    %s61 = ssub.s32 %s27, %s34
    %p62 = scmp.eq.s32.totalorder %s61, 0
    %s64 = sadd.s32 %s63, 1
    %s65 = scalar_select %p62, %s63, %s64
    %p68 = pneg %p62
    %p69 = scmp.eq.s32.totalorder %s27, 1
    %p70 = por %p68, %p69
    %p71 = scmp.ne.s32.totalorder %s63, %s66
    %p72 = scmp.eq.s32.totalorder %s27, 0
    %p73 = por %p71, %p72
    %p74 = scmp.ne.s32.totalorder %s63, %s66
    %p75 = scmp.eq.s32.totalorder %s32, 1
    %p76 = por %p74, %p75
    %p77 = scmp.ne.s32.totalorder %s66, %s67
    %p78 = scmp.eq.s32.totalorder %s32, 0
    %p79 = por %p77, %p78
    %p80 = scmp.ne.s32.totalorder %s66, %s67
    %p81 = scmp.eq.s32.totalorder %s33, 1
    %p82 = por %p80, %p81
    %p84 = scmp.ne.s32.totalorder %s67, %s83
    %p85 = scmp.eq.s32.totalorder %s33, 0
    %p86 = por %p84, %p85
    %s87 = ssub.s32 %s27, %s34
    %p88 = scmp.eq.s32.totalorder %s87, 0
    %s90 = sadd.s32 %s89, 1
    %s91 = scalar_select %p88, %s89, %s90
    %p94 = pneg %p88
    %p95 = scmp.eq.s32.totalorder %s27, 1
    %p96 = por %p94, %p95
    %p97 = scmp.ne.s32.totalorder %s89, %s92
    %p98 = scmp.eq.s32.totalorder %s27, 0
    %p99 = por %p97, %p98
    %p100 = scmp.ne.s32.totalorder %s89, %s92
    %p101 = scmp.eq.s32.totalorder %s32, 1
    %p102 = por %p100, %p101
    %p103 = scmp.ne.s32.totalorder %s92, %s93
    %p104 = scmp.eq.s32.totalorder %s32, 0
    %p105 = por %p103, %p104
    %p106 = scmp.ne.s32.totalorder %s92, %s93
    %p107 = scmp.eq.s32.totalorder %s33, 1
    %p108 = por %p106, %p107
    %p110 = scmp.ne.s32.totalorder %s93, %s109
    %p111 = scmp.eq.s32.totalorder %s33, 0
    %p112 = por %p110, %p111
    %s114 = sadd.s32 %s113, 1
    %p117 = scmp.eq.s32.totalorder %s27, 1
    %p118 = scmp.ne.s32.totalorder %s113, %s115
    %p119 = scmp.eq.s32.totalorder %s27, 0
    %p120 = por %p118, %p119
    %p121 = scmp.ne.s32.totalorder %s113, %s115
    %p122 = scmp.eq.s32.totalorder %s32, 1
    %p123 = por %p121, %p122
    %p124 = scmp.ne.s32.totalorder %s115, %s116
    %p125 = scmp.eq.s32.totalorder %s32, 0
    %p126 = por %p124, %p125
    %p127 = scmp.ne.s32.totalorder %s115, %s116
    %p128 = scmp.eq.s32.totalorder %s33, 1
    %p129 = por %p127, %p128
    %p131 = scmp.ne.s32.totalorder %s116, %s130
    %p132 = scmp.eq.s32.totalorder %s33, 0
    %p133 = por %p131, %p132
    %s135 = sadd.s32 %s134, 1
    %p138 = scmp.eq.s32.totalorder %s27, 1
    %p139 = scmp.ne.s32.totalorder %s134, %s136
    %p140 = scmp.eq.s32.totalorder %s27, 0
    %p141 = por %p139, %p140
    %p142 = scmp.ne.s32.totalorder %s134, %s136
    %p143 = scmp.eq.s32.totalorder %s32, 1
    %p144 = por %p142, %p143
    %p145 = scmp.ne.s32.totalorder %s136, %s137
    %p146 = scmp.eq.s32.totalorder %s32, 0
    %p147 = por %p145, %p146
    %p148 = scmp.ne.s32.totalorder %s136, %s137
    %p149 = scmp.eq.s32.totalorder %s33, 1
    %p150 = por %p148, %p149
    %p152 = scmp.ne.s32.totalorder %s137, %s151
    %p153 = scmp.eq.s32.totalorder %s33, 0
    %p154 = por %p152, %p153
    %s156 = sadd.s32 %s155, 1
    %p159 = scmp.eq.s32.totalorder %s27, 1
    %p160 = scmp.ne.s32.totalorder %s155, %s157
    %p161 = scmp.eq.s32.totalorder %s27, 0
    %p162 = por %p160, %p161
    %p163 = scmp.ne.s32.totalorder %s155, %s157
    %p164 = scmp.eq.s32.totalorder %s32, 1
    %p165 = por %p163, %p164
    %p166 = scmp.ne.s32.totalorder %s157, %s158
    %p167 = scmp.eq.s32.totalorder %s32, 0
    %p168 = por %p166, %p167
    %p169 = scmp.ne.s32.totalorder %s157, %s158
    %p170 = scmp.eq.s32.totalorder %s33, 1
    %p171 = por %p169, %p170
    %p173 = scmp.ne.s32.totalorder %s158, %s172
    %p174 = scmp.eq.s32.totalorder %s33, 0
    %p175 = por %p173, %p174
    %s177 = sadd.s32 %s176, 1
    %p180 = scmp.eq.s32.totalorder %s27, 1
    %p181 = scmp.ne.s32.totalorder %s176, %s178
    %p182 = scmp.eq.s32.totalorder %s27, 0
    %p183 = por %p181, %p182
    %p184 = scmp.ne.s32.totalorder %s176, %s178
    %p185 = scmp.eq.s32.totalorder %s32, 1
    %p186 = por %p184, %p185
    %p187 = scmp.ne.s32.totalorder %s178, %s179
    %p188 = scmp.eq.s32.totalorder %s32, 0
    %p189 = por %p187, %p188
    %p190 = scmp.ne.s32.totalorder %s178, %s179
    %p191 = scmp.eq.s32.totalorder %s33, 1
    %p192 = por %p190, %p191
    %p194 = scmp.ne.s32.totalorder %s179, %s193
    %p195 = scmp.eq.s32.totalorder %s33, 0
    %p196 = por %p194, %p195
    %s198 = sadd.s32 %s197, 1
    %p201 = scmp.eq.s32.totalorder %s27, 1
    %p202 = scmp.ne.s32.totalorder %s197, %s199
    %p203 = scmp.eq.s32.totalorder %s27, 0
    %p204 = por %p202, %p203
    %p205 = scmp.ne.s32.totalorder %s197, %s199
    %p206 = scmp.eq.s32.totalorder %s32, 1
    %p207 = por %p205, %p206
    %p208 = scmp.ne.s32.totalorder %s199, %s200
    %p209 = scmp.eq.s32.totalorder %s32, 0
    %p210 = por %p208, %p209
    %p211 = scmp.ne.s32.totalorder %s199, %s200
    %p212 = scmp.eq.s32.totalorder %s33, 1
    %p213 = por %p211, %p212
    %p215 = scmp.ne.s32.totalorder %s200, %s214
    %p216 = scmp.eq.s32.totalorder %s33, 0
    %p217 = por %p215, %p216
    %s219 = sadd.s32 %s218, 1
    %p222 = scmp.eq.s32.totalorder %s27, 1
    %p223 = scmp.ne.s32.totalorder %s218, %s220
    %p224 = scmp.eq.s32.totalorder %s27, 0
    %p225 = por %p223, %p224
    %p226 = scmp.ne.s32.totalorder %s218, %s220
    %p227 = scmp.eq.s32.totalorder %s32, 1
    %p228 = por %p226, %p227
    %p229 = scmp.ne.s32.totalorder %s220, %s221
    %p230 = scmp.eq.s32.totalorder %s32, 0
    %p231 = por %p229, %p230
    %p232 = scmp.ne.s32.totalorder %s220, %s221
    %p233 = scmp.eq.s32.totalorder %s33, 1
    %p234 = por %p232, %p233
    %p236 = scmp.ne.s32.totalorder %s221, %s235
    %p237 = scmp.eq.s32.totalorder %s33, 0
    %p238 = por %p236, %p237
    %s240 = sadd.s32 %s239, 1
    %p243 = scmp.eq.s32.totalorder %s27, 1
    %p244 = scmp.ne.s32.totalorder %s239, %s241
    %p245 = scmp.eq.s32.totalorder %s27, 0
    %p246 = por %p244, %p245
    %p247 = scmp.ne.s32.totalorder %s239, %s241
    %p248 = scmp.eq.s32.totalorder %s32, 1
    %p249 = por %p247, %p248
    %p250 = scmp.ne.s32.totalorder %s241, %s242
    %p251 = scmp.eq.s32.totalorder %s32, 0
    %p252 = por %p250, %p251
    %p253 = scmp.ne.s32.totalorder %s241, %s242
    %p254 = scmp.eq.s32.totalorder %s33, 1
    %p255 = por %p253, %p254
    %p257 = scmp.ne.s32.totalorder %s242, %s256
    %p258 = scmp.eq.s32.totalorder %s33, 0
    %p259 = por %p257, %p258
    %s261 = sadd.s32 %s260, 1
    %p264 = scmp.eq.s32.totalorder %s27, 1
    %p265 = scmp.ne.s32.totalorder %s260, %s262
    %p266 = scmp.eq.s32.totalorder %s27, 0
    %p267 = por %p265, %p266
    %p268 = scmp.ne.s32.totalorder %s260, %s262
    %p269 = scmp.eq.s32.totalorder %s32, 1
    %p270 = por %p268, %p269
    %p271 = scmp.ne.s32.totalorder %s262, %s263
    %p272 = scmp.eq.s32.totalorder %s32, 0
    %p273 = por %p271, %p272
    %p274 = scmp.ne.s32.totalorder %s262, %s263
    %p275 = scmp.eq.s32.totalorder %s33, 1
    %p276 = por %p274, %p275
    %p278 = scmp.ne.s32.totalorder %s263, %s277
    %p279 = scmp.eq.s32.totalorder %s33, 0
    %p280 = por %p278, %p279
    %s282 = sadd.s32 %s281, 1
    %p285 = scmp.eq.s32.totalorder %s27, 1
    %p286 = scmp.ne.s32.totalorder %s281, %s283
    %p287 = scmp.eq.s32.totalorder %s27, 0
    %p288 = por %p286, %p287
    %p289 = scmp.ne.s32.totalorder %s281, %s283
    %p290 = scmp.eq.s32.totalorder %s32, 1
    %p291 = por %p289, %p290
    %p292 = scmp.ne.s32.totalorder %s283, %s284
    %p293 = scmp.eq.s32.totalorder %s32, 0
    %p294 = por %p292, %p293
    %p295 = scmp.ne.s32.totalorder %s283, %s284
    %p296 = scmp.eq.s32.totalorder %s33, 1
    %p297 = por %p295, %p296
    %p299 = scmp.ne.s32.totalorder %s284, %s298
    %p300 = scmp.eq.s32.totalorder %s33, 0
    %p301 = por %p299, %p300
    %s303 = sadd.s32 %s302, 1
    %p306 = scmp.eq.s32.totalorder %s27, 1
    %p307 = scmp.ne.s32.totalorder %s302, %s304
    %p308 = scmp.eq.s32.totalorder %s27, 0
    %p309 = por %p307, %p308
    %p310 = scmp.ne.s32.totalorder %s302, %s304
    %p311 = scmp.eq.s32.totalorder %s32, 1
    %p312 = por %p310, %p311
    %p313 = scmp.ne.s32.totalorder %s304, %s305
    %p314 = scmp.eq.s32.totalorder %s32, 0
    %p315 = por %p313, %p314
    %p316 = scmp.ne.s32.totalorder %s304, %s305
    %p317 = scmp.eq.s32.totalorder %s33, 1
    %p318 = por %p316, %p317
    %p320 = scmp.ne.s32.totalorder %s305, %s319
    %p321 = scmp.eq.s32.totalorder %s33, 0
    %p322 = por %p320, %p321
    %s324 = sadd.s32 %s323, 1
    %p327 = scmp.eq.s32.totalorder %s27, 1
    %p328 = scmp.ne.s32.totalorder %s323, %s325
    %p329 = scmp.eq.s32.totalorder %s27, 0
    %p330 = por %p328, %p329
    %p331 = scmp.ne.s32.totalorder %s323, %s325
    %p332 = scmp.eq.s32.totalorder %s32, 1
    %p333 = por %p331, %p332
    %p334 = scmp.ne.s32.totalorder %s325, %s326
    %p335 = scmp.eq.s32.totalorder %s32, 0
    %p336 = por %p334, %p335
    %p337 = scmp.ne.s32.totalorder %s325, %s326
    %p338 = scmp.eq.s32.totalorder %s33, 1
    %p339 = por %p337, %p338
    %p341 = scmp.ne.s32.totalorder %s326, %s340
    %p342 = scmp.eq.s32.totalorder %s33, 0
    %p343 = por %p341, %p342
    %s345 = sadd.s32 %s344, 1
    %p348 = scmp.eq.s32.totalorder %s27, 1
    %p349 = scmp.ne.s32.totalorder %s344, %s346
    %p350 = scmp.eq.s32.totalorder %s27, 0
    %p351 = por %p349, %p350
    %p352 = scmp.ne.s32.totalorder %s344, %s346
    %p353 = scmp.eq.s32.totalorder %s32, 1
    %p354 = por %p352, %p353
    %p355 = scmp.ne.s32.totalorder %s346, %s347
    %p356 = scmp.eq.s32.totalorder %s32, 0
    %p357 = por %p355, %p356
    %p358 = scmp.ne.s32.totalorder %s346, %s347
    %p359 = scmp.eq.s32.totalorder %s33, 1
    %p360 = por %p358, %p359
    %p362 = scmp.ne.s32.totalorder %s347, %s361
    %p363 = scmp.eq.s32.totalorder %s33, 0
    %p364 = por %p362, %p363
    %s366 = sadd.s32 %s365, 1
    %p369 = scmp.eq.s32.totalorder %s27, 1
    %p370 = scmp.ne.s32.totalorder %s365, %s367
    %p371 = scmp.eq.s32.totalorder %s27, 0
    %p372 = por %p370, %p371
    %p373 = scmp.ne.s32.totalorder %s365, %s367
    %p374 = scmp.eq.s32.totalorder %s32, 1
    %p375 = por %p373, %p374
    %p376 = scmp.ne.s32.totalorder %s367, %s368
    %p377 = scmp.eq.s32.totalorder %s32, 0
    %p378 = por %p376, %p377
    %p379 = scmp.ne.s32.totalorder %s367, %s368
    %p380 = scmp.eq.s32.totalorder %s33, 1
    %p381 = por %p379, %p380
    %p383 = scmp.ne.s32.totalorder %s368, %s382
    %p384 = scmp.eq.s32.totalorder %s33, 0
    %p385 = por %p383, %p384
    %s387 = sadd.s32 %s386, 1
    %p390 = scmp.eq.s32.totalorder %s27, 1
    %p391 = scmp.ne.s32.totalorder %s386, %s388
    %p392 = scmp.eq.s32.totalorder %s27, 0
    %p393 = por %p391, %p392
    %p394 = scmp.ne.s32.totalorder %s386, %s388
    %p395 = scmp.eq.s32.totalorder %s32, 1
    %p396 = por %p394, %p395
    %p397 = scmp.ne.s32.totalorder %s388, %s389
    %p398 = scmp.eq.s32.totalorder %s32, 0
    %p399 = por %p397, %p398
    %p400 = scmp.ne.s32.totalorder %s388, %s389
    %p401 = scmp.eq.s32.totalorder %s33, 1
    %p402 = por %p400, %p401
    %p404 = scmp.ne.s32.totalorder %s389, %s403
    %p405 = scmp.eq.s32.totalorder %s33, 0
    %p406 = por %p404, %p405
    %s408 = sadd.s32 %s407, 1
    %p411 = scmp.eq.s32.totalorder %s27, 1
    %p412 = scmp.ne.s32.totalorder %s407, %s409
    %p413 = scmp.eq.s32.totalorder %s27, 0
    %p414 = por %p412, %p413
    %p415 = scmp.ne.s32.totalorder %s407, %s409
    %p416 = scmp.eq.s32.totalorder %s32, 1
    %p417 = por %p415, %p416
    %p418 = scmp.ne.s32.totalorder %s409, %s410
    %p419 = scmp.eq.s32.totalorder %s32, 0
    %p420 = por %p418, %p419
    %p421 = scmp.ne.s32.totalorder %s409, %s410
    %p422 = scmp.eq.s32.totalorder %s33, 1
    %p423 = por %p421, %p422
    %p425 = scmp.ne.s32.totalorder %s410, %s424
    %p426 = scmp.eq.s32.totalorder %s33, 0
    %p427 = por %p425, %p426
    %s429 = sadd.s32 %s428, 1
    %p432 = scmp.eq.s32.totalorder %s27, 1
    %p433 = scmp.ne.s32.totalorder %s428, %s430
    %p434 = scmp.eq.s32.totalorder %s27, 0
    %p435 = por %p433, %p434
    %p436 = scmp.ne.s32.totalorder %s428, %s430
    %p437 = scmp.eq.s32.totalorder %s32, 1
    %p438 = por %p436, %p437
    %p439 = scmp.ne.s32.totalorder %s430, %s431
    %p440 = scmp.eq.s32.totalorder %s32, 0
    %p441 = por %p439, %p440
    %p442 = scmp.ne.s32.totalorder %s430, %s431
    %p443 = scmp.eq.s32.totalorder %s33, 1
    %p444 = por %p442, %p443
    %p446 = scmp.ne.s32.totalorder %s431, %s445
    %p447 = scmp.eq.s32.totalorder %s33, 0
    %p448 = por %p446, %p447
    %s449 = ssub.s32 %s27, %s34
    %p450 = scmp.eq.s32.totalorder %s449, 0
    %s452 = sadd.s32 %s451, 1
    %s453 = scalar_select %p450, %s451, %s452
    %p456 = pneg %p450
    %p457 = scmp.eq.s32.totalorder %s27, 1
    %p458 = por %p456, %p457
    %p459 = scmp.ne.s32.totalorder %s451, %s454
    %p460 = scmp.eq.s32.totalorder %s27, 0
    %p461 = por %p459, %p460
    %p462 = scmp.ne.s32.totalorder %s451, %s454
    %p463 = scmp.eq.s32.totalorder %s32, 1
    %p464 = por %p462, %p463
    %p465 = scmp.ne.s32.totalorder %s454, %s455
    %p466 = scmp.eq.s32.totalorder %s32, 0
    %p467 = por %p465, %p466
    %p468 = scmp.ne.s32.totalorder %s454, %s455
    %p469 = scmp.eq.s32.totalorder %s33, 1
    %p470 = por %p468, %p469
    %p472 = scmp.ne.s32.totalorder %s455, %s471
    %p473 = scmp.eq.s32.totalorder %s33, 0
    %p474 = por %p472, %p473
    %s475 = ssub.s32 %s27, %s34
    %p476 = scmp.eq.s32.totalorder %s475, 0
    %s478 = sadd.s32 %s477, 1
    %s479 = scalar_select %p476, %s477, %s478
    %p482 = pneg %p476
    %p483 = scmp.eq.s32.totalorder %s27, 1
    %p484 = por %p482, %p483
    %p485 = scmp.ne.s32.totalorder %s477, %s480
    %p486 = scmp.eq.s32.totalorder %s27, 0
    %p487 = por %p485, %p486
    %p488 = scmp.ne.s32.totalorder %s477, %s480
    %p489 = scmp.eq.s32.totalorder %s32, 1
    %p490 = por %p488, %p489
    %p491 = scmp.ne.s32.totalorder %s480, %s481
    %p492 = scmp.eq.s32.totalorder %s32, 0
    %p493 = por %p491, %p492
    %p494 = scmp.ne.s32.totalorder %s480, %s481
    %p495 = scmp.eq.s32.totalorder %s33, 1
    %p496 = por %p494, %p495
    %p498 = scmp.ne.s32.totalorder %s481, %s497
    %p499 = scmp.eq.s32.totalorder %s33, 0
    %p500 = por %p498, %p499
    %p501 = scmp.le.s32.totalorder 1, %s27
    %p502 = scmp.lt.s32.totalorder %s27, 3
    %p503 = pnand %p501, %p502
    %p504 = pneg %p503
    // Predicated region
    $region9: #{sd3_forward.7} parent=5 // pred_check
      _
    $region10: #{sd3_forward.7} parent=5 // pred_check_branch
      %506 = sbr.rel (%p503) target = $region12
    $region11: #{sd3_forward.7} parent=5 // pred_region
      %s507 = ssub.s32 %s27, 1
      // Predicated region
      $region13: #{sd3_forward.7} parent=11 // pred_check
        %p508 = pneg %p126
      $region14: #{sd3_forward.7} parent=11 // pred_check_branch
        %510 = sbr.rel (%p508) target = $region16
      $region15: #{sd3_forward.7} parent=11 // pred_region
        _
      $region16: #{sd3_forward.7} parent=11 // pred_fallthru
        _
      // Predicated region
      $region17: #{sd3_forward.7} parent=11 // pred_check
        %p511 = pneg %p147
      $region18: #{sd3_forward.7} parent=11 // pred_check_branch
        %513 = sbr.rel (%p511) target = $region20
      $region19: #{sd3_forward.7} parent=11 // pred_region
        _
      $region20: #{sd3_forward.7} parent=11 // pred_fallthru
        _
      // Predicated region
      $region21: #{sd3_forward.7} parent=11 // pred_check
        %p514 = pneg %p168
      $region22: #{sd3_forward.7} parent=11 // pred_check_branch
        %516 = sbr.rel (%p514) target = $region24
      $region23: #{sd3_forward.7} parent=11 // pred_region
        _
      $region24: #{sd3_forward.7} parent=11 // pred_fallthru
        _
      // Predicated region
      $region25: #{sd3_forward.7} parent=11 // pred_check
        %p517 = pneg %p189
      $region26: #{sd3_forward.7} parent=11 // pred_check_branch
        %519 = sbr.rel (%p517) target = $region28
      $region27: #{sd3_forward.7} parent=11 // pred_region
        _
      $region28: #{sd3_forward.7} parent=11 // pred_fallthru
        _
      // Predicated region
      $region29: #{sd3_forward.7} parent=11 // pred_check
        %p520 = pneg %p210
      $region30: #{sd3_forward.7} parent=11 // pred_check_branch
        %522 = sbr.rel (%p520) target = $region32
      $region31: #{sd3_forward.7} parent=11 // pred_region
        _
      $region32: #{sd3_forward.7} parent=11 // pred_fallthru
        _
      // Predicated region
      $region33: #{sd3_forward.7} parent=11 // pred_check
        %p523 = pneg %p231
      $region34: #{sd3_forward.7} parent=11 // pred_check_branch
        %525 = sbr.rel (%p523) target = $region36
      $region35: #{sd3_forward.7} parent=11 // pred_region
        _
      $region36: #{sd3_forward.7} parent=11 // pred_fallthru
        _
      // Predicated region
      $region37: #{sd3_forward.7} parent=11 // pred_check
        %p526 = pneg %p252
      $region38: #{sd3_forward.7} parent=11 // pred_check_branch
        %528 = sbr.rel (%p526) target = $region40
      $region39: #{sd3_forward.7} parent=11 // pred_region
        _
      $region40: #{sd3_forward.7} parent=11 // pred_fallthru
        _
      // Predicated region
      $region41: #{sd3_forward.7} parent=11 // pred_check
        %p529 = pneg %p273
      $region42: #{sd3_forward.7} parent=11 // pred_check_branch
        %531 = sbr.rel (%p529) target = $region44
      $region43: #{sd3_forward.7} parent=11 // pred_region
        _
      $region44: #{sd3_forward.7} parent=11 // pred_fallthru
        _
      // Predicated region
      $region45: #{sd3_forward.7} parent=11 // pred_check
        %p532 = pneg %p294
      $region46: #{sd3_forward.7} parent=11 // pred_check_branch
        %534 = sbr.rel (%p532) target = $region48
      $region47: #{sd3_forward.7} parent=11 // pred_region
        _
      $region48: #{sd3_forward.7} parent=11 // pred_fallthru
        _
      // Predicated region
      $region49: #{sd3_forward.7} parent=11 // pred_check
        %p535 = pneg %p315
      $region50: #{sd3_forward.7} parent=11 // pred_check_branch
        %537 = sbr.rel (%p535) target = $region52
      $region51: #{sd3_forward.7} parent=11 // pred_region
        _
      $region52: #{sd3_forward.7} parent=11 // pred_fallthru
        _
      // Predicated region
      $region53: #{sd3_forward.7} parent=11 // pred_check
        %p538 = pneg %p336
      $region54: #{sd3_forward.7} parent=11 // pred_check_branch
        %540 = sbr.rel (%p538) target = $region56
      $region55: #{sd3_forward.7} parent=11 // pred_region
        _
      $region56: #{sd3_forward.7} parent=11 // pred_fallthru
        _
      // Predicated region
      $region57: #{sd3_forward.7} parent=11 // pred_check
        %p541 = pneg %p357
      $region58: #{sd3_forward.7} parent=11 // pred_check_branch
        %543 = sbr.rel (%p541) target = $region60
      $region59: #{sd3_forward.7} parent=11 // pred_region
        _
      $region60: #{sd3_forward.7} parent=11 // pred_fallthru
        _
      // Predicated region
      $region61: #{sd3_forward.7} parent=11 // pred_check
        %p544 = pneg %p378
      $region62: #{sd3_forward.7} parent=11 // pred_check_branch
        %546 = sbr.rel (%p544) target = $region64
      $region63: #{sd3_forward.7} parent=11 // pred_region
        _
      $region64: #{sd3_forward.7} parent=11 // pred_fallthru
        _
      // Predicated region
      $region65: #{sd3_forward.7} parent=11 // pred_check
        %p547 = pneg %p399
      $region66: #{sd3_forward.7} parent=11 // pred_check_branch
        %549 = sbr.rel (%p547) target = $region68
      $region67: #{sd3_forward.7} parent=11 // pred_region
        _
      $region68: #{sd3_forward.7} parent=11 // pred_fallthru
        _
      // Predicated region
      $region69: #{sd3_forward.7} parent=11 // pred_check
        %p550 = pneg %p420
      $region70: #{sd3_forward.7} parent=11 // pred_check_branch
        %552 = sbr.rel (%p550) target = $region72
      $region71: #{sd3_forward.7} parent=11 // pred_region
        _
      $region72: #{sd3_forward.7} parent=11 // pred_fallthru
        _
      // Predicated region
      $region73: #{sd3_forward.7} parent=11 // pred_check
        %p553 = pneg %p441
      $region74: #{sd3_forward.7} parent=11 // pred_check_branch
        %555 = sbr.rel (%p553) target = $region76
      $region75: #{sd3_forward.7} parent=11 // pred_region
        _
      $region76: #{sd3_forward.7} parent=11 // pred_fallthru
        _
    $region12: #{sd3_forward.7} parent=5 // pred_fallthru
      _
    %p556 = scmp.lt.s32.totalorder %s27, 2
    // Predicated region
    $region77: #{sd3_forward.7} parent=5 // pred_check
      %p557 = pneg %p556
    $region78: #{sd3_forward.7} parent=5 // pred_check_branch
      %559 = sbr.rel (%p557) target = $region80
    $region79: #{sd3_forward.7} parent=5 // pred_region
      // Predicated region
      $region81: #{sd3_forward.7} parent=79 // pred_check
        %p560 = pneg %p47
      $region82: #{sd3_forward.7} parent=79 // pred_check_branch
        %562 = sbr.rel (%p560) target = $region84
      $region83: #{sd3_forward.7} parent=79 // pred_region
        %p563 = scmp.lt.s32.totalorder %s27, 1
        %s564 = scalar_select %p563, %s27, 1
        %s565 = smul.addr %s564, 8
        %s566 = smul.addr %s565, 8
        %s567 = scalar_lea.vmem %s0, %s566
      $region84: #{sd3_forward.7} parent=79 // pred_fallthru
        _
      // Predicated region
      $region85: #{sd3_forward.7} parent=79 // pred_check
        %p568 = pneg %p73
      $region86: #{sd3_forward.7} parent=79 // pred_check_branch
        %570 = sbr.rel (%p568) target = $region88
      $region87: #{sd3_forward.7} parent=79 // pred_region
        %p571 = scmp.lt.s32.totalorder %s27, 1
        %s572 = scalar_select %p571, %s27, 1
        %s573 = smul.addr %s572, 8
        %s574 = scalar_lea.vmem %s1, %s573
      $region88: #{sd3_forward.7} parent=79 // pred_fallthru
        _
      // Predicated region
      $region89: #{sd3_forward.7} parent=79 // pred_check
        %p575 = pneg %p99
      $region90: #{sd3_forward.7} parent=79 // pred_check_branch
        %577 = sbr.rel (%p575) target = $region92
      $region91: #{sd3_forward.7} parent=79 // pred_region
        %p578 = scmp.lt.s32.totalorder %s27, 1
        %s579 = scalar_select %p578, %s27, 1
        %s580 = smul.addr %s579, 2
        %s581 = smul.addr %s580, 8
        %s582 = scalar_lea.vmem %s2, %s581
      $region92: #{sd3_forward.7} parent=79 // pred_fallthru
        _
    $region80: #{sd3_forward.7} parent=5 // pred_fallthru
      _
    %p583 = scmp.le.s32.totalorder 1, %s27
    %p584 = scmp.lt.s32.totalorder %s27, 3
    %p585 = pnand %p583, %p584
    %p586 = pneg %p585
    // Predicated region
    $region93: #{sd3_forward.7} parent=5 // pred_check
      _
    $region94: #{sd3_forward.7} parent=5 // pred_check_branch
      %588 = sbr.rel (%p585) target = $region96
    $region95: #{sd3_forward.7} parent=5 // pred_region
      %s589 = ssub.s32 %s27, 1
      %p590 = scmp.lt.s32.totalorder %s32, 1
      %s591 = scalar_select %p590, %s32, 1
      %s592 = smul.addr %s591, 8
      %s593 = smul.addr %s592, 8
      %s594 = scalar_lea.vmem %s0, %s593
      %p595 = pneg %p53
      %p596 = pneg %p50
      %p597 = scmp.lt.s32.totalorder %s32, 1
      %s598 = scalar_select %p597, %s32, 1
      %s599 = smul.addr %s598, 8
      %s600 = scalar_lea.vmem %s1, %s599
      %p601 = pneg %p79
      %p602 = pneg %p76
      %p603 = scmp.lt.s32.totalorder %s32, 1
      %s604 = scalar_select %p603, %s32, 1
      %s605 = smul.addr %s604, 2
      %s606 = smul.addr %s605, 8
      %s607 = scalar_lea.vmem %s2, %s606
      %p608 = pneg %p105
      %p609 = pneg %p102
      %p610 = pneg %p126
      %p611 = pneg %p123
      %p612 = pneg %p147
      %p613 = pneg %p144
      %p614 = pneg %p168
      %p615 = pneg %p165
      %p616 = pneg %p189
      %p617 = pneg %p186
      %p618 = pneg %p210
      %p619 = pneg %p207
      %p620 = pneg %p231
      %p621 = pneg %p228
      %p622 = pneg %p252
      %p623 = pneg %p249
      %p624 = pneg %p273
      %p625 = pneg %p270
      %p626 = pneg %p294
      %p627 = pneg %p291
      %p628 = pneg %p315
      %p629 = pneg %p312
      %p630 = pneg %p336
      %p631 = pneg %p333
      %p632 = pneg %p357
      %p633 = pneg %p354
      %p634 = pneg %p378
      %p635 = pneg %p375
      %p636 = pneg %p399
      %p637 = pneg %p396
      %p638 = pneg %p420
      %p639 = pneg %p417
      %p640 = pneg %p441
      %p641 = pneg %p438
      %p642 = pneg %p467
      %p643 = pneg %p464
      %p644 = scmp.lt.s32.totalorder %s32, 1
      %s645 = scalar_select %p644, %s32, 1
      %s646 = smul.addr %s645, 8
      %s647 = smul.addr %s646, 8
      %s648 = scalar_lea.vmem %s19, %s647
      %p649 = pneg %p493
      %p650 = pneg %p490
      %p651 = scmp.lt.s32.totalorder %s32, 1
      %s652 = scalar_select %p651, %s32, 1
      %s653 = smul.addr %s652, 8
      %s654 = scalar_lea.vmem %s20, %s653
      %p655 = scmp.lt.s32.totalorder %s32, 1
      %s656 = scalar_select %p655, %s32, 1
      %s657 = smul.addr %s656, 8
      %s658 = smul.addr %s657, 8
      %s659 = scalar_lea.vmem %s0, %s658
      %p660 = scmp.lt.s32.totalorder %s32, 1
      %s661 = scalar_select %p660, %s32, 1
      %s662 = smul.addr %s661, 8
      %s663 = scalar_lea.vmem %s1, %s662
      %p664 = scmp.lt.s32.totalorder %s32, 1
      %s665 = scalar_select %p664, %s32, 1
      %s666 = smul.addr %s665, 2
      %s667 = smul.addr %s666, 8
      %s668 = scalar_lea.vmem %s2, %s667
      %p669 = scmp.lt.s32.totalorder %s32, 1
      %s670 = scalar_select %p669, %s32, 1
      %s671 = smul.addr %s670, 8
      %s672 = smul.addr %s671, 8
      %s673 = scalar_lea.vmem %s19, %s672
      %p674 = scmp.lt.s32.totalorder %s32, 1
      %s675 = scalar_select %p674, %s32, 1
      %s676 = smul.addr %s675, 8
      %s677 = scalar_lea.vmem %s20, %s676
      %v679 = vld [vmem:[%s659] sm:$0xff]
      %v680 = vld [vmem:[%s659 + $0x8] sm:$0xff]
      %v681 = vld [vmem:[%s659 + $0x10] sm:$0xff]
      %v682 = vld [vmem:[%s659 + $0x18] sm:$0xff]
      %v683 = vld [vmem:[%s659 + $0x20] sm:$0xff]
      %v684 = vld [vmem:[%s659 + $0x28] sm:$0xff]
      %v685 = vld [vmem:[%s659 + $0x30] sm:$0xff]
      %v686 = vld [vmem:[%s659 + $0x38] sm:$0xff]
      %v687 = vld [vmem:[%s663] sm:$0xff]
      %v688 = vld [vmem:[%s668] sm:$0xff]
      %v689 = vld [vmem:[%s668 + $0x8] sm:$0xf]
      %690 = vadd.xlane.f32.xlu0 %v679
      %v691 = vpop.xlane.xlu0 %690
      %692 = vadd.xlane.f32.xlu0 %v680
      %v693 = vpop.xlane.xlu0 %692
      %694 = vadd.xlane.f32.xlu0 %v681
      %v695 = vpop.xlane.xlu0 %694
      %696 = vadd.xlane.f32.xlu0 %v682
      %v697 = vpop.xlane.xlu0 %696
      %698 = vadd.xlane.f32.xlu0 %v683
      %v699 = vpop.xlane.xlu0 %698
      %700 = vadd.xlane.f32.xlu0 %v684
      %v701 = vpop.xlane.xlu0 %700
      %702 = vadd.xlane.f32.xlu0 %v685
      %v703 = vpop.xlane.xlu0 %702
      %704 = vadd.xlane.f32.xlu0 %v686
      %v705 = vpop.xlane.xlu0 %704
      %v706 = vrcp.pop 128.0
      %v707 = vmul.f32 %v691, %v706
      %v708 = vmul.f32 %v693, %v706
      %v709 = vmul.f32 %v695, %v706
      %v710 = vmul.f32 %v697, %v706
      %v711 = vmul.f32 %v699, %v706
      %v712 = vmul.f32 %v701, %v706
      %v713 = vmul.f32 %v703, %v706
      %v714 = vmul.f32 %v705, %v706
      %v715 = vsub.f32 %v679, %v707
      %v716 = vsub.f32 %v680, %v708
      %v717 = vsub.f32 %v681, %v709
      %v718 = vsub.f32 %v682, %v710
      %v719 = vsub.f32 %v683, %v711
      %v720 = vsub.f32 %v684, %v712
      %v721 = vsub.f32 %v685, %v713
      %v722 = vsub.f32 %v686, %v714
      %v723 = vmul.f32 %v715, %v715
      %v724 = vmul.f32 %v716, %v716
      %v725 = vmul.f32 %v717, %v717
      %v726 = vmul.f32 %v718, %v718
      %v727 = vmul.f32 %v719, %v719
      %v728 = vmul.f32 %v720, %v720
      %v729 = vmul.f32 %v721, %v721
      %v730 = vmul.f32 %v722, %v722
      %731 = vadd.xlane.f32.xlu0 %v723
      %v732 = vpop.xlane.xlu0 %731
      %733 = vadd.xlane.f32.xlu0 %v724
      %v734 = vpop.xlane.xlu0 %733
      %735 = vadd.xlane.f32.xlu0 %v725
      %v736 = vpop.xlane.xlu0 %735
      %737 = vadd.xlane.f32.xlu0 %v726
      %v738 = vpop.xlane.xlu0 %737
      %739 = vadd.xlane.f32.xlu0 %v727
      %v740 = vpop.xlane.xlu0 %739
      %741 = vadd.xlane.f32.xlu0 %v728
      %v742 = vpop.xlane.xlu0 %741
      %743 = vadd.xlane.f32.xlu0 %v729
      %v744 = vpop.xlane.xlu0 %743
      %745 = vadd.xlane.f32.xlu0 %v730
      %v746 = vpop.xlane.xlu0 %745
      %v747 = vmul.f32 %v732, %v706
      %v748 = vmul.f32 %v734, %v706
      %v749 = vmul.f32 %v736, %v706
      %v750 = vmul.f32 %v738, %v706
      %v751 = vmul.f32 %v740, %v706
      %v752 = vmul.f32 %v742, %v706
      %v753 = vmul.f32 %v744, %v706
      %v754 = vmul.f32 %v746, %v706
      %v755 = vadd.f32 %v747, 1e-06
      %v756 = vadd.f32 %v748, 1e-06
      %v757 = vadd.f32 %v749, 1e-06
      %v758 = vadd.f32 %v750, 1e-06
      %v759 = vadd.f32 %v751, 1e-06
      %v760 = vadd.f32 %v752, 1e-06
      %v761 = vadd.f32 %v753, 1e-06
      %v762 = vadd.f32 %v754, 1e-06
      %v763 = vrsqrt.pop %v755
      %v764 = vrsqrt.pop %v756
      %v765 = vrsqrt.pop %v757
      %v766 = vrsqrt.pop %v758
      %v767 = vrsqrt.pop %v759
      %v768 = vrsqrt.pop %v760
      %v769 = vrsqrt.pop %v761
      %v770 = vrsqrt.pop %v762
      %v771 = vmul.f32 %v715, %v763
      %v772 = vmul.f32 %v716, %v764
      %v773 = vmul.f32 %v717, %v765
      %v774 = vmul.f32 %v718, %v766
      %v775 = vmul.f32 %v719, %v767
      %v776 = vmul.f32 %v720, %v768
      %v777 = vmul.f32 %v721, %v769
      %v778 = vmul.f32 %v722, %v770
      %v779 = vadd.f32 %v688, 1.0
      %v780 = vlaneseq
      %v781 = vshrl.u32 %v780, 7
      %v782 = vsub.s32 1, %v781
      %v783 = vrot.slane %v779, %v782
      %v784 = vmul.f32 %v771, %v783
      %v785 = vmul.f32 %v772, %v783
      %v786 = vmul.f32 %v773, %v783
      %v787 = vmul.f32 %v774, %v783
      %v788 = vmul.f32 %v775, %v783
      %v789 = vmul.f32 %v776, %v783
      %v790 = vmul.f32 %v777, %v783
      %v791 = vmul.f32 %v778, %v783
      %v792 = vlaneseq
      %v793 = vshrl.u32 %v792, 7
      %v794 = vsub.s32 0, %v793
      %v795 = vrot.slane %v688, %v794
      %v796 = vadd.f32 %v784, %v795
      %v797 = vadd.f32 %v785, %v795
      %v798 = vadd.f32 %v786, %v795
      %v799 = vadd.f32 %v787, %v795
      %v800 = vadd.f32 %v788, %v795
      %v801 = vadd.f32 %v789, %v795
      %v802 = vadd.f32 %v790, %v795
      %v803 = vadd.f32 %v791, %v795
      %804 = vadd.xlane.f32.xlu0 %v687
      %v805 = vpop.xlane.xlu0 %804
      %v806 = vmul.f32 %v805, %v706
      %v807 = vsub.f32 %v687, %v806
      %v808 = vmul.f32 %v807, %v807
      %809 = vadd.xlane.f32.xlu0 %v808
      %v810 = vpop.xlane.xlu0 %809
      %v811 = vmul.f32 %v810, %v706
      %v812 = vadd.f32 %v811, 1e-06
      %v813 = vrsqrt.pop %v812
      %v814 = vmul.f32 %v807, %v813
      %v815 = vlaneseq
      %v816 = vshrl.u32 %v815, 7
      %v817 = vsub.s32 7, %v816
      %v818 = vrot.slane %v779, %v817
      %v819 = vmul.f32 %v814, %v818
      %v820 = vlaneseq
      %v821 = vshrl.u32 %v820, 7
      %v822 = vsub.s32 6, %v821
      %v823 = vrot.slane %v688, %v822
      %v824 = vadd.f32 %v819, %v823
      %v825 = vpack.c.bf16 %v797, %v796
      %v826 = vpack.c.bf16 %v799, %v798
      %v827 = vpack.c.bf16 %v801, %v800
      %v828 = vpack.c.bf16 %v803, %v802
      %v829 = vld [vmem:[%s3] sm:$0xff]
      %v830 = vld [vmem:[%s3 + $0x8] sm:$0xf]
      %v831 = vld [vmem:[%s3 + $0xc] sm:$0xff]
      %v832 = vld [vmem:[%s3 + $0x14] sm:$0xf]
      %v833 = vld [vmem:[%s3 + $0x18] sm:$0xff]
      %v834 = vld [vmem:[%s3 + $0x20] sm:$0xf]
      %v835 = vld [vmem:[%s3 + $0x24] sm:$0xff]
      %v836 = vld [vmem:[%s3 + $0x2c] sm:$0xf]
      %v837 = vld [vmem:[%s3 + $0x30] sm:$0xff]
      %v838 = vld [vmem:[%s3 + $0x38] sm:$0xf]
      %v839 = vld [vmem:[%s3 + $0x3c] sm:$0xff]
      %v840 = vld [vmem:[%s3 + $0x44] sm:$0xf]
      %v841 = vld [vmem:[%s3 + $0x48] sm:$0xff]
      %v842 = vld [vmem:[%s3 + $0x50] sm:$0xf]
      %v843 = vld [vmem:[%s3 + $0x54] sm:$0xff]
      %v844 = vld [vmem:[%s3 + $0x5c] sm:$0xf]
      %v845 = vld [vmem:[%s3 + $0x60] sm:$0xff]
      %v846 = vld [vmem:[%s3 + $0x68] sm:$0xf]
      %v847 = vld [vmem:[%s3 + $0x6c] sm:$0xff]
      %v848 = vld [vmem:[%s3 + $0x74] sm:$0xf]
      %v849 = vld [vmem:[%s3 + $0x78] sm:$0xff]
      %v850 = vld [vmem:[%s3 + $0x80] sm:$0xf]
      %v851 = vld [vmem:[%s3 + $0x84] sm:$0xff]
      %v852 = vld [vmem:[%s3 + $0x8c] sm:$0xf]
      %v853 = vld [vmem:[%s3 + $0x90] sm:$0xff]
      %v854 = vld [vmem:[%s3 + $0x98] sm:$0xf]
      %v855 = vld [vmem:[%s3 + $0x9c] sm:$0xff]
      %v856 = vld [vmem:[%s3 + $0xa4] sm:$0xf]
      %v857 = vld [vmem:[%s3 + $0xa8] sm:$0xff]
      %v858 = vld [vmem:[%s3 + $0xb0] sm:$0xf]
      %v859 = vld [vmem:[%s3 + $0xb4] sm:$0xff]
      %v860 = vld [vmem:[%s3 + $0xbc] sm:$0xf]
      %v861 = vld [vmem:[%s4] sm:$0x7]
      %v863 = vlaneseq
      %v864 = vshrl.u32 %v863, 7
      %v865 = vsub.s32 0, %v864
      %v866 = vrot.slane %v861, %v865
      %v867 = vlaneseq
      %v868 = vshrl.u32 %v867, 7
      %v869 = vsub.s32 1, %v868
      %v870 = vrot.slane %v861, %v869
      %v871 = vlaneseq
      %v872 = vshrl.u32 %v871, 7
      %v873 = vsub.s32 2, %v872
      %v874 = vrot.slane %v861, %v873
      %v910 = vunpack.c.l.b16 %v829
      %v911 = vunpack.c.h.b16 %v829
      %v912 = vunpack.c.l.b16 %v830
      %v913 = vunpack.c.l.b16 %v831
      %v914 = vunpack.c.h.b16 %v831
      %v915 = vunpack.c.l.b16 %v832
      %v916 = vunpack.c.l.b16 %v833
      %v917 = vunpack.c.h.b16 %v833
      %v918 = vunpack.c.l.b16 %v834
      %v919 = vunpack.c.l.b16 %v835
      %v920 = vunpack.c.h.b16 %v835
      %v921 = vunpack.c.l.b16 %v836
      %v922 = vunpack.c.l.b16 %v837
      %v923 = vunpack.c.h.b16 %v837
      %v924 = vunpack.c.l.b16 %v838
      %v925 = vunpack.c.l.b16 %v839
      %v926 = vunpack.c.h.b16 %v839
      %v927 = vunpack.c.l.b16 %v840
      %v928 = vunpack.c.l.b16 %v841
      %v929 = vunpack.c.h.b16 %v841
      %v930 = vunpack.c.l.b16 %v842
      %v931 = vunpack.c.l.b16 %v843
      %v932 = vunpack.c.h.b16 %v843
      %v933 = vunpack.c.l.b16 %v844
      %v934 = vunpack.c.l.b16 %v845
      %v935 = vunpack.c.h.b16 %v845
      %v936 = vunpack.c.l.b16 %v846
      %v937 = vunpack.c.l.b16 %v847
      %v938 = vunpack.c.h.b16 %v847
      %v939 = vunpack.c.l.b16 %v848
      %v940 = vunpack.c.l.b16 %v849
      %v941 = vunpack.c.h.b16 %v849
      %v942 = vunpack.c.l.b16 %v850
      %v943 = vunpack.c.l.b16 %v851
      %v944 = vunpack.c.h.b16 %v851
      %v945 = vunpack.c.l.b16 %v852
      %v946 = vunpack.c.l.b16 %v853
      %v947 = vunpack.c.h.b16 %v853
      %v948 = vunpack.c.l.b16 %v854
      %v949 = vunpack.c.l.b16 %v855
      %v950 = vunpack.c.h.b16 %v855
      %v951 = vunpack.c.l.b16 %v856
      %v952 = vunpack.c.l.b16 %v857
      %v953 = vunpack.c.h.b16 %v857
      %v954 = vunpack.c.l.b16 %v858
      %v955 = vunpack.c.l.b16 %v859
      %v956 = vunpack.c.h.b16 %v859
      %v957 = vunpack.c.l.b16 %v860
      %v958 = vpack.c.b16 %v913, %v910
      %v959 = vpack.c.b16 %v914, %v911
      %v960 = vpack.c.b16 %v915, %v912
      %v961 = vpack.c.b16 %v919, %v916
      %v962 = vpack.c.b16 %v920, %v917
      %v963 = vpack.c.b16 %v921, %v918
      %v964 = vpack.c.b16 %v925, %v922
      %v965 = vpack.c.b16 %v926, %v923
      %v966 = vpack.c.b16 %v927, %v924
      %v967 = vpack.c.b16 %v931, %v928
      %v968 = vpack.c.b16 %v932, %v929
      %v969 = vpack.c.b16 %v933, %v930
      %v970 = vpack.c.b16 %v937, %v934
      %v971 = vpack.c.b16 %v938, %v935
      %v972 = vpack.c.b16 %v939, %v936
      %v973 = vpack.c.b16 %v943, %v940
      %v974 = vpack.c.b16 %v944, %v941
      %v975 = vpack.c.b16 %v945, %v942
      %v976 = vpack.c.b16 %v949, %v946
      %v977 = vpack.c.b16 %v950, %v947
      %v978 = vpack.c.b16 %v951, %v948
      %v979 = vpack.c.b16 %v955, %v952
      %v980 = vpack.c.b16 %v956, %v953
      %v981 = vpack.c.b16 %v957, %v954
      %1006 = vmatprep.subr.bf16.mxu0 %v959
      %1007 = vmatpush1.bf16.msra.mxu0 %v958
      %1008 = vmatprep.subr.bf16.mxu0 %v962
      %1009 = vmatpush1.bf16.msra.mxu0 %v961
      %1010 = vmatprep.subr.bf16.mxu0 %v965
      %1011 = vmatpush1.bf16.msra.mxu0 %v964
      %1012 = vmatprep.subr.bf16.mxu0 %v968
      %1013 = vmatpush1.bf16.msra.mxu0 %v967
      %1014 = vmatprep.subr.bf16.mxu0 %v971
      %1015 = vmatpush1.bf16.msra.mxu0 %v970
      %1016 = vmatprep.subr.bf16.mxu0 %v974
      %1017 = vmatpush1.bf16.msra.mxu0 %v973
      %1018 = vmatprep.subr.bf16.mxu0 %v977
      %1019 = vmatpush1.bf16.msra.mxu0 %v976
      %1020 = vmatprep.subr.bf16.mxu0 %v980
      %1021 = vmatpush1.bf16.msra.mxu0 %v979
      %1022 = vmatprep.subr.bf16.mxu0 0
      %1023 = vmatpush1.bf16.msra.mxu0 0
      %1024 = vmatprep.subr.bf16.mxu0 0
      %1025 = vmatpush1.bf16.msra.mxu0 0
      %1026 = vmatprep.subr.bf16.mxu0 0
      %1027 = vmatpush1.bf16.msra.mxu0 0
      %1028 = vmatprep.subr.bf16.mxu0 0
      %1029 = vmatpush1.bf16.msra.mxu0 0
      %1030 = vmatprep.subr.bf16.mxu0 0
      %1031 = vmatpush1.bf16.msra.mxu0 0
      %1032 = vmatprep.subr.bf16.mxu0 0
      %1033 = vmatpush1.bf16.msra.mxu0 0
      %1034 = vmatprep.subr.bf16.mxu0 0
      %1035 = vmatpush1.bf16.msra.mxu0 0
      %1036 = vmatprep.subr.bf16.mxu0 0
      %1037 = vmatpush1.bf16.msra.mxu0 0
      %1038 = vmatprep.mubr.bf16.mxu0 0
      %1039 = vmatmul.mubr.bf16.gmra.mrb[0].mxu0 %v825
      %v1040 = vpop.f32.mrb[0].mxu0
      %v1041 = vadd.f32 %v866, %v1040
      %v1042 = vpop.f32.mrb[0].mxu0
      %v1043 = vadd.f32 %v870, %v1042
      %v1044 = vpop.f32.mrb[0].mxu0
      %v1045 = vadd.f32 %v866, %v1044
      %v1046 = vpop.f32.mrb[0].mxu0
      %v1047 = vadd.f32 %v870, %v1046
      %1048 = vmatprep.mubr.bf16.mxu0 0
      %1049 = vmatmul.mubr.bf16.gmra.mrb[0].mxu0 %v826
      %v1050 = vpop.f32.mrb[0].mxu0
      %v1051 = vadd.f32 %v866, %v1050
      %v1052 = vpop.f32.mrb[0].mxu0
      %v1053 = vadd.f32 %v870, %v1052
      %v1054 = vpop.f32.mrb[0].mxu0
      %v1055 = vadd.f32 %v866, %v1054
      %v1056 = vpop.f32.mrb[0].mxu0
      %v1057 = vadd.f32 %v870, %v1056
      %1058 = vmatprep.mubr.bf16.mxu0 0
      %1059 = vmatmul.mubr.bf16.gmra.mrb[0].mxu0 %v827
      %v1060 = vpop.f32.mrb[0].mxu0
      %v1061 = vadd.f32 %v866, %v1060
      %v1062 = vpop.f32.mrb[0].mxu0
      %v1063 = vadd.f32 %v870, %v1062
      %v1064 = vpop.f32.mrb[0].mxu0
      %v1065 = vadd.f32 %v866, %v1064
      %v1066 = vpop.f32.mrb[0].mxu0
      %v1067 = vadd.f32 %v870, %v1066
      %1068 = vmatprep.mubr.bf16.mxu0 0
      %1069 = vmatmul.mubr.bf16.gmra.mrb[0].mxu0 %v828
      %v1070 = vpop.f32.mrb[0].mxu0
      %v1071 = vadd.f32 %v866, %v1070
      %v1072 = vpop.f32.mrb[0].mxu0
      %v1073 = vadd.f32 %v870, %v1072
      %v1074 = vpop.f32.mrb[0].mxu0
      %v1075 = vadd.f32 %v866, %v1074
      %v1076 = vpop.f32.mrb[0].mxu0
      %v1077 = vadd.f32 %v870, %v1076
      %1078 = vdwg.mxu0
      %1079 = vmatprep.subr.bf16.mxu0 0
      %1080 = vmatpush1.bf16.msra.mxu0 %v960
      %1081 = vmatprep.subr.bf16.mxu0 0
      %1082 = vmatpush1.bf16.msra.mxu0 %v963
      %1083 = vmatprep.subr.bf16.mxu0 0
      %1084 = vmatpush1.bf16.msra.mxu0 %v966
      %1085 = vmatprep.subr.bf16.mxu0 0
      %1086 = vmatpush1.bf16.msra.mxu0 %v969
      %1087 = vmatprep.subr.bf16.mxu0 0
      %1088 = vmatpush1.bf16.msra.mxu0 %v972
      %1089 = vmatprep.subr.bf16.mxu0 0
      %1090 = vmatpush1.bf16.msra.mxu0 %v975
      %1091 = vmatprep.subr.bf16.mxu0 0
      %1092 = vmatpush1.bf16.msra.mxu0 %v978
      %1093 = vmatprep.subr.bf16.mxu0 0
      %1094 = vmatpush1.bf16.msra.mxu0 %v981
      %1095 = vmatprep.subr.bf16.mxu0 0
      %1096 = vmatpush1.bf16.msra.mxu0 0
      %1097 = vmatprep.subr.bf16.mxu0 0
      %1098 = vmatpush1.bf16.msra.mxu0 0
      %1099 = vmatprep.subr.bf16.mxu0 0
      %1100 = vmatpush1.bf16.msra.mxu0 0
      %1101 = vmatprep.subr.bf16.mxu0 0
      %1102 = vmatpush1.bf16.msra.mxu0 0
      %1103 = vmatprep.subr.bf16.mxu0 0
      %1104 = vmatpush1.bf16.msra.mxu0 0
      %1105 = vmatprep.subr.bf16.mxu0 0
      %1106 = vmatpush1.bf16.msra.mxu0 0
      %1107 = vmatprep.subr.bf16.mxu0 0
      %1108 = vmatpush1.bf16.msra.mxu0 0
      %1109 = vmatprep.subr.bf16.mxu0 0
      %1110 = vmatpush1.bf16.msra.mxu0 0
      %1111 = vmatprep.mubr.bf16.mxu0 0
      %1112 = vmatmul.mubr.bf16.gmra.mrb[0].mxu0 %v825
      %v1113 = vpop.f32.mrb[0].mxu0
      %v1114 = vadd.f32 %v874, %v1113
      %v1115 = vpop.f32.mrb[0].mxu0
      %v1116 = vpop.f32.mrb[0].mxu0
      %v1117 = vadd.f32 %v874, %v1116
      %v1118 = vpop.f32.mrb[0].mxu0
      %1119 = vmatprep.mubr.bf16.mxu0 0
      %1120 = vmatmul.mubr.bf16.gmra.mrb[0].mxu0 %v826
      %v1121 = vpop.f32.mrb[0].mxu0
      %v1122 = vadd.f32 %v874, %v1121
      %v1123 = vpop.f32.mrb[0].mxu0
      %v1124 = vpop.f32.mrb[0].mxu0
      %v1125 = vadd.f32 %v874, %v1124
      %v1126 = vpop.f32.mrb[0].mxu0
      %1127 = vmatprep.mubr.bf16.mxu0 0
      %1128 = vmatmul.mubr.bf16.gmra.mrb[0].mxu0 %v827
      %v1129 = vpop.f32.mrb[0].mxu0
      %v1130 = vadd.f32 %v874, %v1129
      %v1131 = vpop.f32.mrb[0].mxu0
      %v1132 = vpop.f32.mrb[0].mxu0
      %v1133 = vadd.f32 %v874, %v1132
      %v1134 = vpop.f32.mrb[0].mxu0
      %1135 = vmatprep.mubr.bf16.mxu0 0
      %1136 = vmatmul.mubr.bf16.gmra.mrb[0].mxu0 %v828
      %v1137 = vpop.f32.mrb[0].mxu0
      %v1138 = vadd.f32 %v874, %v1137
      %v1139 = vpop.f32.mrb[0].mxu0
      %v1140 = vpop.f32.mrb[0].mxu0
      %v1141 = vadd.f32 %v874, %v1140
      %v1142 = vpop.f32.mrb[0].mxu0
      %1143 = vdwg.mxu0
      %v1144 = vpack.c.bf16 %v824, %v824
      %v1145 = vld [vmem:[%s5] sm:$0xff]
      %v1146 = vld [vmem:[%s5 + $0x8] sm:$0xf]
      %v1147 = vld [vmem:[%s5 + $0xc] sm:$0xff]
      %v1148 = vld [vmem:[%s5 + $0x14] sm:$0xf]
      %v1149 = vld [vmem:[%s5 + $0x18] sm:$0xff]
      %v1150 = vld [vmem:[%s5 + $0x20] sm:$0xf]
      %v1151 = vld [vmem:[%s5 + $0x24] sm:$0xff]
      %v1152 = vld [vmem:[%s5 + $0x2c] sm:$0xf]
      %v1153 = vld [vmem:[%s5 + $0x30] sm:$0xff]
      %v1154 = vld [vmem:[%s5 + $0x38] sm:$0xf]
      %v1155 = vld [vmem:[%s5 + $0x3c] sm:$0xff]
      %v1156 = vld [vmem:[%s5 + $0x44] sm:$0xf]
      %v1157 = vld [vmem:[%s5 + $0x48] sm:$0xff]
      %v1158 = vld [vmem:[%s5 + $0x50] sm:$0xf]
      %v1159 = vld [vmem:[%s5 + $0x54] sm:$0xff]
      %v1160 = vld [vmem:[%s5 + $0x5c] sm:$0xf]
      %v1161 = vld [vmem:[%s5 + $0x60] sm:$0xff]
      %v1162 = vld [vmem:[%s5 + $0x68] sm:$0xf]
      %v1163 = vld [vmem:[%s5 + $0x6c] sm:$0xff]
      %v1164 = vld [vmem:[%s5 + $0x74] sm:$0xf]
      %v1165 = vld [vmem:[%s5 + $0x78] sm:$0xff]
      %v1166 = vld [vmem:[%s5 + $0x80] sm:$0xf]
      %v1167 = vld [vmem:[%s5 + $0x84] sm:$0xff]
      %v1168 = vld [vmem:[%s5 + $0x8c] sm:$0xf]
      %v1169 = vld [vmem:[%s5 + $0x90] sm:$0xff]
      %v1170 = vld [vmem:[%s5 + $0x98] sm:$0xf]
      %v1171 = vld [vmem:[%s5 + $0x9c] sm:$0xff]
      %v1172 = vld [vmem:[%s5 + $0xa4] sm:$0xf]
      %v1173 = vld [vmem:[%s5 + $0xa8] sm:$0xff]
      %v1174 = vld [vmem:[%s5 + $0xb0] sm:$0xf]
      %v1175 = vld [vmem:[%s5 + $0xb4] sm:$0xff]
      %v1176 = vld [vmem:[%s5 + $0xbc] sm:$0xf]
      %v1177 = vld [vmem:[%s6] sm:$0x7]
      %v1179 = vlaneseq
      %v1180 = vshrl.u32 %v1179, 7
      %v1181 = vsub.s32 0, %v1180
      %v1182 = vrot.slane %v1177, %v1181
      %v1183 = vlaneseq
      %v1184 = vshrl.u32 %v1183, 7
      %v1185 = vsub.s32 1, %v1184
      %v1186 = vrot.slane %v1177, %v1185
      %v1187 = vlaneseq
      %v1188 = vshrl.u32 %v1187, 7
      %v1189 = vsub.s32 2, %v1188
      %v1190 = vrot.slane %v1177, %v1189
      %v1226 = vunpack.c.l.b16 %v1145
      %v1227 = vunpack.c.h.b16 %v1145
      %v1228 = vunpack.c.l.b16 %v1146
      %v1229 = vunpack.c.l.b16 %v1147
      %v1230 = vunpack.c.h.b16 %v1147
      %v1231 = vunpack.c.l.b16 %v1148
      %v1232 = vunpack.c.l.b16 %v1149
      %v1233 = vunpack.c.h.b16 %v1149
      %v1234 = vunpack.c.l.b16 %v1150
      %v1235 = vunpack.c.l.b16 %v1151
      %v1236 = vunpack.c.h.b16 %v1151
      %v1237 = vunpack.c.l.b16 %v1152
      %v1238 = vunpack.c.l.b16 %v1153
      %v1239 = vunpack.c.h.b16 %v1153
      %v1240 = vunpack.c.l.b16 %v1154
      %v1241 = vunpack.c.l.b16 %v1155
      %v1242 = vunpack.c.h.b16 %v1155
      %v1243 = vunpack.c.l.b16 %v1156
      %v1244 = vunpack.c.l.b16 %v1157
      %v1245 = vunpack.c.h.b16 %v1157
      %v1246 = vunpack.c.l.b16 %v1158
      %v1247 = vunpack.c.l.b16 %v1159
      %v1248 = vunpack.c.h.b16 %v1159
      %v1249 = vunpack.c.l.b16 %v1160
      %v1250 = vunpack.c.l.b16 %v1161
      %v1251 = vunpack.c.h.b16 %v1161
      %v1252 = vunpack.c.l.b16 %v1162
      %v1253 = vunpack.c.l.b16 %v1163
      %v1254 = vunpack.c.h.b16 %v1163
      %v1255 = vunpack.c.l.b16 %v1164
      %v1256 = vunpack.c.l.b16 %v1165
      %v1257 = vunpack.c.h.b16 %v1165
      %v1258 = vunpack.c.l.b16 %v1166
      %v1259 = vunpack.c.l.b16 %v1167
      %v1260 = vunpack.c.h.b16 %v1167
      %v1261 = vunpack.c.l.b16 %v1168
      %v1262 = vunpack.c.l.b16 %v1169
      %v1263 = vunpack.c.h.b16 %v1169
      %v1264 = vunpack.c.l.b16 %v1170
      %v1265 = vunpack.c.l.b16 %v1171
      %v1266 = vunpack.c.h.b16 %v1171
      %v1267 = vunpack.c.l.b16 %v1172
      %v1268 = vunpack.c.l.b16 %v1173
      %v1269 = vunpack.c.h.b16 %v1173
      %v1270 = vunpack.c.l.b16 %v1174
      %v1271 = vunpack.c.l.b16 %v1175
      %v1272 = vunpack.c.h.b16 %v1175
      %v1273 = vunpack.c.l.b16 %v1176
      %v1274 = vpack.c.b16 %v1229, %v1226
      %v1275 = vpack.c.b16 %v1230, %v1227
      %v1276 = vpack.c.b16 %v1231, %v1228
      %v1277 = vpack.c.b16 %v1235, %v1232
      %v1278 = vpack.c.b16 %v1236, %v1233
      %v1279 = vpack.c.b16 %v1237, %v1234
      %v1280 = vpack.c.b16 %v1241, %v1238
      %v1281 = vpack.c.b16 %v1242, %v1239
      %v1282 = vpack.c.b16 %v1243, %v1240
      %v1283 = vpack.c.b16 %v1247, %v1244
      %v1284 = vpack.c.b16 %v1248, %v1245
      %v1285 = vpack.c.b16 %v1249, %v1246
      %v1286 = vpack.c.b16 %v1253, %v1250
      %v1287 = vpack.c.b16 %v1254, %v1251
      %v1288 = vpack.c.b16 %v1255, %v1252
      %v1289 = vpack.c.b16 %v1259, %v1256
      %v1290 = vpack.c.b16 %v1260, %v1257
      %v1291 = vpack.c.b16 %v1261, %v1258
      %v1292 = vpack.c.b16 %v1265, %v1262
      %v1293 = vpack.c.b16 %v1266, %v1263
      %v1294 = vpack.c.b16 %v1267, %v1264
      %v1295 = vpack.c.b16 %v1271, %v1268
      %v1296 = vpack.c.b16 %v1272, %v1269
      %v1297 = vpack.c.b16 %v1273, %v1270
      %1322 = vmatprep.subr.bf16.mxu0 %v1275
      %1323 = vmatpush1.bf16.msra.mxu0 %v1274
      %1324 = vmatprep.subr.bf16.mxu0 %v1278
      %1325 = vmatpush1.bf16.msra.mxu0 %v1277
      %1326 = vmatprep.subr.bf16.mxu0 %v1281
      %1327 = vmatpush1.bf16.msra.mxu0 %v1280
      %1328 = vmatprep.subr.bf16.mxu0 %v1284
      %1329 = vmatpush1.bf16.msra.mxu0 %v1283
      %1330 = vmatprep.subr.bf16.mxu0 %v1287
      %1331 = vmatpush1.bf16.msra.mxu0 %v1286
      %1332 = vmatprep.subr.bf16.mxu0 %v1290
      %1333 = vmatpush1.bf16.msra.mxu0 %v1289
      %1334 = vmatprep.subr.bf16.mxu0 %v1293
      %1335 = vmatpush1.bf16.msra.mxu0 %v1292
      %1336 = vmatprep.subr.bf16.mxu0 %v1296
      %1337 = vmatpush1.bf16.msra.mxu0 %v1295
      %1338 = vmatprep.subr.bf16.mxu0 0
      %1339 = vmatpush1.bf16.msra.mxu0 0
      %1340 = vmatprep.subr.bf16.mxu0 0
      %1341 = vmatpush1.bf16.msra.mxu0 0
      %1342 = vmatprep.subr.bf16.mxu0 0
      %1343 = vmatpush1.bf16.msra.mxu0 0
      %1344 = vmatprep.subr.bf16.mxu0 0
      %1345 = vmatpush1.bf16.msra.mxu0 0
      %1346 = vmatprep.subr.bf16.mxu0 0
      %1347 = vmatpush1.bf16.msra.mxu0 0
      %1348 = vmatprep.subr.bf16.mxu0 0
      %1349 = vmatpush1.bf16.msra.mxu0 0
      %1350 = vmatprep.subr.bf16.mxu0 0
      %1351 = vmatpush1.bf16.msra.mxu0 0
      %1352 = vmatprep.subr.bf16.mxu0 0
      %1353 = vmatpush1.bf16.msra.mxu0 0
      %1354 = vmatprep.mubr.bf16.mxu0 0
      %1355 = vmatmul.mubr.bf16.gmra.mrb[0].mxu0 %v1144
      %v1356 = vpop.f32.mrb[0].mxu0
      %v1357 = vadd.f32 %v1182, %v1356
      %v1358 = vpop.f32.mrb[0].mxu0
      %v1359 = vadd.f32 %v1186, %v1358
      %v1360 = vpop.f32.mrb[0].mxu0
      %v1361 = vpop.f32.mrb[0].mxu0
      %1362 = vdwg.mxu0
      %1363 = vmatprep.subr.bf16.mxu0 0
      %1364 = vmatpush1.bf16.msra.mxu0 %v1276
      %1365 = vmatprep.subr.bf16.mxu0 0
      %1366 = vmatpush1.bf16.msra.mxu0 %v1279
      %1367 = vmatprep.subr.bf16.mxu0 0
      %1368 = vmatpush1.bf16.msra.mxu0 %v1282
      %1369 = vmatprep.subr.bf16.mxu0 0
      %1370 = vmatpush1.bf16.msra.mxu0 %v1285
      %1371 = vmatprep.subr.bf16.mxu0 0
      %1372 = vmatpush1.bf16.msra.mxu0 %v1288
      %1373 = vmatprep.subr.bf16.mxu0 0
      %1374 = vmatpush1.bf16.msra.mxu0 %v1291
      %1375 = vmatprep.subr.bf16.mxu0 0
      %1376 = vmatpush1.bf16.msra.mxu0 %v1294
      %1377 = vmatprep.subr.bf16.mxu0 0
      %1378 = vmatpush1.bf16.msra.mxu0 %v1297
      %1379 = vmatprep.subr.bf16.mxu0 0
      %1380 = vmatpush1.bf16.msra.mxu0 0
      %1381 = vmatprep.subr.bf16.mxu0 0
      %1382 = vmatpush1.bf16.msra.mxu0 0
      %1383 = vmatprep.subr.bf16.mxu0 0
      %1384 = vmatpush1.bf16.msra.mxu0 0
      %1385 = vmatprep.subr.bf16.mxu0 0
      %1386 = vmatpush1.bf16.msra.mxu0 0
      %1387 = vmatprep.subr.bf16.mxu0 0
      %1388 = vmatpush1.bf16.msra.mxu0 0
      %1389 = vmatprep.subr.bf16.mxu0 0
      %1390 = vmatpush1.bf16.msra.mxu0 0
      %1391 = vmatprep.subr.bf16.mxu0 0
      %1392 = vmatpush1.bf16.msra.mxu0 0
      %1393 = vmatprep.subr.bf16.mxu0 0
      %1394 = vmatpush1.bf16.msra.mxu0 0
      %1395 = vmatprep.mubr.bf16.mxu0 0
      %1396 = vmatmul.mubr.bf16.gmra.mrb[0].mxu0 %v1144
      %v1397 = vpop.f32.mrb[0].mxu0
      %v1398 = vadd.f32 %v1190, %v1397
      %v1399 = vpop.f32.mrb[0].mxu0
      %v1400 = vpop.f32.mrb[0].mxu0
      %v1401 = vpop.f32.mrb[0].mxu0
      %1402 = vdwg.mxu0
      %v1403 = vpack.c.bf16 %v1045, %v1041
      %v1404 = vpack.c.bf16 %v1055, %v1051
      %v1405 = vpack.c.bf16 %v1065, %v1061
      %v1406 = vpack.c.bf16 %v1075, %v1071
      %v1407 = vpack.c.bf16 %v1357, %v1357
      %v1408 = vpack.c.bf16 %v1047, %v1043
      %v1409 = vpack.c.bf16 %v1057, %v1053
      %v1410 = vpack.c.bf16 %v1067, %v1063
      %v1411 = vpack.c.bf16 %v1077, %v1073
      %v1412 = vpack.c.bf16 %v1359, %v1359
      %v1413 = vpack.c.bf16 %v1117, %v1114
      %v1414 = vpack.c.bf16 %v1125, %v1122
      %v1415 = vpack.c.bf16 %v1133, %v1130
      %v1416 = vpack.c.bf16 %v1141, %v1138
      %v1417 = vpack.c.bf16 %v1398, %v1398
      %vm1418 = vcmask 261120
      %v1420 = vsel %vm1418, %v1403, 0
      %v1423 = vsel %vm1418, %v1404, 0
      %v1426 = vsel %vm1418, %v1405, 0
      %v1429 = vsel %vm1418, %v1406, 0
      %v1432 = vsel %vm1418, %v1407, 0
      %v1435 = vsel %vm1418, %v1408, 0
      %v1438 = vsel %vm1418, %v1409, 0
      %v1441 = vsel %vm1418, %v1410, 0
      %v1444 = vsel %vm1418, %v1411, 0
      %v1447 = vsel %vm1418, %v1412, 0
      %1449 = vmatprep.subr.bf16.mxu0 0
      %1450 = vmatpush1.bf16.xpose.msra.mxu0 %v1435
      %1451 = vmatprep.subr.bf16.mxu0 0
      %1452 = vmatpush1.bf16.xpose.msra.mxu0 %v1438
      %1453 = vmatprep.subr.bf16.mxu0 0
      %1454 = vmatpush1.bf16.xpose.msra.mxu0 %v1441
      %1455 = vmatprep.subr.bf16.mxu0 0
      %1456 = vmatpush1.bf16.xpose.msra.mxu0 %v1444
      %1457 = vmatprep.subr.bf16.mxu0 0
      %1458 = vmatpush1.bf16.xpose.msra.mxu0 %v1447
      %1459 = vmatprep.subr.bf16.mxu0 0
      %1460 = vmatpush1.bf16.xpose.msra.mxu0 0
      %1461 = vmatprep.subr.bf16.mxu0 0
      %1462 = vmatpush1.bf16.xpose.msra.mxu0 0
      %1463 = vmatprep.subr.bf16.mxu0 0
      %1464 = vmatpush1.bf16.xpose.msra.mxu0 0
      %1465 = vmatprep.subr.bf16.mxu0 0
      %1466 = vmatpush1.bf16.xpose.msra.mxu0 0
      %1467 = vmatprep.subr.bf16.mxu0 0
      %1468 = vmatpush1.bf16.xpose.msra.mxu0 0
      %1469 = vmatprep.subr.bf16.mxu0 0
      %1470 = vmatpush1.bf16.xpose.msra.mxu0 0
      %1471 = vmatprep.subr.bf16.mxu0 0
      %1472 = vmatpush1.bf16.xpose.msra.mxu0 0
      %1473 = vmatprep.subr.bf16.mxu0 0
      %1474 = vmatpush1.bf16.xpose.msra.mxu0 0
      %1475 = vmatprep.subr.bf16.mxu0 0
      %1476 = vmatpush1.bf16.xpose.msra.mxu0 0
      %1477 = vmatprep.subr.bf16.mxu0 0
      %1478 = vmatpush1.bf16.xpose.msra.mxu0 0
      %1479 = vmatprep.subr.bf16.mxu0 0
      %1480 = vmatpush1.bf16.xpose.msra.mxu0 0
      %1481 = vmatprep.mubr.bf16.mxu0 0
      %1482 = vmatmul.mubr.bf16.gmra.mrb[0].mxu0 %v1420
      %v1483 = vpop.f32.mrb[0].mxu0
      %v1484 = vadd.f32 0.0, %v1483
      %v1485 = vpop.f32.mrb[0].mxu0
      %v1486 = vpop.f32.mrb[0].mxu0
      %v1487 = vadd.f32 0.0, %v1486
      %v1488 = vpop.f32.mrb[0].mxu0
      %1489 = vmatprep.mubr.bf16.mxu0 0
      %1490 = vmatmul.mubr.bf16.gmra.mrb[0].mxu0 %v1423
      %v1491 = vpop.f32.mrb[0].mxu0
      %v1492 = vadd.f32 0.0, %v1491
      %v1493 = vpop.f32.mrb[0].mxu0
      %v1494 = vpop.f32.mrb[0].mxu0
      %v1495 = vadd.f32 0.0, %v1494
      %v1496 = vpop.f32.mrb[0].mxu0
      %1497 = vmatprep.mubr.bf16.mxu0 0
      %1498 = vmatmul.mubr.bf16.gmra.mrb[0].mxu0 %v1426
      %v1499 = vpop.f32.mrb[0].mxu0
      %v1500 = vadd.f32 0.0, %v1499
      %v1501 = vpop.f32.mrb[0].mxu0
      %v1502 = vpop.f32.mrb[0].mxu0
      %v1503 = vadd.f32 0.0, %v1502
      %v1504 = vpop.f32.mrb[0].mxu0
      %1505 = vmatprep.mubr.bf16.mxu0 0
      %1506 = vmatmul.mubr.bf16.gmra.mrb[0].mxu0 %v1429
      %v1507 = vpop.f32.mrb[0].mxu0
      %v1508 = vadd.f32 0.0, %v1507
      %v1509 = vpop.f32.mrb[0].mxu0
      %v1510 = vpop.f32.mrb[0].mxu0
      %v1511 = vadd.f32 0.0, %v1510
      %v1512 = vpop.f32.mrb[0].mxu0
      %1513 = vmatprep.mubr.bf16.mxu0 0
      %1514 = vmatmul.mubr.bf16.gmra.mrb[0].mxu0 %v1432
      %v1515 = vpop.f32.mrb[0].mxu0
      %v1516 = vadd.f32 0.0, %v1515
      %v1517 = vpop.f32.mrb[0].mxu0
      %v1518 = vpop.f32.mrb[0].mxu0
      %v1519 = vpop.f32.mrb[0].mxu0
      %1520 = vdwg.mxu0
      %v1521 = vmul.f32 %v1484, 0.17677669
      %v1522 = vmul.f32 %v1487, 0.17677669
      %v1523 = vmul.f32 %v1492, 0.17677669
      %v1524 = vmul.f32 %v1495, 0.17677669
      %v1525 = vmul.f32 %v1500, 0.17677669
      %v1526 = vmul.f32 %v1503, 0.17677669
      %v1527 = vmul.f32 %v1508, 0.17677669
      %v1528 = vmul.f32 %v1511, 0.17677669
      %v1529 = vmul.f32 %v1516, 0.17677669
      %vm1530 = vcmask 588800
      %v1531 = vsel %vm1530, %v1521, -inf
      %1532 = vmax.xlane.f32.xlu0 %v1531
      %v1533 = vpop.xlane.xlu0 %1532
      %v1534 = vsel %vm1530, %v1522, -inf
      %1535 = vmax.xlane.f32.xlu0 %v1534
      %v1536 = vpop.xlane.xlu0 %1535
      %v1537 = vsel %vm1530, %v1523, -inf
      %1538 = vmax.xlane.f32.xlu0 %v1537
      %v1539 = vpop.xlane.xlu0 %1538
      %v1540 = vsel %vm1530, %v1524, -inf
      %1541 = vmax.xlane.f32.xlu0 %v1540
      %v1542 = vpop.xlane.xlu0 %1541
      %v1543 = vsel %vm1530, %v1525, -inf
      %1544 = vmax.xlane.f32.xlu0 %v1543
      %v1545 = vpop.xlane.xlu0 %1544
      %v1546 = vsel %vm1530, %v1526, -inf
      %1547 = vmax.xlane.f32.xlu0 %v1546
      %v1548 = vpop.xlane.xlu0 %1547
      %v1549 = vsel %vm1530, %v1527, -inf
      %1550 = vmax.xlane.f32.xlu0 %v1549
      %v1551 = vpop.xlane.xlu0 %1550
      %v1552 = vsel %vm1530, %v1528, -inf
      %1553 = vmax.xlane.f32.xlu0 %v1552
      %v1554 = vpop.xlane.xlu0 %1553
      %v1555 = vsel %vm1530, %v1529, -inf
      %1556 = vmax.xlane.f32.xlu0 %v1555
      %v1557 = vpop.xlane.xlu0 %1556
      %v1558 = vsub.f32 %v1521, %v1533
      %v1559 = vsub.f32 %v1522, %v1536
      %v1560 = vsub.f32 %v1523, %v1539
      %v1561 = vsub.f32 %v1524, %v1542
      %v1562 = vsub.f32 %v1525, %v1545
      %v1563 = vsub.f32 %v1526, %v1548
      %v1564 = vsub.f32 %v1527, %v1551
      %v1565 = vsub.f32 %v1528, %v1554
      %v1566 = vsub.f32 %v1529, %v1557
      %v1567 = vmul.f32 %v1558, 1.442695
      %v1568 = vpow.pop %v1567
      %v1569 = vmul.f32 %v1559, 1.442695
      %v1570 = vpow.pop %v1569
      %v1571 = vmul.f32 %v1560, 1.442695
      %v1572 = vpow.pop %v1571
      %v1573 = vmul.f32 %v1561, 1.442695
      %v1574 = vpow.pop %v1573
      %v1575 = vmul.f32 %v1562, 1.442695
      %v1576 = vpow.pop %v1575
      %v1577 = vmul.f32 %v1563, 1.442695
      %v1578 = vpow.pop %v1577
      %v1579 = vmul.f32 %v1564, 1.442695
      %v1580 = vpow.pop %v1579
      %v1581 = vmul.f32 %v1565, 1.442695
      %v1582 = vpow.pop %v1581
      %v1583 = vmul.f32 %v1566, 1.442695
      %v1584 = vpow.pop %v1583
      %v1585 = vsel %vm1530, %v1568, 0.0
      %1586 = vadd.xlane.f32.xlu0 %v1585
      %v1587 = vpop.xlane.xlu0 %1586
      %v1588 = vsel %vm1530, %v1570, 0.0
      %1589 = vadd.xlane.f32.xlu0 %v1588
      %v1590 = vpop.xlane.xlu0 %1589
      %v1591 = vsel %vm1530, %v1572, 0.0
      %1592 = vadd.xlane.f32.xlu0 %v1591
      %v1593 = vpop.xlane.xlu0 %1592
      %v1594 = vsel %vm1530, %v1574, 0.0
      %1595 = vadd.xlane.f32.xlu0 %v1594
      %v1596 = vpop.xlane.xlu0 %1595
      %v1597 = vsel %vm1530, %v1576, 0.0
      %1598 = vadd.xlane.f32.xlu0 %v1597
      %v1599 = vpop.xlane.xlu0 %1598
      %v1600 = vsel %vm1530, %v1578, 0.0
      %1601 = vadd.xlane.f32.xlu0 %v1600
      %v1602 = vpop.xlane.xlu0 %1601
      %v1603 = vsel %vm1530, %v1580, 0.0
      %1604 = vadd.xlane.f32.xlu0 %v1603
      %v1605 = vpop.xlane.xlu0 %1604
      %v1606 = vsel %vm1530, %v1582, 0.0
      %1607 = vadd.xlane.f32.xlu0 %v1606
      %v1608 = vpop.xlane.xlu0 %1607
      %v1609 = vsel %vm1530, %v1584, 0.0
      %1610 = vadd.xlane.f32.xlu0 %v1609
      %v1611 = vpop.xlane.xlu0 %1610
      %v1612 = vrcp.pop %v1587
      %v1613 = vrcp.pop %v1590
      %v1614 = vrcp.pop %v1593
      %v1615 = vrcp.pop %v1596
      %v1616 = vrcp.pop %v1599
      %v1617 = vrcp.pop %v1602
      %v1618 = vrcp.pop %v1605
      %v1619 = vrcp.pop %v1608
      %v1620 = vrcp.pop %v1611
      %v1621 = vmul.f32 %v1568, %v1612
      %v1622 = vmul.f32 %v1570, %v1613
      %v1623 = vmul.f32 %v1572, %v1614
      %v1624 = vmul.f32 %v1574, %v1615
      %v1625 = vmul.f32 %v1576, %v1616
      %v1626 = vmul.f32 %v1578, %v1617
      %v1627 = vmul.f32 %v1580, %v1618
      %v1628 = vmul.f32 %v1582, %v1619
      %v1629 = vmul.f32 %v1584, %v1620
      %v1630 = vpack.c.bf16 %v1622, %v1621
      %v1631 = vpack.c.bf16 %v1624, %v1623
      %v1632 = vpack.c.bf16 %v1626, %v1625
      %v1633 = vpack.c.bf16 %v1628, %v1627
      %v1634 = vpack.c.bf16 %v1629, %v1629
      %v1636 = vsel %vm1530, %v1630, 0
      %v1639 = vsel %vm1530, %v1631, 0
      %v1642 = vsel %vm1530, %v1632, 0
      %v1645 = vsel %vm1530, %v1633, 0
      %v1648 = vsel %vm1530, %v1634, 0
      %vm1650 = vcmask 1043456
      %v1652 = vsel %vm1650, %v1417, 0
      %1654 = vmatprep.subr.bf16.mxu0 0
      %1655 = vmatpush1.bf16.msra.mxu0 %v1413
      %1656 = vmatprep.subr.bf16.mxu0 0
      %1657 = vmatpush1.bf16.msra.mxu0 %v1414
      %1658 = vmatprep.subr.bf16.mxu0 0
      %1659 = vmatpush1.bf16.msra.mxu0 %v1415
      %1660 = vmatprep.subr.bf16.mxu0 0
      %1661 = vmatpush1.bf16.msra.mxu0 %v1416
      %1662 = vmatprep.subr.bf16.mxu0 0
      %1663 = vmatpush1.bf16.msra.mxu0 %v1652
      %1664 = vmatprep.subr.bf16.mxu0 0
      %1665 = vmatpush1.bf16.msra.mxu0 0
      %1666 = vmatprep.subr.bf16.mxu0 0
      %1667 = vmatpush1.bf16.msra.mxu0 0
      %1668 = vmatprep.subr.bf16.mxu0 0
      %1669 = vmatpush1.bf16.msra.mxu0 0
      %1670 = vmatprep.subr.bf16.mxu0 0
      %1671 = vmatpush1.bf16.msra.mxu0 0
      %1672 = vmatprep.subr.bf16.mxu0 0
      %1673 = vmatpush1.bf16.msra.mxu0 0
      %1674 = vmatprep.subr.bf16.mxu0 0
      %1675 = vmatpush1.bf16.msra.mxu0 0
      %1676 = vmatprep.subr.bf16.mxu0 0
      %1677 = vmatpush1.bf16.msra.mxu0 0
      %1678 = vmatprep.subr.bf16.mxu0 0
      %1679 = vmatpush1.bf16.msra.mxu0 0
      %1680 = vmatprep.subr.bf16.mxu0 0
      %1681 = vmatpush1.bf16.msra.mxu0 0
      %1682 = vmatprep.subr.bf16.mxu0 0
      %1683 = vmatpush1.bf16.msra.mxu0 0
      %1684 = vmatprep.subr.bf16.mxu0 0
      %1685 = vmatpush1.bf16.msra.mxu0 0
      %1686 = vmatprep.mubr.bf16.mxu0 0
      %1687 = vmatmul.mubr.bf16.gmra.mrb[0].mxu0 %v1636
      %v1688 = vpop.f32.mrb[0].mxu0
      %v1689 = vadd.f32 0.0, %v1688
      %v1690 = vpop.f32.mrb[0].mxu0
      %v1691 = vpop.f32.mrb[0].mxu0
      %v1692 = vadd.f32 0.0, %v1691
      %v1693 = vpop.f32.mrb[0].mxu0
      %1694 = vmatprep.mubr.bf16.mxu0 0
      %1695 = vmatmul.mubr.bf16.gmra.mrb[0].mxu0 %v1639
      %v1696 = vpop.f32.mrb[0].mxu0
      %v1697 = vadd.f32 0.0, %v1696
      %v1698 = vpop.f32.mrb[0].mxu0
      %v1699 = vpop.f32.mrb[0].mxu0
      %v1700 = vadd.f32 0.0, %v1699
      %v1701 = vpop.f32.mrb[0].mxu0
      %1702 = vmatprep.mubr.bf16.mxu0 0
      %1703 = vmatmul.mubr.bf16.gmra.mrb[0].mxu0 %v1642
      %v1704 = vpop.f32.mrb[0].mxu0
      %v1705 = vadd.f32 0.0, %v1704
      %v1706 = vpop.f32.mrb[0].mxu0
      %v1707 = vpop.f32.mrb[0].mxu0
      %v1708 = vadd.f32 0.0, %v1707
      %v1709 = vpop.f32.mrb[0].mxu0
      %1710 = vmatprep.mubr.bf16.mxu0 0
      %1711 = vmatmul.mubr.bf16.gmra.mrb[0].mxu0 %v1645
      %v1712 = vpop.f32.mrb[0].mxu0
      %v1713 = vadd.f32 0.0, %v1712
      %v1714 = vpop.f32.mrb[0].mxu0
      %v1715 = vpop.f32.mrb[0].mxu0
      %v1716 = vadd.f32 0.0, %v1715
      %v1717 = vpop.f32.mrb[0].mxu0
      %1718 = vmatprep.mubr.bf16.mxu0 0
      %1719 = vmatmul.mubr.bf16.gmra.mrb[0].mxu0 %v1648
      %v1720 = vpop.f32.mrb[0].mxu0
      %v1721 = vadd.f32 0.0, %v1720
      %v1722 = vpop.f32.mrb[0].mxu0
      %v1723 = vpop.f32.mrb[0].mxu0
      %v1724 = vpop.f32.mrb[0].mxu0
      %1725 = vdwg.mxu0
      %1731 = vrot.lane.b32.xlu0 %v1403, 96
      %v1732 = vpop.permute.xlu0 %1731
      %1733 = vrot.lane.b32.xlu0 %v1404, 96
      %v1734 = vpop.permute.xlu0 %1733
      %1735 = vrot.lane.b32.xlu0 %v1405, 96
      %v1736 = vpop.permute.xlu0 %1735
      %1737 = vrot.lane.b32.xlu0 %v1406, 96
      %v1738 = vpop.permute.xlu0 %1737
      %1739 = vrot.lane.b32.xlu0 %v1407, 96
      %v1740 = vpop.permute.xlu0 %1739
      %1746 = vrot.lane.b32.xlu0 %v1408, 96
      %v1747 = vpop.permute.xlu0 %1746
      %1748 = vrot.lane.b32.xlu0 %v1409, 96
      %v1749 = vpop.permute.xlu0 %1748
      %1750 = vrot.lane.b32.xlu0 %v1410, 96
      %v1751 = vpop.permute.xlu0 %1750
      %1752 = vrot.lane.b32.xlu0 %v1411, 96
      %v1753 = vpop.permute.xlu0 %1752
      %1754 = vrot.lane.b32.xlu0 %v1412, 96
      %v1755 = vpop.permute.xlu0 %1754
      %v1757 = vsel %vm1418, %v1732, 0
      %v1760 = vsel %vm1418, %v1734, 0
      %v1763 = vsel %vm1418, %v1736, 0
      %v1766 = vsel %vm1418, %v1738, 0
      %v1769 = vsel %vm1418, %v1740, 0
      %v1772 = vsel %vm1418, %v1747, 0
      %v1775 = vsel %vm1418, %v1749, 0
      %v1778 = vsel %vm1418, %v1751, 0
      %v1781 = vsel %vm1418, %v1753, 0
      %v1784 = vsel %vm1418, %v1755, 0
      %1786 = vmatprep.subr.bf16.mxu0 0
      %1787 = vmatpush1.bf16.xpose.msra.mxu0 %v1772
      %1788 = vmatprep.subr.bf16.mxu0 0
      %1789 = vmatpush1.bf16.xpose.msra.mxu0 %v1775
      %1790 = vmatprep.subr.bf16.mxu0 0
      %1791 = vmatpush1.bf16.xpose.msra.mxu0 %v1778
      %1792 = vmatprep.subr.bf16.mxu0 0
      %1793 = vmatpush1.bf16.xpose.msra.mxu0 %v1781
      %1794 = vmatprep.subr.bf16.mxu0 0
      %1795 = vmatpush1.bf16.xpose.msra.mxu0 %v1784
      %1796 = vmatprep.subr.bf16.mxu0 0
      %1797 = vmatpush1.bf16.xpose.msra.mxu0 0
      %1798 = vmatprep.subr.bf16.mxu0 0
      %1799 = vmatpush1.bf16.xpose.msra.mxu0 0
      %1800 = vmatprep.subr.bf16.mxu0 0
      %1801 = vmatpush1.bf16.xpose.msra.mxu0 0
      %1802 = vmatprep.subr.bf16.mxu0 0
      %1803 = vmatpush1.bf16.xpose.msra.mxu0 0
      %1804 = vmatprep.subr.bf16.mxu0 0
      %1805 = vmatpush1.bf16.xpose.msra.mxu0 0
      %1806 = vmatprep.subr.bf16.mxu0 0
      %1807 = vmatpush1.bf16.xpose.msra.mxu0 0
      %1808 = vmatprep.subr.bf16.mxu0 0
      %1809 = vmatpush1.bf16.xpose.msra.mxu0 0
      %1810 = vmatprep.subr.bf16.mxu0 0
      %1811 = vmatpush1.bf16.xpose.msra.mxu0 0
      %1812 = vmatprep.subr.bf16.mxu0 0
      %1813 = vmatpush1.bf16.xpose.msra.mxu0 0
      %1814 = vmatprep.subr.bf16.mxu0 0
      %1815 = vmatpush1.bf16.xpose.msra.mxu0 0
      %1816 = vmatprep.subr.bf16.mxu0 0
      %1817 = vmatpush1.bf16.xpose.msra.mxu0 0
      %1818 = vmatprep.mubr.bf16.mxu0 0
      %1819 = vmatmul.mubr.bf16.gmra.mrb[0].mxu0 %v1757
      %v1820 = vpop.f32.mrb[0].mxu0
      %v1821 = vadd.f32 0.0, %v1820
      %v1822 = vpop.f32.mrb[0].mxu0
      %v1823 = vpop.f32.mrb[0].mxu0
      %v1824 = vadd.f32 0.0, %v1823
      %v1825 = vpop.f32.mrb[0].mxu0
      %1826 = vmatprep.mubr.bf16.mxu0 0
      %1827 = vmatmul.mubr.bf16.gmra.mrb[0].mxu0 %v1760
      %v1828 = vpop.f32.mrb[0].mxu0
      %v1829 = vadd.f32 0.0, %v1828
      %v1830 = vpop.f32.mrb[0].mxu0
      %v1831 = vpop.f32.mrb[0].mxu0
      %v1832 = vadd.f32 0.0, %v1831
      %v1833 = vpop.f32.mrb[0].mxu0
      %1834 = vmatprep.mubr.bf16.mxu0 0
      %1835 = vmatmul.mubr.bf16.gmra.mrb[0].mxu0 %v1763
      %v1836 = vpop.f32.mrb[0].mxu0
      %v1837 = vadd.f32 0.0, %v1836
      %v1838 = vpop.f32.mrb[0].mxu0
      %v1839 = vpop.f32.mrb[0].mxu0
      %v1840 = vadd.f32 0.0, %v1839
      %v1841 = vpop.f32.mrb[0].mxu0
      %1842 = vmatprep.mubr.bf16.mxu0 0
      %1843 = vmatmul.mubr.bf16.gmra.mrb[0].mxu0 %v1766
      %v1844 = vpop.f32.mrb[0].mxu0
      %v1845 = vadd.f32 0.0, %v1844
      %v1846 = vpop.f32.mrb[0].mxu0
      %v1847 = vpop.f32.mrb[0].mxu0
      %v1848 = vadd.f32 0.0, %v1847
      %v1849 = vpop.f32.mrb[0].mxu0
      %1850 = vmatprep.mubr.bf16.mxu0 0
      %1851 = vmatmul.mubr.bf16.gmra.mrb[0].mxu0 %v1769
      %v1852 = vpop.f32.mrb[0].mxu0
      %v1853 = vadd.f32 0.0, %v1852
      %v1854 = vpop.f32.mrb[0].mxu0
      %v1855 = vpop.f32.mrb[0].mxu0
      %v1856 = vpop.f32.mrb[0].mxu0
      %1857 = vdwg.mxu0
      %v1858 = vmul.f32 %v1821, 0.17677669
      %v1859 = vmul.f32 %v1824, 0.17677669
      %v1860 = vmul.f32 %v1829, 0.17677669
      %v1861 = vmul.f32 %v1832, 0.17677669
      %v1862 = vmul.f32 %v1837, 0.17677669
      %v1863 = vmul.f32 %v1840, 0.17677669
      %v1864 = vmul.f32 %v1845, 0.17677669
      %v1865 = vmul.f32 %v1848, 0.17677669
      %v1866 = vmul.f32 %v1853, 0.17677669
      %v1867 = vsel %vm1530, %v1858, -inf
      %1868 = vmax.xlane.f32.xlu0 %v1867
      %v1869 = vpop.xlane.xlu0 %1868
      %v1870 = vsel %vm1530, %v1859, -inf
      %1871 = vmax.xlane.f32.xlu0 %v1870
      %v1872 = vpop.xlane.xlu0 %1871
      %v1873 = vsel %vm1530, %v1860, -inf
      %1874 = vmax.xlane.f32.xlu0 %v1873
      %v1875 = vpop.xlane.xlu0 %1874
      %v1876 = vsel %vm1530, %v1861, -inf
      %1877 = vmax.xlane.f32.xlu0 %v1876
      %v1878 = vpop.xlane.xlu0 %1877
      %v1879 = vsel %vm1530, %v1862, -inf
      %1880 = vmax.xlane.f32.xlu0 %v1879
      %v1881 = vpop.xlane.xlu0 %1880
      %v1882 = vsel %vm1530, %v1863, -inf
      %1883 = vmax.xlane.f32.xlu0 %v1882
      %v1884 = vpop.xlane.xlu0 %1883
      %v1885 = vsel %vm1530, %v1864, -inf
      %1886 = vmax.xlane.f32.xlu0 %v1885
      %v1887 = vpop.xlane.xlu0 %1886
      %v1888 = vsel %vm1530, %v1865, -inf
      %1889 = vmax.xlane.f32.xlu0 %v1888
      %v1890 = vpop.xlane.xlu0 %1889
      %v1891 = vsel %vm1530, %v1866, -inf
      %1892 = vmax.xlane.f32.xlu0 %v1891
      %v1893 = vpop.xlane.xlu0 %1892
      %v1894 = vsub.f32 %v1858, %v1869
      %v1895 = vsub.f32 %v1859, %v1872
      %v1896 = vsub.f32 %v1860, %v1875
      %v1897 = vsub.f32 %v1861, %v1878
      %v1898 = vsub.f32 %v1862, %v1881
      %v1899 = vsub.f32 %v1863, %v1884
      %v1900 = vsub.f32 %v1864, %v1887
      %v1901 = vsub.f32 %v1865, %v1890
      %v1902 = vsub.f32 %v1866, %v1893
      %v1903 = vmul.f32 %v1894, 1.442695
      %v1904 = vpow.pop %v1903
      %v1905 = vmul.f32 %v1895, 1.442695
      %v1906 = vpow.pop %v1905
      %v1907 = vmul.f32 %v1896, 1.442695
      %v1908 = vpow.pop %v1907
      %v1909 = vmul.f32 %v1897, 1.442695
      %v1910 = vpow.pop %v1909
      %v1911 = vmul.f32 %v1898, 1.442695
      %v1912 = vpow.pop %v1911
      %v1913 = vmul.f32 %v1899, 1.442695
      %v1914 = vpow.pop %v1913
      %v1915 = vmul.f32 %v1900, 1.442695
      %v1916 = vpow.pop %v1915
      %v1917 = vmul.f32 %v1901, 1.442695
      %v1918 = vpow.pop %v1917
      %v1919 = vmul.f32 %v1902, 1.442695
      %v1920 = vpow.pop %v1919
      %v1921 = vsel %vm1530, %v1904, 0.0
      %1922 = vadd.xlane.f32.xlu0 %v1921
      %v1923 = vpop.xlane.xlu0 %1922
      %v1924 = vsel %vm1530, %v1906, 0.0
      %1925 = vadd.xlane.f32.xlu0 %v1924
      %v1926 = vpop.xlane.xlu0 %1925
      %v1927 = vsel %vm1530, %v1908, 0.0
      %1928 = vadd.xlane.f32.xlu0 %v1927
      %v1929 = vpop.xlane.xlu0 %1928
      %v1930 = vsel %vm1530, %v1910, 0.0
      %1931 = vadd.xlane.f32.xlu0 %v1930
      %v1932 = vpop.xlane.xlu0 %1931
      %v1933 = vsel %vm1530, %v1912, 0.0
      %1934 = vadd.xlane.f32.xlu0 %v1933
      %v1935 = vpop.xlane.xlu0 %1934
      %v1936 = vsel %vm1530, %v1914, 0.0
      %1937 = vadd.xlane.f32.xlu0 %v1936
      %v1938 = vpop.xlane.xlu0 %1937
      %v1939 = vsel %vm1530, %v1916, 0.0
      %1940 = vadd.xlane.f32.xlu0 %v1939
      %v1941 = vpop.xlane.xlu0 %1940
      %v1942 = vsel %vm1530, %v1918, 0.0
      %1943 = vadd.xlane.f32.xlu0 %v1942
      %v1944 = vpop.xlane.xlu0 %1943
      %v1945 = vsel %vm1530, %v1920, 0.0
      %1946 = vadd.xlane.f32.xlu0 %v1945
      %v1947 = vpop.xlane.xlu0 %1946
      %v1948 = vrcp.pop %v1923
      %v1949 = vrcp.pop %v1926
      %v1950 = vrcp.pop %v1929
      %v1951 = vrcp.pop %v1932
      %v1952 = vrcp.pop %v1935
      %v1953 = vrcp.pop %v1938
      %v1954 = vrcp.pop %v1941
      %v1955 = vrcp.pop %v1944
      %v1956 = vrcp.pop %v1947
      %v1957 = vmul.f32 %v1904, %v1948
      %v1958 = vmul.f32 %v1906, %v1949
      %v1959 = vmul.f32 %v1908, %v1950
      %v1960 = vmul.f32 %v1910, %v1951
      %v1961 = vmul.f32 %v1912, %v1952
      %v1962 = vmul.f32 %v1914, %v1953
      %v1963 = vmul.f32 %v1916, %v1954
      %v1964 = vmul.f32 %v1918, %v1955
      %v1965 = vmul.f32 %v1920, %v1956
      %v1966 = vpack.c.bf16 %v1958, %v1957
      %v1967 = vpack.c.bf16 %v1960, %v1959
      %v1968 = vpack.c.bf16 %v1962, %v1961
      %v1969 = vpack.c.bf16 %v1964, %v1963
      %v1970 = vpack.c.bf16 %v1965, %v1965
      %1976 = vrot.lane.b32.xlu0 %v1413, 96
      %v1977 = vpop.permute.xlu0 %1976
      %1978 = vrot.lane.b32.xlu0 %v1414, 96
      %v1979 = vpop.permute.xlu0 %1978
      %1980 = vrot.lane.b32.xlu0 %v1415, 96
      %v1981 = vpop.permute.xlu0 %1980
      %1982 = vrot.lane.b32.xlu0 %v1416, 96
      %v1983 = vpop.permute.xlu0 %1982
      %1984 = vrot.lane.b32.xlu0 %v1417, 96
      %v1985 = vpop.permute.xlu0 %1984
      %v1991 = vsel %vm1530, %v1966, 0
      %v1994 = vsel %vm1530, %v1967, 0
      %v1997 = vsel %vm1530, %v1968, 0
      %v2000 = vsel %vm1530, %v1969, 0
      %v2003 = vsel %vm1530, %v1970, 0
      %v2006 = vsel %vm1650, %v1985, 0
      %2008 = vmatprep.subr.bf16.mxu0 0
      %2009 = vmatpush1.bf16.msra.mxu0 %v1977
      %2010 = vmatprep.subr.bf16.mxu0 0
      %2011 = vmatpush1.bf16.msra.mxu0 %v1979
      %2012 = vmatprep.subr.bf16.mxu0 0
      %2013 = vmatpush1.bf16.msra.mxu0 %v1981
      %2014 = vmatprep.subr.bf16.mxu0 0
      %2015 = vmatpush1.bf16.msra.mxu0 %v1983
      %2016 = vmatprep.subr.bf16.mxu0 0
      %2017 = vmatpush1.bf16.msra.mxu0 %v2006
      %2018 = vmatprep.subr.bf16.mxu0 0
      %2019 = vmatpush1.bf16.msra.mxu0 0
      %2020 = vmatprep.subr.bf16.mxu0 0
      %2021 = vmatpush1.bf16.msra.mxu0 0
      %2022 = vmatprep.subr.bf16.mxu0 0
      %2023 = vmatpush1.bf16.msra.mxu0 0
      %2024 = vmatprep.subr.bf16.mxu0 0
      %2025 = vmatpush1.bf16.msra.mxu0 0
      %2026 = vmatprep.subr.bf16.mxu0 0
      %2027 = vmatpush1.bf16.msra.mxu0 0
      %2028 = vmatprep.subr.bf16.mxu0 0
      %2029 = vmatpush1.bf16.msra.mxu0 0
      %2030 = vmatprep.subr.bf16.mxu0 0
      %2031 = vmatpush1.bf16.msra.mxu0 0
      %2032 = vmatprep.subr.bf16.mxu0 0
      %2033 = vmatpush1.bf16.msra.mxu0 0
      %2034 = vmatprep.subr.bf16.mxu0 0
      %2035 = vmatpush1.bf16.msra.mxu0 0
      %2036 = vmatprep.subr.bf16.mxu0 0
      %2037 = vmatpush1.bf16.msra.mxu0 0
      %2038 = vmatprep.subr.bf16.mxu0 0
      %2039 = vmatpush1.bf16.msra.mxu0 0
      %2040 = vmatprep.mubr.bf16.mxu0 0
      %2041 = vmatmul.mubr.bf16.gmra.mrb[0].mxu0 %v1991
      %v2042 = vpop.f32.mrb[0].mxu0
      %v2043 = vadd.f32 0.0, %v2042
      %v2044 = vpop.f32.mrb[0].mxu0
      %v2045 = vpop.f32.mrb[0].mxu0
      %v2046 = vadd.f32 0.0, %v2045
      %v2047 = vpop.f32.mrb[0].mxu0
      %2048 = vmatprep.mubr.bf16.mxu0 0
      %2049 = vmatmul.mubr.bf16.gmra.mrb[0].mxu0 %v1994
      %v2050 = vpop.f32.mrb[0].mxu0
      %v2051 = vadd.f32 0.0, %v2050
      %v2052 = vpop.f32.mrb[0].mxu0
      %v2053 = vpop.f32.mrb[0].mxu0
      %v2054 = vadd.f32 0.0, %v2053
      %v2055 = vpop.f32.mrb[0].mxu0
      %2056 = vmatprep.mubr.bf16.mxu0 0
      %2057 = vmatmul.mubr.bf16.gmra.mrb[0].mxu0 %v1997
      %v2058 = vpop.f32.mrb[0].mxu0
      %v2059 = vadd.f32 0.0, %v2058
      %v2060 = vpop.f32.mrb[0].mxu0
      %v2061 = vpop.f32.mrb[0].mxu0
      %v2062 = vadd.f32 0.0, %v2061
      %v2063 = vpop.f32.mrb[0].mxu0
      %2064 = vmatprep.mubr.bf16.mxu0 0
      %2065 = vmatmul.mubr.bf16.gmra.mrb[0].mxu0 %v2000
      %v2066 = vpop.f32.mrb[0].mxu0
      %v2067 = vadd.f32 0.0, %v2066
      %v2068 = vpop.f32.mrb[0].mxu0
      %v2069 = vpop.f32.mrb[0].mxu0
      %v2070 = vadd.f32 0.0, %v2069
      %v2071 = vpop.f32.mrb[0].mxu0
      %2072 = vmatprep.mubr.bf16.mxu0 0
      %2073 = vmatmul.mubr.bf16.gmra.mrb[0].mxu0 %v2003
      %v2074 = vpop.f32.mrb[0].mxu0
      %v2075 = vadd.f32 0.0, %v2074
      %v2076 = vpop.f32.mrb[0].mxu0
      %v2077 = vpop.f32.mrb[0].mxu0
      %v2078 = vpop.f32.mrb[0].mxu0
      %2079 = vdwg.mxu0
      %2080 = vrot.lane.b32.xlu0 %v1403, 64
      %v2081 = vpop.permute.xlu0 %2080
      %2082 = vrot.lane.b32.xlu0 %v1404, 64
      %v2083 = vpop.permute.xlu0 %2082
      %2084 = vrot.lane.b32.xlu0 %v1405, 64
      %v2085 = vpop.permute.xlu0 %2084
      %2086 = vrot.lane.b32.xlu0 %v1406, 64
      %v2087 = vpop.permute.xlu0 %2086
      %2088 = vrot.lane.b32.xlu0 %v1407, 64
      %v2089 = vpop.permute.xlu0 %2088
      %2090 = vrot.lane.b32.xlu0 %v1408, 64
      %v2091 = vpop.permute.xlu0 %2090
      %2092 = vrot.lane.b32.xlu0 %v1409, 64
      %v2093 = vpop.permute.xlu0 %2092
      %2094 = vrot.lane.b32.xlu0 %v1410, 64
      %v2095 = vpop.permute.xlu0 %2094
      %2096 = vrot.lane.b32.xlu0 %v1411, 64
      %v2097 = vpop.permute.xlu0 %2096
      %2098 = vrot.lane.b32.xlu0 %v1412, 64
      %v2099 = vpop.permute.xlu0 %2098
      %v2101 = vsel %vm1418, %v2081, 0
      %v2104 = vsel %vm1418, %v2083, 0
      %v2107 = vsel %vm1418, %v2085, 0
      %v2110 = vsel %vm1418, %v2087, 0
      %v2113 = vsel %vm1418, %v2089, 0
      %v2116 = vsel %vm1418, %v2091, 0
      %v2119 = vsel %vm1418, %v2093, 0
      %v2122 = vsel %vm1418, %v2095, 0
      %v2125 = vsel %vm1418, %v2097, 0
      %v2128 = vsel %vm1418, %v2099, 0
      %2130 = vmatprep.subr.bf16.mxu0 0
      %2131 = vmatpush1.bf16.xpose.msra.mxu0 %v2116
      %2132 = vmatprep.subr.bf16.mxu0 0
      %2133 = vmatpush1.bf16.xpose.msra.mxu0 %v2119
      %2134 = vmatprep.subr.bf16.mxu0 0
      %2135 = vmatpush1.bf16.xpose.msra.mxu0 %v2122
      %2136 = vmatprep.subr.bf16.mxu0 0
      %2137 = vmatpush1.bf16.xpose.msra.mxu0 %v2125
      %2138 = vmatprep.subr.bf16.mxu0 0
      %2139 = vmatpush1.bf16.xpose.msra.mxu0 %v2128
      %2140 = vmatprep.subr.bf16.mxu0 0
      %2141 = vmatpush1.bf16.xpose.msra.mxu0 0
      %2142 = vmatprep.subr.bf16.mxu0 0
      %2143 = vmatpush1.bf16.xpose.msra.mxu0 0
      %2144 = vmatprep.subr.bf16.mxu0 0
      %2145 = vmatpush1.bf16.xpose.msra.mxu0 0
      %2146 = vmatprep.subr.bf16.mxu0 0
      %2147 = vmatpush1.bf16.xpose.msra.mxu0 0
      %2148 = vmatprep.subr.bf16.mxu0 0
      %2149 = vmatpush1.bf16.xpose.msra.mxu0 0
      %2150 = vmatprep.subr.bf16.mxu0 0
      %2151 = vmatpush1.bf16.xpose.msra.mxu0 0
      %2152 = vmatprep.subr.bf16.mxu0 0
      %2153 = vmatpush1.bf16.xpose.msra.mxu0 0
      %2154 = vmatprep.subr.bf16.mxu0 0
      %2155 = vmatpush1.bf16.xpose.msra.mxu0 0
      %2156 = vmatprep.subr.bf16.mxu0 0
      %2157 = vmatpush1.bf16.xpose.msra.mxu0 0
      %2158 = vmatprep.subr.bf16.mxu0 0
      %2159 = vmatpush1.bf16.xpose.msra.mxu0 0
      %2160 = vmatprep.subr.bf16.mxu0 0
      %2161 = vmatpush1.bf16.xpose.msra.mxu0 0
      %2162 = vmatprep.mubr.bf16.mxu0 0
      %2163 = vmatmul.mubr.bf16.gmra.mrb[0].mxu0 %v2101
      %v2164 = vpop.f32.mrb[0].mxu0
      %v2165 = vadd.f32 0.0, %v2164
      %v2166 = vpop.f32.mrb[0].mxu0
      %v2167 = vpop.f32.mrb[0].mxu0
      %v2168 = vadd.f32 0.0, %v2167
      %v2169 = vpop.f32.mrb[0].mxu0
      %2170 = vmatprep.mubr.bf16.mxu0 0
      %2171 = vmatmul.mubr.bf16.gmra.mrb[0].mxu0 %v2104
      %v2172 = vpop.f32.mrb[0].mxu0
      %v2173 = vadd.f32 0.0, %v2172
      %v2174 = vpop.f32.mrb[0].mxu0
      %v2175 = vpop.f32.mrb[0].mxu0
      %v2176 = vadd.f32 0.0, %v2175
      %v2177 = vpop.f32.mrb[0].mxu0
      %2178 = vmatprep.mubr.bf16.mxu0 0
      %2179 = vmatmul.mubr.bf16.gmra.mrb[0].mxu0 %v2107
      %v2180 = vpop.f32.mrb[0].mxu0
      %v2181 = vadd.f32 0.0, %v2180
      %v2182 = vpop.f32.mrb[0].mxu0
      %v2183 = vpop.f32.mrb[0].mxu0
      %v2184 = vadd.f32 0.0, %v2183
      %v2185 = vpop.f32.mrb[0].mxu0
      %2186 = vmatprep.mubr.bf16.mxu0 0
      %2187 = vmatmul.mubr.bf16.gmra.mrb[0].mxu0 %v2110
      %v2188 = vpop.f32.mrb[0].mxu0
      %v2189 = vadd.f32 0.0, %v2188
      %v2190 = vpop.f32.mrb[0].mxu0
      %v2191 = vpop.f32.mrb[0].mxu0
      %v2192 = vadd.f32 0.0, %v2191
      %v2193 = vpop.f32.mrb[0].mxu0
      %2194 = vmatprep.mubr.bf16.mxu0 0
      %2195 = vmatmul.mubr.bf16.gmra.mrb[0].mxu0 %v2113
      %v2196 = vpop.f32.mrb[0].mxu0
      %v2197 = vadd.f32 0.0, %v2196
      %v2198 = vpop.f32.mrb[0].mxu0
      %v2199 = vpop.f32.mrb[0].mxu0
      %v2200 = vpop.f32.mrb[0].mxu0
      %2201 = vdwg.mxu0
      %v2202 = vmul.f32 %v2165, 0.17677669
      %v2203 = vmul.f32 %v2168, 0.17677669
      %v2204 = vmul.f32 %v2173, 0.17677669
      %v2205 = vmul.f32 %v2176, 0.17677669
      %v2206 = vmul.f32 %v2181, 0.17677669
      %v2207 = vmul.f32 %v2184, 0.17677669
      %v2208 = vmul.f32 %v2189, 0.17677669
      %v2209 = vmul.f32 %v2192, 0.17677669
      %v2210 = vmul.f32 %v2197, 0.17677669
      %v2211 = vsel %vm1530, %v2202, -inf
      %2212 = vmax.xlane.f32.xlu0 %v2211
      %v2213 = vpop.xlane.xlu0 %2212
      %v2214 = vsel %vm1530, %v2203, -inf
      %2215 = vmax.xlane.f32.xlu0 %v2214
      %v2216 = vpop.xlane.xlu0 %2215
      %v2217 = vsel %vm1530, %v2204, -inf
      %2218 = vmax.xlane.f32.xlu0 %v2217
      %v2219 = vpop.xlane.xlu0 %2218
      %v2220 = vsel %vm1530, %v2205, -inf
      %2221 = vmax.xlane.f32.xlu0 %v2220
      %v2222 = vpop.xlane.xlu0 %2221
      %v2223 = vsel %vm1530, %v2206, -inf
      %2224 = vmax.xlane.f32.xlu0 %v2223
      %v2225 = vpop.xlane.xlu0 %2224
      %v2226 = vsel %vm1530, %v2207, -inf
      %2227 = vmax.xlane.f32.xlu0 %v2226
      %v2228 = vpop.xlane.xlu0 %2227
      %v2229 = vsel %vm1530, %v2208, -inf
      %2230 = vmax.xlane.f32.xlu0 %v2229
      %v2231 = vpop.xlane.xlu0 %2230
      %v2232 = vsel %vm1530, %v2209, -inf
      %2233 = vmax.xlane.f32.xlu0 %v2232
      %v2234 = vpop.xlane.xlu0 %2233
      %v2235 = vsel %vm1530, %v2210, -inf
      %2236 = vmax.xlane.f32.xlu0 %v2235
      %v2237 = vpop.xlane.xlu0 %2236
      %v2238 = vsub.f32 %v2202, %v2213
      %v2239 = vsub.f32 %v2203, %v2216
      %v2240 = vsub.f32 %v2204, %v2219
      %v2241 = vsub.f32 %v2205, %v2222
      %v2242 = vsub.f32 %v2206, %v2225
      %v2243 = vsub.f32 %v2207, %v2228
      %v2244 = vsub.f32 %v2208, %v2231
      %v2245 = vsub.f32 %v2209, %v2234
      %v2246 = vsub.f32 %v2210, %v2237
      %v2247 = vmul.f32 %v2238, 1.442695
      %v2248 = vpow.pop %v2247
      %v2249 = vmul.f32 %v2239, 1.442695
      %v2250 = vpow.pop %v2249
      %v2251 = vmul.f32 %v2240, 1.442695
      %v2252 = vpow.pop %v2251
      %v2253 = vmul.f32 %v2241, 1.442695
      %v2254 = vpow.pop %v2253
      %v2255 = vmul.f32 %v2242, 1.442695
      %v2256 = vpow.pop %v2255
      %v2257 = vmul.f32 %v2243, 1.442695
      %v2258 = vpow.pop %v2257
      %v2259 = vmul.f32 %v2244, 1.442695
      %v2260 = vpow.pop %v2259
      %v2261 = vmul.f32 %v2245, 1.442695
      %v2262 = vpow.pop %v2261
      %v2263 = vmul.f32 %v2246, 1.442695
      %v2264 = vpow.pop %v2263
      %v2265 = vsel %vm1530, %v2248, 0.0
      %2266 = vadd.xlane.f32.xlu0 %v2265
      %v2267 = vpop.xlane.xlu0 %2266
      %v2268 = vsel %vm1530, %v2250, 0.0
      %2269 = vadd.xlane.f32.xlu0 %v2268
      %v2270 = vpop.xlane.xlu0 %2269
      %v2271 = vsel %vm1530, %v2252, 0.0
      %2272 = vadd.xlane.f32.xlu0 %v2271
      %v2273 = vpop.xlane.xlu0 %2272
      %v2274 = vsel %vm1530, %v2254, 0.0
      %2275 = vadd.xlane.f32.xlu0 %v2274
      %v2276 = vpop.xlane.xlu0 %2275
      %v2277 = vsel %vm1530, %v2256, 0.0
      %2278 = vadd.xlane.f32.xlu0 %v2277
      %v2279 = vpop.xlane.xlu0 %2278
      %v2280 = vsel %vm1530, %v2258, 0.0
      %2281 = vadd.xlane.f32.xlu0 %v2280
      %v2282 = vpop.xlane.xlu0 %2281
      %v2283 = vsel %vm1530, %v2260, 0.0
      %2284 = vadd.xlane.f32.xlu0 %v2283
      %v2285 = vpop.xlane.xlu0 %2284
      %v2286 = vsel %vm1530, %v2262, 0.0
      %2287 = vadd.xlane.f32.xlu0 %v2286
      %v2288 = vpop.xlane.xlu0 %2287
      %v2289 = vsel %vm1530, %v2264, 0.0
      %2290 = vadd.xlane.f32.xlu0 %v2289
      %v2291 = vpop.xlane.xlu0 %2290
      %v2292 = vrcp.pop %v2267
      %v2293 = vrcp.pop %v2270
      %v2294 = vrcp.pop %v2273
      %v2295 = vrcp.pop %v2276
      %v2296 = vrcp.pop %v2279
      %v2297 = vrcp.pop %v2282
      %v2298 = vrcp.pop %v2285
      %v2299 = vrcp.pop %v2288
      %v2300 = vrcp.pop %v2291
      %v2301 = vmul.f32 %v2248, %v2292
      %v2302 = vmul.f32 %v2250, %v2293
      %v2303 = vmul.f32 %v2252, %v2294
      %v2304 = vmul.f32 %v2254, %v2295
      %v2305 = vmul.f32 %v2256, %v2296
      %v2306 = vmul.f32 %v2258, %v2297
      %v2307 = vmul.f32 %v2260, %v2298
      %v2308 = vmul.f32 %v2262, %v2299
      %v2309 = vmul.f32 %v2264, %v2300
      %v2310 = vpack.c.bf16 %v2302, %v2301
      %v2311 = vpack.c.bf16 %v2304, %v2303
      %v2312 = vpack.c.bf16 %v2306, %v2305
      %v2313 = vpack.c.bf16 %v2308, %v2307
      %v2314 = vpack.c.bf16 %v2309, %v2309
      %2315 = vrot.lane.b32.xlu0 %v1413, 64
      %v2316 = vpop.permute.xlu0 %2315
      %2317 = vrot.lane.b32.xlu0 %v1414, 64
      %v2318 = vpop.permute.xlu0 %2317
      %2319 = vrot.lane.b32.xlu0 %v1415, 64
      %v2320 = vpop.permute.xlu0 %2319
      %2321 = vrot.lane.b32.xlu0 %v1416, 64
      %v2322 = vpop.permute.xlu0 %2321
      %2323 = vrot.lane.b32.xlu0 %v1417, 64
      %v2324 = vpop.permute.xlu0 %2323
      %v2330 = vsel %vm1530, %v2310, 0
      %v2333 = vsel %vm1530, %v2311, 0
      %v2336 = vsel %vm1530, %v2312, 0
      %v2339 = vsel %vm1530, %v2313, 0
      %v2342 = vsel %vm1530, %v2314, 0
      %v2345 = vsel %vm1650, %v2324, 0
      %2347 = vmatprep.subr.bf16.mxu0 0
      %2348 = vmatpush1.bf16.msra.mxu0 %v2316
      %2349 = vmatprep.subr.bf16.mxu0 0
      %2350 = vmatpush1.bf16.msra.mxu0 %v2318
      %2351 = vmatprep.subr.bf16.mxu0 0
      %2352 = vmatpush1.bf16.msra.mxu0 %v2320
      %2353 = vmatprep.subr.bf16.mxu0 0
      %2354 = vmatpush1.bf16.msra.mxu0 %v2322
      %2355 = vmatprep.subr.bf16.mxu0 0
      %2356 = vmatpush1.bf16.msra.mxu0 %v2345
      %2357 = vmatprep.subr.bf16.mxu0 0
      %2358 = vmatpush1.bf16.msra.mxu0 0
      %2359 = vmatprep.subr.bf16.mxu0 0
      %2360 = vmatpush1.bf16.msra.mxu0 0
      %2361 = vmatprep.subr.bf16.mxu0 0
      %2362 = vmatpush1.bf16.msra.mxu0 0
      %2363 = vmatprep.subr.bf16.mxu0 0
      %2364 = vmatpush1.bf16.msra.mxu0 0
      %2365 = vmatprep.subr.bf16.mxu0 0
      %2366 = vmatpush1.bf16.msra.mxu0 0
      %2367 = vmatprep.subr.bf16.mxu0 0
      %2368 = vmatpush1.bf16.msra.mxu0 0
      %2369 = vmatprep.subr.bf16.mxu0 0
      %2370 = vmatpush1.bf16.msra.mxu0 0
      %2371 = vmatprep.subr.bf16.mxu0 0
      %2372 = vmatpush1.bf16.msra.mxu0 0
      %2373 = vmatprep.subr.bf16.mxu0 0
      %2374 = vmatpush1.bf16.msra.mxu0 0
      %2375 = vmatprep.subr.bf16.mxu0 0
      %2376 = vmatpush1.bf16.msra.mxu0 0
      %2377 = vmatprep.subr.bf16.mxu0 0
      %2378 = vmatpush1.bf16.msra.mxu0 0
      %2379 = vmatprep.mubr.bf16.mxu0 0
      %2380 = vmatmul.mubr.bf16.gmra.mrb[0].mxu0 %v2330
      %v2381 = vpop.f32.mrb[0].mxu0
      %v2382 = vadd.f32 0.0, %v2381
      %v2383 = vpop.f32.mrb[0].mxu0
      %v2384 = vpop.f32.mrb[0].mxu0
      %v2385 = vadd.f32 0.0, %v2384
      %v2386 = vpop.f32.mrb[0].mxu0
      %2387 = vmatprep.mubr.bf16.mxu0 0
      %2388 = vmatmul.mubr.bf16.gmra.mrb[0].mxu0 %v2333
      %v2389 = vpop.f32.mrb[0].mxu0
      %v2390 = vadd.f32 0.0, %v2389
      %v2391 = vpop.f32.mrb[0].mxu0
      %v2392 = vpop.f32.mrb[0].mxu0
      %v2393 = vadd.f32 0.0, %v2392
      %v2394 = vpop.f32.mrb[0].mxu0
      %2395 = vmatprep.mubr.bf16.mxu0 0
      %2396 = vmatmul.mubr.bf16.gmra.mrb[0].mxu0 %v2336
      %v2397 = vpop.f32.mrb[0].mxu0
      %v2398 = vadd.f32 0.0, %v2397
      %v2399 = vpop.f32.mrb[0].mxu0
      %v2400 = vpop.f32.mrb[0].mxu0
      %v2401 = vadd.f32 0.0, %v2400
      %v2402 = vpop.f32.mrb[0].mxu0
      %2403 = vmatprep.mubr.bf16.mxu0 0
      %2404 = vmatmul.mubr.bf16.gmra.mrb[0].mxu0 %v2339
      %v2405 = vpop.f32.mrb[0].mxu0
      %v2406 = vadd.f32 0.0, %v2405
      %v2407 = vpop.f32.mrb[0].mxu0
      %v2408 = vpop.f32.mrb[0].mxu0
      %v2409 = vadd.f32 0.0, %v2408
      %v2410 = vpop.f32.mrb[0].mxu0
      %2411 = vmatprep.mubr.bf16.mxu0 0
      %2412 = vmatmul.mubr.bf16.gmra.mrb[0].mxu0 %v2342
      %v2413 = vpop.f32.mrb[0].mxu0
      %v2414 = vadd.f32 0.0, %v2413
      %v2415 = vpop.f32.mrb[0].mxu0
      %v2416 = vpop.f32.mrb[0].mxu0
      %v2417 = vpop.f32.mrb[0].mxu0
      %2418 = vdwg.mxu0
      %2419 = vrot.lane.b32.xlu0 %v1403, 32
      %v2420 = vpop.permute.xlu0 %2419
      %2421 = vrot.lane.b32.xlu0 %v1404, 32
      %v2422 = vpop.permute.xlu0 %2421
      %2423 = vrot.lane.b32.xlu0 %v1405, 32
      %v2424 = vpop.permute.xlu0 %2423
      %2425 = vrot.lane.b32.xlu0 %v1406, 32
      %v2426 = vpop.permute.xlu0 %2425
      %2427 = vrot.lane.b32.xlu0 %v1407, 32
      %v2428 = vpop.permute.xlu0 %2427
      %2429 = vrot.lane.b32.xlu0 %v1408, 32
      %v2430 = vpop.permute.xlu0 %2429
      %2431 = vrot.lane.b32.xlu0 %v1409, 32
      %v2432 = vpop.permute.xlu0 %2431
      %2433 = vrot.lane.b32.xlu0 %v1410, 32
      %v2434 = vpop.permute.xlu0 %2433
      %2435 = vrot.lane.b32.xlu0 %v1411, 32
      %v2436 = vpop.permute.xlu0 %2435
      %2437 = vrot.lane.b32.xlu0 %v1412, 32
      %v2438 = vpop.permute.xlu0 %2437
      %v2440 = vsel %vm1418, %v2420, 0
      %v2443 = vsel %vm1418, %v2422, 0
      %v2446 = vsel %vm1418, %v2424, 0
      %v2449 = vsel %vm1418, %v2426, 0
      %v2452 = vsel %vm1418, %v2428, 0
      %v2455 = vsel %vm1418, %v2430, 0
      %v2458 = vsel %vm1418, %v2432, 0
      %v2461 = vsel %vm1418, %v2434, 0
      %v2464 = vsel %vm1418, %v2436, 0
      %v2467 = vsel %vm1418, %v2438, 0
      %2469 = vmatprep.subr.bf16.mxu0 0
      %2470 = vmatpush1.bf16.xpose.msra.mxu0 %v2455
      %2471 = vmatprep.subr.bf16.mxu0 0
      %2472 = vmatpush1.bf16.xpose.msra.mxu0 %v2458
      %2473 = vmatprep.subr.bf16.mxu0 0
      %2474 = vmatpush1.bf16.xpose.msra.mxu0 %v2461
      %2475 = vmatprep.subr.bf16.mxu0 0
      %2476 = vmatpush1.bf16.xpose.msra.mxu0 %v2464
      %2477 = vmatprep.subr.bf16.mxu0 0
      %2478 = vmatpush1.bf16.xpose.msra.mxu0 %v2467
      %2479 = vmatprep.subr.bf16.mxu0 0
      %2480 = vmatpush1.bf16.xpose.msra.mxu0 0
      %2481 = vmatprep.subr.bf16.mxu0 0
      %2482 = vmatpush1.bf16.xpose.msra.mxu0 0
      %2483 = vmatprep.subr.bf16.mxu0 0
      %2484 = vmatpush1.bf16.xpose.msra.mxu0 0
      %2485 = vmatprep.subr.bf16.mxu0 0
      %2486 = vmatpush1.bf16.xpose.msra.mxu0 0
      %2487 = vmatprep.subr.bf16.mxu0 0
      %2488 = vmatpush1.bf16.xpose.msra.mxu0 0
      %2489 = vmatprep.subr.bf16.mxu0 0
      %2490 = vmatpush1.bf16.xpose.msra.mxu0 0
      %2491 = vmatprep.subr.bf16.mxu0 0
      %2492 = vmatpush1.bf16.xpose.msra.mxu0 0
      %2493 = vmatprep.subr.bf16.mxu0 0
      %2494 = vmatpush1.bf16.xpose.msra.mxu0 0
      %2495 = vmatprep.subr.bf16.mxu0 0
      %2496 = vmatpush1.bf16.xpose.msra.mxu0 0
      %2497 = vmatprep.subr.bf16.mxu0 0
      %2498 = vmatpush1.bf16.xpose.msra.mxu0 0
      %2499 = vmatprep.subr.bf16.mxu0 0
      %2500 = vmatpush1.bf16.xpose.msra.mxu0 0
      %2501 = vmatprep.mubr.bf16.mxu0 0
      %2502 = vmatmul.mubr.bf16.gmra.mrb[0].mxu0 %v2440
      %v2503 = vpop.f32.mrb[0].mxu0
      %v2504 = vadd.f32 0.0, %v2503
      %v2505 = vpop.f32.mrb[0].mxu0
      %v2506 = vpop.f32.mrb[0].mxu0
      %v2507 = vadd.f32 0.0, %v2506
      %v2508 = vpop.f32.mrb[0].mxu0
      %2509 = vmatprep.mubr.bf16.mxu0 0
      %2510 = vmatmul.mubr.bf16.gmra.mrb[0].mxu0 %v2443
      %v2511 = vpop.f32.mrb[0].mxu0
      %v2512 = vadd.f32 0.0, %v2511
      %v2513 = vpop.f32.mrb[0].mxu0
      %v2514 = vpop.f32.mrb[0].mxu0
      %v2515 = vadd.f32 0.0, %v2514
      %v2516 = vpop.f32.mrb[0].mxu0
      %2517 = vmatprep.mubr.bf16.mxu0 0
      %2518 = vmatmul.mubr.bf16.gmra.mrb[0].mxu0 %v2446
      %v2519 = vpop.f32.mrb[0].mxu0
      %v2520 = vadd.f32 0.0, %v2519
      %v2521 = vpop.f32.mrb[0].mxu0
      %v2522 = vpop.f32.mrb[0].mxu0
      %v2523 = vadd.f32 0.0, %v2522
      %v2524 = vpop.f32.mrb[0].mxu0
      %2525 = vmatprep.mubr.bf16.mxu0 0
      %2526 = vmatmul.mubr.bf16.gmra.mrb[0].mxu0 %v2449
      %v2527 = vpop.f32.mrb[0].mxu0
      %v2528 = vadd.f32 0.0, %v2527
      %v2529 = vpop.f32.mrb[0].mxu0
      %v2530 = vpop.f32.mrb[0].mxu0
      %v2531 = vadd.f32 0.0, %v2530
      %v2532 = vpop.f32.mrb[0].mxu0
      %2533 = vmatprep.mubr.bf16.mxu0 0
      %2534 = vmatmul.mubr.bf16.gmra.mrb[0].mxu0 %v2452
      %v2535 = vpop.f32.mrb[0].mxu0
      %v2536 = vadd.f32 0.0, %v2535
      %v2537 = vpop.f32.mrb[0].mxu0
      %v2538 = vpop.f32.mrb[0].mxu0
      %v2539 = vpop.f32.mrb[0].mxu0
      %2540 = vdwg.mxu0
      %v2541 = vmul.f32 %v2504, 0.17677669
      %v2542 = vmul.f32 %v2507, 0.17677669
      %v2543 = vmul.f32 %v2512, 0.17677669
      %v2544 = vmul.f32 %v2515, 0.17677669
      %v2545 = vmul.f32 %v2520, 0.17677669
      %v2546 = vmul.f32 %v2523, 0.17677669
      %v2547 = vmul.f32 %v2528, 0.17677669
      %v2548 = vmul.f32 %v2531, 0.17677669
      %v2549 = vmul.f32 %v2536, 0.17677669
      %v2550 = vsel %vm1530, %v2541, -inf
      %2551 = vmax.xlane.f32.xlu0 %v2550
      %v2552 = vpop.xlane.xlu0 %2551
      %v2553 = vsel %vm1530, %v2542, -inf
      %2554 = vmax.xlane.f32.xlu0 %v2553
      %v2555 = vpop.xlane.xlu0 %2554
      %v2556 = vsel %vm1530, %v2543, -inf
      %2557 = vmax.xlane.f32.xlu0 %v2556
      %v2558 = vpop.xlane.xlu0 %2557
      %v2559 = vsel %vm1530, %v2544, -inf
      %2560 = vmax.xlane.f32.xlu0 %v2559
      %v2561 = vpop.xlane.xlu0 %2560
      %v2562 = vsel %vm1530, %v2545, -inf
      %2563 = vmax.xlane.f32.xlu0 %v2562
      %v2564 = vpop.xlane.xlu0 %2563
      %v2565 = vsel %vm1530, %v2546, -inf
      %2566 = vmax.xlane.f32.xlu0 %v2565
      %v2567 = vpop.xlane.xlu0 %2566
      %v2568 = vsel %vm1530, %v2547, -inf
      %2569 = vmax.xlane.f32.xlu0 %v2568
      %v2570 = vpop.xlane.xlu0 %2569
      %v2571 = vsel %vm1530, %v2548, -inf
      %2572 = vmax.xlane.f32.xlu0 %v2571
      %v2573 = vpop.xlane.xlu0 %2572
      %v2574 = vsel %vm1530, %v2549, -inf
      %2575 = vmax.xlane.f32.xlu0 %v2574
      %v2576 = vpop.xlane.xlu0 %2575
      %v2577 = vsub.f32 %v2541, %v2552
      %v2578 = vsub.f32 %v2542, %v2555
      %v2579 = vsub.f32 %v2543, %v2558
      %v2580 = vsub.f32 %v2544, %v2561
      %v2581 = vsub.f32 %v2545, %v2564
      %v2582 = vsub.f32 %v2546, %v2567
      %v2583 = vsub.f32 %v2547, %v2570
      %v2584 = vsub.f32 %v2548, %v2573
      %v2585 = vsub.f32 %v2549, %v2576
      %v2586 = vmul.f32 %v2577, 1.442695
      %v2587 = vpow.pop %v2586
      %v2588 = vmul.f32 %v2578, 1.442695
      %v2589 = vpow.pop %v2588
      %v2590 = vmul.f32 %v2579, 1.442695
      %v2591 = vpow.pop %v2590
      %v2592 = vmul.f32 %v2580, 1.442695
      %v2593 = vpow.pop %v2592
      %v2594 = vmul.f32 %v2581, 1.442695
      %v2595 = vpow.pop %v2594
      %v2596 = vmul.f32 %v2582, 1.442695
      %v2597 = vpow.pop %v2596
      %v2598 = vmul.f32 %v2583, 1.442695
      %v2599 = vpow.pop %v2598
      %v2600 = vmul.f32 %v2584, 1.442695
      %v2601 = vpow.pop %v2600
      %v2602 = vmul.f32 %v2585, 1.442695
      %v2603 = vpow.pop %v2602
      %v2604 = vsel %vm1530, %v2587, 0.0
      %2605 = vadd.xlane.f32.xlu0 %v2604
      %v2606 = vpop.xlane.xlu0 %2605
      %v2607 = vsel %vm1530, %v2589, 0.0
      %2608 = vadd.xlane.f32.xlu0 %v2607
      %v2609 = vpop.xlane.xlu0 %2608
      %v2610 = vsel %vm1530, %v2591, 0.0
      %2611 = vadd.xlane.f32.xlu0 %v2610
      %v2612 = vpop.xlane.xlu0 %2611
      %v2613 = vsel %vm1530, %v2593, 0.0
      %2614 = vadd.xlane.f32.xlu0 %v2613
      %v2615 = vpop.xlane.xlu0 %2614
      %v2616 = vsel %vm1530, %v2595, 0.0
      %2617 = vadd.xlane.f32.xlu0 %v2616
      %v2618 = vpop.xlane.xlu0 %2617
      %v2619 = vsel %vm1530, %v2597, 0.0
      %2620 = vadd.xlane.f32.xlu0 %v2619
      %v2621 = vpop.xlane.xlu0 %2620
      %v2622 = vsel %vm1530, %v2599, 0.0
      %2623 = vadd.xlane.f32.xlu0 %v2622
      %v2624 = vpop.xlane.xlu0 %2623
      %v2625 = vsel %vm1530, %v2601, 0.0
      %2626 = vadd.xlane.f32.xlu0 %v2625
      %v2627 = vpop.xlane.xlu0 %2626
      %v2628 = vsel %vm1530, %v2603, 0.0
      %2629 = vadd.xlane.f32.xlu0 %v2628
      %v2630 = vpop.xlane.xlu0 %2629
      %v2631 = vrcp.pop %v2606
      %v2632 = vrcp.pop %v2609
      %v2633 = vrcp.pop %v2612
      %v2634 = vrcp.pop %v2615
      %v2635 = vrcp.pop %v2618
      %v2636 = vrcp.pop %v2621
      %v2637 = vrcp.pop %v2624
      %v2638 = vrcp.pop %v2627
      %v2639 = vrcp.pop %v2630
      %v2640 = vmul.f32 %v2587, %v2631
      %v2641 = vmul.f32 %v2589, %v2632
      %v2642 = vmul.f32 %v2591, %v2633
      %v2643 = vmul.f32 %v2593, %v2634
      %v2644 = vmul.f32 %v2595, %v2635
      %v2645 = vmul.f32 %v2597, %v2636
      %v2646 = vmul.f32 %v2599, %v2637
      %v2647 = vmul.f32 %v2601, %v2638
      %v2648 = vmul.f32 %v2603, %v2639
      %v2649 = vpack.c.bf16 %v2641, %v2640
      %v2650 = vpack.c.bf16 %v2643, %v2642
      %v2651 = vpack.c.bf16 %v2645, %v2644
      %v2652 = vpack.c.bf16 %v2647, %v2646
      %v2653 = vpack.c.bf16 %v2648, %v2648
      %2654 = vrot.lane.b32.xlu0 %v1413, 32
      %v2655 = vpop.permute.xlu0 %2654
      %2656 = vrot.lane.b32.xlu0 %v1414, 32
      %v2657 = vpop.permute.xlu0 %2656
      %2658 = vrot.lane.b32.xlu0 %v1415, 32
      %v2659 = vpop.permute.xlu0 %2658
      %2660 = vrot.lane.b32.xlu0 %v1416, 32
      %v2661 = vpop.permute.xlu0 %2660
      %2662 = vrot.lane.b32.xlu0 %v1417, 32
      %v2663 = vpop.permute.xlu0 %2662
      %v2669 = vsel %vm1530, %v2649, 0
      %v2672 = vsel %vm1530, %v2650, 0
      %v2675 = vsel %vm1530, %v2651, 0
      %v2678 = vsel %vm1530, %v2652, 0
      %v2681 = vsel %vm1530, %v2653, 0
      %v2684 = vsel %vm1650, %v2663, 0
      %2686 = vmatprep.subr.bf16.mxu0 0
      %2687 = vmatpush1.bf16.msra.mxu0 %v2655
      %2688 = vmatprep.subr.bf16.mxu0 0
      %2689 = vmatpush1.bf16.msra.mxu0 %v2657
      %2690 = vmatprep.subr.bf16.mxu0 0
      %2691 = vmatpush1.bf16.msra.mxu0 %v2659
      %2692 = vmatprep.subr.bf16.mxu0 0
      %2693 = vmatpush1.bf16.msra.mxu0 %v2661
      %2694 = vmatprep.subr.bf16.mxu0 0
      %2695 = vmatpush1.bf16.msra.mxu0 %v2684
      %2696 = vmatprep.subr.bf16.mxu0 0
      %2697 = vmatpush1.bf16.msra.mxu0 0
      %2698 = vmatprep.subr.bf16.mxu0 0
      %2699 = vmatpush1.bf16.msra.mxu0 0
      %2700 = vmatprep.subr.bf16.mxu0 0
      %2701 = vmatpush1.bf16.msra.mxu0 0
      %2702 = vmatprep.subr.bf16.mxu0 0
      %2703 = vmatpush1.bf16.msra.mxu0 0
      %2704 = vmatprep.subr.bf16.mxu0 0
      %2705 = vmatpush1.bf16.msra.mxu0 0
      %2706 = vmatprep.subr.bf16.mxu0 0
      %2707 = vmatpush1.bf16.msra.mxu0 0
      %2708 = vmatprep.subr.bf16.mxu0 0
      %2709 = vmatpush1.bf16.msra.mxu0 0
      %2710 = vmatprep.subr.bf16.mxu0 0
      %2711 = vmatpush1.bf16.msra.mxu0 0
      %2712 = vmatprep.subr.bf16.mxu0 0
      %2713 = vmatpush1.bf16.msra.mxu0 0
      %2714 = vmatprep.subr.bf16.mxu0 0
      %2715 = vmatpush1.bf16.msra.mxu0 0
      %2716 = vmatprep.subr.bf16.mxu0 0
      %2717 = vmatpush1.bf16.msra.mxu0 0
      %2718 = vmatprep.mubr.bf16.mxu0 0
      %2719 = vmatmul.mubr.bf16.gmra.mrb[0].mxu0 %v2669
      %v2720 = vpop.f32.mrb[0].mxu0
      %v2721 = vadd.f32 0.0, %v2720
      %v2722 = vpop.f32.mrb[0].mxu0
      %v2723 = vpop.f32.mrb[0].mxu0
      %v2724 = vadd.f32 0.0, %v2723
      %v2725 = vpop.f32.mrb[0].mxu0
      %2726 = vmatprep.mubr.bf16.mxu0 0
      %2727 = vmatmul.mubr.bf16.gmra.mrb[0].mxu0 %v2672
      %v2728 = vpop.f32.mrb[0].mxu0
      %v2729 = vadd.f32 0.0, %v2728
      %v2730 = vpop.f32.mrb[0].mxu0
      %v2731 = vpop.f32.mrb[0].mxu0
      %v2732 = vadd.f32 0.0, %v2731
      %v2733 = vpop.f32.mrb[0].mxu0
      %2734 = vmatprep.mubr.bf16.mxu0 0
      %2735 = vmatmul.mubr.bf16.gmra.mrb[0].mxu0 %v2675
      %v2736 = vpop.f32.mrb[0].mxu0
      %v2737 = vadd.f32 0.0, %v2736
      %v2738 = vpop.f32.mrb[0].mxu0
      %v2739 = vpop.f32.mrb[0].mxu0
      %v2740 = vadd.f32 0.0, %v2739
      %v2741 = vpop.f32.mrb[0].mxu0
      %2742 = vmatprep.mubr.bf16.mxu0 0
      %2743 = vmatmul.mubr.bf16.gmra.mrb[0].mxu0 %v2678
      %v2744 = vpop.f32.mrb[0].mxu0
      %v2745 = vadd.f32 0.0, %v2744
      %v2746 = vpop.f32.mrb[0].mxu0
      %v2747 = vpop.f32.mrb[0].mxu0
      %v2748 = vadd.f32 0.0, %v2747
      %v2749 = vpop.f32.mrb[0].mxu0
      %2750 = vmatprep.mubr.bf16.mxu0 0
      %2751 = vmatmul.mubr.bf16.gmra.mrb[0].mxu0 %v2681
      %v2752 = vpop.f32.mrb[0].mxu0
      %v2753 = vadd.f32 0.0, %v2752
      %v2754 = vpop.f32.mrb[0].mxu0
      %v2755 = vpop.f32.mrb[0].mxu0
      %v2756 = vpop.f32.mrb[0].mxu0
      %2757 = vdwg.mxu0
      %2767 = vrot.lane.b32.xlu0 %v2043, 32
      %v2768 = vpop.permute.xlu0 %2767
      %2769 = vrot.lane.b32.xlu0 %v2046, 32
      %v2770 = vpop.permute.xlu0 %2769
      %2771 = vrot.lane.b32.xlu0 %v2051, 32
      %v2772 = vpop.permute.xlu0 %2771
      %2773 = vrot.lane.b32.xlu0 %v2054, 32
      %v2774 = vpop.permute.xlu0 %2773
      %2775 = vrot.lane.b32.xlu0 %v2059, 32
      %v2776 = vpop.permute.xlu0 %2775
      %2777 = vrot.lane.b32.xlu0 %v2062, 32
      %v2778 = vpop.permute.xlu0 %2777
      %2779 = vrot.lane.b32.xlu0 %v2067, 32
      %v2780 = vpop.permute.xlu0 %2779
      %2781 = vrot.lane.b32.xlu0 %v2070, 32
      %v2782 = vpop.permute.xlu0 %2781
      %2783 = vrot.lane.b32.xlu0 %v2075, 32
      %v2784 = vpop.permute.xlu0 %2783
      %2803 = vrot.lane.b32.xlu0 %v2382, 64
      %v2804 = vpop.permute.xlu0 %2803
      %2805 = vrot.lane.b32.xlu0 %v2385, 64
      %v2806 = vpop.permute.xlu0 %2805
      %2807 = vrot.lane.b32.xlu0 %v2390, 64
      %v2808 = vpop.permute.xlu0 %2807
      %2809 = vrot.lane.b32.xlu0 %v2393, 64
      %v2810 = vpop.permute.xlu0 %2809
      %2811 = vrot.lane.b32.xlu0 %v2398, 64
      %v2812 = vpop.permute.xlu0 %2811
      %2813 = vrot.lane.b32.xlu0 %v2401, 64
      %v2814 = vpop.permute.xlu0 %2813
      %2815 = vrot.lane.b32.xlu0 %v2406, 64
      %v2816 = vpop.permute.xlu0 %2815
      %2817 = vrot.lane.b32.xlu0 %v2409, 64
      %v2818 = vpop.permute.xlu0 %2817
      %2819 = vrot.lane.b32.xlu0 %v2414, 64
      %v2820 = vpop.permute.xlu0 %2819
      %2839 = vrot.lane.b32.xlu0 %v2721, 96
      %v2840 = vpop.permute.xlu0 %2839
      %2841 = vrot.lane.b32.xlu0 %v2724, 96
      %v2842 = vpop.permute.xlu0 %2841
      %2843 = vrot.lane.b32.xlu0 %v2729, 96
      %v2844 = vpop.permute.xlu0 %2843
      %2845 = vrot.lane.b32.xlu0 %v2732, 96
      %v2846 = vpop.permute.xlu0 %2845
      %2847 = vrot.lane.b32.xlu0 %v2737, 96
      %v2848 = vpop.permute.xlu0 %2847
      %2849 = vrot.lane.b32.xlu0 %v2740, 96
      %v2850 = vpop.permute.xlu0 %2849
      %2851 = vrot.lane.b32.xlu0 %v2745, 96
      %v2852 = vpop.permute.xlu0 %2851
      %2853 = vrot.lane.b32.xlu0 %v2748, 96
      %v2854 = vpop.permute.xlu0 %2853
      %2855 = vrot.lane.b32.xlu0 %v2753, 96
      %v2856 = vpop.permute.xlu0 %2855
      %v2866 = vsel %vm1418, %v1689, %v2768
      %v2867 = vsel %vm1418, %v1692, %v2770
      %v2868 = vsel %vm1418, %v1697, %v2772
      %v2869 = vsel %vm1418, %v1700, %v2774
      %v2870 = vsel %vm1418, %v1705, %v2776
      %v2871 = vsel %vm1418, %v1708, %v2778
      %v2872 = vsel %vm1418, %v1713, %v2780
      %v2873 = vsel %vm1418, %v1716, %v2782
      %v2874 = vsel %vm1418, %v1721, %v2784
      %vm2875 = vcmask 523264
      %v2876 = vsel %vm2875, %v2866, %v2804
      %v2877 = vsel %vm2875, %v2867, %v2806
      %v2878 = vsel %vm2875, %v2868, %v2808
      %v2879 = vsel %vm2875, %v2869, %v2810
      %v2880 = vsel %vm2875, %v2870, %v2812
      %v2881 = vsel %vm2875, %v2871, %v2814
      %v2882 = vsel %vm2875, %v2872, %v2816
      %v2883 = vsel %vm2875, %v2873, %v2818
      %v2884 = vsel %vm2875, %v2874, %v2820
      %vm2885 = vcmask 785408
      %v2886 = vsel %vm2885, %v2876, %v2840
      %v2887 = vsel %vm2885, %v2877, %v2842
      %v2888 = vsel %vm2885, %v2878, %v2844
      %v2889 = vsel %vm2885, %v2879, %v2846
      %v2890 = vsel %vm2885, %v2880, %v2848
      %v2891 = vsel %vm2885, %v2881, %v2850
      %v2892 = vsel %vm2885, %v2882, %v2852
      %v2893 = vsel %vm2885, %v2883, %v2854
      %v2894 = vsel %vm2885, %v2884, %v2856
      %v2895 = vpack.c.bf16 %v2887, %v2886
      %v2896 = vpack.c.bf16 %v2889, %v2888
      %v2897 = vpack.c.bf16 %v2891, %v2890
      %v2898 = vpack.c.bf16 %v2893, %v2892
      %v2899 = vld [vmem:[%s7] sm:$0xf]
      %v2900 = vld [vmem:[%s7 + $0x4] sm:$0xf]
      %v2901 = vld [vmem:[%s7 + $0x8] sm:$0xf]
      %v2902 = vld [vmem:[%s7 + $0xc] sm:$0xf]
      %v2903 = vld [vmem:[%s7 + $0x10] sm:$0xf]
      %v2904 = vld [vmem:[%s7 + $0x14] sm:$0xf]
      %v2905 = vld [vmem:[%s7 + $0x18] sm:$0xf]
      %v2906 = vld [vmem:[%s7 + $0x1c] sm:$0xf]
      %v2907 = vld [vmem:[%s7 + $0x20] sm:$0xf]
      %v2908 = vld [vmem:[%s7 + $0x24] sm:$0xf]
      %v2909 = vld [vmem:[%s7 + $0x28] sm:$0xf]
      %v2910 = vld [vmem:[%s7 + $0x2c] sm:$0xf]
      %v2911 = vld [vmem:[%s7 + $0x30] sm:$0xf]
      %v2912 = vld [vmem:[%s7 + $0x34] sm:$0xf]
      %v2913 = vld [vmem:[%s7 + $0x38] sm:$0xf]
      %v2914 = vld [vmem:[%s7 + $0x3c] sm:$0xf]
      %v2915 = vld [vmem:[%s8] sm:$0x1]
      %v2917 = vlaneseq
      %v2918 = vshrl.u32 %v2917, 7
      %v2919 = vsub.s32 0, %v2918
      %v2920 = vrot.slane %v2915, %v2919
      %v2938 = vunpack.c.l.b16 %v2899
      %v2939 = vunpack.c.l.b16 %v2900
      %v2940 = vunpack.c.l.b16 %v2901
      %v2941 = vunpack.c.l.b16 %v2902
      %v2942 = vunpack.c.l.b16 %v2903
      %v2943 = vunpack.c.l.b16 %v2904
      %v2944 = vunpack.c.l.b16 %v2905
      %v2945 = vunpack.c.l.b16 %v2906
      %v2946 = vunpack.c.l.b16 %v2907
      %v2947 = vunpack.c.l.b16 %v2908
      %v2948 = vunpack.c.l.b16 %v2909
      %v2949 = vunpack.c.l.b16 %v2910
      %v2950 = vunpack.c.l.b16 %v2911
      %v2951 = vunpack.c.l.b16 %v2912
      %v2952 = vunpack.c.l.b16 %v2913
      %v2953 = vunpack.c.l.b16 %v2914
      %v2954 = vpack.c.b16 %v2939, %v2938
      %v2955 = vpack.c.b16 %v2941, %v2940
      %v2956 = vpack.c.b16 %v2943, %v2942
      %v2957 = vpack.c.b16 %v2945, %v2944
      %v2958 = vpack.c.b16 %v2947, %v2946
      %v2959 = vpack.c.b16 %v2949, %v2948
      %v2960 = vpack.c.b16 %v2951, %v2950
      %v2961 = vpack.c.b16 %v2953, %v2952
      %2970 = vmatprep.subr.bf16.mxu0 0
      %2971 = vmatpush1.bf16.msra.mxu0 %v2954
      %2972 = vmatprep.subr.bf16.mxu0 0
      %2973 = vmatpush1.bf16.msra.mxu0 %v2955
      %2974 = vmatprep.subr.bf16.mxu0 0
      %2975 = vmatpush1.bf16.msra.mxu0 %v2956
      %2976 = vmatprep.subr.bf16.mxu0 0
      %2977 = vmatpush1.bf16.msra.mxu0 %v2957
      %2978 = vmatprep.subr.bf16.mxu0 0
      %2979 = vmatpush1.bf16.msra.mxu0 %v2958
      %2980 = vmatprep.subr.bf16.mxu0 0
      %2981 = vmatpush1.bf16.msra.mxu0 %v2959
      %2982 = vmatprep.subr.bf16.mxu0 0
      %2983 = vmatpush1.bf16.msra.mxu0 %v2960
      %2984 = vmatprep.subr.bf16.mxu0 0
      %2985 = vmatpush1.bf16.msra.mxu0 %v2961
      %2986 = vmatprep.subr.bf16.mxu0 0
      %2987 = vmatpush1.bf16.msra.mxu0 0
      %2988 = vmatprep.subr.bf16.mxu0 0
      %2989 = vmatpush1.bf16.msra.mxu0 0
      %2990 = vmatprep.subr.bf16.mxu0 0
      %2991 = vmatpush1.bf16.msra.mxu0 0
      %2992 = vmatprep.subr.bf16.mxu0 0
      %2993 = vmatpush1.bf16.msra.mxu0 0
      %2994 = vmatprep.subr.bf16.mxu0 0
      %2995 = vmatpush1.bf16.msra.mxu0 0
      %2996 = vmatprep.subr.bf16.mxu0 0
      %2997 = vmatpush1.bf16.msra.mxu0 0
      %2998 = vmatprep.subr.bf16.mxu0 0
      %2999 = vmatpush1.bf16.msra.mxu0 0
      %3000 = vmatprep.subr.bf16.mxu0 0
      %3001 = vmatpush1.bf16.msra.mxu0 0
      %3002 = vmatprep.mubr.bf16.mxu0 0
      %3003 = vmatmul.mubr.bf16.gmra.mrb[0].mxu0 %v2895
      %v3004 = vpop.f32.mrb[0].mxu0
      %v3005 = vadd.f32 %v2920, %v3004
      %v3006 = vpop.f32.mrb[0].mxu0
      %v3007 = vpop.f32.mrb[0].mxu0
      %v3008 = vadd.f32 %v2920, %v3007
      %v3009 = vpop.f32.mrb[0].mxu0
      %3010 = vmatprep.mubr.bf16.mxu0 0
      %3011 = vmatmul.mubr.bf16.gmra.mrb[0].mxu0 %v2896
      %v3012 = vpop.f32.mrb[0].mxu0
      %v3013 = vadd.f32 %v2920, %v3012
      %v3014 = vpop.f32.mrb[0].mxu0
      %v3015 = vpop.f32.mrb[0].mxu0
      %v3016 = vadd.f32 %v2920, %v3015
      %v3017 = vpop.f32.mrb[0].mxu0
      %3018 = vmatprep.mubr.bf16.mxu0 0
      %3019 = vmatmul.mubr.bf16.gmra.mrb[0].mxu0 %v2897
      %v3020 = vpop.f32.mrb[0].mxu0
      %v3021 = vadd.f32 %v2920, %v3020
      %v3022 = vpop.f32.mrb[0].mxu0
      %v3023 = vpop.f32.mrb[0].mxu0
      %v3024 = vadd.f32 %v2920, %v3023
      %v3025 = vpop.f32.mrb[0].mxu0
      %3026 = vmatprep.mubr.bf16.mxu0 0
      %3027 = vmatmul.mubr.bf16.gmra.mrb[0].mxu0 %v2898
      %v3028 = vpop.f32.mrb[0].mxu0
      %v3029 = vadd.f32 %v2920, %v3028
      %v3030 = vpop.f32.mrb[0].mxu0
      %v3031 = vpop.f32.mrb[0].mxu0
      %v3032 = vadd.f32 %v2920, %v3031
      %v3033 = vpop.f32.mrb[0].mxu0
      %3034 = vdwg.mxu0
      %v3035 = vlaneseq
      %v3036 = vshrl.u32 %v3035, 7
      %v3037 = vsub.s32 2, %v3036
      %v3038 = vrot.slane %v688, %v3037
      %v3039 = vmul.f32 %v3038, %v3005
      %v3040 = vmul.f32 %v3038, %v3008
      %v3041 = vmul.f32 %v3038, %v3013
      %v3042 = vmul.f32 %v3038, %v3016
      %v3043 = vmul.f32 %v3038, %v3021
      %v3044 = vmul.f32 %v3038, %v3024
      %v3045 = vmul.f32 %v3038, %v3029
      %v3046 = vmul.f32 %v3038, %v3032
      %v3047 = vadd.f32 %v679, %v3039
      %v3048 = vadd.f32 %v680, %v3040
      %v3049 = vadd.f32 %v681, %v3041
      %v3050 = vadd.f32 %v682, %v3042
      %v3051 = vadd.f32 %v683, %v3043
      %v3052 = vadd.f32 %v684, %v3044
      %v3053 = vadd.f32 %v685, %v3045
      %v3054 = vadd.f32 %v686, %v3046
      %v3055 = vpack.c.bf16 %v2894, %v2894
      %v3056 = vld [vmem:[%s9] sm:$0xf]
      %v3057 = vld [vmem:[%s9 + $0x4] sm:$0xf]
      %v3058 = vld [vmem:[%s9 + $0x8] sm:$0xf]
      %v3059 = vld [vmem:[%s9 + $0xc] sm:$0xf]
      %v3060 = vld [vmem:[%s9 + $0x10] sm:$0xf]
      %v3061 = vld [vmem:[%s9 + $0x14] sm:$0xf]
      %v3062 = vld [vmem:[%s9 + $0x18] sm:$0xf]
      %v3063 = vld [vmem:[%s9 + $0x1c] sm:$0xf]
      %v3064 = vld [vmem:[%s9 + $0x20] sm:$0xf]
      %v3065 = vld [vmem:[%s9 + $0x24] sm:$0xf]
      %v3066 = vld [vmem:[%s9 + $0x28] sm:$0xf]
      %v3067 = vld [vmem:[%s9 + $0x2c] sm:$0xf]
      %v3068 = vld [vmem:[%s9 + $0x30] sm:$0xf]
      %v3069 = vld [vmem:[%s9 + $0x34] sm:$0xf]
      %v3070 = vld [vmem:[%s9 + $0x38] sm:$0xf]
      %v3071 = vld [vmem:[%s9 + $0x3c] sm:$0xf]
      %v3072 = vld [vmem:[%s10] sm:$0x1]
      %v3074 = vlaneseq
      %v3075 = vshrl.u32 %v3074, 7
      %v3076 = vsub.s32 0, %v3075
      %v3077 = vrot.slane %v3072, %v3076
      %v3095 = vunpack.c.l.b16 %v3056
      %v3096 = vunpack.c.l.b16 %v3057
      %v3097 = vunpack.c.l.b16 %v3058
      %v3098 = vunpack.c.l.b16 %v3059
      %v3099 = vunpack.c.l.b16 %v3060
      %v3100 = vunpack.c.l.b16 %v3061
      %v3101 = vunpack.c.l.b16 %v3062
      %v3102 = vunpack.c.l.b16 %v3063
      %v3103 = vunpack.c.l.b16 %v3064
      %v3104 = vunpack.c.l.b16 %v3065
      %v3105 = vunpack.c.l.b16 %v3066
      %v3106 = vunpack.c.l.b16 %v3067
      %v3107 = vunpack.c.l.b16 %v3068
      %v3108 = vunpack.c.l.b16 %v3069
      %v3109 = vunpack.c.l.b16 %v3070
      %v3110 = vunpack.c.l.b16 %v3071
      %v3111 = vpack.c.b16 %v3096, %v3095
      %v3112 = vpack.c.b16 %v3098, %v3097
      %v3113 = vpack.c.b16 %v3100, %v3099
      %v3114 = vpack.c.b16 %v3102, %v3101
      %v3115 = vpack.c.b16 %v3104, %v3103
      %v3116 = vpack.c.b16 %v3106, %v3105
      %v3117 = vpack.c.b16 %v3108, %v3107
      %v3118 = vpack.c.b16 %v3110, %v3109
      %3127 = vmatprep.subr.bf16.mxu0 0
      %3128 = vmatpush1.bf16.msra.mxu0 %v3111
      %3129 = vmatprep.subr.bf16.mxu0 0
      %3130 = vmatpush1.bf16.msra.mxu0 %v3112
      %3131 = vmatprep.subr.bf16.mxu0 0
      %3132 = vmatpush1.bf16.msra.mxu0 %v3113
      %3133 = vmatprep.subr.bf16.mxu0 0
      %3134 = vmatpush1.bf16.msra.mxu0 %v3114
      %3135 = vmatprep.subr.bf16.mxu0 0
      %3136 = vmatpush1.bf16.msra.mxu0 %v3115
      %3137 = vmatprep.subr.bf16.mxu0 0
      %3138 = vmatpush1.bf16.msra.mxu0 %v3116
      %3139 = vmatprep.subr.bf16.mxu0 0
      %3140 = vmatpush1.bf16.msra.mxu0 %v3117
      %3141 = vmatprep.subr.bf16.mxu0 0
      %3142 = vmatpush1.bf16.msra.mxu0 %v3118
      %3143 = vmatprep.subr.bf16.mxu0 0
      %3144 = vmatpush1.bf16.msra.mxu0 0
      %3145 = vmatprep.subr.bf16.mxu0 0
      %3146 = vmatpush1.bf16.msra.mxu0 0
      %3147 = vmatprep.subr.bf16.mxu0 0
      %3148 = vmatpush1.bf16.msra.mxu0 0
      %3149 = vmatprep.subr.bf16.mxu0 0
      %3150 = vmatpush1.bf16.msra.mxu0 0
      %3151 = vmatprep.subr.bf16.mxu0 0
      %3152 = vmatpush1.bf16.msra.mxu0 0
      %3153 = vmatprep.subr.bf16.mxu0 0
      %3154 = vmatpush1.bf16.msra.mxu0 0
      %3155 = vmatprep.subr.bf16.mxu0 0
      %3156 = vmatpush1.bf16.msra.mxu0 0
      %3157 = vmatprep.subr.bf16.mxu0 0
      %3158 = vmatpush1.bf16.msra.mxu0 0
      %3159 = vmatprep.mubr.bf16.mxu0 0
      %3160 = vmatmul.mubr.bf16.gmra.mrb[0].mxu0 %v3055
      %v3161 = vpop.f32.mrb[0].mxu0
      %v3162 = vadd.f32 %v3077, %v3161
      %v3163 = vpop.f32.mrb[0].mxu0
      %v3164 = vpop.f32.mrb[0].mxu0
      %v3165 = vpop.f32.mrb[0].mxu0
      %3166 = vdwg.mxu0
      %v3167 = vlaneseq
      %v3168 = vshrl.u32 %v3167, 7
      %v3169 = vsub.s32 0, %v3168
      %v3170 = vrot.slane %v689, %v3169
      %v3171 = vmul.f32 %v3170, %v3162
      %v3172 = vadd.f32 %v687, %v3171
      %3173 = vadd.xlane.f32.xlu0 %v3047
      %v3174 = vpop.xlane.xlu0 %3173
      %3175 = vadd.xlane.f32.xlu0 %v3048
      %v3176 = vpop.xlane.xlu0 %3175
      %3177 = vadd.xlane.f32.xlu0 %v3049
      %v3178 = vpop.xlane.xlu0 %3177
      %3179 = vadd.xlane.f32.xlu0 %v3050
      %v3180 = vpop.xlane.xlu0 %3179
      %3181 = vadd.xlane.f32.xlu0 %v3051
      %v3182 = vpop.xlane.xlu0 %3181
      %3183 = vadd.xlane.f32.xlu0 %v3052
      %v3184 = vpop.xlane.xlu0 %3183
      %3185 = vadd.xlane.f32.xlu0 %v3053
      %v3186 = vpop.xlane.xlu0 %3185
      %3187 = vadd.xlane.f32.xlu0 %v3054
      %v3188 = vpop.xlane.xlu0 %3187
      %v3189 = vmul.f32 %v3174, %v706
      %v3190 = vmul.f32 %v3176, %v706
      %v3191 = vmul.f32 %v3178, %v706
      %v3192 = vmul.f32 %v3180, %v706
      %v3193 = vmul.f32 %v3182, %v706
      %v3194 = vmul.f32 %v3184, %v706
      %v3195 = vmul.f32 %v3186, %v706
      %v3196 = vmul.f32 %v3188, %v706
      %v3197 = vsub.f32 %v3047, %v3189
      %v3198 = vsub.f32 %v3048, %v3190
      %v3199 = vsub.f32 %v3049, %v3191
      %v3200 = vsub.f32 %v3050, %v3192
      %v3201 = vsub.f32 %v3051, %v3193
      %v3202 = vsub.f32 %v3052, %v3194
      %v3203 = vsub.f32 %v3053, %v3195
      %v3204 = vsub.f32 %v3054, %v3196
      %v3205 = vmul.f32 %v3197, %v3197
      %v3206 = vmul.f32 %v3198, %v3198
      %v3207 = vmul.f32 %v3199, %v3199
      %v3208 = vmul.f32 %v3200, %v3200
      %v3209 = vmul.f32 %v3201, %v3201
      %v3210 = vmul.f32 %v3202, %v3202
      %v3211 = vmul.f32 %v3203, %v3203
      %v3212 = vmul.f32 %v3204, %v3204
      %3213 = vadd.xlane.f32.xlu0 %v3205
      %v3214 = vpop.xlane.xlu0 %3213
      %3215 = vadd.xlane.f32.xlu0 %v3206
      %v3216 = vpop.xlane.xlu0 %3215
      %3217 = vadd.xlane.f32.xlu0 %v3207
      %v3218 = vpop.xlane.xlu0 %3217
      %3219 = vadd.xlane.f32.xlu0 %v3208
      %v3220 = vpop.xlane.xlu0 %3219
      %3221 = vadd.xlane.f32.xlu0 %v3209
      %v3222 = vpop.xlane.xlu0 %3221
      %3223 = vadd.xlane.f32.xlu0 %v3210
      %v3224 = vpop.xlane.xlu0 %3223
      %3225 = vadd.xlane.f32.xlu0 %v3211
      %v3226 = vpop.xlane.xlu0 %3225
      %3227 = vadd.xlane.f32.xlu0 %v3212
      %v3228 = vpop.xlane.xlu0 %3227
      %v3229 = vmul.f32 %v3214, %v706
      %v3230 = vmul.f32 %v3216, %v706
      %v3231 = vmul.f32 %v3218, %v706
      %v3232 = vmul.f32 %v3220, %v706
      %v3233 = vmul.f32 %v3222, %v706
      %v3234 = vmul.f32 %v3224, %v706
      %v3235 = vmul.f32 %v3226, %v706
      %v3236 = vmul.f32 %v3228, %v706
      %v3237 = vadd.f32 %v3229, 1e-06
      %v3238 = vadd.f32 %v3230, 1e-06
      %v3239 = vadd.f32 %v3231, 1e-06
      %v3240 = vadd.f32 %v3232, 1e-06
      %v3241 = vadd.f32 %v3233, 1e-06
      %v3242 = vadd.f32 %v3234, 1e-06
      %v3243 = vadd.f32 %v3235, 1e-06
      %v3244 = vadd.f32 %v3236, 1e-06
      %v3245 = vrsqrt.pop %v3237
      %v3246 = vrsqrt.pop %v3238
      %v3247 = vrsqrt.pop %v3239
      %v3248 = vrsqrt.pop %v3240
      %v3249 = vrsqrt.pop %v3241
      %v3250 = vrsqrt.pop %v3242
      %v3251 = vrsqrt.pop %v3243
      %v3252 = vrsqrt.pop %v3244
      %v3253 = vmul.f32 %v3197, %v3245
      %v3254 = vmul.f32 %v3198, %v3246
      %v3255 = vmul.f32 %v3199, %v3247
      %v3256 = vmul.f32 %v3200, %v3248
      %v3257 = vmul.f32 %v3201, %v3249
      %v3258 = vmul.f32 %v3202, %v3250
      %v3259 = vmul.f32 %v3203, %v3251
      %v3260 = vmul.f32 %v3204, %v3252
      %v3261 = vlaneseq
      %v3262 = vshrl.u32 %v3261, 7
      %v3263 = vsub.s32 4, %v3262
      %v3264 = vrot.slane %v779, %v3263
      %v3265 = vmul.f32 %v3253, %v3264
      %v3266 = vmul.f32 %v3254, %v3264
      %v3267 = vmul.f32 %v3255, %v3264
      %v3268 = vmul.f32 %v3256, %v3264
      %v3269 = vmul.f32 %v3257, %v3264
      %v3270 = vmul.f32 %v3258, %v3264
      %v3271 = vmul.f32 %v3259, %v3264
      %v3272 = vmul.f32 %v3260, %v3264
      %v3273 = vlaneseq
      %v3274 = vshrl.u32 %v3273, 7
      %v3275 = vsub.s32 3, %v3274
      %v3276 = vrot.slane %v688, %v3275
      %v3277 = vadd.f32 %v3265, %v3276
      %v3278 = vadd.f32 %v3266, %v3276
      %v3279 = vadd.f32 %v3267, %v3276
      %v3280 = vadd.f32 %v3268, %v3276
      %v3281 = vadd.f32 %v3269, %v3276
      %v3282 = vadd.f32 %v3270, %v3276
      %v3283 = vadd.f32 %v3271, %v3276
      %v3284 = vadd.f32 %v3272, %v3276
      %v3285 = vpack.c.bf16 %v3278, %v3277
      %v3286 = vpack.c.bf16 %v3280, %v3279
      %v3287 = vpack.c.bf16 %v3282, %v3281
      %v3288 = vpack.c.bf16 %v3284, %v3283
      %v3289 = vld [vmem:[%s11] sm:$0xff]
      %v3290 = vld [vmem:[%s11 + $0x8] sm:$0xff]
      %v3291 = vld [vmem:[%s11 + $0x10] sm:$0xff]
      %v3292 = vld [vmem:[%s11 + $0x18] sm:$0xff]
      %v3293 = vld [vmem:[%s11 + $0x20] sm:$0xff]
      %v3294 = vld [vmem:[%s11 + $0x28] sm:$0xff]
      %v3295 = vld [vmem:[%s11 + $0x30] sm:$0xff]
      %v3296 = vld [vmem:[%s11 + $0x38] sm:$0xff]
      %v3297 = vld [vmem:[%s11 + $0x40] sm:$0xff]
      %v3298 = vld [vmem:[%s11 + $0x48] sm:$0xff]
      %v3299 = vld [vmem:[%s11 + $0x50] sm:$0xff]
      %v3300 = vld [vmem:[%s11 + $0x58] sm:$0xff]
      %v3301 = vld [vmem:[%s11 + $0x60] sm:$0xff]
      %v3302 = vld [vmem:[%s11 + $0x68] sm:$0xff]
      %v3303 = vld [vmem:[%s11 + $0x70] sm:$0xff]
      %v3304 = vld [vmem:[%s11 + $0x78] sm:$0xff]
      %v3305 = vld [vmem:[%s11 + $0x80] sm:$0xff]
      %v3306 = vld [vmem:[%s11 + $0x88] sm:$0xff]
      %v3307 = vld [vmem:[%s11 + $0x90] sm:$0xff]
      %v3308 = vld [vmem:[%s11 + $0x98] sm:$0xff]
      %v3309 = vld [vmem:[%s11 + $0xa0] sm:$0xff]
      %v3310 = vld [vmem:[%s11 + $0xa8] sm:$0xff]
      %v3311 = vld [vmem:[%s11 + $0xb0] sm:$0xff]
      %v3312 = vld [vmem:[%s11 + $0xb8] sm:$0xff]
      %v3313 = vld [vmem:[%s11 + $0xc0] sm:$0xff]
      %v3314 = vld [vmem:[%s11 + $0xc8] sm:$0xff]
      %v3315 = vld [vmem:[%s11 + $0xd0] sm:$0xff]
      %v3316 = vld [vmem:[%s11 + $0xd8] sm:$0xff]
      %v3317 = vld [vmem:[%s11 + $0xe0] sm:$0xff]
      %v3318 = vld [vmem:[%s11 + $0xe8] sm:$0xff]
      %v3319 = vld [vmem:[%s11 + $0xf0] sm:$0xff]
      %v3320 = vld [vmem:[%s11 + $0xf8] sm:$0xff]
      %v3321 = vld [vmem:[%s12] sm:$0xf]
      %v3323 = vlaneseq
      %v3324 = vshrl.u32 %v3323, 7
      %v3325 = vsub.s32 0, %v3324
      %v3326 = vrot.slane %v3321, %v3325
      %v3327 = vlaneseq
      %v3328 = vshrl.u32 %v3327, 7
      %v3329 = vsub.s32 1, %v3328
      %v3330 = vrot.slane %v3321, %v3329
      %v3331 = vlaneseq
      %v3332 = vshrl.u32 %v3331, 7
      %v3333 = vsub.s32 2, %v3332
      %v3334 = vrot.slane %v3321, %v3333
      %v3335 = vlaneseq
      %v3336 = vshrl.u32 %v3335, 7
      %v3337 = vsub.s32 3, %v3336
      %v3338 = vrot.slane %v3321, %v3337
      %v3375 = vunpack.c.l.b16 %v3289
      %v3376 = vunpack.c.h.b16 %v3289
      %v3377 = vunpack.c.l.b16 %v3290
      %v3378 = vunpack.c.h.b16 %v3290
      %v3379 = vunpack.c.l.b16 %v3291
      %v3380 = vunpack.c.h.b16 %v3291
      %v3381 = vunpack.c.l.b16 %v3292
      %v3382 = vunpack.c.h.b16 %v3292
      %v3383 = vunpack.c.l.b16 %v3293
      %v3384 = vunpack.c.h.b16 %v3293
      %v3385 = vunpack.c.l.b16 %v3294
      %v3386 = vunpack.c.h.b16 %v3294
      %v3387 = vunpack.c.l.b16 %v3295
      %v3388 = vunpack.c.h.b16 %v3295
      %v3389 = vunpack.c.l.b16 %v3296
      %v3390 = vunpack.c.h.b16 %v3296
      %v3391 = vunpack.c.l.b16 %v3297
      %v3392 = vunpack.c.h.b16 %v3297
      %v3393 = vunpack.c.l.b16 %v3298
      %v3394 = vunpack.c.h.b16 %v3298
      %v3395 = vunpack.c.l.b16 %v3299
      %v3396 = vunpack.c.h.b16 %v3299
      %v3397 = vunpack.c.l.b16 %v3300
      %v3398 = vunpack.c.h.b16 %v3300
      %v3399 = vunpack.c.l.b16 %v3301
      %v3400 = vunpack.c.h.b16 %v3301
      %v3401 = vunpack.c.l.b16 %v3302
      %v3402 = vunpack.c.h.b16 %v3302
      %v3403 = vunpack.c.l.b16 %v3303
      %v3404 = vunpack.c.h.b16 %v3303
      %v3405 = vunpack.c.l.b16 %v3304
      %v3406 = vunpack.c.h.b16 %v3304
      %v3407 = vunpack.c.l.b16 %v3305
      %v3408 = vunpack.c.h.b16 %v3305
      %v3409 = vunpack.c.l.b16 %v3306
      %v3410 = vunpack.c.h.b16 %v3306
      %v3411 = vunpack.c.l.b16 %v3307
      %v3412 = vunpack.c.h.b16 %v3307
      %v3413 = vunpack.c.l.b16 %v3308
      %v3414 = vunpack.c.h.b16 %v3308
      %v3415 = vunpack.c.l.b16 %v3309
      %v3416 = vunpack.c.h.b16 %v3309
      %v3417 = vunpack.c.l.b16 %v3310
      %v3418 = vunpack.c.h.b16 %v3310
      %v3419 = vunpack.c.l.b16 %v3311
      %v3420 = vunpack.c.h.b16 %v3311
      %v3421 = vunpack.c.l.b16 %v3312
      %v3422 = vunpack.c.h.b16 %v3312
      %v3423 = vunpack.c.l.b16 %v3313
      %v3424 = vunpack.c.h.b16 %v3313
      %v3425 = vunpack.c.l.b16 %v3314
      %v3426 = vunpack.c.h.b16 %v3314
      %v3427 = vunpack.c.l.b16 %v3315
      %v3428 = vunpack.c.h.b16 %v3315
      %v3429 = vunpack.c.l.b16 %v3316
      %v3430 = vunpack.c.h.b16 %v3316
      %v3431 = vunpack.c.l.b16 %v3317
      %v3432 = vunpack.c.h.b16 %v3317
      %v3433 = vunpack.c.l.b16 %v3318
      %v3434 = vunpack.c.h.b16 %v3318
      %v3435 = vunpack.c.l.b16 %v3319
      %v3436 = vunpack.c.h.b16 %v3319
      %v3437 = vunpack.c.l.b16 %v3320
      %v3438 = vunpack.c.h.b16 %v3320
      %v3439 = vpack.c.b16 %v3379, %v3375
      %v3440 = vpack.c.b16 %v3380, %v3376
      %v3441 = vpack.c.b16 %v3381, %v3377
      %v3442 = vpack.c.b16 %v3382, %v3378
      %v3443 = vpack.c.b16 %v3387, %v3383
      %v3444 = vpack.c.b16 %v3388, %v3384
      %v3445 = vpack.c.b16 %v3389, %v3385
      %v3446 = vpack.c.b16 %v3390, %v3386
      %v3447 = vpack.c.b16 %v3395, %v3391
      %v3448 = vpack.c.b16 %v3396, %v3392
      %v3449 = vpack.c.b16 %v3397, %v3393
      %v3450 = vpack.c.b16 %v3398, %v3394
      %v3451 = vpack.c.b16 %v3403, %v3399
      %v3452 = vpack.c.b16 %v3404, %v3400
      %v3453 = vpack.c.b16 %v3405, %v3401
      %v3454 = vpack.c.b16 %v3406, %v3402
      %v3455 = vpack.c.b16 %v3411, %v3407
      %v3456 = vpack.c.b16 %v3412, %v3408
      %v3457 = vpack.c.b16 %v3413, %v3409
      %v3458 = vpack.c.b16 %v3414, %v3410
      %v3459 = vpack.c.b16 %v3419, %v3415
      %v3460 = vpack.c.b16 %v3420, %v3416
      %v3461 = vpack.c.b16 %v3421, %v3417
      %v3462 = vpack.c.b16 %v3422, %v3418
      %v3463 = vpack.c.b16 %v3427, %v3423
      %v3464 = vpack.c.b16 %v3428, %v3424
      %v3465 = vpack.c.b16 %v3429, %v3425
      %v3466 = vpack.c.b16 %v3430, %v3426
      %v3467 = vpack.c.b16 %v3435, %v3431
      %v3468 = vpack.c.b16 %v3436, %v3432
      %v3469 = vpack.c.b16 %v3437, %v3433
      %v3470 = vpack.c.b16 %v3438, %v3434
      %3503 = vmatprep.subr.bf16.mxu0 %v3440
      %3504 = vmatpush1.bf16.msra.mxu0 %v3439
      %3505 = vmatprep.subr.bf16.mxu0 %v3444
      %3506 = vmatpush1.bf16.msra.mxu0 %v3443
      %3507 = vmatprep.subr.bf16.mxu0 %v3448
      %3508 = vmatpush1.bf16.msra.mxu0 %v3447
      %3509 = vmatprep.subr.bf16.mxu0 %v3452
      %3510 = vmatpush1.bf16.msra.mxu0 %v3451
      %3511 = vmatprep.subr.bf16.mxu0 %v3456
      %3512 = vmatpush1.bf16.msra.mxu0 %v3455
      %3513 = vmatprep.subr.bf16.mxu0 %v3460
      %3514 = vmatpush1.bf16.msra.mxu0 %v3459
      %3515 = vmatprep.subr.bf16.mxu0 %v3464
      %3516 = vmatpush1.bf16.msra.mxu0 %v3463
      %3517 = vmatprep.subr.bf16.mxu0 %v3468
      %3518 = vmatpush1.bf16.msra.mxu0 %v3467
      %3519 = vmatprep.subr.bf16.mxu0 0
      %3520 = vmatpush1.bf16.msra.mxu0 0
      %3521 = vmatprep.subr.bf16.mxu0 0
      %3522 = vmatpush1.bf16.msra.mxu0 0
      %3523 = vmatprep.subr.bf16.mxu0 0
      %3524 = vmatpush1.bf16.msra.mxu0 0
      %3525 = vmatprep.subr.bf16.mxu0 0
      %3526 = vmatpush1.bf16.msra.mxu0 0
      %3527 = vmatprep.subr.bf16.mxu0 0
      %3528 = vmatpush1.bf16.msra.mxu0 0
      %3529 = vmatprep.subr.bf16.mxu0 0
      %3530 = vmatpush1.bf16.msra.mxu0 0
      %3531 = vmatprep.subr.bf16.mxu0 0
      %3532 = vmatpush1.bf16.msra.mxu0 0
      %3533 = vmatprep.subr.bf16.mxu0 0
      %3534 = vmatpush1.bf16.msra.mxu0 0
      %3535 = vmatprep.mubr.bf16.mxu0 0
      %3536 = vmatmul.mubr.bf16.gmra.mrb[0].mxu0 %v3285
      %v3537 = vpop.f32.mrb[0].mxu0
      %v3538 = vadd.f32 %v3326, %v3537
      %v3539 = vpop.f32.mrb[0].mxu0
      %v3540 = vadd.f32 %v3330, %v3539
      %v3541 = vpop.f32.mrb[0].mxu0
      %v3542 = vadd.f32 %v3326, %v3541
      %v3543 = vpop.f32.mrb[0].mxu0
      %v3544 = vadd.f32 %v3330, %v3543
      %3545 = vmatprep.mubr.bf16.mxu0 0
      %3546 = vmatmul.mubr.bf16.gmra.mrb[0].mxu0 %v3286
      %v3547 = vpop.f32.mrb[0].mxu0
      %v3548 = vadd.f32 %v3326, %v3547
      %v3549 = vpop.f32.mrb[0].mxu0
      %v3550 = vadd.f32 %v3330, %v3549
      %v3551 = vpop.f32.mrb[0].mxu0
      %v3552 = vadd.f32 %v3326, %v3551
      %v3553 = vpop.f32.mrb[0].mxu0
      %v3554 = vadd.f32 %v3330, %v3553
      %3555 = vmatprep.mubr.bf16.mxu0 0
      %3556 = vmatmul.mubr.bf16.gmra.mrb[0].mxu0 %v3287
      %v3557 = vpop.f32.mrb[0].mxu0
      %v3558 = vadd.f32 %v3326, %v3557
      %v3559 = vpop.f32.mrb[0].mxu0
      %v3560 = vadd.f32 %v3330, %v3559
      %v3561 = vpop.f32.mrb[0].mxu0
      %v3562 = vadd.f32 %v3326, %v3561
      %v3563 = vpop.f32.mrb[0].mxu0
      %v3564 = vadd.f32 %v3330, %v3563
      %3565 = vmatprep.mubr.bf16.mxu0 0
      %3566 = vmatmul.mubr.bf16.gmra.mrb[0].mxu0 %v3288
      %v3567 = vpop.f32.mrb[0].mxu0
      %v3568 = vadd.f32 %v3326, %v3567
      %v3569 = vpop.f32.mrb[0].mxu0
      %v3570 = vadd.f32 %v3330, %v3569
      %v3571 = vpop.f32.mrb[0].mxu0
      %v3572 = vadd.f32 %v3326, %v3571
      %v3573 = vpop.f32.mrb[0].mxu0
      %v3574 = vadd.f32 %v3330, %v3573
      %3575 = vdwg.mxu0
      %3576 = vmatprep.subr.bf16.mxu0 %v3442
      %3577 = vmatpush1.bf16.msra.mxu0 %v3441
      %3578 = vmatprep.subr.bf16.mxu0 %v3446
      %3579 = vmatpush1.bf16.msra.mxu0 %v3445
      %3580 = vmatprep.subr.bf16.mxu0 %v3450
      %3581 = vmatpush1.bf16.msra.mxu0 %v3449
      %3582 = vmatprep.subr.bf16.mxu0 %v3454
      %3583 = vmatpush1.bf16.msra.mxu0 %v3453
      %3584 = vmatprep.subr.bf16.mxu0 %v3458
      %3585 = vmatpush1.bf16.msra.mxu0 %v3457
      %3586 = vmatprep.subr.bf16.mxu0 %v3462
      %3587 = vmatpush1.bf16.msra.mxu0 %v3461
      %3588 = vmatprep.subr.bf16.mxu0 %v3466
      %3589 = vmatpush1.bf16.msra.mxu0 %v3465
      %3590 = vmatprep.subr.bf16.mxu0 %v3470
      %3591 = vmatpush1.bf16.msra.mxu0 %v3469
      %3592 = vmatprep.subr.bf16.mxu0 0
      %3593 = vmatpush1.bf16.msra.mxu0 0
      %3594 = vmatprep.subr.bf16.mxu0 0
      %3595 = vmatpush1.bf16.msra.mxu0 0
      %3596 = vmatprep.subr.bf16.mxu0 0
      %3597 = vmatpush1.bf16.msra.mxu0 0
      %3598 = vmatprep.subr.bf16.mxu0 0
      %3599 = vmatpush1.bf16.msra.mxu0 0
      %3600 = vmatprep.subr.bf16.mxu0 0
      %3601 = vmatpush1.bf16.msra.mxu0 0
      %3602 = vmatprep.subr.bf16.mxu0 0
      %3603 = vmatpush1.bf16.msra.mxu0 0
      %3604 = vmatprep.subr.bf16.mxu0 0
      %3605 = vmatpush1.bf16.msra.mxu0 0
      %3606 = vmatprep.subr.bf16.mxu0 0
      %3607 = vmatpush1.bf16.msra.mxu0 0
      %3608 = vmatprep.mubr.bf16.mxu0 0
      %3609 = vmatmul.mubr.bf16.gmra.mrb[0].mxu0 %v3285
      %v3610 = vpop.f32.mrb[0].mxu0
      %v3611 = vadd.f32 %v3334, %v3610
      %v3612 = vpop.f32.mrb[0].mxu0
      %v3613 = vadd.f32 %v3338, %v3612
      %v3614 = vpop.f32.mrb[0].mxu0
      %v3615 = vadd.f32 %v3334, %v3614
      %v3616 = vpop.f32.mrb[0].mxu0
      %v3617 = vadd.f32 %v3338, %v3616
      %3618 = vmatprep.mubr.bf16.mxu0 0
      %3619 = vmatmul.mubr.bf16.gmra.mrb[0].mxu0 %v3286
      %v3620 = vpop.f32.mrb[0].mxu0
      %v3621 = vadd.f32 %v3334, %v3620
      %v3622 = vpop.f32.mrb[0].mxu0
      %v3623 = vadd.f32 %v3338, %v3622
      %v3624 = vpop.f32.mrb[0].mxu0
      %v3625 = vadd.f32 %v3334, %v3624
      %v3626 = vpop.f32.mrb[0].mxu0
      %v3627 = vadd.f32 %v3338, %v3626
      %3628 = vmatprep.mubr.bf16.mxu0 0
      %3629 = vmatmul.mubr.bf16.gmra.mrb[0].mxu0 %v3287
      %v3630 = vpop.f32.mrb[0].mxu0
      %v3631 = vadd.f32 %v3334, %v3630
      %v3632 = vpop.f32.mrb[0].mxu0
      %v3633 = vadd.f32 %v3338, %v3632
      %v3634 = vpop.f32.mrb[0].mxu0
      %v3635 = vadd.f32 %v3334, %v3634
      %v3636 = vpop.f32.mrb[0].mxu0
      %v3637 = vadd.f32 %v3338, %v3636
      %3638 = vmatprep.mubr.bf16.mxu0 0
      %3639 = vmatmul.mubr.bf16.gmra.mrb[0].mxu0 %v3288
      %v3640 = vpop.f32.mrb[0].mxu0
      %v3641 = vadd.f32 %v3334, %v3640
      %v3642 = vpop.f32.mrb[0].mxu0
      %v3643 = vadd.f32 %v3338, %v3642
      %v3644 = vpop.f32.mrb[0].mxu0
      %v3645 = vadd.f32 %v3334, %v3644
      %v3646 = vpop.f32.mrb[0].mxu0
      %v3647 = vadd.f32 %v3338, %v3646
      %3648 = vdwg.mxu0
      %v3649 = vmul.f32 %v3538, %v3538
      %v3650 = vmul.f32 %v3540, %v3540
      %v3651 = vmul.f32 %v3611, %v3611
      %v3652 = vmul.f32 %v3613, %v3613
      %v3653 = vmul.f32 %v3542, %v3542
      %v3654 = vmul.f32 %v3544, %v3544
      %v3655 = vmul.f32 %v3615, %v3615
      %v3656 = vmul.f32 %v3617, %v3617
      %v3657 = vmul.f32 %v3548, %v3548
      %v3658 = vmul.f32 %v3550, %v3550
      %v3659 = vmul.f32 %v3621, %v3621
      %v3660 = vmul.f32 %v3623, %v3623
      %v3661 = vmul.f32 %v3552, %v3552
      %v3662 = vmul.f32 %v3554, %v3554
      %v3663 = vmul.f32 %v3625, %v3625
      %v3664 = vmul.f32 %v3627, %v3627
      %v3665 = vmul.f32 %v3558, %v3558
      %v3666 = vmul.f32 %v3560, %v3560
      %v3667 = vmul.f32 %v3631, %v3631
      %v3668 = vmul.f32 %v3633, %v3633
      %v3669 = vmul.f32 %v3562, %v3562
      %v3670 = vmul.f32 %v3564, %v3564
      %v3671 = vmul.f32 %v3635, %v3635
      %v3672 = vmul.f32 %v3637, %v3637
      %v3673 = vmul.f32 %v3568, %v3568
      %v3674 = vmul.f32 %v3570, %v3570
      %v3675 = vmul.f32 %v3641, %v3641
      %v3676 = vmul.f32 %v3643, %v3643
      %v3677 = vmul.f32 %v3572, %v3572
      %v3678 = vmul.f32 %v3574, %v3574
      %v3679 = vmul.f32 %v3645, %v3645
      %v3680 = vmul.f32 %v3647, %v3647
      %v3681 = vmul.f32 %v3538, %v3649
      %v3682 = vmul.f32 %v3540, %v3650
      %v3683 = vmul.f32 %v3611, %v3651
      %v3684 = vmul.f32 %v3613, %v3652
      %v3685 = vmul.f32 %v3542, %v3653
      %v3686 = vmul.f32 %v3544, %v3654
      %v3687 = vmul.f32 %v3615, %v3655
      %v3688 = vmul.f32 %v3617, %v3656
      %v3689 = vmul.f32 %v3548, %v3657
      %v3690 = vmul.f32 %v3550, %v3658
      %v3691 = vmul.f32 %v3621, %v3659
      %v3692 = vmul.f32 %v3623, %v3660
      %v3693 = vmul.f32 %v3552, %v3661
      %v3694 = vmul.f32 %v3554, %v3662
      %v3695 = vmul.f32 %v3625, %v3663
      %v3696 = vmul.f32 %v3627, %v3664
      %v3697 = vmul.f32 %v3558, %v3665
      %v3698 = vmul.f32 %v3560, %v3666
      %v3699 = vmul.f32 %v3631, %v3667
      %v3700 = vmul.f32 %v3633, %v3668
      %v3701 = vmul.f32 %v3562, %v3669
      %v3702 = vmul.f32 %v3564, %v3670
      %v3703 = vmul.f32 %v3635, %v3671
      %v3704 = vmul.f32 %v3637, %v3672
      %v3705 = vmul.f32 %v3568, %v3673
      %v3706 = vmul.f32 %v3570, %v3674
      %v3707 = vmul.f32 %v3641, %v3675
      %v3708 = vmul.f32 %v3643, %v3676
      %v3709 = vmul.f32 %v3572, %v3677
      %v3710 = vmul.f32 %v3574, %v3678
      %v3711 = vmul.f32 %v3645, %v3679
      %v3712 = vmul.f32 %v3647, %v3680
      %v3713 = vmul.f32 %v3681, 0.044715
      %v3714 = vmul.f32 %v3682, 0.044715
      %v3715 = vmul.f32 %v3683, 0.044715
      %v3716 = vmul.f32 %v3684, 0.044715
      %v3717 = vmul.f32 %v3685, 0.044715
      %v3718 = vmul.f32 %v3686, 0.044715
      %v3719 = vmul.f32 %v3687, 0.044715
      %v3720 = vmul.f32 %v3688, 0.044715
      %v3721 = vmul.f32 %v3689, 0.044715
      %v3722 = vmul.f32 %v3690, 0.044715
      %v3723 = vmul.f32 %v3691, 0.044715
      %v3724 = vmul.f32 %v3692, 0.044715
      %v3725 = vmul.f32 %v3693, 0.044715
      %v3726 = vmul.f32 %v3694, 0.044715
      %v3727 = vmul.f32 %v3695, 0.044715
      %v3728 = vmul.f32 %v3696, 0.044715
      %v3729 = vmul.f32 %v3697, 0.044715
      %v3730 = vmul.f32 %v3698, 0.044715
      %v3731 = vmul.f32 %v3699, 0.044715
      %v3732 = vmul.f32 %v3700, 0.044715
      %v3733 = vmul.f32 %v3701, 0.044715
      %v3734 = vmul.f32 %v3702, 0.044715
      %v3735 = vmul.f32 %v3703, 0.044715
      %v3736 = vmul.f32 %v3704, 0.044715
      %v3737 = vmul.f32 %v3705, 0.044715
      %v3738 = vmul.f32 %v3706, 0.044715
      %v3739 = vmul.f32 %v3707, 0.044715
      %v3740 = vmul.f32 %v3708, 0.044715
      %v3741 = vmul.f32 %v3709, 0.044715
      %v3742 = vmul.f32 %v3710, 0.044715
      %v3743 = vmul.f32 %v3711, 0.044715
      %v3744 = vmul.f32 %v3712, 0.044715
      %v3745 = vadd.f32 %v3538, %v3713
      %v3746 = vadd.f32 %v3540, %v3714
      %v3747 = vadd.f32 %v3611, %v3715
      %v3748 = vadd.f32 %v3613, %v3716
      %v3749 = vadd.f32 %v3542, %v3717
      %v3750 = vadd.f32 %v3544, %v3718
      %v3751 = vadd.f32 %v3615, %v3719
      %v3752 = vadd.f32 %v3617, %v3720
      %v3753 = vadd.f32 %v3548, %v3721
      %v3754 = vadd.f32 %v3550, %v3722
      %v3755 = vadd.f32 %v3621, %v3723
      %v3756 = vadd.f32 %v3623, %v3724
      %v3757 = vadd.f32 %v3552, %v3725
      %v3758 = vadd.f32 %v3554, %v3726
      %v3759 = vadd.f32 %v3625, %v3727
      %v3760 = vadd.f32 %v3627, %v3728
      %v3761 = vadd.f32 %v3558, %v3729
      %v3762 = vadd.f32 %v3560, %v3730
      %v3763 = vadd.f32 %v3631, %v3731
      %v3764 = vadd.f32 %v3633, %v3732
      %v3765 = vadd.f32 %v3562, %v3733
      %v3766 = vadd.f32 %v3564, %v3734
      %v3767 = vadd.f32 %v3635, %v3735
      %v3768 = vadd.f32 %v3637, %v3736
      %v3769 = vadd.f32 %v3568, %v3737
      %v3770 = vadd.f32 %v3570, %v3738
      %v3771 = vadd.f32 %v3641, %v3739
      %v3772 = vadd.f32 %v3643, %v3740
      %v3773 = vadd.f32 %v3572, %v3741
      %v3774 = vadd.f32 %v3574, %v3742
      %v3775 = vadd.f32 %v3645, %v3743
      %v3776 = vadd.f32 %v3647, %v3744
      %v3777 = vmul.f32 %v3745, 0.7978846
      %v3778 = vmul.f32 %v3746, 0.7978846
      %v3779 = vmul.f32 %v3747, 0.7978846
      %v3780 = vmul.f32 %v3748, 0.7978846
      %v3781 = vmul.f32 %v3749, 0.7978846
      %v3782 = vmul.f32 %v3750, 0.7978846
      %v3783 = vmul.f32 %v3751, 0.7978846
      %v3784 = vmul.f32 %v3752, 0.7978846
      %v3785 = vmul.f32 %v3753, 0.7978846
      %v3786 = vmul.f32 %v3754, 0.7978846
      %v3787 = vmul.f32 %v3755, 0.7978846
      %v3788 = vmul.f32 %v3756, 0.7978846
      %v3789 = vmul.f32 %v3757, 0.7978846
      %v3790 = vmul.f32 %v3758, 0.7978846
      %v3791 = vmul.f32 %v3759, 0.7978846
      %v3792 = vmul.f32 %v3760, 0.7978846
      %v3793 = vmul.f32 %v3761, 0.7978846
      %v3794 = vmul.f32 %v3762, 0.7978846
      %v3795 = vmul.f32 %v3763, 0.7978846
      %v3796 = vmul.f32 %v3764, 0.7978846
      %v3797 = vmul.f32 %v3765, 0.7978846
      %v3798 = vmul.f32 %v3766, 0.7978846
      %v3799 = vmul.f32 %v3767, 0.7978846
      %v3800 = vmul.f32 %v3768, 0.7978846
      %v3801 = vmul.f32 %v3769, 0.7978846
      %v3802 = vmul.f32 %v3770, 0.7978846
      %v3803 = vmul.f32 %v3771, 0.7978846
      %v3804 = vmul.f32 %v3772, 0.7978846
      %v3805 = vmul.f32 %v3773, 0.7978846
      %v3806 = vmul.f32 %v3774, 0.7978846
      %v3807 = vmul.f32 %v3775, 0.7978846
      %v3808 = vmul.f32 %v3776, 0.7978846
      %v3809 = vtanh.pop %v3777
      %v3810 = vtanh.pop %v3778
      %v3811 = vtanh.pop %v3779
      %v3812 = vtanh.pop %v3780
      %v3813 = vtanh.pop %v3781
      %v3814 = vtanh.pop %v3782
      %v3815 = vtanh.pop %v3783
      %v3816 = vtanh.pop %v3784
      %v3817 = vtanh.pop %v3785
      %v3818 = vtanh.pop %v3786
      %v3819 = vtanh.pop %v3787
      %v3820 = vtanh.pop %v3788
      %v3821 = vtanh.pop %v3789
      %v3822 = vtanh.pop %v3790
      %v3823 = vtanh.pop %v3791
      %v3824 = vtanh.pop %v3792
      %v3825 = vtanh.pop %v3793
      %v3826 = vtanh.pop %v3794
      %v3827 = vtanh.pop %v3795
      %v3828 = vtanh.pop %v3796
      %v3829 = vtanh.pop %v3797
      %v3830 = vtanh.pop %v3798
      %v3831 = vtanh.pop %v3799
      %v3832 = vtanh.pop %v3800
      %v3833 = vtanh.pop %v3801
      %v3834 = vtanh.pop %v3802
      %v3835 = vtanh.pop %v3803
      %v3836 = vtanh.pop %v3804
      %v3837 = vtanh.pop %v3805
      %v3838 = vtanh.pop %v3806
      %v3839 = vtanh.pop %v3807
      %v3840 = vtanh.pop %v3808
      %v3841 = vadd.f32 %v3809, 1.0
      %v3842 = vadd.f32 %v3810, 1.0
      %v3843 = vadd.f32 %v3811, 1.0
      %v3844 = vadd.f32 %v3812, 1.0
      %v3845 = vadd.f32 %v3813, 1.0
      %v3846 = vadd.f32 %v3814, 1.0
      %v3847 = vadd.f32 %v3815, 1.0
      %v3848 = vadd.f32 %v3816, 1.0
      %v3849 = vadd.f32 %v3817, 1.0
      %v3850 = vadd.f32 %v3818, 1.0
      %v3851 = vadd.f32 %v3819, 1.0
      %v3852 = vadd.f32 %v3820, 1.0
      %v3853 = vadd.f32 %v3821, 1.0
      %v3854 = vadd.f32 %v3822, 1.0
      %v3855 = vadd.f32 %v3823, 1.0
      %v3856 = vadd.f32 %v3824, 1.0
      %v3857 = vadd.f32 %v3825, 1.0
      %v3858 = vadd.f32 %v3826, 1.0
      %v3859 = vadd.f32 %v3827, 1.0
      %v3860 = vadd.f32 %v3828, 1.0
      %v3861 = vadd.f32 %v3829, 1.0
      %v3862 = vadd.f32 %v3830, 1.0
      %v3863 = vadd.f32 %v3831, 1.0
      %v3864 = vadd.f32 %v3832, 1.0
      %v3865 = vadd.f32 %v3833, 1.0
      %v3866 = vadd.f32 %v3834, 1.0
      %v3867 = vadd.f32 %v3835, 1.0
      %v3868 = vadd.f32 %v3836, 1.0
      %v3869 = vadd.f32 %v3837, 1.0
      %v3870 = vadd.f32 %v3838, 1.0
      %v3871 = vadd.f32 %v3839, 1.0
      %v3872 = vadd.f32 %v3840, 1.0
      %v3873 = vmul.f32 %v3841, 0.5
      %v3874 = vmul.f32 %v3842, 0.5
      %v3875 = vmul.f32 %v3843, 0.5
      %v3876 = vmul.f32 %v3844, 0.5
      %v3877 = vmul.f32 %v3845, 0.5
      %v3878 = vmul.f32 %v3846, 0.5
      %v3879 = vmul.f32 %v3847, 0.5
      %v3880 = vmul.f32 %v3848, 0.5
      %v3881 = vmul.f32 %v3849, 0.5
      %v3882 = vmul.f32 %v3850, 0.5
      %v3883 = vmul.f32 %v3851, 0.5
      %v3884 = vmul.f32 %v3852, 0.5
      %v3885 = vmul.f32 %v3853, 0.5
      %v3886 = vmul.f32 %v3854, 0.5
      %v3887 = vmul.f32 %v3855, 0.5
      %v3888 = vmul.f32 %v3856, 0.5
      %v3889 = vmul.f32 %v3857, 0.5
      %v3890 = vmul.f32 %v3858, 0.5
      %v3891 = vmul.f32 %v3859, 0.5
      %v3892 = vmul.f32 %v3860, 0.5
      %v3893 = vmul.f32 %v3861, 0.5
      %v3894 = vmul.f32 %v3862, 0.5
      %v3895 = vmul.f32 %v3863, 0.5
      %v3896 = vmul.f32 %v3864, 0.5
      %v3897 = vmul.f32 %v3865, 0.5
      %v3898 = vmul.f32 %v3866, 0.5
      %v3899 = vmul.f32 %v3867, 0.5
      %v3900 = vmul.f32 %v3868, 0.5
      %v3901 = vmul.f32 %v3869, 0.5
      %v3902 = vmul.f32 %v3870, 0.5
      %v3903 = vmul.f32 %v3871, 0.5
      %v3904 = vmul.f32 %v3872, 0.5
      %v3905 = vmul.f32 %v3538, %v3873
      %v3906 = vmul.f32 %v3540, %v3874
      %v3907 = vmul.f32 %v3611, %v3875
      %v3908 = vmul.f32 %v3613, %v3876
      %v3909 = vmul.f32 %v3542, %v3877
      %v3910 = vmul.f32 %v3544, %v3878
      %v3911 = vmul.f32 %v3615, %v3879
      %v3912 = vmul.f32 %v3617, %v3880
      %v3913 = vmul.f32 %v3548, %v3881
      %v3914 = vmul.f32 %v3550, %v3882
      %v3915 = vmul.f32 %v3621, %v3883
      %v3916 = vmul.f32 %v3623, %v3884
      %v3917 = vmul.f32 %v3552, %v3885
      %v3918 = vmul.f32 %v3554, %v3886
      %v3919 = vmul.f32 %v3625, %v3887
      %v3920 = vmul.f32 %v3627, %v3888
      %v3921 = vmul.f32 %v3558, %v3889
      %v3922 = vmul.f32 %v3560, %v3890
      %v3923 = vmul.f32 %v3631, %v3891
      %v3924 = vmul.f32 %v3633, %v3892
      %v3925 = vmul.f32 %v3562, %v3893
      %v3926 = vmul.f32 %v3564, %v3894
      %v3927 = vmul.f32 %v3635, %v3895
      %v3928 = vmul.f32 %v3637, %v3896
      %v3929 = vmul.f32 %v3568, %v3897
      %v3930 = vmul.f32 %v3570, %v3898
      %v3931 = vmul.f32 %v3641, %v3899
      %v3932 = vmul.f32 %v3643, %v3900
      %v3933 = vmul.f32 %v3572, %v3901
      %v3934 = vmul.f32 %v3574, %v3902
      %v3935 = vmul.f32 %v3645, %v3903
      %v3936 = vmul.f32 %v3647, %v3904
      %v3937 = vpack.c.bf16 %v3909, %v3905
      %v3938 = vpack.c.bf16 %v3910, %v3906
      %v3939 = vpack.c.bf16 %v3911, %v3907
      %v3940 = vpack.c.bf16 %v3912, %v3908
      %v3941 = vpack.c.bf16 %v3917, %v3913
      %v3942 = vpack.c.bf16 %v3918, %v3914
      %v3943 = vpack.c.bf16 %v3919, %v3915
      %v3944 = vpack.c.bf16 %v3920, %v3916
      %v3945 = vpack.c.bf16 %v3925, %v3921
      %v3946 = vpack.c.bf16 %v3926, %v3922
      %v3947 = vpack.c.bf16 %v3927, %v3923
      %v3948 = vpack.c.bf16 %v3928, %v3924
      %v3949 = vpack.c.bf16 %v3933, %v3929
      %v3950 = vpack.c.bf16 %v3934, %v3930
      %v3951 = vpack.c.bf16 %v3935, %v3931
      %v3952 = vpack.c.bf16 %v3936, %v3932
      %v3953 = vld [vmem:[%s13] sm:$0xf]
      %v3954 = vld [vmem:[%s13 + $0x4] sm:$0xf]
      %v3955 = vld [vmem:[%s13 + $0x8] sm:$0xf]
      %v3956 = vld [vmem:[%s13 + $0xc] sm:$0xf]
      %v3957 = vld [vmem:[%s13 + $0x10] sm:$0xf]
      %v3958 = vld [vmem:[%s13 + $0x14] sm:$0xf]
      %v3959 = vld [vmem:[%s13 + $0x18] sm:$0xf]
      %v3960 = vld [vmem:[%s13 + $0x1c] sm:$0xf]
      %v3961 = vld [vmem:[%s13 + $0x20] sm:$0xf]
      %v3962 = vld [vmem:[%s13 + $0x24] sm:$0xf]
      %v3963 = vld [vmem:[%s13 + $0x28] sm:$0xf]
      %v3964 = vld [vmem:[%s13 + $0x2c] sm:$0xf]
      %v3965 = vld [vmem:[%s13 + $0x30] sm:$0xf]
      %v3966 = vld [vmem:[%s13 + $0x34] sm:$0xf]
      %v3967 = vld [vmem:[%s13 + $0x38] sm:$0xf]
      %v3968 = vld [vmem:[%s13 + $0x3c] sm:$0xf]
      %v3969 = vld [vmem:[%s13 + $0x40] sm:$0xf]
      %v3970 = vld [vmem:[%s13 + $0x44] sm:$0xf]
      %v3971 = vld [vmem:[%s13 + $0x48] sm:$0xf]
      %v3972 = vld [vmem:[%s13 + $0x4c] sm:$0xf]
      %v3973 = vld [vmem:[%s13 + $0x50] sm:$0xf]
      %v3974 = vld [vmem:[%s13 + $0x54] sm:$0xf]
      %v3975 = vld [vmem:[%s13 + $0x58] sm:$0xf]
      %v3976 = vld [vmem:[%s13 + $0x5c] sm:$0xf]
      %v3977 = vld [vmem:[%s13 + $0x60] sm:$0xf]
      %v3978 = vld [vmem:[%s13 + $0x64] sm:$0xf]
      %v3979 = vld [vmem:[%s13 + $0x68] sm:$0xf]
      %v3980 = vld [vmem:[%s13 + $0x6c] sm:$0xf]
      %v3981 = vld [vmem:[%s13 + $0x70] sm:$0xf]
      %v3982 = vld [vmem:[%s13 + $0x74] sm:$0xf]
      %v3983 = vld [vmem:[%s13 + $0x78] sm:$0xf]
      %v3984 = vld [vmem:[%s13 + $0x7c] sm:$0xf]
      %v3985 = vld [vmem:[%s13 + $0x80] sm:$0xf]
      %v3986 = vld [vmem:[%s13 + $0x84] sm:$0xf]
      %v3987 = vld [vmem:[%s13 + $0x88] sm:$0xf]
      %v3988 = vld [vmem:[%s13 + $0x8c] sm:$0xf]
      %v3989 = vld [vmem:[%s13 + $0x90] sm:$0xf]
      %v3990 = vld [vmem:[%s13 + $0x94] sm:$0xf]
      %v3991 = vld [vmem:[%s13 + $0x98] sm:$0xf]
      %v3992 = vld [vmem:[%s13 + $0x9c] sm:$0xf]
      %v3993 = vld [vmem:[%s13 + $0xa0] sm:$0xf]
      %v3994 = vld [vmem:[%s13 + $0xa4] sm:$0xf]
      %v3995 = vld [vmem:[%s13 + $0xa8] sm:$0xf]
      %v3996 = vld [vmem:[%s13 + $0xac] sm:$0xf]
      %v3997 = vld [vmem:[%s13 + $0xb0] sm:$0xf]
      %v3998 = vld [vmem:[%s13 + $0xb4] sm:$0xf]
      %v3999 = vld [vmem:[%s13 + $0xb8] sm:$0xf]
      %v4000 = vld [vmem:[%s13 + $0xbc] sm:$0xf]
      %v4001 = vld [vmem:[%s13 + $0xc0] sm:$0xf]
      %v4002 = vld [vmem:[%s13 + $0xc4] sm:$0xf]
      %v4003 = vld [vmem:[%s13 + $0xc8] sm:$0xf]
      %v4004 = vld [vmem:[%s13 + $0xcc] sm:$0xf]
      %v4005 = vld [vmem:[%s13 + $0xd0] sm:$0xf]
      %v4006 = vld [vmem:[%s13 + $0xd4] sm:$0xf]
      %v4007 = vld [vmem:[%s13 + $0xd8] sm:$0xf]
      %v4008 = vld [vmem:[%s13 + $0xdc] sm:$0xf]
      %v4009 = vld [vmem:[%s13 + $0xe0] sm:$0xf]
      %v4010 = vld [vmem:[%s13 + $0xe4] sm:$0xf]
      %v4011 = vld [vmem:[%s13 + $0xe8] sm:$0xf]
      %v4012 = vld [vmem:[%s13 + $0xec] sm:$0xf]
      %v4013 = vld [vmem:[%s13 + $0xf0] sm:$0xf]
      %v4014 = vld [vmem:[%s13 + $0xf4] sm:$0xf]
      %v4015 = vld [vmem:[%s13 + $0xf8] sm:$0xf]
      %v4016 = vld [vmem:[%s13 + $0xfc] sm:$0xf]
      %v4017 = vld [vmem:[%s14] sm:$0x1]
      %v4019 = vlaneseq
      %v4020 = vshrl.u32 %v4019, 7
      %v4021 = vsub.s32 0, %v4020
      %v4022 = vrot.slane %v4017, %v4021
      %v4088 = vunpack.c.l.b16 %v3953
      %v4089 = vunpack.c.l.b16 %v3954
      %v4090 = vunpack.c.l.b16 %v3955
      %v4091 = vunpack.c.l.b16 %v3956
      %v4092 = vunpack.c.l.b16 %v3957
      %v4093 = vunpack.c.l.b16 %v3958
      %v4094 = vunpack.c.l.b16 %v3959
      %v4095 = vunpack.c.l.b16 %v3960
      %v4096 = vunpack.c.l.b16 %v3961
      %v4097 = vunpack.c.l.b16 %v3962
      %v4098 = vunpack.c.l.b16 %v3963
      %v4099 = vunpack.c.l.b16 %v3964
      %v4100 = vunpack.c.l.b16 %v3965
      %v4101 = vunpack.c.l.b16 %v3966
      %v4102 = vunpack.c.l.b16 %v3967
      %v4103 = vunpack.c.l.b16 %v3968
      %v4104 = vunpack.c.l.b16 %v3969
      %v4105 = vunpack.c.l.b16 %v3970
      %v4106 = vunpack.c.l.b16 %v3971
      %v4107 = vunpack.c.l.b16 %v3972
      %v4108 = vunpack.c.l.b16 %v3973
      %v4109 = vunpack.c.l.b16 %v3974
      %v4110 = vunpack.c.l.b16 %v3975
      %v4111 = vunpack.c.l.b16 %v3976
      %v4112 = vunpack.c.l.b16 %v3977
      %v4113 = vunpack.c.l.b16 %v3978
      %v4114 = vunpack.c.l.b16 %v3979
      %v4115 = vunpack.c.l.b16 %v3980
      %v4116 = vunpack.c.l.b16 %v3981
      %v4117 = vunpack.c.l.b16 %v3982
      %v4118 = vunpack.c.l.b16 %v3983
      %v4119 = vunpack.c.l.b16 %v3984
      %v4120 = vunpack.c.l.b16 %v3985
      %v4121 = vunpack.c.l.b16 %v3986
      %v4122 = vunpack.c.l.b16 %v3987
      %v4123 = vunpack.c.l.b16 %v3988
      %v4124 = vunpack.c.l.b16 %v3989
      %v4125 = vunpack.c.l.b16 %v3990
      %v4126 = vunpack.c.l.b16 %v3991
      %v4127 = vunpack.c.l.b16 %v3992
      %v4128 = vunpack.c.l.b16 %v3993
      %v4129 = vunpack.c.l.b16 %v3994
      %v4130 = vunpack.c.l.b16 %v3995
      %v4131 = vunpack.c.l.b16 %v3996
      %v4132 = vunpack.c.l.b16 %v3997
      %v4133 = vunpack.c.l.b16 %v3998
      %v4134 = vunpack.c.l.b16 %v3999
      %v4135 = vunpack.c.l.b16 %v4000
      %v4136 = vunpack.c.l.b16 %v4001
      %v4137 = vunpack.c.l.b16 %v4002
      %v4138 = vunpack.c.l.b16 %v4003
      %v4139 = vunpack.c.l.b16 %v4004
      %v4140 = vunpack.c.l.b16 %v4005
      %v4141 = vunpack.c.l.b16 %v4006
      %v4142 = vunpack.c.l.b16 %v4007
      %v4143 = vunpack.c.l.b16 %v4008
      %v4144 = vunpack.c.l.b16 %v4009
      %v4145 = vunpack.c.l.b16 %v4010
      %v4146 = vunpack.c.l.b16 %v4011
      %v4147 = vunpack.c.l.b16 %v4012
      %v4148 = vunpack.c.l.b16 %v4013
      %v4149 = vunpack.c.l.b16 %v4014
      %v4150 = vunpack.c.l.b16 %v4015
      %v4151 = vunpack.c.l.b16 %v4016
      %v4152 = vpack.c.b16 %v4089, %v4088
      %v4153 = vpack.c.b16 %v4091, %v4090
      %v4154 = vpack.c.b16 %v4093, %v4092
      %v4155 = vpack.c.b16 %v4095, %v4094
      %v4156 = vpack.c.b16 %v4097, %v4096
      %v4157 = vpack.c.b16 %v4099, %v4098
      %v4158 = vpack.c.b16 %v4101, %v4100
      %v4159 = vpack.c.b16 %v4103, %v4102
      %v4160 = vpack.c.b16 %v4105, %v4104
      %v4161 = vpack.c.b16 %v4107, %v4106
      %v4162 = vpack.c.b16 %v4109, %v4108
      %v4163 = vpack.c.b16 %v4111, %v4110
      %v4164 = vpack.c.b16 %v4113, %v4112
      %v4165 = vpack.c.b16 %v4115, %v4114
      %v4166 = vpack.c.b16 %v4117, %v4116
      %v4167 = vpack.c.b16 %v4119, %v4118
      %v4168 = vpack.c.b16 %v4121, %v4120
      %v4169 = vpack.c.b16 %v4123, %v4122
      %v4170 = vpack.c.b16 %v4125, %v4124
      %v4171 = vpack.c.b16 %v4127, %v4126
      %v4172 = vpack.c.b16 %v4129, %v4128
      %v4173 = vpack.c.b16 %v4131, %v4130
      %v4174 = vpack.c.b16 %v4133, %v4132
      %v4175 = vpack.c.b16 %v4135, %v4134
      %v4176 = vpack.c.b16 %v4137, %v4136
      %v4177 = vpack.c.b16 %v4139, %v4138
      %v4178 = vpack.c.b16 %v4141, %v4140
      %v4179 = vpack.c.b16 %v4143, %v4142
      %v4180 = vpack.c.b16 %v4145, %v4144
      %v4181 = vpack.c.b16 %v4147, %v4146
      %v4182 = vpack.c.b16 %v4149, %v4148
      %v4183 = vpack.c.b16 %v4151, %v4150
      %4216 = vmatprep.subr.bf16.mxu0 0
      %4217 = vmatpush1.bf16.msra.mxu0 %v4152
      %4218 = vmatprep.subr.bf16.mxu0 0
      %4219 = vmatpush1.bf16.msra.mxu0 %v4153
      %4220 = vmatprep.subr.bf16.mxu0 0
      %4221 = vmatpush1.bf16.msra.mxu0 %v4154
      %4222 = vmatprep.subr.bf16.mxu0 0
      %4223 = vmatpush1.bf16.msra.mxu0 %v4155
      %4224 = vmatprep.subr.bf16.mxu0 0
      %4225 = vmatpush1.bf16.msra.mxu0 %v4156
      %4226 = vmatprep.subr.bf16.mxu0 0
      %4227 = vmatpush1.bf16.msra.mxu0 %v4157
      %4228 = vmatprep.subr.bf16.mxu0 0
      %4229 = vmatpush1.bf16.msra.mxu0 %v4158
      %4230 = vmatprep.subr.bf16.mxu0 0
      %4231 = vmatpush1.bf16.msra.mxu0 %v4159
      %4232 = vmatprep.subr.bf16.mxu0 0
      %4233 = vmatpush1.bf16.msra.mxu0 %v4160
      %4234 = vmatprep.subr.bf16.mxu0 0
      %4235 = vmatpush1.bf16.msra.mxu0 %v4161
      %4236 = vmatprep.subr.bf16.mxu0 0
      %4237 = vmatpush1.bf16.msra.mxu0 %v4162
      %4238 = vmatprep.subr.bf16.mxu0 0
      %4239 = vmatpush1.bf16.msra.mxu0 %v4163
      %4240 = vmatprep.subr.bf16.mxu0 0
      %4241 = vmatpush1.bf16.msra.mxu0 %v4164
      %4242 = vmatprep.subr.bf16.mxu0 0
      %4243 = vmatpush1.bf16.msra.mxu0 %v4165
      %4244 = vmatprep.subr.bf16.mxu0 0
      %4245 = vmatpush1.bf16.msra.mxu0 %v4166
      %4246 = vmatprep.subr.bf16.mxu0 0
      %4247 = vmatpush1.bf16.msra.mxu0 %v4167
      %4248 = vmatprep.mubr.bf16.mxu0 %v3938
      %4249 = vmatmul.mubr.bf16.gmra.mrb[0].mxu0 %v3937
      %v4250 = vpop.f32.mrb[0].mxu0
      %v4251 = vadd.f32 %v4022, %v4250
      %v4252 = vpop.f32.mrb[0].mxu0
      %v4253 = vpop.f32.mrb[0].mxu0
      %v4254 = vadd.f32 %v4022, %v4253
      %v4255 = vpop.f32.mrb[0].mxu0
      %4256 = vmatprep.mubr.bf16.mxu0 %v3942
      %4257 = vmatmul.mubr.bf16.gmra.mrb[0].mxu0 %v3941
      %v4258 = vpop.f32.mrb[0].mxu0
      %v4259 = vadd.f32 %v4022, %v4258
      %v4260 = vpop.f32.mrb[0].mxu0
      %v4261 = vpop.f32.mrb[0].mxu0
      %v4262 = vadd.f32 %v4022, %v4261
      %v4263 = vpop.f32.mrb[0].mxu0
      %4264 = vmatprep.mubr.bf16.mxu0 %v3946
      %4265 = vmatmul.mubr.bf16.gmra.mrb[0].mxu0 %v3945
      %v4266 = vpop.f32.mrb[0].mxu0
      %v4267 = vadd.f32 %v4022, %v4266
      %v4268 = vpop.f32.mrb[0].mxu0
      %v4269 = vpop.f32.mrb[0].mxu0
      %v4270 = vadd.f32 %v4022, %v4269
      %v4271 = vpop.f32.mrb[0].mxu0
      %4272 = vmatprep.mubr.bf16.mxu0 %v3950
      %4273 = vmatmul.mubr.bf16.gmra.mrb[0].mxu0 %v3949
      %v4274 = vpop.f32.mrb[0].mxu0
      %v4275 = vadd.f32 %v4022, %v4274
      %v4276 = vpop.f32.mrb[0].mxu0
      %v4277 = vpop.f32.mrb[0].mxu0
      %v4278 = vadd.f32 %v4022, %v4277
      %v4279 = vpop.f32.mrb[0].mxu0
      %4280 = vdwg.mxu0
      %4281 = vmatprep.subr.bf16.mxu0 0
      %4282 = vmatpush1.bf16.msra.mxu0 %v4168
      %4283 = vmatprep.subr.bf16.mxu0 0
      %4284 = vmatpush1.bf16.msra.mxu0 %v4169
      %4285 = vmatprep.subr.bf16.mxu0 0
      %4286 = vmatpush1.bf16.msra.mxu0 %v4170
      %4287 = vmatprep.subr.bf16.mxu0 0
      %4288 = vmatpush1.bf16.msra.mxu0 %v4171
      %4289 = vmatprep.subr.bf16.mxu0 0
      %4290 = vmatpush1.bf16.msra.mxu0 %v4172
      %4291 = vmatprep.subr.bf16.mxu0 0
      %4292 = vmatpush1.bf16.msra.mxu0 %v4173
      %4293 = vmatprep.subr.bf16.mxu0 0
      %4294 = vmatpush1.bf16.msra.mxu0 %v4174
      %4295 = vmatprep.subr.bf16.mxu0 0
      %4296 = vmatpush1.bf16.msra.mxu0 %v4175
      %4297 = vmatprep.subr.bf16.mxu0 0
      %4298 = vmatpush1.bf16.msra.mxu0 %v4176
      %4299 = vmatprep.subr.bf16.mxu0 0
      %4300 = vmatpush1.bf16.msra.mxu0 %v4177
      %4301 = vmatprep.subr.bf16.mxu0 0
      %4302 = vmatpush1.bf16.msra.mxu0 %v4178
      %4303 = vmatprep.subr.bf16.mxu0 0
      %4304 = vmatpush1.bf16.msra.mxu0 %v4179
      %4305 = vmatprep.subr.bf16.mxu0 0
      %4306 = vmatpush1.bf16.msra.mxu0 %v4180
      %4307 = vmatprep.subr.bf16.mxu0 0
      %4308 = vmatpush1.bf16.msra.mxu0 %v4181
      %4309 = vmatprep.subr.bf16.mxu0 0
      %4310 = vmatpush1.bf16.msra.mxu0 %v4182
      %4311 = vmatprep.subr.bf16.mxu0 0
      %4312 = vmatpush1.bf16.msra.mxu0 %v4183
      %4313 = vmatprep.mubr.bf16.mxu0 %v3940
      %4314 = vmatmul.mubr.bf16.gmra.mrb[0].mxu0 %v3939
      %v4315 = vpop.f32.mrb[0].mxu0
      %v4316 = vadd.f32 %v4251, %v4315
      %v4317 = vpop.f32.mrb[0].mxu0
      %v4318 = vpop.f32.mrb[0].mxu0
      %v4319 = vadd.f32 %v4254, %v4318
      %v4320 = vpop.f32.mrb[0].mxu0
      %4321 = vmatprep.mubr.bf16.mxu0 %v3944
      %4322 = vmatmul.mubr.bf16.gmra.mrb[0].mxu0 %v3943
      %v4323 = vpop.f32.mrb[0].mxu0
      %v4324 = vadd.f32 %v4259, %v4323
      %v4325 = vpop.f32.mrb[0].mxu0
      %v4326 = vpop.f32.mrb[0].mxu0
      %v4327 = vadd.f32 %v4262, %v4326
      %v4328 = vpop.f32.mrb[0].mxu0
      %4329 = vmatprep.mubr.bf16.mxu0 %v3948
      %4330 = vmatmul.mubr.bf16.gmra.mrb[0].mxu0 %v3947
      %v4331 = vpop.f32.mrb[0].mxu0
      %v4332 = vadd.f32 %v4267, %v4331
      %v4333 = vpop.f32.mrb[0].mxu0
      %v4334 = vpop.f32.mrb[0].mxu0
      %v4335 = vadd.f32 %v4270, %v4334
      %v4336 = vpop.f32.mrb[0].mxu0
      %4337 = vmatprep.mubr.bf16.mxu0 %v3952
      %4338 = vmatmul.mubr.bf16.gmra.mrb[0].mxu0 %v3951
      %v4339 = vpop.f32.mrb[0].mxu0
      %v4340 = vadd.f32 %v4275, %v4339
      %v4341 = vpop.f32.mrb[0].mxu0
      %v4342 = vpop.f32.mrb[0].mxu0
      %v4343 = vadd.f32 %v4278, %v4342
      %v4344 = vpop.f32.mrb[0].mxu0
      %4345 = vdwg.mxu0
      %v4346 = vlaneseq
      %v4347 = vshrl.u32 %v4346, 7
      %v4348 = vsub.s32 5, %v4347
      %v4349 = vrot.slane %v688, %v4348
      %v4350 = vmul.f32 %v4349, %v4316
      %v4351 = vmul.f32 %v4349, %v4319
      %v4352 = vmul.f32 %v4349, %v4324
      %v4353 = vmul.f32 %v4349, %v4327
      %v4354 = vmul.f32 %v4349, %v4332
      %v4355 = vmul.f32 %v4349, %v4335
      %v4356 = vmul.f32 %v4349, %v4340
      %v4357 = vmul.f32 %v4349, %v4343
      %v4358 = vadd.f32 %v3047, %v4350
      %v4359 = vadd.f32 %v3048, %v4351
      %v4360 = vadd.f32 %v3049, %v4352
      %v4361 = vadd.f32 %v3050, %v4353
      %v4362 = vadd.f32 %v3051, %v4354
      %v4363 = vadd.f32 %v3052, %v4355
      %v4364 = vadd.f32 %v3053, %v4356
      %v4365 = vadd.f32 %v3054, %v4357
      %4366 = vst [vmem:[%s673] sm:$0xff] %v4358
      %4367 = vst [vmem:[%s673 + $0x8] sm:$0xff] %v4359
      %4368 = vst [vmem:[%s673 + $0x10] sm:$0xff] %v4360
      %4369 = vst [vmem:[%s673 + $0x18] sm:$0xff] %v4361
      %4370 = vst [vmem:[%s673 + $0x20] sm:$0xff] %v4362
      %4371 = vst [vmem:[%s673 + $0x28] sm:$0xff] %v4363
      %4372 = vst [vmem:[%s673 + $0x30] sm:$0xff] %v4364
      %4373 = vst [vmem:[%s673 + $0x38] sm:$0xff] %v4365
      %4374 = vadd.xlane.f32.xlu0 %v3172
      %v4375 = vpop.xlane.xlu0 %4374
      %v4376 = vmul.f32 %v4375, %v706
      %v4377 = vsub.f32 %v3172, %v4376
      %v4378 = vmul.f32 %v4377, %v4377
      %4379 = vadd.xlane.f32.xlu0 %v4378
      %v4380 = vpop.xlane.xlu0 %4379
      %v4381 = vmul.f32 %v4380, %v706
      %v4382 = vadd.f32 %v4381, 1e-06
      %v4383 = vrsqrt.pop %v4382
      %v4384 = vmul.f32 %v4377, %v4383
      %v4385 = vadd.f32 %v689, 1.0
      %v4386 = vlaneseq
      %v4387 = vshrl.u32 %v4386, 7
      %v4388 = vsub.s32 2, %v4387
      %v4389 = vrot.slane %v4385, %v4388
      %v4390 = vmul.f32 %v4384, %v4389
      %v4391 = vlaneseq
      %v4392 = vshrl.u32 %v4391, 7
      %v4393 = vsub.s32 1, %v4392
      %v4394 = vrot.slane %v689, %v4393
      %v4395 = vadd.f32 %v4390, %v4394
      %v4396 = vpack.c.bf16 %v4395, %v4395
      %v4397 = vld [vmem:[%s15] sm:$0xff]
      %v4398 = vld [vmem:[%s15 + $0x8] sm:$0xff]
      %v4399 = vld [vmem:[%s15 + $0x10] sm:$0xff]
      %v4400 = vld [vmem:[%s15 + $0x18] sm:$0xff]
      %v4401 = vld [vmem:[%s15 + $0x20] sm:$0xff]
      %v4402 = vld [vmem:[%s15 + $0x28] sm:$0xff]
      %v4403 = vld [vmem:[%s15 + $0x30] sm:$0xff]
      %v4404 = vld [vmem:[%s15 + $0x38] sm:$0xff]
      %v4405 = vld [vmem:[%s15 + $0x40] sm:$0xff]
      %v4406 = vld [vmem:[%s15 + $0x48] sm:$0xff]
      %v4407 = vld [vmem:[%s15 + $0x50] sm:$0xff]
      %v4408 = vld [vmem:[%s15 + $0x58] sm:$0xff]
      %v4409 = vld [vmem:[%s15 + $0x60] sm:$0xff]
      %v4410 = vld [vmem:[%s15 + $0x68] sm:$0xff]
      %v4411 = vld [vmem:[%s15 + $0x70] sm:$0xff]
      %v4412 = vld [vmem:[%s15 + $0x78] sm:$0xff]
      %v4413 = vld [vmem:[%s15 + $0x80] sm:$0xff]
      %v4414 = vld [vmem:[%s15 + $0x88] sm:$0xff]
      %v4415 = vld [vmem:[%s15 + $0x90] sm:$0xff]
      %v4416 = vld [vmem:[%s15 + $0x98] sm:$0xff]
      %v4417 = vld [vmem:[%s15 + $0xa0] sm:$0xff]
      %v4418 = vld [vmem:[%s15 + $0xa8] sm:$0xff]
      %v4419 = vld [vmem:[%s15 + $0xb0] sm:$0xff]
      %v4420 = vld [vmem:[%s15 + $0xb8] sm:$0xff]
      %v4421 = vld [vmem:[%s15 + $0xc0] sm:$0xff]
      %v4422 = vld [vmem:[%s15 + $0xc8] sm:$0xff]
      %v4423 = vld [vmem:[%s15 + $0xd0] sm:$0xff]
      %v4424 = vld [vmem:[%s15 + $0xd8] sm:$0xff]
      %v4425 = vld [vmem:[%s15 + $0xe0] sm:$0xff]
      %v4426 = vld [vmem:[%s15 + $0xe8] sm:$0xff]
      %v4427 = vld [vmem:[%s15 + $0xf0] sm:$0xff]
      %v4428 = vld [vmem:[%s15 + $0xf8] sm:$0xff]
      %v4429 = vld [vmem:[%s16] sm:$0xf]
      %v4431 = vlaneseq
      %v4432 = vshrl.u32 %v4431, 7
      %v4433 = vsub.s32 0, %v4432
      %v4434 = vrot.slane %v4429, %v4433
      %v4435 = vlaneseq
      %v4436 = vshrl.u32 %v4435, 7
      %v4437 = vsub.s32 1, %v4436
      %v4438 = vrot.slane %v4429, %v4437
      %v4439 = vlaneseq
      %v4440 = vshrl.u32 %v4439, 7
      %v4441 = vsub.s32 2, %v4440
      %v4442 = vrot.slane %v4429, %v4441
      %v4443 = vlaneseq
      %v4444 = vshrl.u32 %v4443, 7
      %v4445 = vsub.s32 3, %v4444
      %v4446 = vrot.slane %v4429, %v4445
      %v4483 = vunpack.c.l.b16 %v4397
      %v4484 = vunpack.c.h.b16 %v4397
      %v4485 = vunpack.c.l.b16 %v4398
      %v4486 = vunpack.c.h.b16 %v4398
      %v4487 = vunpack.c.l.b16 %v4399
      %v4488 = vunpack.c.h.b16 %v4399
      %v4489 = vunpack.c.l.b16 %v4400
      %v4490 = vunpack.c.h.b16 %v4400
      %v4491 = vunpack.c.l.b16 %v4401
      %v4492 = vunpack.c.h.b16 %v4401
      %v4493 = vunpack.c.l.b16 %v4402
      %v4494 = vunpack.c.h.b16 %v4402
      %v4495 = vunpack.c.l.b16 %v4403
      %v4496 = vunpack.c.h.b16 %v4403
      %v4497 = vunpack.c.l.b16 %v4404
      %v4498 = vunpack.c.h.b16 %v4404
      %v4499 = vunpack.c.l.b16 %v4405
      %v4500 = vunpack.c.h.b16 %v4405
      %v4501 = vunpack.c.l.b16 %v4406
      %v4502 = vunpack.c.h.b16 %v4406
      %v4503 = vunpack.c.l.b16 %v4407
      %v4504 = vunpack.c.h.b16 %v4407
      %v4505 = vunpack.c.l.b16 %v4408
      %v4506 = vunpack.c.h.b16 %v4408
      %v4507 = vunpack.c.l.b16 %v4409
      %v4508 = vunpack.c.h.b16 %v4409
      %v4509 = vunpack.c.l.b16 %v4410
      %v4510 = vunpack.c.h.b16 %v4410
      %v4511 = vunpack.c.l.b16 %v4411
      %v4512 = vunpack.c.h.b16 %v4411
      %v4513 = vunpack.c.l.b16 %v4412
      %v4514 = vunpack.c.h.b16 %v4412
      %v4515 = vunpack.c.l.b16 %v4413
      %v4516 = vunpack.c.h.b16 %v4413
      %v4517 = vunpack.c.l.b16 %v4414
      %v4518 = vunpack.c.h.b16 %v4414
      %v4519 = vunpack.c.l.b16 %v4415
      %v4520 = vunpack.c.h.b16 %v4415
      %v4521 = vunpack.c.l.b16 %v4416
      %v4522 = vunpack.c.h.b16 %v4416
      %v4523 = vunpack.c.l.b16 %v4417
      %v4524 = vunpack.c.h.b16 %v4417
      %v4525 = vunpack.c.l.b16 %v4418
      %v4526 = vunpack.c.h.b16 %v4418
      %v4527 = vunpack.c.l.b16 %v4419
      %v4528 = vunpack.c.h.b16 %v4419
      %v4529 = vunpack.c.l.b16 %v4420
      %v4530 = vunpack.c.h.b16 %v4420
      %v4531 = vunpack.c.l.b16 %v4421
      %v4532 = vunpack.c.h.b16 %v4421
      %v4533 = vunpack.c.l.b16 %v4422
      %v4534 = vunpack.c.h.b16 %v4422
      %v4535 = vunpack.c.l.b16 %v4423
      %v4536 = vunpack.c.h.b16 %v4423
      %v4537 = vunpack.c.l.b16 %v4424
      %v4538 = vunpack.c.h.b16 %v4424
      %v4539 = vunpack.c.l.b16 %v4425
      %v4540 = vunpack.c.h.b16 %v4425
      %v4541 = vunpack.c.l.b16 %v4426
      %v4542 = vunpack.c.h.b16 %v4426
      %v4543 = vunpack.c.l.b16 %v4427
      %v4544 = vunpack.c.h.b16 %v4427
      %v4545 = vunpack.c.l.b16 %v4428
      %v4546 = vunpack.c.h.b16 %v4428
      %v4547 = vpack.c.b16 %v4487, %v4483
      %v4548 = vpack.c.b16 %v4488, %v4484
      %v4549 = vpack.c.b16 %v4489, %v4485
      %v4550 = vpack.c.b16 %v4490, %v4486
      %v4551 = vpack.c.b16 %v4495, %v4491
      %v4552 = vpack.c.b16 %v4496, %v4492
      %v4553 = vpack.c.b16 %v4497, %v4493
      %v4554 = vpack.c.b16 %v4498, %v4494
      %v4555 = vpack.c.b16 %v4503, %v4499
      %v4556 = vpack.c.b16 %v4504, %v4500
      %v4557 = vpack.c.b16 %v4505, %v4501
      %v4558 = vpack.c.b16 %v4506, %v4502
      %v4559 = vpack.c.b16 %v4511, %v4507
      %v4560 = vpack.c.b16 %v4512, %v4508
      %v4561 = vpack.c.b16 %v4513, %v4509
      %v4562 = vpack.c.b16 %v4514, %v4510
      %v4563 = vpack.c.b16 %v4519, %v4515
      %v4564 = vpack.c.b16 %v4520, %v4516
      %v4565 = vpack.c.b16 %v4521, %v4517
      %v4566 = vpack.c.b16 %v4522, %v4518
      %v4567 = vpack.c.b16 %v4527, %v4523
      %v4568 = vpack.c.b16 %v4528, %v4524
      %v4569 = vpack.c.b16 %v4529, %v4525
      %v4570 = vpack.c.b16 %v4530, %v4526
      %v4571 = vpack.c.b16 %v4535, %v4531
      %v4572 = vpack.c.b16 %v4536, %v4532
      %v4573 = vpack.c.b16 %v4537, %v4533
      %v4574 = vpack.c.b16 %v4538, %v4534
      %v4575 = vpack.c.b16 %v4543, %v4539
      %v4576 = vpack.c.b16 %v4544, %v4540
      %v4577 = vpack.c.b16 %v4545, %v4541
      %v4578 = vpack.c.b16 %v4546, %v4542
      %4611 = vmatprep.subr.bf16.mxu0 %v4548
      %4612 = vmatpush1.bf16.msra.mxu0 %v4547
      %4613 = vmatprep.subr.bf16.mxu0 %v4552
      %4614 = vmatpush1.bf16.msra.mxu0 %v4551
      %4615 = vmatprep.subr.bf16.mxu0 %v4556
      %4616 = vmatpush1.bf16.msra.mxu0 %v4555
      %4617 = vmatprep.subr.bf16.mxu0 %v4560
      %4618 = vmatpush1.bf16.msra.mxu0 %v4559
      %4619 = vmatprep.subr.bf16.mxu0 %v4564
      %4620 = vmatpush1.bf16.msra.mxu0 %v4563
      %4621 = vmatprep.subr.bf16.mxu0 %v4568
      %4622 = vmatpush1.bf16.msra.mxu0 %v4567
      %4623 = vmatprep.subr.bf16.mxu0 %v4572
      %4624 = vmatpush1.bf16.msra.mxu0 %v4571
      %4625 = vmatprep.subr.bf16.mxu0 %v4576
      %4626 = vmatpush1.bf16.msra.mxu0 %v4575
      %4627 = vmatprep.subr.bf16.mxu0 0
      %4628 = vmatpush1.bf16.msra.mxu0 0
      %4629 = vmatprep.subr.bf16.mxu0 0
      %4630 = vmatpush1.bf16.msra.mxu0 0
      %4631 = vmatprep.subr.bf16.mxu0 0
      %4632 = vmatpush1.bf16.msra.mxu0 0
      %4633 = vmatprep.subr.bf16.mxu0 0
      %4634 = vmatpush1.bf16.msra.mxu0 0
      %4635 = vmatprep.subr.bf16.mxu0 0
      %4636 = vmatpush1.bf16.msra.mxu0 0
      %4637 = vmatprep.subr.bf16.mxu0 0
      %4638 = vmatpush1.bf16.msra.mxu0 0
      %4639 = vmatprep.subr.bf16.mxu0 0
      %4640 = vmatpush1.bf16.msra.mxu0 0
      %4641 = vmatprep.subr.bf16.mxu0 0
      %4642 = vmatpush1.bf16.msra.mxu0 0
      %4643 = vmatprep.mubr.bf16.mxu0 0
      %4644 = vmatmul.mubr.bf16.gmra.mrb[0].mxu0 %v4396
      %v4645 = vpop.f32.mrb[0].mxu0
      %v4646 = vadd.f32 %v4434, %v4645
      %v4647 = vpop.f32.mrb[0].mxu0
      %v4648 = vadd.f32 %v4438, %v4647
      %v4649 = vpop.f32.mrb[0].mxu0
      %v4650 = vpop.f32.mrb[0].mxu0
      %4651 = vdwg.mxu0
      %4652 = vmatprep.subr.bf16.mxu0 %v4550
      %4653 = vmatpush1.bf16.msra.mxu0 %v4549
      %4654 = vmatprep.subr.bf16.mxu0 %v4554
      %4655 = vmatpush1.bf16.msra.mxu0 %v4553
      %4656 = vmatprep.subr.bf16.mxu0 %v4558
      %4657 = vmatpush1.bf16.msra.mxu0 %v4557
      %4658 = vmatprep.subr.bf16.mxu0 %v4562
      %4659 = vmatpush1.bf16.msra.mxu0 %v4561
      %4660 = vmatprep.subr.bf16.mxu0 %v4566
      %4661 = vmatpush1.bf16.msra.mxu0 %v4565
      %4662 = vmatprep.subr.bf16.mxu0 %v4570
      %4663 = vmatpush1.bf16.msra.mxu0 %v4569
      %4664 = vmatprep.subr.bf16.mxu0 %v4574
      %4665 = vmatpush1.bf16.msra.mxu0 %v4573
      %4666 = vmatprep.subr.bf16.mxu0 %v4578
      %4667 = vmatpush1.bf16.msra.mxu0 %v4577
      %4668 = vmatprep.subr.bf16.mxu0 0
      %4669 = vmatpush1.bf16.msra.mxu0 0
      %4670 = vmatprep.subr.bf16.mxu0 0
      %4671 = vmatpush1.bf16.msra.mxu0 0
      %4672 = vmatprep.subr.bf16.mxu0 0
      %4673 = vmatpush1.bf16.msra.mxu0 0
      %4674 = vmatprep.subr.bf16.mxu0 0
      %4675 = vmatpush1.bf16.msra.mxu0 0
      %4676 = vmatprep.subr.bf16.mxu0 0
      %4677 = vmatpush1.bf16.msra.mxu0 0
      %4678 = vmatprep.subr.bf16.mxu0 0
      %4679 = vmatpush1.bf16.msra.mxu0 0
      %4680 = vmatprep.subr.bf16.mxu0 0
      %4681 = vmatpush1.bf16.msra.mxu0 0
      %4682 = vmatprep.subr.bf16.mxu0 0
      %4683 = vmatpush1.bf16.msra.mxu0 0
      %4684 = vmatprep.mubr.bf16.mxu0 0
      %4685 = vmatmul.mubr.bf16.gmra.mrb[0].mxu0 %v4396
      %v4686 = vpop.f32.mrb[0].mxu0
      %v4687 = vadd.f32 %v4442, %v4686
      %v4688 = vpop.f32.mrb[0].mxu0
      %v4689 = vadd.f32 %v4446, %v4688
      %v4690 = vpop.f32.mrb[0].mxu0
      %v4691 = vpop.f32.mrb[0].mxu0
      %4692 = vdwg.mxu0
      %v4693 = vmul.f32 %v4646, %v4646
      %v4694 = vmul.f32 %v4648, %v4648
      %v4695 = vmul.f32 %v4687, %v4687
      %v4696 = vmul.f32 %v4689, %v4689
      %v4697 = vmul.f32 %v4646, %v4693
      %v4698 = vmul.f32 %v4648, %v4694
      %v4699 = vmul.f32 %v4687, %v4695
      %v4700 = vmul.f32 %v4689, %v4696
      %v4701 = vmul.f32 %v4697, 0.044715
      %v4702 = vmul.f32 %v4698, 0.044715
      %v4703 = vmul.f32 %v4699, 0.044715
      %v4704 = vmul.f32 %v4700, 0.044715
      %v4705 = vadd.f32 %v4646, %v4701
      %v4706 = vadd.f32 %v4648, %v4702
      %v4707 = vadd.f32 %v4687, %v4703
      %v4708 = vadd.f32 %v4689, %v4704
      %v4709 = vmul.f32 %v4705, 0.7978846
      %v4710 = vmul.f32 %v4706, 0.7978846
      %v4711 = vmul.f32 %v4707, 0.7978846
      %v4712 = vmul.f32 %v4708, 0.7978846
      %v4713 = vtanh.pop %v4709
      %v4714 = vtanh.pop %v4710
      %v4715 = vtanh.pop %v4711
      %v4716 = vtanh.pop %v4712
      %v4717 = vadd.f32 %v4713, 1.0
      %v4718 = vadd.f32 %v4714, 1.0
      %v4719 = vadd.f32 %v4715, 1.0
      %v4720 = vadd.f32 %v4716, 1.0
      %v4721 = vmul.f32 %v4717, 0.5
      %v4722 = vmul.f32 %v4718, 0.5
      %v4723 = vmul.f32 %v4719, 0.5
      %v4724 = vmul.f32 %v4720, 0.5
      %v4725 = vmul.f32 %v4646, %v4721
      %v4726 = vmul.f32 %v4648, %v4722
      %v4727 = vmul.f32 %v4687, %v4723
      %v4728 = vmul.f32 %v4689, %v4724
      %v4729 = vpack.c.bf16 %v4725, %v4725
      %v4730 = vpack.c.bf16 %v4726, %v4726
      %v4731 = vpack.c.bf16 %v4727, %v4727
      %v4732 = vpack.c.bf16 %v4728, %v4728
      %v4733 = vld [vmem:[%s17] sm:$0xf]
      %v4734 = vld [vmem:[%s17 + $0x4] sm:$0xf]
      %v4735 = vld [vmem:[%s17 + $0x8] sm:$0xf]
      %v4736 = vld [vmem:[%s17 + $0xc] sm:$0xf]
      %v4737 = vld [vmem:[%s17 + $0x10] sm:$0xf]
      %v4738 = vld [vmem:[%s17 + $0x14] sm:$0xf]
      %v4739 = vld [vmem:[%s17 + $0x18] sm:$0xf]
      %v4740 = vld [vmem:[%s17 + $0x1c] sm:$0xf]
      %v4741 = vld [vmem:[%s17 + $0x20] sm:$0xf]
      %v4742 = vld [vmem:[%s17 + $0x24] sm:$0xf]
      %v4743 = vld [vmem:[%s17 + $0x28] sm:$0xf]
      %v4744 = vld [vmem:[%s17 + $0x2c] sm:$0xf]
      %v4745 = vld [vmem:[%s17 + $0x30] sm:$0xf]
      %v4746 = vld [vmem:[%s17 + $0x34] sm:$0xf]
      %v4747 = vld [vmem:[%s17 + $0x38] sm:$0xf]
      %v4748 = vld [vmem:[%s17 + $0x3c] sm:$0xf]
      %v4749 = vld [vmem:[%s17 + $0x40] sm:$0xf]
      %v4750 = vld [vmem:[%s17 + $0x44] sm:$0xf]
      %v4751 = vld [vmem:[%s17 + $0x48] sm:$0xf]
      %v4752 = vld [vmem:[%s17 + $0x4c] sm:$0xf]
      %v4753 = vld [vmem:[%s17 + $0x50] sm:$0xf]
      %v4754 = vld [vmem:[%s17 + $0x54] sm:$0xf]
      %v4755 = vld [vmem:[%s17 + $0x58] sm:$0xf]
      %v4756 = vld [vmem:[%s17 + $0x5c] sm:$0xf]
      %v4757 = vld [vmem:[%s17 + $0x60] sm:$0xf]
      %v4758 = vld [vmem:[%s17 + $0x64] sm:$0xf]
      %v4759 = vld [vmem:[%s17 + $0x68] sm:$0xf]
      %v4760 = vld [vmem:[%s17 + $0x6c] sm:$0xf]
      %v4761 = vld [vmem:[%s17 + $0x70] sm:$0xf]
      %v4762 = vld [vmem:[%s17 + $0x74] sm:$0xf]
      %v4763 = vld [vmem:[%s17 + $0x78] sm:$0xf]
      %v4764 = vld [vmem:[%s17 + $0x7c] sm:$0xf]
      %v4765 = vld [vmem:[%s17 + $0x80] sm:$0xf]
      %v4766 = vld [vmem:[%s17 + $0x84] sm:$0xf]
      %v4767 = vld [vmem:[%s17 + $0x88] sm:$0xf]
      %v4768 = vld [vmem:[%s17 + $0x8c] sm:$0xf]
      %v4769 = vld [vmem:[%s17 + $0x90] sm:$0xf]
      %v4770 = vld [vmem:[%s17 + $0x94] sm:$0xf]
      %v4771 = vld [vmem:[%s17 + $0x98] sm:$0xf]
      %v4772 = vld [vmem:[%s17 + $0x9c] sm:$0xf]
      %v4773 = vld [vmem:[%s17 + $0xa0] sm:$0xf]
      %v4774 = vld [vmem:[%s17 + $0xa4] sm:$0xf]
      %v4775 = vld [vmem:[%s17 + $0xa8] sm:$0xf]
      %v4776 = vld [vmem:[%s17 + $0xac] sm:$0xf]
      %v4777 = vld [vmem:[%s17 + $0xb0] sm:$0xf]
      %v4778 = vld [vmem:[%s17 + $0xb4] sm:$0xf]
      %v4779 = vld [vmem:[%s17 + $0xb8] sm:$0xf]
      %v4780 = vld [vmem:[%s17 + $0xbc] sm:$0xf]
      %v4781 = vld [vmem:[%s17 + $0xc0] sm:$0xf]
      %v4782 = vld [vmem:[%s17 + $0xc4] sm:$0xf]
      %v4783 = vld [vmem:[%s17 + $0xc8] sm:$0xf]
      %v4784 = vld [vmem:[%s17 + $0xcc] sm:$0xf]
      %v4785 = vld [vmem:[%s17 + $0xd0] sm:$0xf]
      %v4786 = vld [vmem:[%s17 + $0xd4] sm:$0xf]
      %v4787 = vld [vmem:[%s17 + $0xd8] sm:$0xf]
      %v4788 = vld [vmem:[%s17 + $0xdc] sm:$0xf]
      %v4789 = vld [vmem:[%s17 + $0xe0] sm:$0xf]
      %v4790 = vld [vmem:[%s17 + $0xe4] sm:$0xf]
      %v4791 = vld [vmem:[%s17 + $0xe8] sm:$0xf]
      %v4792 = vld [vmem:[%s17 + $0xec] sm:$0xf]
      %v4793 = vld [vmem:[%s17 + $0xf0] sm:$0xf]
      %v4794 = vld [vmem:[%s17 + $0xf4] sm:$0xf]
      %v4795 = vld [vmem:[%s17 + $0xf8] sm:$0xf]
      %v4796 = vld [vmem:[%s17 + $0xfc] sm:$0xf]
      %v4797 = vld [vmem:[%s18] sm:$0x1]
      %v4799 = vlaneseq
      %v4800 = vshrl.u32 %v4799, 7
      %v4801 = vsub.s32 0, %v4800
      %v4802 = vrot.slane %v4797, %v4801
      %v4868 = vunpack.c.l.b16 %v4733
      %v4869 = vunpack.c.l.b16 %v4734
      %v4870 = vunpack.c.l.b16 %v4735
      %v4871 = vunpack.c.l.b16 %v4736
      %v4872 = vunpack.c.l.b16 %v4737
      %v4873 = vunpack.c.l.b16 %v4738
      %v4874 = vunpack.c.l.b16 %v4739
      %v4875 = vunpack.c.l.b16 %v4740
      %v4876 = vunpack.c.l.b16 %v4741
      %v4877 = vunpack.c.l.b16 %v4742
      %v4878 = vunpack.c.l.b16 %v4743
      %v4879 = vunpack.c.l.b16 %v4744
      %v4880 = vunpack.c.l.b16 %v4745
      %v4881 = vunpack.c.l.b16 %v4746
      %v4882 = vunpack.c.l.b16 %v4747
      %v4883 = vunpack.c.l.b16 %v4748
      %v4884 = vunpack.c.l.b16 %v4749
      %v4885 = vunpack.c.l.b16 %v4750
      %v4886 = vunpack.c.l.b16 %v4751
      %v4887 = vunpack.c.l.b16 %v4752
      %v4888 = vunpack.c.l.b16 %v4753
      %v4889 = vunpack.c.l.b16 %v4754
      %v4890 = vunpack.c.l.b16 %v4755
      %v4891 = vunpack.c.l.b16 %v4756
      %v4892 = vunpack.c.l.b16 %v4757
      %v4893 = vunpack.c.l.b16 %v4758
      %v4894 = vunpack.c.l.b16 %v4759
      %v4895 = vunpack.c.l.b16 %v4760
      %v4896 = vunpack.c.l.b16 %v4761
      %v4897 = vunpack.c.l.b16 %v4762
      %v4898 = vunpack.c.l.b16 %v4763
      %v4899 = vunpack.c.l.b16 %v4764
      %v4900 = vunpack.c.l.b16 %v4765
      %v4901 = vunpack.c.l.b16 %v4766
      %v4902 = vunpack.c.l.b16 %v4767
      %v4903 = vunpack.c.l.b16 %v4768
      %v4904 = vunpack.c.l.b16 %v4769
      %v4905 = vunpack.c.l.b16 %v4770
      %v4906 = vunpack.c.l.b16 %v4771
      %v4907 = vunpack.c.l.b16 %v4772
      %v4908 = vunpack.c.l.b16 %v4773
      %v4909 = vunpack.c.l.b16 %v4774
      %v4910 = vunpack.c.l.b16 %v4775
      %v4911 = vunpack.c.l.b16 %v4776
      %v4912 = vunpack.c.l.b16 %v4777
      %v4913 = vunpack.c.l.b16 %v4778
      %v4914 = vunpack.c.l.b16 %v4779
      %v4915 = vunpack.c.l.b16 %v4780
      %v4916 = vunpack.c.l.b16 %v4781
      %v4917 = vunpack.c.l.b16 %v4782
      %v4918 = vunpack.c.l.b16 %v4783
      %v4919 = vunpack.c.l.b16 %v4784
      %v4920 = vunpack.c.l.b16 %v4785
      %v4921 = vunpack.c.l.b16 %v4786
      %v4922 = vunpack.c.l.b16 %v4787
      %v4923 = vunpack.c.l.b16 %v4788
      %v4924 = vunpack.c.l.b16 %v4789
      %v4925 = vunpack.c.l.b16 %v4790
      %v4926 = vunpack.c.l.b16 %v4791
      %v4927 = vunpack.c.l.b16 %v4792
      %v4928 = vunpack.c.l.b16 %v4793
      %v4929 = vunpack.c.l.b16 %v4794
      %v4930 = vunpack.c.l.b16 %v4795
      %v4931 = vunpack.c.l.b16 %v4796
      %v4932 = vpack.c.b16 %v4869, %v4868
      %v4933 = vpack.c.b16 %v4871, %v4870
      %v4934 = vpack.c.b16 %v4873, %v4872
      %v4935 = vpack.c.b16 %v4875, %v4874
      %v4936 = vpack.c.b16 %v4877, %v4876
      %v4937 = vpack.c.b16 %v4879, %v4878
      %v4938 = vpack.c.b16 %v4881, %v4880
      %v4939 = vpack.c.b16 %v4883, %v4882
      %v4940 = vpack.c.b16 %v4885, %v4884
      %v4941 = vpack.c.b16 %v4887, %v4886
      %v4942 = vpack.c.b16 %v4889, %v4888
      %v4943 = vpack.c.b16 %v4891, %v4890
      %v4944 = vpack.c.b16 %v4893, %v4892
      %v4945 = vpack.c.b16 %v4895, %v4894
      %v4946 = vpack.c.b16 %v4897, %v4896
      %v4947 = vpack.c.b16 %v4899, %v4898
      %v4948 = vpack.c.b16 %v4901, %v4900
      %v4949 = vpack.c.b16 %v4903, %v4902
      %v4950 = vpack.c.b16 %v4905, %v4904
      %v4951 = vpack.c.b16 %v4907, %v4906
      %v4952 = vpack.c.b16 %v4909, %v4908
      %v4953 = vpack.c.b16 %v4911, %v4910
      %v4954 = vpack.c.b16 %v4913, %v4912
      %v4955 = vpack.c.b16 %v4915, %v4914
      %v4956 = vpack.c.b16 %v4917, %v4916
      %v4957 = vpack.c.b16 %v4919, %v4918
      %v4958 = vpack.c.b16 %v4921, %v4920
      %v4959 = vpack.c.b16 %v4923, %v4922
      %v4960 = vpack.c.b16 %v4925, %v4924
      %v4961 = vpack.c.b16 %v4927, %v4926
      %v4962 = vpack.c.b16 %v4929, %v4928
      %v4963 = vpack.c.b16 %v4931, %v4930
      %4996 = vmatprep.subr.bf16.mxu0 0
      %4997 = vmatpush1.bf16.msra.mxu0 %v4932
      %4998 = vmatprep.subr.bf16.mxu0 0
      %4999 = vmatpush1.bf16.msra.mxu0 %v4933
      %5000 = vmatprep.subr.bf16.mxu0 0
      %5001 = vmatpush1.bf16.msra.mxu0 %v4934
      %5002 = vmatprep.subr.bf16.mxu0 0
      %5003 = vmatpush1.bf16.msra.mxu0 %v4935
      %5004 = vmatprep.subr.bf16.mxu0 0
      %5005 = vmatpush1.bf16.msra.mxu0 %v4936
      %5006 = vmatprep.subr.bf16.mxu0 0
      %5007 = vmatpush1.bf16.msra.mxu0 %v4937
      %5008 = vmatprep.subr.bf16.mxu0 0
      %5009 = vmatpush1.bf16.msra.mxu0 %v4938
      %5010 = vmatprep.subr.bf16.mxu0 0
      %5011 = vmatpush1.bf16.msra.mxu0 %v4939
      %5012 = vmatprep.subr.bf16.mxu0 0
      %5013 = vmatpush1.bf16.msra.mxu0 %v4940
      %5014 = vmatprep.subr.bf16.mxu0 0
      %5015 = vmatpush1.bf16.msra.mxu0 %v4941
      %5016 = vmatprep.subr.bf16.mxu0 0
      %5017 = vmatpush1.bf16.msra.mxu0 %v4942
      %5018 = vmatprep.subr.bf16.mxu0 0
      %5019 = vmatpush1.bf16.msra.mxu0 %v4943
      %5020 = vmatprep.subr.bf16.mxu0 0
      %5021 = vmatpush1.bf16.msra.mxu0 %v4944
      %5022 = vmatprep.subr.bf16.mxu0 0
      %5023 = vmatpush1.bf16.msra.mxu0 %v4945
      %5024 = vmatprep.subr.bf16.mxu0 0
      %5025 = vmatpush1.bf16.msra.mxu0 %v4946
      %5026 = vmatprep.subr.bf16.mxu0 0
      %5027 = vmatpush1.bf16.msra.mxu0 %v4947
      %5028 = vmatprep.mubr.bf16.mxu0 %v4730
      %5029 = vmatmul.mubr.bf16.gmra.mrb[0].mxu0 %v4729
      %v5030 = vpop.f32.mrb[0].mxu0
      %v5031 = vadd.f32 %v4802, %v5030
      %v5032 = vpop.f32.mrb[0].mxu0
      %v5033 = vpop.f32.mrb[0].mxu0
      %v5034 = vpop.f32.mrb[0].mxu0
      %5035 = vdwg.mxu0
      %5036 = vmatprep.subr.bf16.mxu0 0
      %5037 = vmatpush1.bf16.msra.mxu0 %v4948
      %5038 = vmatprep.subr.bf16.mxu0 0
      %5039 = vmatpush1.bf16.msra.mxu0 %v4949
      %5040 = vmatprep.subr.bf16.mxu0 0
      %5041 = vmatpush1.bf16.msra.mxu0 %v4950
      %5042 = vmatprep.subr.bf16.mxu0 0
      %5043 = vmatpush1.bf16.msra.mxu0 %v4951
      %5044 = vmatprep.subr.bf16.mxu0 0
      %5045 = vmatpush1.bf16.msra.mxu0 %v4952
      %5046 = vmatprep.subr.bf16.mxu0 0
      %5047 = vmatpush1.bf16.msra.mxu0 %v4953
      %5048 = vmatprep.subr.bf16.mxu0 0
      %5049 = vmatpush1.bf16.msra.mxu0 %v4954
      %5050 = vmatprep.subr.bf16.mxu0 0
      %5051 = vmatpush1.bf16.msra.mxu0 %v4955
      %5052 = vmatprep.subr.bf16.mxu0 0
      %5053 = vmatpush1.bf16.msra.mxu0 %v4956
      %5054 = vmatprep.subr.bf16.mxu0 0
      %5055 = vmatpush1.bf16.msra.mxu0 %v4957
      %5056 = vmatprep.subr.bf16.mxu0 0
      %5057 = vmatpush1.bf16.msra.mxu0 %v4958
      %5058 = vmatprep.subr.bf16.mxu0 0
      %5059 = vmatpush1.bf16.msra.mxu0 %v4959
      %5060 = vmatprep.subr.bf16.mxu0 0
      %5061 = vmatpush1.bf16.msra.mxu0 %v4960
      %5062 = vmatprep.subr.bf16.mxu0 0
      %5063 = vmatpush1.bf16.msra.mxu0 %v4961
      %5064 = vmatprep.subr.bf16.mxu0 0
      %5065 = vmatpush1.bf16.msra.mxu0 %v4962
      %5066 = vmatprep.subr.bf16.mxu0 0
      %5067 = vmatpush1.bf16.msra.mxu0 %v4963
      %5068 = vmatprep.mubr.bf16.mxu0 %v4732
      %5069 = vmatmul.mubr.bf16.gmra.mrb[0].mxu0 %v4731
      %v5070 = vpop.f32.mrb[0].mxu0
      %v5071 = vadd.f32 %v5031, %v5070
      %v5072 = vpop.f32.mrb[0].mxu0
      %v5073 = vpop.f32.mrb[0].mxu0
      %v5074 = vpop.f32.mrb[0].mxu0
      %5075 = vdwg.mxu0
      %v5076 = vlaneseq
      %v5077 = vshrl.u32 %v5076, 7
      %v5078 = vsub.s32 3, %v5077
      %v5079 = vrot.slane %v689, %v5078
      %v5080 = vmul.f32 %v5079, %v5071
      %v5081 = vadd.f32 %v3172, %v5080
      %5082 = vst [vmem:[%s677] sm:$0xff] %v5081
      %p5083 = scmp.lt.s32.totalorder %s32, 1
      %s5084 = scalar_select %p5083, %s32, 1
      %s5085 = smul.addr %s5084, 8
      %s5086 = smul.addr %s5085, 8
      %s5087 = scalar_lea.vmem %s19, %s5086
      %p5088 = scmp.lt.s32.totalorder %s32, 1
      %s5089 = scalar_select %p5088, %s32, 1
      %s5090 = smul.addr %s5089, 8
      %s5091 = scalar_lea.vmem %s20, %s5090
      // Predicated region
      $region97: #{sd3_forward.7} parent=95 // pred_check
        %p5092 = pneg %p464
      $region98: #{sd3_forward.7} parent=95 // pred_check_branch
        %5094 = sbr.rel (%p5092) target = $region100
      $region99: #{sd3_forward.7} parent=95 // pred_region
        _
      $region100: #{sd3_forward.7} parent=95 // pred_fallthru
        _
      // Predicated region
      $region101: #{sd3_forward.7} parent=95 // pred_check
        %p5095 = pneg %p490
      $region102: #{sd3_forward.7} parent=95 // pred_check_branch
        %5097 = sbr.rel (%p5095) target = $region104
      $region103: #{sd3_forward.7} parent=95 // pred_region
        _
      $region104: #{sd3_forward.7} parent=95 // pred_fallthru
        _
    $region96: #{sd3_forward.7} parent=5 // pred_fallthru
      _
    %p5098 = scmp.le.s32.totalorder 2, %s27
    // Predicated region
    $region105: #{sd3_forward.7} parent=5 // pred_check
      %p5099 = pneg %p5098
    $region106: #{sd3_forward.7} parent=5 // pred_check_branch
      %5101 = sbr.rel (%p5099) target = $region108
    $region107: #{sd3_forward.7} parent=5 // pred_region
      %s5102 = ssub.s32 %s27, 2
      // Predicated region
      $region109: #{sd3_forward.7} parent=107 // pred_check
        %p5103 = pneg %p470
      $region110: #{sd3_forward.7} parent=107 // pred_check_branch
        %5105 = sbr.rel (%p5103) target = $region112
      $region111: #{sd3_forward.7} parent=107 // pred_region
        %p5106 = scmp.lt.s32.totalorder %s33, 1
        %s5107 = scalar_select %p5106, %s33, 1
        %s5108 = smul.addr %s5107, 8
        %s5109 = smul.addr %s5108, 8
        %s5110 = scalar_lea.vmem %s19, %s5109
      $region112: #{sd3_forward.7} parent=107 // pred_fallthru
        _
      // Predicated region
      $region113: #{sd3_forward.7} parent=107 // pred_check
        %p5111 = pneg %p496
      $region114: #{sd3_forward.7} parent=107 // pred_check_branch
        %5113 = sbr.rel (%p5111) target = $region116
      $region115: #{sd3_forward.7} parent=107 // pred_region
        %p5114 = scmp.lt.s32.totalorder %s33, 1
        %s5115 = scalar_select %p5114, %s33, 1
        %s5116 = smul.addr %s5115, 8
        %s5117 = scalar_lea.vmem %s20, %s5116
      $region116: #{sd3_forward.7} parent=107 // pred_fallthru
        _
    $region108: #{sd3_forward.7} parent=5 // pred_fallthru
      _
  $region6: #{sd3_forward.7} parent=0 // loop_footer
    %s31 = sadd.s32 1, %s27
  $region7: #{sd3_forward.7} parent=0 // loop_footer_branch
    %26 = sbr.rel target = $region3
  $region8: #{sd3_forward.7} parent=0 // loop_exit
    _

</llo_original>
